<compile_context>
chip_gen: v6e
topology: v6e:2x2x1
jax: 0.10.0
libtpu: 0.0.40
codegen_flags: <defaults>
</compile_context>

<pallas_src>
import functools

import jax
import jax.numpy as jnp
from jax import lax
from jax.experimental import pallas as pl
from jax.experimental.pallas import tpu as pltpu

_VMEM_LIMIT = 32 * 1024 * 1024  # comfortably below v7x's 64 MiB physical; above v5e's 16 MiB default


def _round_up(x, m):
    return (x + m - 1) // m * m


def _cdiv(a, b):
    return (a + b - 1) // b


# ----------------------------------------------------------------------------
# Pallas kernel 1: fused 3x3 conv (pad=1, stride=1) + bias + ReLU, one image per grid step.
# The 3 vertical taps are pre-folded into the channel dim (C3 = 3*Cin) by the glue; the kernel
# accumulates the 3 horizontal taps with shifted VMEM reads -> 3 MXU dots per row band.
# ----------------------------------------------------------------------------
def _conv3x3_relu_kernel(x_ref, w_ref, b_ref, o_ref, *, H, W, Wc, C3, Cout, TB):
    # x_ref: (1, H, Wc+2, C3) bf16   (row h already holds padded rows h, h+1, h+2)
    # w_ref: (3, C3, Cout) bf16      (indexed by horizontal tap dw)
    # b_ref: (1, Cout) f32
    # o_ref: (1, H, W, Cout) bf16
    bias = b_ref[...]
    nbands = H // TB

    def band(r, carry):
        h0 = r * TB

        def tap(dw):
            lhs = x_ref[0, pl.ds(h0, TB), dw:dw + Wc, :]        # (TB, Wc, C3) bf16
            lhs = lhs.reshape(TB * Wc, C3)                      # Wc % 16 == 0 -> layout-trivial
            return jnp.dot(lhs, w_ref[dw],
                           preferred_element_type=jnp.float32)  # (TB*Wc, Cout) f32

        acc = tap(0)
        acc = acc + tap(1)
        acc = acc + tap(2)
        y = jnp.maximum(acc + bias, 0.0).astype(o_ref.dtype)
        y = y.reshape(TB, Wc, Cout)
        if Wc != W:
            y = y[:, :W, :]                                     # drop the alignment-only columns
        o_ref[0, pl.ds(h0, TB), :, :] = y
        return carry

    lax.fori_loop(0, nbands, band, 0)


def _pick_band_rows(H, Wc, C3, Cout, budget=40):
    """Largest row band TB (divisor of H) whose accumulator + lhs stay ~within the vreg file."""
    best = 1
    for tb in range(1, H + 1):
        if H % tb:
            continue
        acc_vregs = (tb * Wc // 8) * _cdiv(Cout, 128)    # f32 accumulator tiles
        lhs_vregs = (tb * Wc // 16) * _cdiv(C3, 128)     # bf16 lhs tiles
        if acc_vregs + lhs_vregs <= budget:
            best = tb
    return best


def conv3x3_relu(x, wr, b):
    """x: (NB, H, W, Cin) bf16 NHWC.  wr: (3, 3*Cin, Cout) bf16 (dh folded into channels, see
    init_params).  b: (1, Cout) f32.  Returns relu(conv3x3(x, pad=1) + b) as (NB, H, W, Cout) bf16."""
    NB, H, W, Cin = x.shape
    _, C3, Cout = wr.shape
    assert C3 == 3 * Cin
    Wc = _round_up(W, 16)  # compute width (multiple of 16 keeps in-kernel reshapes layout-trivial)

    # glue: spatial halo pad (+ alignment columns), then fold the 3 vertical taps into channels.
    # This is a 3x materialization of a small activation (vs. 9x for full im2col).
    xp = jnp.pad(x, ((0, 0), (1, 1), (1, Wc - W + 1), (0, 0)))
    xrt = jnp.concatenate([xp[:, dh:dh + H] for dh in range(3)], axis=-1)  # (NB, H, Wc+2, 3*Cin)

    TB = _pick_band_rows(H, Wc, C3, Cout)
    kernel = functools.partial(_conv3x3_relu_kernel,
                               H=H, W=W, Wc=Wc, C3=C3, Cout=Cout, TB=TB)
    return pl.pallas_call(
        kernel,
        out_shape=jax.ShapeDtypeStruct((NB, H, W, Cout), jnp.bfloat16),
        grid_spec=pltpu.PrefetchScalarGridSpec(
            num_scalar_prefetch=0,
            grid=(NB,),
            in_specs=[
                pl.BlockSpec((1, H, Wc + 2, C3), lambda n: (n, 0, 0, 0)),
                pl.BlockSpec((3, C3, Cout), lambda n: (0, 0, 0)),
                pl.BlockSpec((1, Cout), lambda n: (0, 0)),
            ],
            out_specs=pl.BlockSpec((1, H, W, Cout), lambda n: (n, 0, 0, 0)),
        ),
        compiler_params=pltpu.CompilerParams(
            dimension_semantics=("parallel",),
            vmem_limit_bytes=_VMEM_LIMIT),
    )(xrt, wr, b)


# ----------------------------------------------------------------------------
# Pallas kernel 2: fused MIL head.
# fc1 (K-tiled reduction) + ReLU + fc2 + classifier hidden + ReLU + classifier output + sigmoid,
# all in one launch.  Rows are padded only to 8 (vs. 128 before).
# ----------------------------------------------------------------------------
def _mil_head_kernel(x_ref, w1_ref, b1_ref, w2_ref, b2_ref,
                     wh_ref, bh_ref, wo_ref, bo_ref, o_ref, acc_ref):
    k = pl.program_id(0)

    @pl.when(k == 0)
    def _():
        acc_ref[...] = jnp.zeros_like(acc_ref)

    acc_ref[...] += jnp.dot(x_ref[...], w1_ref[...],
                            preferred_element_type=jnp.float32)

    @pl.when(k == pl.num_programs(0) - 1)
    def _():
        h1 = jnp.maximum(acc_ref[...] + b1_ref[...], 0.0)                   # fc1 + ReLU
        f2 = jnp.dot(h1.astype(jnp.bfloat16), w2_ref[...],
                     preferred_element_type=jnp.float32) + b2_ref[...]      # fc2 (no activation)
        hh = jnp.maximum(
            jnp.dot(f2.astype(jnp.bfloat16), wh_ref[...],
                    preferred_element_type=jnp.float32) + bh_ref[...], 0.0)  # classifier hidden
        # classifier output (N=1): lane reduction instead of an N=1 MXU matmul
        logits = jnp.sum(hh * wo_ref[...].astype(jnp.float32),
                         axis=1, keepdims=True) + bo_ref[...]
        o_ref[...] = jax.nn.sigmoid(logits)


def mil_head(featp, params, *, tk=1152):
    """featp: (Mp, 9216) bf16 (rows padded to a multiple of 8).  Returns instance scores (Mp, 1) f32."""
    Mp, K1 = featp.shape
    assert K1 % tk == 0 and Mp % 8 == 0
    H1 = params["fc1_w"].shape[1]
    H2 = params["fc2_w"].shape[1]
    Hh = params["cls_h_w"].shape[1]
    return pl.pallas_call(
        _mil_head_kernel,
        out_shape=jax.ShapeDtypeStruct((Mp, 1), jnp.float32),
        grid_spec=pltpu.PrefetchScalarGridSpec(
            num_scalar_prefetch=0,
            grid=(K1 // tk,),
            in_specs=[
                pl.BlockSpec((Mp, tk), lambda k: (0, k)),
                pl.BlockSpec((tk, H1), lambda k: (k, 0)),
                pl.BlockSpec((1, H1), lambda k: (0, 0)),
                pl.BlockSpec((H1, H2), lambda k: (0, 0)),
                pl.BlockSpec((1, H2), lambda k: (0, 0)),
                pl.BlockSpec((H2, Hh), lambda k: (0, 0)),
                pl.BlockSpec((1, Hh), lambda k: (0, 0)),
                pl.BlockSpec((1, Hh), lambda k: (0, 0)),
                pl.BlockSpec((1, 1), lambda k: (0, 0)),
            ],
            out_specs=pl.BlockSpec((Mp, 1), lambda k: (0, 0)),
            scratch_shapes=[pltpu.VMEM((Mp, H1), jnp.float32)],
        ),
        compiler_params=pltpu.CompilerParams(
            dimension_semantics=("arbitrary",),
            vmem_limit_bytes=_VMEM_LIMIT),
    )(featp, params["fc1_w"], params["fc1_b"], params["fc2_w"], params["fc2_b"],
      params["cls_h_w"], params["cls_h_b"], params["cls_o_w"], params["cls_o_b"])


# ----------------------------------------------------------------------------
# Pallas kernel 3: masked max over instances (the MIL pooling reduction).
# Note: an all-zero mask row yields -inf, matching PyTorch masked_fill(-inf) + max.
# ----------------------------------------------------------------------------
def _masked_max_kernel(s_ref, m_ref, o_ref):
    s = s_ref[...]
    m = m_ref[...]
    o_ref[...] = jnp.max(jnp.where(m == 0, -jnp.inf, s), axis=1, keepdims=True)


def masked_max(scores, masks):
    B, N = scores.shape
    return pl.pallas_call(
        _masked_max_kernel,
        out_shape=jax.ShapeDtypeStruct((B, 1), jnp.float32),
        in_specs=[pl.BlockSpec((B, N), lambda: (0, 0)),
                  pl.BlockSpec((B, N), lambda: (0, 0))],
        out_specs=pl.BlockSpec((B, 1), lambda: (0, 0)),
    )(scores.astype(jnp.float32), masks.astype(jnp.float32))


# ----------------------------------------------------------------------------
# JAX glue: 2x2 max-pool, parameter init (pre-cast / pre-laid-out once), full forward.
# ----------------------------------------------------------------------------
def maxpool2x2(x):  # (NB, H, W, C) -> (NB, H/2, W/2, C)
    # TODO(synk): could be fused into the conv epilogue to halve conv writeback bytes.
    NB, H, W, C = x.shape
    return x.reshape(NB, H // 2, 2, W // 2, 2, C).max(axis=(2, 4))


def init_params(key, hidden_size=32):
    """Weights are created directly in the layout/dtype the kernels consume (hoisted out of the
    forward path): conv weights as (dw, dh*Cin + c, Cout) bf16, linears bf16, biases (1, C) f32."""
    ks = jax.random.split(key, 16)

    def u(k, shape, fan_in):
        bound = 1.0 / jnp.sqrt(fan_in)
        return jax.random.uniform(k, shape, jnp.float32, -bound, bound)

    p = {}
    conv_chs = [(3, 32), (32, 64), (64, 128), (128, 256)]
    for i, (cin, cout) in enumerate(conv_chs):
        w = u(ks[2 * i], (3, 3, cin, cout), 9 * cin)             # HWIO (dh, dw, cin, cout)
        p[f"conv{i+1}_w"] = (jnp.transpose(w, (1, 0, 2, 3))      # (dw, dh, cin, cout)
                             .reshape(3, 3 * cin, cout)
                             .astype(jnp.bfloat16))
        p[f"conv{i+1}_b"] = u(ks[2 * i + 1], (1, cout), 9 * cin)
    p["fc1_w"] = u(ks[8], (256 * 6 * 6, 512), 256 * 6 * 6).astype(jnp.bfloat16)
    p["fc1_b"] = u(ks[9], (1, 512), 256 * 6 * 6)
    p["fc2_w"] = u(ks[10], (512, 256), 512).astype(jnp.bfloat16)
    p["fc2_b"] = u(ks[11], (1, 256), 512)
    p["cls_h_w"] = u(ks[12], (256, hidden_size), 256).astype(jnp.bfloat16)
    p["cls_h_b"] = u(ks[13], (1, hidden_size), 256)
    p["cls_o_w"] = u(ks[14], (1, hidden_size), hidden_size).astype(jnp.bfloat16)  # pre-transposed
    p["cls_o_b"] = u(ks[15], (1, 1), hidden_size)
    return p


def mil_forward(params, bags, masks):
    """bags: (B, N, 3, 96, 96) NCHW; masks: (B, N).  Returns bag_scores: (B, 1) f32."""
    B, N = bags.shape[0], bags.shape[1]
    NB = B * N
    # NCHW -> NHWC, bf16 activations end-to-end through the conv stack.
    x = bags.reshape(NB, 3, 96, 96).transpose(0, 2, 3, 1).astype(jnp.bfloat16)

    # InstanceEncoder conv stack: fused conv+bias+ReLU Pallas kernels, pool as glue.
    for i in range(4):
        x = conv3x3_relu(x, params[f"conv{i+1}_w"], params[f"conv{i+1}_b"])
        x = maxpool2x2(x)

    # NOTE: flatten order is HWC (vs PyTorch's CHW); equivalent up to a fixed permutation of the
    # fc1 input weights, which are synthetically initialized in this layout.
    feat = x.reshape(NB, 6 * 6 * 256)
    Mp = max(8, _round_up(NB, 8))
    featp = jnp.pad(feat, ((0, Mp - NB), (0, 0)))

    # Fused head: fc1 + ReLU + fc2 + classifier (hidden/ReLU/output/sigmoid) in one kernel.
    scores = mil_head(featp, params)             # (Mp, 1) f32
    scores = scores[:NB].reshape(B, N)

    # Masked max over instances (MIL pooling) in Pallas.
    return masked_max(scores, masks)             # (B, 1)


if __name__ == "__main__":
    key = jax.random.PRNGKey(0)
    k_params, k_bags = jax.random.split(key)

    B, N = 2, 3  # small bags; images must be 3x96x96 (fc expects 256*6*6)
    hidden_size = 32
    params = init_params(k_params, hidden_size=hidden_size)

    bags = jax.random.normal(k_bags, (B, N, 3, 96, 96), dtype=jnp.float32)
    masks = jnp.array([[1.0, 1.0, 0.0],
                       [1.0, 0.0, 0.0]], dtype=jnp.float32)

    fwd = jax.jit(mil_forward)
    out = jax.block_until_ready(fwd(params, bags, masks))
    assert out.shape == (B, 1) and out.dtype == jnp.float32
    assert bool(jnp.isfinite(out).all())
    print("KERNEL_OK")
</pallas_src>

<mosaic_0001>
module attributes {stable_mosaic.version = 11 : i64} {
  func.func @_conv3x3_relu_kernel(%arg0: i32, %arg1: memref<1x96x98x9xbf16, #tpu.memory_space<vmem>>, %arg2: memref<3x9x32xbf16, #tpu.memory_space<vmem>>, %arg3: memref<1x32xf32, #tpu.memory_space<vmem>>, %arg4: memref<1x96x96x32xbf16, #tpu.memory_space<vmem>>) attributes {dimension_semantics = [#tpu.dimension_semantics<parallel>], iteration_bounds = array<i64: 6>, scalar_prefetch = 0 : i64, scratch_operands = 0 : i64, tpu.core_type = #tpu.core_type<tc>, window_params = [{transform_indices = @transform_0, window_bounds = array<i64: 1, 96, 98, 9>}, {pipeline_mode = #tpu.pipeline_mode<synchronous>, transform_indices = @transform_1, window_bounds = array<i64: 3, 9, 32>}, {pipeline_mode = #tpu.pipeline_mode<synchronous>, transform_indices = @transform_2, window_bounds = array<i64: 1, 32>}, {transform_indices = @transform_3, window_bounds = array<i64: 1, 96, 96, 32>}]} {
    %c0 = arith.constant 0 : index
    %c0_0 = arith.constant 0 : index
    %0 = vector.load %arg3[%c0, %c0_0] : memref<1x32xf32, #tpu.memory_space<vmem>>, vector<1x32xf32>
    %c0_i32 = arith.constant 0 : i32
    %c48_i32 = arith.constant 48 : i32
    %1 = arith.addi %c0_i32, %c48_i32 : i32
    %c1_i32 = arith.constant 1 : i32
    scf.for %arg5 = %c0_i32 to %1 step %c1_i32  : i32 {
      %c2_i32 = arith.constant 2 : i32
      %2 = arith.muli %arg5, %c2_i32 : i32
      %c0_2 = arith.constant 0 : index
      %3 = arith.index_cast %2 : i32 to index
      %c0_3 = arith.constant 0 : index
      %c0_4 = arith.constant 0 : index
      %4 = vector.load %arg1[%c0_2, %3, %c0_3, %c0_4] : memref<1x96x98x9xbf16, #tpu.memory_space<vmem>>, vector<1x2x96x9xbf16>
      %5 = vector.shape_cast %4 : vector<1x2x96x9xbf16> to vector<2x96x9xbf16>
      %6 = vector.shape_cast %5 : vector<2x96x9xbf16> to vector<192x9xbf16>
      %c0_5 = arith.constant 0 : index
      %c0_6 = arith.constant 0 : index
      %c0_7 = arith.constant 0 : index
      %7 = vector.load %arg2[%c0_5, %c0_6, %c0_7] : memref<3x9x32xbf16, #tpu.memory_space<vmem>>, vector<1x9x32xbf16>
      %8 = vector.shape_cast %7 : vector<1x9x32xbf16> to vector<9x32xbf16>
      %cst = arith.constant dense<0.000000e+00> : vector<192x32xf32>
      %9 = tpu.matmul %6, %8, %cst {dimension_numbers = #tpu.dot_dimension_numbers<[1], [0], [0], [1], [0, 0, 1, 1], [], []>} : vector<192x9xbf16>, vector<9x32xbf16>, vector<192x32xf32> -> vector<192x32xf32>
      %c0_8 = arith.constant 0 : index
      %10 = arith.index_cast %2 : i32 to index
      %c1 = arith.constant 1 : index
      %c0_9 = arith.constant 0 : index
      %11 = vector.load %arg1[%c0_8, %10, %c1, %c0_9] : memref<1x96x98x9xbf16, #tpu.memory_space<vmem>>, vector<1x2x96x9xbf16>
      %12 = vector.shape_cast %11 : vector<1x2x96x9xbf16> to vector<2x96x9xbf16>
      %13 = vector.shape_cast %12 : vector<2x96x9xbf16> to vector<192x9xbf16>
      %c1_10 = arith.constant 1 : index
      %c0_11 = arith.constant 0 : index
      %c0_12 = arith.constant 0 : index
      %14 = vector.load %arg2[%c1_10, %c0_11, %c0_12] : memref<3x9x32xbf16, #tpu.memory_space<vmem>>, vector<1x9x32xbf16>
      %15 = vector.shape_cast %14 : vector<1x9x32xbf16> to vector<9x32xbf16>
      %cst_13 = arith.constant dense<0.000000e+00> : vector<192x32xf32>
      %16 = tpu.matmul %13, %15, %cst_13 {dimension_numbers = #tpu.dot_dimension_numbers<[1], [0], [0], [1], [0, 0, 1, 1], [], []>} : vector<192x9xbf16>, vector<9x32xbf16>, vector<192x32xf32> -> vector<192x32xf32>
      %17 = arith.addf %9, %16 : vector<192x32xf32>
      %c0_14 = arith.constant 0 : index
      %18 = arith.index_cast %2 : i32 to index
      %c2 = arith.constant 2 : index
      %c0_15 = arith.constant 0 : index
      %19 = vector.load %arg1[%c0_14, %18, %c2, %c0_15] : memref<1x96x98x9xbf16, #tpu.memory_space<vmem>>, vector<1x2x96x9xbf16>
      %20 = vector.shape_cast %19 : vector<1x2x96x9xbf16> to vector<2x96x9xbf16>
      %21 = vector.shape_cast %20 : vector<2x96x9xbf16> to vector<192x9xbf16>
      %c2_16 = arith.constant 2 : index
      %c0_17 = arith.constant 0 : index
      %c0_18 = arith.constant 0 : index
      %22 = vector.load %arg2[%c2_16, %c0_17, %c0_18] : memref<3x9x32xbf16, #tpu.memory_space<vmem>>, vector<1x9x32xbf16>
      %23 = vector.shape_cast %22 : vector<1x9x32xbf16> to vector<9x32xbf16>
      %cst_19 = arith.constant dense<0.000000e+00> : vector<192x32xf32>
      %24 = tpu.matmul %21, %23, %cst_19 {dimension_numbers = #tpu.dot_dimension_numbers<[1], [0], [0], [1], [0, 0, 1, 1], [], []>} : vector<192x9xbf16>, vector<9x32xbf16>, vector<192x32xf32> -> vector<192x32xf32>
      %25 = arith.addf %17, %24 : vector<192x32xf32>
      %26 = vector.broadcast %0 : vector<1x32xf32> to vector<192x32xf32>
      %27 = arith.addf %25, %26 : vector<192x32xf32>
      %cst_20 = arith.constant 0.000000e+00 : f32
      %28 = vector.broadcast %cst_20 : f32 to vector<192x32xf32>
      %29 = arith.maximumf %27, %28 : vector<192x32xf32>
      %30 = arith.truncf %29 : vector<192x32xf32> to vector<192x32xbf16>
      %31 = vector.shape_cast %30 : vector<192x32xbf16> to vector<2x96x32xbf16>
      %c0_21 = arith.constant 0 : index
      %32 = arith.index_cast %2 : i32 to index
      %c0_22 = arith.constant 0 : index
      %c0_23 = arith.constant 0 : index
      %33 = vector.load %arg4[%c0_21, %32, %c0_22, %c0_23] : memref<1x96x96x32xbf16, #tpu.memory_space<vmem>>, vector<1x2x96x32xbf16>
      %34 = vector.shape_cast %33 : vector<1x2x96x32xbf16> to vector<2x96x32xbf16>
      %35 = vector.shape_cast %31 : vector<2x96x32xbf16> to vector<1x2x96x32xbf16>
      tpu.vector_store %arg4[%c0_21, %32, %c0_22, %c0_23], %35 {strides = array<i32>} : memref<1x96x96x32xbf16, #tpu.memory_space<vmem>>, vector<1x2x96x32xbf16>,
    }
    %c48_i32_1 = arith.constant 48 : i32
    return
  }
  func.func @transform_0(%arg0: i32) -> (i32, i32, i32, i32) {
    %c0_i32 = arith.constant 0 : i32
    %c0_i32_0 = arith.constant 0 : i32
    %c0_i32_1 = arith.constant 0 : i32
    %c0_i32_2 = arith.constant 0 : i32
    return %arg0, %c0_i32, %c0_i32_0, %c0_i32_1 : i32, i32, i32, i32
  }
  func.func @transform_1(%arg0: i32) -> (i32, i32, i32) {
    %c0_i32 = arith.constant 0 : i32
    %c0_i32_0 = arith.constant 0 : i32
    %c0_i32_1 = arith.constant 0 : i32
    %c0_i32_2 = arith.constant 0 : i32
    return %c0_i32, %c0_i32_0, %c0_i32_1 : i32, i32, i32
  }
  func.func @transform_2(%arg0: i32) -> (i32, i32) {
    %c0_i32 = arith.constant 0 : i32
    %c0_i32_0 = arith.constant 0 : i32
    %c0_i32_1 = arith.constant 0 : i32
    return %c0_i32, %c0_i32_0 : i32, i32
  }
  func.func @transform_3(%arg0: i32) -> (i32, i32, i32, i32) {
    %c0_i32 = arith.constant 0 : i32
    %c0_i32_0 = arith.constant 0 : i32
    %c0_i32_1 = arith.constant 0 : i32
    %c0_i32_2 = arith.constant 0 : i32
    return %arg0, %c0_i32, %c0_i32_0, %c0_i32_1 : i32, i32, i32, i32
  }
}

module attributes {stable_mosaic.version = 11 : i64} {
  func.func @_conv3x3_relu_kernel(%arg0: i32, %arg1: memref<1x48x50x96xbf16, #tpu.memory_space<vmem>>, %arg2: memref<3x96x64xbf16, #tpu.memory_space<vmem>>, %arg3: memref<1x64xf32, #tpu.memory_space<vmem>>, %arg4: memref<1x48x48x64xbf16, #tpu.memory_space<vmem>>) attributes {dimension_semantics = [#tpu.dimension_semantics<parallel>], iteration_bounds = array<i64: 6>, scalar_prefetch = 0 : i64, scratch_operands = 0 : i64, tpu.core_type = #tpu.core_type<tc>, window_params = [{transform_indices = @transform_0, window_bounds = array<i64: 1, 48, 50, 96>}, {pipeline_mode = #tpu.pipeline_mode<synchronous>, transform_indices = @transform_1, window_bounds = array<i64: 3, 96, 64>}, {pipeline_mode = #tpu.pipeline_mode<synchronous>, transform_indices = @transform_2, window_bounds = array<i64: 1, 64>}, {transform_indices = @transform_3, window_bounds = array<i64: 1, 48, 48, 64>}]} {
    %c0 = arith.constant 0 : index
    %c0_0 = arith.constant 0 : index
    %0 = vector.load %arg3[%c0, %c0_0] : memref<1x64xf32, #tpu.memory_space<vmem>>, vector<1x64xf32>
    %c0_i32 = arith.constant 0 : i32
    %c12_i32 = arith.constant 12 : i32
    %1 = arith.addi %c0_i32, %c12_i32 : i32
    %c1_i32 = arith.constant 1 : i32
    scf.for %arg5 = %c0_i32 to %1 step %c1_i32  : i32 {
      %c4_i32 = arith.constant 4 : i32
      %2 = arith.muli %arg5, %c4_i32 : i32
      %c0_2 = arith.constant 0 : index
      %3 = arith.index_cast %2 : i32 to index
      %c0_3 = arith.constant 0 : index
      %c0_4 = arith.constant 0 : index
      %4 = vector.load %arg1[%c0_2, %3, %c0_3, %c0_4] : memref<1x48x50x96xbf16, #tpu.memory_space<vmem>>, vector<1x4x48x96xbf16>
      %5 = vector.shape_cast %4 : vector<1x4x48x96xbf16> to vector<4x48x96xbf16>
      %6 = vector.shape_cast %5 : vector<4x48x96xbf16> to vector<192x96xbf16>
      %c0_5 = arith.constant 0 : index
      %c0_6 = arith.constant 0 : index
      %c0_7 = arith.constant 0 : index
      %7 = vector.load %arg2[%c0_5, %c0_6, %c0_7] : memref<3x96x64xbf16, #tpu.memory_space<vmem>>, vector<1x96x64xbf16>
      %8 = vector.shape_cast %7 : vector<1x96x64xbf16> to vector<96x64xbf16>
      %cst = arith.constant dense<0.000000e+00> : vector<192x64xf32>
      %9 = tpu.matmul %6, %8, %cst {dimension_numbers = #tpu.dot_dimension_numbers<[1], [0], [0], [1], [0, 0, 1, 1], [], []>} : vector<192x96xbf16>, vector<96x64xbf16>, vector<192x64xf32> -> vector<192x64xf32>
      %c0_8 = arith.constant 0 : index
      %10 = arith.index_cast %2 : i32 to index
      %c1 = arith.constant 1 : index
      %c0_9 = arith.constant 0 : index
      %11 = vector.load %arg1[%c0_8, %10, %c1, %c0_9] : memref<1x48x50x96xbf16, #tpu.memory_space<vmem>>, vector<1x4x48x96xbf16>
      %12 = vector.shape_cast %11 : vector<1x4x48x96xbf16> to vector<4x48x96xbf16>
      %13 = vector.shape_cast %12 : vector<4x48x96xbf16> to vector<192x96xbf16>
      %c1_10 = arith.constant 1 : index
      %c0_11 = arith.constant 0 : index
      %c0_12 = arith.constant 0 : index
      %14 = vector.load %arg2[%c1_10, %c0_11, %c0_12] : memref<3x96x64xbf16, #tpu.memory_space<vmem>>, vector<1x96x64xbf16>
      %15 = vector.shape_cast %14 : vector<1x96x64xbf16> to vector<96x64xbf16>
      %cst_13 = arith.constant dense<0.000000e+00> : vector<192x64xf32>
      %16 = tpu.matmul %13, %15, %cst_13 {dimension_numbers = #tpu.dot_dimension_numbers<[1], [0], [0], [1], [0, 0, 1, 1], [], []>} : vector<192x96xbf16>, vector<96x64xbf16>, vector<192x64xf32> -> vector<192x64xf32>
      %17 = arith.addf %9, %16 : vector<192x64xf32>
      %c0_14 = arith.constant 0 : index
      %18 = arith.index_cast %2 : i32 to index
      %c2 = arith.constant 2 : index
      %c0_15 = arith.constant 0 : index
      %19 = vector.load %arg1[%c0_14, %18, %c2, %c0_15] : memref<1x48x50x96xbf16, #tpu.memory_space<vmem>>, vector<1x4x48x96xbf16>
      %20 = vector.shape_cast %19 : vector<1x4x48x96xbf16> to vector<4x48x96xbf16>
      %21 = vector.shape_cast %20 : vector<4x48x96xbf16> to vector<192x96xbf16>
      %c2_16 = arith.constant 2 : index
      %c0_17 = arith.constant 0 : index
      %c0_18 = arith.constant 0 : index
      %22 = vector.load %arg2[%c2_16, %c0_17, %c0_18] : memref<3x96x64xbf16, #tpu.memory_space<vmem>>, vector<1x96x64xbf16>
      %23 = vector.shape_cast %22 : vector<1x96x64xbf16> to vector<96x64xbf16>
      %cst_19 = arith.constant dense<0.000000e+00> : vector<192x64xf32>
      %24 = tpu.matmul %21, %23, %cst_19 {dimension_numbers = #tpu.dot_dimension_numbers<[1], [0], [0], [1], [0, 0, 1, 1], [], []>} : vector<192x96xbf16>, vector<96x64xbf16>, vector<192x64xf32> -> vector<192x64xf32>
      %25 = arith.addf %17, %24 : vector<192x64xf32>
      %26 = vector.broadcast %0 : vector<1x64xf32> to vector<192x64xf32>
      %27 = arith.addf %25, %26 : vector<192x64xf32>
      %cst_20 = arith.constant 0.000000e+00 : f32
      %28 = vector.broadcast %cst_20 : f32 to vector<192x64xf32>
      %29 = arith.maximumf %27, %28 : vector<192x64xf32>
      %30 = arith.truncf %29 : vector<192x64xf32> to vector<192x64xbf16>
      %31 = vector.shape_cast %30 : vector<192x64xbf16> to vector<4x48x64xbf16>
      %c0_21 = arith.constant 0 : index
      %32 = arith.index_cast %2 : i32 to index
      %c0_22 = arith.constant 0 : index
      %c0_23 = arith.constant 0 : index
      %33 = vector.load %arg4[%c0_21, %32, %c0_22, %c0_23] : memref<1x48x48x64xbf16, #tpu.memory_space<vmem>>, vector<1x4x48x64xbf16>
      %34 = vector.shape_cast %33 : vector<1x4x48x64xbf16> to vector<4x48x64xbf16>
      %35 = vector.shape_cast %31 : vector<4x48x64xbf16> to vector<1x4x48x64xbf16>
      tpu.vector_store %arg4[%c0_21, %32, %c0_22, %c0_23], %35 {strides = array<i32>} : memref<1x48x48x64xbf16, #tpu.memory_space<vmem>>, vector<1x4x48x64xbf16>,
    }
    %c12_i32_1 = arith.constant 12 : i32
    return
  }
  func.func @transform_0(%arg0: i32) -> (i32, i32, i32, i32) {
    %c0_i32 = arith.constant 0 : i32
    %c0_i32_0 = arith.constant 0 : i32
    %c0_i32_1 = arith.constant 0 : i32
    %c0_i32_2 = arith.constant 0 : i32
    return %arg0, %c0_i32, %c0_i32_0, %c0_i32_1 : i32, i32, i32, i32
  }
  func.func @transform_1(%arg0: i32) -> (i32, i32, i32) {
    %c0_i32 = arith.constant 0 : i32
    %c0_i32_0 = arith.constant 0 : i32
    %c0_i32_1 = arith.constant 0 : i32
    %c0_i32_2 = arith.constant 0 : i32
    return %c0_i32, %c0_i32_0, %c0_i32_1 : i32, i32, i32
  }
  func.func @transform_2(%arg0: i32) -> (i32, i32) {
    %c0_i32 = arith.constant 0 : i32
    %c0_i32_0 = arith.constant 0 : i32
    %c0_i32_1 = arith.constant 0 : i32
    return %c0_i32, %c0_i32_0 : i32, i32
  }
  func.func @transform_3(%arg0: i32) -> (i32, i32, i32, i32) {
    %c0_i32 = arith.constant 0 : i32
    %c0_i32_0 = arith.constant 0 : i32
    %c0_i32_1 = arith.constant 0 : i32
    %c0_i32_2 = arith.constant 0 : i32
    return %arg0, %c0_i32, %c0_i32_0, %c0_i32_1 : i32, i32, i32, i32
  }
}

module attributes {stable_mosaic.version = 11 : i64} {
  func.func @_conv3x3_relu_kernel(%arg0: i32, %arg1: memref<1x24x34x192xbf16, #tpu.memory_space<vmem>>, %arg2: memref<3x192x128xbf16, #tpu.memory_space<vmem>>, %arg3: memref<1x128xf32, #tpu.memory_space<vmem>>, %arg4: memref<1x24x24x128xbf16, #tpu.memory_space<vmem>>) attributes {dimension_semantics = [#tpu.dimension_semantics<parallel>], iteration_bounds = array<i64: 6>, scalar_prefetch = 0 : i64, scratch_operands = 0 : i64, tpu.core_type = #tpu.core_type<tc>, window_params = [{transform_indices = @transform_0, window_bounds = array<i64: 1, 24, 34, 192>}, {pipeline_mode = #tpu.pipeline_mode<synchronous>, transform_indices = @transform_1, window_bounds = array<i64: 3, 192, 128>}, {pipeline_mode = #tpu.pipeline_mode<synchronous>, transform_indices = @transform_2, window_bounds = array<i64: 1, 128>}, {transform_indices = @transform_3, window_bounds = array<i64: 1, 24, 24, 128>}]} {
    %c0 = arith.constant 0 : index
    %c0_0 = arith.constant 0 : index
    %0 = vector.load %arg3[%c0, %c0_0] : memref<1x128xf32, #tpu.memory_space<vmem>>, vector<1x128xf32>
    %c0_i32 = arith.constant 0 : i32
    %c6_i32 = arith.constant 6 : i32
    %1 = arith.addi %c0_i32, %c6_i32 : i32
    %c1_i32 = arith.constant 1 : i32
    scf.for %arg5 = %c0_i32 to %1 step %c1_i32  : i32 {
      %c4_i32 = arith.constant 4 : i32
      %2 = arith.muli %arg5, %c4_i32 : i32
      %c0_2 = arith.constant 0 : index
      %3 = arith.index_cast %2 : i32 to index
      %c0_3 = arith.constant 0 : index
      %c0_4 = arith.constant 0 : index
      %4 = vector.load %arg1[%c0_2, %3, %c0_3, %c0_4] : memref<1x24x34x192xbf16, #tpu.memory_space<vmem>>, vector<1x4x32x192xbf16>
      %5 = vector.shape_cast %4 : vector<1x4x32x192xbf16> to vector<4x32x192xbf16>
      %6 = vector.shape_cast %5 : vector<4x32x192xbf16> to vector<128x192xbf16>
      %c0_5 = arith.constant 0 : index
      %c0_6 = arith.constant 0 : index
      %c0_7 = arith.constant 0 : index
      %7 = vector.load %arg2[%c0_5, %c0_6, %c0_7] : memref<3x192x128xbf16, #tpu.memory_space<vmem>>, vector<1x192x128xbf16>
      %8 = vector.shape_cast %7 : vector<1x192x128xbf16> to vector<192x128xbf16>
      %cst = arith.constant dense<0.000000e+00> : vector<128x128xf32>
      %9 = tpu.matmul %6, %8, %cst {dimension_numbers = #tpu.dot_dimension_numbers<[1], [0], [0], [1], [0, 0, 1, 1], [], []>} : vector<128x192xbf16>, vector<192x128xbf16>, vector<128x128xf32> -> vector<128x128xf32>
      %c0_8 = arith.constant 0 : index
      %10 = arith.index_cast %2 : i32 to index
      %c1 = arith.constant 1 : index
      %c0_9 = arith.constant 0 : index
      %11 = vector.load %arg1[%c0_8, %10, %c1, %c0_9] : memref<1x24x34x192xbf16, #tpu.memory_space<vmem>>, vector<1x4x32x192xbf16>
      %12 = vector.shape_cast %11 : vector<1x4x32x192xbf16> to vector<4x32x192xbf16>
      %13 = vector.shape_cast %12 : vector<4x32x192xbf16> to vector<128x192xbf16>
      %c1_10 = arith.constant 1 : index
      %c0_11 = arith.constant 0 : index
      %c0_12 = arith.constant 0 : index
      %14 = vector.load %arg2[%c1_10, %c0_11, %c0_12] : memref<3x192x128xbf16, #tpu.memory_space<vmem>>, vector<1x192x128xbf16>
      %15 = vector.shape_cast %14 : vector<1x192x128xbf16> to vector<192x128xbf16>
      %cst_13 = arith.constant dense<0.000000e+00> : vector<128x128xf32>
      %16 = tpu.matmul %13, %15, %cst_13 {dimension_numbers = #tpu.dot_dimension_numbers<[1], [0], [0], [1], [0, 0, 1, 1], [], []>} : vector<128x192xbf16>, vector<192x128xbf16>, vector<128x128xf32> -> vector<128x128xf32>
      %17 = arith.addf %9, %16 : vector<128x128xf32>
      %c0_14 = arith.constant 0 : index
      %18 = arith.index_cast %2 : i32 to index
      %c2 = arith.constant 2 : index
      %c0_15 = arith.constant 0 : index
      %19 = vector.load %arg1[%c0_14, %18, %c2, %c0_15] : memref<1x24x34x192xbf16, #tpu.memory_space<vmem>>, vector<1x4x32x192xbf16>
      %20 = vector.shape_cast %19 : vector<1x4x32x192xbf16> to vector<4x32x192xbf16>
      %21 = vector.shape_cast %20 : vector<4x32x192xbf16> to vector<128x192xbf16>
      %c2_16 = arith.constant 2 : index
      %c0_17 = arith.constant 0 : index
      %c0_18 = arith.constant 0 : index
      %22 = vector.load %arg2[%c2_16, %c0_17, %c0_18] : memref<3x192x128xbf16, #tpu.memory_space<vmem>>, vector<1x192x128xbf16>
      %23 = vector.shape_cast %22 : vector<1x192x128xbf16> to vector<192x128xbf16>
      %cst_19 = arith.constant dense<0.000000e+00> : vector<128x128xf32>
      %24 = tpu.matmul %21, %23, %cst_19 {dimension_numbers = #tpu.dot_dimension_numbers<[1], [0], [0], [1], [0, 0, 1, 1], [], []>} : vector<128x192xbf16>, vector<192x128xbf16>, vector<128x128xf32> -> vector<128x128xf32>
      %25 = arith.addf %17, %24 : vector<128x128xf32>
      %26 = vector.broadcast %0 : vector<1x128xf32> to vector<128x128xf32>
      %27 = arith.addf %25, %26 : vector<128x128xf32>
      %cst_20 = arith.constant 0.000000e+00 : f32
      %28 = vector.broadcast %cst_20 : f32 to vector<128x128xf32>
      %29 = arith.maximumf %27, %28 : vector<128x128xf32>
      %30 = arith.truncf %29 : vector<128x128xf32> to vector<128x128xbf16>
      %31 = vector.shape_cast %30 : vector<128x128xbf16> to vector<4x32x128xbf16>
      %32 = vector.extract_strided_slice %31 {offsets = [0, 0, 0], sizes = [4, 24, 128], strides = [1, 1, 1]} : vector<4x32x128xbf16> to vector<4x24x128xbf16>
      %c0_21 = arith.constant 0 : index
      %33 = arith.index_cast %2 : i32 to index
      %c0_22 = arith.constant 0 : index
      %c0_23 = arith.constant 0 : index
      %34 = vector.load %arg4[%c0_21, %33, %c0_22, %c0_23] : memref<1x24x24x128xbf16, #tpu.memory_space<vmem>>, vector<1x4x24x128xbf16>
      %35 = vector.shape_cast %34 : vector<1x4x24x128xbf16> to vector<4x24x128xbf16>
      %36 = vector.shape_cast %32 : vector<4x24x128xbf16> to vector<1x4x24x128xbf16>
      tpu.vector_store %arg4[%c0_21, %33, %c0_22, %c0_23], %36 {strides = array<i32>} : memref<1x24x24x128xbf16, #tpu.memory_space<vmem>>, vector<1x4x24x128xbf16>,
    }
    %c6_i32_1 = arith.constant 6 : i32
    return
  }
  func.func @transform_0(%arg0: i32) -> (i32, i32, i32, i32) {
    %c0_i32 = arith.constant 0 : i32
    %c0_i32_0 = arith.constant 0 : i32
    %c0_i32_1 = arith.constant 0 : i32
    %c0_i32_2 = arith.constant 0 : i32
    return %arg0, %c0_i32, %c0_i32_0, %c0_i32_1 : i32, i32, i32, i32
  }
  func.func @transform_1(%arg0: i32) -> (i32, i32, i32) {
    %c0_i32 = arith.constant 0 : i32
    %c0_i32_0 = arith.constant 0 : i32
    %c0_i32_1 = arith.constant 0 : i32
    %c0_i32_2 = arith.constant 0 : i32
    return %c0_i32, %c0_i32_0, %c0_i32_1 : i32, i32, i32
  }
  func.func @transform_2(%arg0: i32) -> (i32, i32) {
    %c0_i32 = arith.constant 0 : i32
    %c0_i32_0 = arith.constant 0 : i32
    %c0_i32_1 = arith.constant 0 : i32
    return %c0_i32, %c0_i32_0 : i32, i32
  }
  func.func @transform_3(%arg0: i32) -> (i32, i32, i32, i32) {
    %c0_i32 = arith.constant 0 : i32
    %c0_i32_0 = arith.constant 0 : i32
    %c0_i32_1 = arith.constant 0 : i32
    %c0_i32_2 = arith.constant 0 : i32
    return %arg0, %c0_i32, %c0_i32_0, %c0_i32_1 : i32, i32, i32, i32
  }
}

module attributes {stable_mosaic.version = 11 : i64} {
  func.func @_conv3x3_relu_kernel(%arg0: i32, %arg1: memref<1x12x18x384xbf16, #tpu.memory_space<vmem>>, %arg2: memref<3x384x256xbf16, #tpu.memory_space<vmem>>, %arg3: memref<1x256xf32, #tpu.memory_space<vmem>>, %arg4: memref<1x12x12x256xbf16, #tpu.memory_space<vmem>>) attributes {dimension_semantics = [#tpu.dimension_semantics<parallel>], iteration_bounds = array<i64: 6>, scalar_prefetch = 0 : i64, scratch_operands = 0 : i64, tpu.core_type = #tpu.core_type<tc>, window_params = [{transform_indices = @transform_0, window_bounds = array<i64: 1, 12, 18, 384>}, {pipeline_mode = #tpu.pipeline_mode<synchronous>, transform_indices = @transform_1, window_bounds = array<i64: 3, 384, 256>}, {pipeline_mode = #tpu.pipeline_mode<synchronous>, transform_indices = @transform_2, window_bounds = array<i64: 1, 256>}, {transform_indices = @transform_3, window_bounds = array<i64: 1, 12, 12, 256>}]} {
    %c0 = arith.constant 0 : index
    %c0_0 = arith.constant 0 : index
    %0 = vector.load %arg3[%c0, %c0_0] : memref<1x256xf32, #tpu.memory_space<vmem>>, vector<1x256xf32>
    %c0_i32 = arith.constant 0 : i32
    %c3_i32 = arith.constant 3 : i32
    %1 = arith.addi %c0_i32, %c3_i32 : i32
    %c1_i32 = arith.constant 1 : i32
    scf.for %arg5 = %c0_i32 to %1 step %c1_i32  : i32 {
      %c4_i32 = arith.constant 4 : i32
      %2 = arith.muli %arg5, %c4_i32 : i32
      %c0_2 = arith.constant 0 : index
      %3 = arith.index_cast %2 : i32 to index
      %c0_3 = arith.constant 0 : index
      %c0_4 = arith.constant 0 : index
      %4 = vector.load %arg1[%c0_2, %3, %c0_3, %c0_4] : memref<1x12x18x384xbf16, #tpu.memory_space<vmem>>, vector<1x4x16x384xbf16>
      %5 = vector.shape_cast %4 : vector<1x4x16x384xbf16> to vector<4x16x384xbf16>
      %6 = vector.shape_cast %5 : vector<4x16x384xbf16> to vector<64x384xbf16>
      %c0_5 = arith.constant 0 : index
      %c0_6 = arith.constant 0 : index
      %c0_7 = arith.constant 0 : index
      %7 = vector.load %arg2[%c0_5, %c0_6, %c0_7] : memref<3x384x256xbf16, #tpu.memory_space<vmem>>, vector<1x384x256xbf16>
      %8 = vector.shape_cast %7 : vector<1x384x256xbf16> to vector<384x256xbf16>
      %cst = arith.constant dense<0.000000e+00> : vector<64x256xf32>
      %9 = tpu.matmul %6, %8, %cst {dimension_numbers = #tpu.dot_dimension_numbers<[1], [0], [0], [1], [0, 0, 1, 1], [], []>} : vector<64x384xbf16>, vector<384x256xbf16>, vector<64x256xf32> -> vector<64x256xf32>
      %c0_8 = arith.constant 0 : index
      %10 = arith.index_cast %2 : i32 to index
      %c1 = arith.constant 1 : index
      %c0_9 = arith.constant 0 : index
      %11 = vector.load %arg1[%c0_8, %10, %c1, %c0_9] : memref<1x12x18x384xbf16, #tpu.memory_space<vmem>>, vector<1x4x16x384xbf16>
      %12 = vector.shape_cast %11 : vector<1x4x16x384xbf16> to vector<4x16x384xbf16>
      %13 = vector.shape_cast %12 : vector<4x16x384xbf16> to vector<64x384xbf16>
      %c1_10 = arith.constant 1 : index
      %c0_11 = arith.constant 0 : index
      %c0_12 = arith.constant 0 : index
      %14 = vector.load %arg2[%c1_10, %c0_11, %c0_12] : memref<3x384x256xbf16, #tpu.memory_space<vmem>>, vector<1x384x256xbf16>
      %15 = vector.shape_cast %14 : vector<1x384x256xbf16> to vector<384x256xbf16>
      %cst_13 = arith.constant dense<0.000000e+00> : vector<64x256xf32>
      %16 = tpu.matmul %13, %15, %cst_13 {dimension_numbers = #tpu.dot_dimension_numbers<[1], [0], [0], [1], [0, 0, 1, 1], [], []>} : vector<64x384xbf16>, vector<384x256xbf16>, vector<64x256xf32> -> vector<64x256xf32>
      %17 = arith.addf %9, %16 : vector<64x256xf32>
      %c0_14 = arith.constant 0 : index
      %18 = arith.index_cast %2 : i32 to index
      %c2 = arith.constant 2 : index
      %c0_15 = arith.constant 0 : index
      %19 = vector.load %arg1[%c0_14, %18, %c2, %c0_15] : memref<1x12x18x384xbf16, #tpu.memory_space<vmem>>, vector<1x4x16x384xbf16>
      %20 = vector.shape_cast %19 : vector<1x4x16x384xbf16> to vector<4x16x384xbf16>
      %21 = vector.shape_cast %20 : vector<4x16x384xbf16> to vector<64x384xbf16>
      %c2_16 = arith.constant 2 : index
      %c0_17 = arith.constant 0 : index
      %c0_18 = arith.constant 0 : index
      %22 = vector.load %arg2[%c2_16, %c0_17, %c0_18] : memref<3x384x256xbf16, #tpu.memory_space<vmem>>, vector<1x384x256xbf16>
      %23 = vector.shape_cast %22 : vector<1x384x256xbf16> to vector<384x256xbf16>
      %cst_19 = arith.constant dense<0.000000e+00> : vector<64x256xf32>
      %24 = tpu.matmul %21, %23, %cst_19 {dimension_numbers = #tpu.dot_dimension_numbers<[1], [0], [0], [1], [0, 0, 1, 1], [], []>} : vector<64x384xbf16>, vector<384x256xbf16>, vector<64x256xf32> -> vector<64x256xf32>
      %25 = arith.addf %17, %24 : vector<64x256xf32>
      %26 = vector.broadcast %0 : vector<1x256xf32> to vector<64x256xf32>
      %27 = arith.addf %25, %26 : vector<64x256xf32>
      %cst_20 = arith.constant 0.000000e+00 : f32
      %28 = vector.broadcast %cst_20 : f32 to vector<64x256xf32>
      %29 = arith.maximumf %27, %28 : vector<64x256xf32>
      %30 = arith.truncf %29 : vector<64x256xf32> to vector<64x256xbf16>
      %31 = vector.shape_cast %30 : vector<64x256xbf16> to vector<4x16x256xbf16>
      %32 = vector.extract_strided_slice %31 {offsets = [0, 0, 0], sizes = [4, 12, 256], strides = [1, 1, 1]} : vector<4x16x256xbf16> to vector<4x12x256xbf16>
      %c0_21 = arith.constant 0 : index
      %33 = arith.index_cast %2 : i32 to index
      %c0_22 = arith.constant 0 : index
      %c0_23 = arith.constant 0 : index
      %34 = vector.load %arg4[%c0_21, %33, %c0_22, %c0_23] : memref<1x12x12x256xbf16, #tpu.memory_space<vmem>>, vector<1x4x12x256xbf16>
      %35 = vector.shape_cast %34 : vector<1x4x12x256xbf16> to vector<4x12x256xbf16>
      %36 = vector.shape_cast %32 : vector<4x12x256xbf16> to vector<1x4x12x256xbf16>
      tpu.vector_store %arg4[%c0_21, %33, %c0_22, %c0_23], %36 {strides = array<i32>} : memref<1x12x12x256xbf16, #tpu.memory_space<vmem>>, vector<1x4x12x256xbf16>,
    }
    %c3_i32_1 = arith.constant 3 : i32
    return
  }
  func.func @transform_0(%arg0: i32) -> (i32, i32, i32, i32) {
    %c0_i32 = arith.constant 0 : i32
    %c0_i32_0 = arith.constant 0 : i32
    %c0_i32_1 = arith.constant 0 : i32
    %c0_i32_2 = arith.constant 0 : i32
    return %arg0, %c0_i32, %c0_i32_0, %c0_i32_1 : i32, i32, i32, i32
  }
  func.func @transform_1(%arg0: i32) -> (i32, i32, i32) {
    %c0_i32 = arith.constant 0 : i32
    %c0_i32_0 = arith.constant 0 : i32
    %c0_i32_1 = arith.constant 0 : i32
    %c0_i32_2 = arith.constant 0 : i32
    return %c0_i32, %c0_i32_0, %c0_i32_1 : i32, i32, i32
  }
  func.func @transform_2(%arg0: i32) -> (i32, i32) {
    %c0_i32 = arith.constant 0 : i32
    %c0_i32_0 = arith.constant 0 : i32
    %c0_i32_1 = arith.constant 0 : i32
    return %c0_i32, %c0_i32_0 : i32, i32
  }
  func.func @transform_3(%arg0: i32) -> (i32, i32, i32, i32) {
    %c0_i32 = arith.constant 0 : i32
    %c0_i32_0 = arith.constant 0 : i32
    %c0_i32_1 = arith.constant 0 : i32
    %c0_i32_2 = arith.constant 0 : i32
    return %arg0, %c0_i32, %c0_i32_0, %c0_i32_1 : i32, i32, i32, i32
  }
}

module attributes {stable_mosaic.version = 11 : i64} {
  func.func @_mil_head_kernel(%arg0: i32, %arg1: memref<8x1152xbf16, #tpu.memory_space<vmem>>, %arg2: memref<1152x512xbf16, #tpu.memory_space<vmem>>, %arg3: memref<1x512xf32, #tpu.memory_space<vmem>>, %arg4: memref<512x256xbf16, #tpu.memory_space<vmem>>, %arg5: memref<1x256xf32, #tpu.memory_space<vmem>>, %arg6: memref<256x32xbf16, #tpu.memory_space<vmem>>, %arg7: memref<1x32xf32, #tpu.memory_space<vmem>>, %arg8: memref<1x32xbf16, #tpu.memory_space<vmem>>, %arg9: memref<1x1xf32, #tpu.memory_space<vmem>>, %arg10: memref<8x1xf32, #tpu.memory_space<vmem>>, %arg11: memref<8x512xf32, #tpu.memory_space<vmem>>) attributes {dimension_semantics = [#tpu.dimension_semantics<arbitrary>], iteration_bounds = array<i64: 8>, scalar_prefetch = 0 : i64, scratch_operands = 1 : i64, tpu.core_type = #tpu.core_type<tc>, window_params = [{transform_indices = @transform_0, window_bounds = array<i64: 8, 1152>}, {transform_indices = @transform_1, window_bounds = array<i64: 1152, 512>}, {pipeline_mode = #tpu.pipeline_mode<synchronous>, transform_indices = @transform_2, window_bounds = array<i64: 1, 512>}, {pipeline_mode = #tpu.pipeline_mode<synchronous>, transform_indices = @transform_3, window_bounds = array<i64: 512, 256>}, {pipeline_mode = #tpu.pipeline_mode<synchronous>, transform_indices = @transform_4, window_bounds = array<i64: 1, 256>}, {pipeline_mode = #tpu.pipeline_mode<synchronous>, transform_indices = @transform_5, window_bounds = array<i64: 256, 32>}, {pipeline_mode = #tpu.pipeline_mode<synchronous>, transform_indices = @transform_6, window_bounds = array<i64: 1, 32>}, {pipeline_mode = #tpu.pipeline_mode<synchronous>, transform_indices = @transform_7, window_bounds = array<i64: 1, 32>}, {pipeline_mode = #tpu.pipeline_mode<synchronous>, transform_indices = @transform_8, window_bounds = array<i64: 1, 1>}, {pipeline_mode = #tpu.pipeline_mode<synchronous>, transform_indices = @transform_9, window_bounds = array<i64: 8, 1>}]} {
    %c0_i32 = arith.constant 0 : i32
    %0 = arith.cmpi eq, %arg0, %c0_i32 : i32
    %1 = arith.extui %0 : i1 to i32
    %c0_i32_0 = arith.constant 0 : i32
    %2 = arith.cmpi ne, %1, %c0_i32_0 : i32
    scf.if %2 {
      %cst_9 = arith.constant 0.000000e+00 : f32
      %12 = vector.broadcast %cst_9 : f32 to vector<8x512xf32>
      %c0_10 = arith.constant 0 : index
      %c0_11 = arith.constant 0 : index
      %13 = vector.load %arg11[%c0_10, %c0_11] : memref<8x512xf32, #tpu.memory_space<vmem>>, vector<8x512xf32>
      tpu.vector_store %arg11[%c0_10, %c0_11], %12 {strides = array<i32>} : memref<8x512xf32, #tpu.memory_space<vmem>>, vector<8x512xf32>,
    } else {
    }
    %c0 = arith.constant 0 : index
    %c0_1 = arith.constant 0 : index
    %3 = vector.load %arg11[%c0, %c0_1] : memref<8x512xf32, #tpu.memory_space<vmem>>, vector<8x512xf32>
    %c0_2 = arith.constant 0 : index
    %c0_3 = arith.constant 0 : index
    %4 = vector.load %arg1[%c0_2, %c0_3] : memref<8x1152xbf16, #tpu.memory_space<vmem>>, vector<8x1152xbf16>
    %c0_4 = arith.constant 0 : index
    %c0_5 = arith.constant 0 : index
    %5 = vector.load %arg2[%c0_4, %c0_5] : memref<1152x512xbf16, #tpu.memory_space<vmem>>, vector<1152x512xbf16>
    %cst = arith.constant dense<0.000000e+00> : vector<8x512xf32>
    %6 = tpu.matmul %4, %5, %cst {dimension_numbers = #tpu.dot_dimension_numbers<[1], [0], [0], [1], [0, 0, 1, 1], [], []>} : vector<8x1152xbf16>, vector<1152x512xbf16>, vector<8x512xf32> -> vector<8x512xf32>
    %7 = arith.addf %3, %6 : vector<8x512xf32>
    %c0_6 = arith.constant 0 : index
    %c0_7 = arith.constant 0 : index
    %8 = vector.load %arg11[%c0_6, %c0_7] : memref<8x512xf32, #tpu.memory_space<vmem>>, vector<8x512xf32>
    tpu.vector_store %arg11[%c0_6, %c0_7], %7 {strides = array<i32>} : memref<8x512xf32, #tpu.memory_space<vmem>>, vector<8x512xf32>,
    %c7_i32 = arith.constant 7 : i32
    %9 = arith.cmpi eq, %arg0, %c7_i32 : i32
    %10 = arith.extui %9 : i1 to i32
    %c0_i32_8 = arith.constant 0 : i32
    %11 = arith.cmpi ne, %10, %c0_i32_8 : i32
    scf.if %11 {
      %c0_9 = arith.constant 0 : index
      %c0_10 = arith.constant 0 : index
      %12 = vector.load %arg11[%c0_9, %c0_10] : memref<8x512xf32, #tpu.memory_space<vmem>>, vector<8x512xf32>
      %c0_11 = arith.constant 0 : index
      %c0_12 = arith.constant 0 : index
      %13 = vector.load %arg3[%c0_11, %c0_12] : memref<1x512xf32, #tpu.memory_space<vmem>>, vector<1x512xf32>
      %14 = vector.broadcast %13 : vector<1x512xf32> to vector<8x512xf32>
      %15 = arith.addf %12, %14 : vector<8x512xf32>
      %cst_13 = arith.constant 0.000000e+00 : f32
      %16 = vector.broadcast %cst_13 : f32 to vector<8x512xf32>
      %17 = arith.maximumf %15, %16 : vector<8x512xf32>
      %18 = arith.truncf %17 : vector<8x512xf32> to vector<8x512xbf16>
      %c0_14 = arith.constant 0 : index
      %c0_15 = arith.constant 0 : index
      %19 = vector.load %arg4[%c0_14, %c0_15] : memref<512x256xbf16, #tpu.memory_space<vmem>>, vector<512x256xbf16>
      %cst_16 = arith.constant dense<0.000000e+00> : vector<8x256xf32>
      %20 = tpu.matmul %18, %19, %cst_16 {dimension_numbers = #tpu.dot_dimension_numbers<[1], [0], [0], [1], [0, 0, 1, 1], [], []>} : vector<8x512xbf16>, vector<512x256xbf16>, vector<8x256xf32> -> vector<8x256xf32>
      %c0_17 = arith.constant 0 : index
      %c0_18 = arith.constant 0 : index
      %21 = vector.load %arg5[%c0_17, %c0_18] : memref<1x256xf32, #tpu.memory_space<vmem>>, vector<1x256xf32>
      %22 = vector.broadcast %21 : vector<1x256xf32> to vector<8x256xf32>
      %23 = arith.addf %20, %22 : vector<8x256xf32>
      %24 = arith.truncf %23 : vector<8x256xf32> to vector<8x256xbf16>
      %c0_19 = arith.constant 0 : index
      %c0_20 = arith.constant 0 : index
      %25 = vector.load %arg6[%c0_19, %c0_20] : memref<256x32xbf16, #tpu.memory_space<vmem>>, vector<256x32xbf16>
      %cst_21 = arith.constant dense<0.000000e+00> : vector<8x32xf32>
      %26 = tpu.matmul %24, %25, %cst_21 {dimension_numbers = #tpu.dot_dimension_numbers<[1], [0], [0], [1], [0, 0, 1, 1], [], []>} : vector<8x256xbf16>, vector<256x32xbf16>, vector<8x32xf32> -> vector<8x32xf32>
      %c0_22 = arith.constant 0 : index
      %c0_23 = arith.constant 0 : index
      %27 = vector.load %arg7[%c0_22, %c0_23] : memref<1x32xf32, #tpu.memory_space<vmem>>, vector<1x32xf32>
      %28 = vector.broadcast %27 : vector<1x32xf32> to vector<8x32xf32>
      %29 = arith.addf %26, %28 : vector<8x32xf32>
      %cst_24 = arith.constant 0.000000e+00 : f32
      %30 = vector.broadcast %cst_24 : f32 to vector<8x32xf32>
      %31 = arith.maximumf %29, %30 : vector<8x32xf32>
      %c0_25 = arith.constant 0 : index
      %c0_26 = arith.constant 0 : index
      %32 = vector.load %arg8[%c0_25, %c0_26] : memref<1x32xbf16, #tpu.memory_space<vmem>>, vector<1x32xbf16>
      %33 = arith.extf %32 : vector<1x32xbf16> to vector<1x32xf32>
      %34 = vector.broadcast %33 : vector<1x32xf32> to vector<8x32xf32>
      %35 = arith.mulf %31, %34 : vector<8x32xf32>
      %cst_27 = arith.constant dense<0.000000e+00> : vector<8xf32>
      %36 = vector.multi_reduction <add>, %35, %cst_27 [1] : vector<8x32xf32> to vector<8xf32>
      %37 = vector.shape_cast %36 : vector<8xf32> to vector<8x1xf32>
      %c0_28 = arith.constant 0 : index
      %c0_29 = arith.constant 0 : index
      %38 = vector.load %arg9[%c0_28, %c0_29] : memref<1x1xf32, #tpu.memory_space<vmem>>, vector<1x1xf32>
      %39 = vector.broadcast %38 : vector<1x1xf32> to vector<8x1xf32>
      %40 = arith.addf %37, %39 : vector<8x1xf32>
      %41 = arith.negf %40 : vector<8x1xf32>
      %42 = math.exp %41 : vector<8x1xf32>
      %cst_30 = arith.constant 1.000000e+00 : f32
      %43 = vector.broadcast %cst_30 : f32 to vector<8x1xf32>
      %44 = arith.addf %43, %42 : vector<8x1xf32>
      %45 = arith.divf %43, %44 : vector<8x1xf32>
      %c0_31 = arith.constant 0 : index
      %c0_32 = arith.constant 0 : index
      %46 = vector.load %arg10[%c0_31, %c0_32] : memref<8x1xf32, #tpu.memory_space<vmem>>, vector<8x1xf32>
      tpu.vector_store %arg10[%c0_31, %c0_32], %45 {strides = array<i32>} : memref<8x1xf32, #tpu.memory_space<vmem>>, vector<8x1xf32>,
    } else {
    }
    return
  }
  func.func @transform_0(%arg0: i32) -> (i32, i32) {
    %c0_i32 = arith.constant 0 : i32
    %c0_i32_0 = arith.constant 0 : i32
    return %c0_i32, %arg0 : i32, i32
  }
  func.func @transform_1(%arg0: i32) -> (i32, i32) {
    %c0_i32 = arith.constant 0 : i32
    %c0_i32_0 = arith.constant 0 : i32
    return %arg0, %c0_i32 : i32, i32
  }
  func.func @transform_2(%arg0: i32) -> (i32, i32) {
    %c0_i32 = arith.constant 0 : i32
    %c0_i32_0 = arith.constant 0 : i32
    %c0_i32_1 = arith.constant 0 : i32
    return %c0_i32, %c0_i32_0 : i32, i32
  }
  func.func @transform_3(%arg0: i32) -> (i32, i32) {
    %c0_i32 = arith.constant 0 : i32
    %c0_i32_0 = arith.constant 0 : i32
    %c0_i32_1 = arith.constant 0 : i32
    return %c0_i32, %c0_i32_0 : i32, i32
  }
  func.func @transform_4(%arg0: i32) -> (i32, i32) {
    %c0_i32 = arith.constant 0 : i32
    %c0_i32_0 = arith.constant 0 : i32
    %c0_i32_1 = arith.constant 0 : i32
    return %c0_i32, %c0_i32_0 : i32, i32
  }
  func.func @transform_5(%arg0: i32) -> (i32, i32) {
    %c0_i32 = arith.constant 0 : i32
    %c0_i32_0 = arith.constant 0 : i32
    %c0_i32_1 = arith.constant 0 : i32
    return %c0_i32, %c0_i32_0 : i32, i32
  }
  func.func @transform_6(%arg0: i32) -> (i32, i32) {
    %c0_i32 = arith.constant 0 : i32
    %c0_i32_0 = arith.constant 0 : i32
    %c0_i32_1 = arith.constant 0 : i32
    return %c0_i32, %c0_i32_0 : i32, i32
  }
  func.func @transform_7(%arg0: i32) -> (i32, i32) {
    %c0_i32 = arith.constant 0 : i32
    %c0_i32_0 = arith.constant 0 : i32
    %c0_i32_1 = arith.constant 0 : i32
    return %c0_i32, %c0_i32_0 : i32, i32
  }
  func.func @transform_8(%arg0: i32) -> (i32, i32) {
    %c0_i32 = arith.constant 0 : i32
    %c0_i32_0 = arith.constant 0 : i32
    %c0_i32_1 = arith.constant 0 : i32
    return %c0_i32, %c0_i32_0 : i32, i32
  }
  func.func @transform_9(%arg0: i32) -> (i32, i32) {
    %c0_i32 = arith.constant 0 : i32
    %c0_i32_0 = arith.constant 0 : i32
    %c0_i32_1 = arith.constant 0 : i32
    return %c0_i32, %c0_i32_0 : i32, i32
  }
}

module attributes {stable_mosaic.version = 11 : i64} {
  func.func @_masked_max_kernel(%arg0: memref<2x3xf32, #tpu.memory_space<vmem>>, %arg1: memref<2x3xf32, #tpu.memory_space<vmem>>, %arg2: memref<2x1xf32, #tpu.memory_space<vmem>>) attributes {dimension_semantics = [], scalar_prefetch = 0 : i64, scratch_operands = 0 : i64, tpu.core_type = #tpu.core_type<tc>} {
    %c0 = arith.constant 0 : index
    %c0_0 = arith.constant 0 : index
    %0 = vector.load %arg0[%c0, %c0_0] : memref<2x3xf32, #tpu.memory_space<vmem>>, vector<2x3xf32>
    %c0_1 = arith.constant 0 : index
    %c0_2 = arith.constant 0 : index
    %1 = vector.load %arg1[%c0_1, %c0_2] : memref<2x3xf32, #tpu.memory_space<vmem>>, vector<2x3xf32>
    %cst = arith.constant 0.000000e+00 : f32
    %2 = vector.broadcast %cst : f32 to vector<2x3xf32>
    %3 = arith.cmpf oeq, %1, %2 : vector<2x3xf32>
    %cst_3 = arith.constant 0xFF800000 : f32
    %4 = vector.broadcast %cst_3 : f32 to vector<2x3xf32>
    %5 = arith.select %3, %4, %0 : vector<2x3xi1>, vector<2x3xf32>
    %cst_4 = arith.constant dense<0xFF800000> : vector<2xf32>
    %6 = vector.multi_reduction <maximumf>, %5, %cst_4 [1] : vector<2x3xf32> to vector<2xf32>
    %7 = vector.shape_cast %6 : vector<2xf32> to vector<2x1xf32>
    %c0_5 = arith.constant 0 : index
    %c0_6 = arith.constant 0 : index
    %8 = vector.load %arg2[%c0_5, %c0_6] : memref<2x1xf32, #tpu.memory_space<vmem>>, vector<2x1xf32>
    tpu.vector_store %arg2[%c0_5, %c0_6], %7 {strides = array<i32>} : memref<2x1xf32, #tpu.memory_space<vmem>>, vector<2x1xf32>,
    return
  }
}

</mosaic_0001>

<llo_original>
// kernel: mil_forward.6
$region0: #{mil_forward.6}
  #allocation0 [shape = 'u32[]', space=smem, size = 0x4, offset = 0x4, fixed_abs, tag = 'smem constant byte address 0x4 - core index']
  #allocation1 [shape = 'u32[144,128]{1,0:T(1,128)}', space=vmem, size = 0x12000, scoped, tag = 'internal scratch']
  %s0 = inlined_call_operand.vmem [shape: bf16[6,96,98,9], index: 0, kind: input, shape index: {}]
  %s1 = inlined_call_operand.vmem [shape: bf16[3,9,32], index: 1, kind: input, shape index: {}]
  %s2 = inlined_call_operand.vmem [shape: f32[1,32], index: 2, kind: input, shape index: {}]
  %s3 = inlined_call_operand.vmem [shape: bf16[6,96,96,32], index: 3, kind: output, shape index: {}]
  %s4 = sld [smem:[#allocation0]]
  $region52: #{mil_forward.6} parent=0
    _
  %s6 = ssub.s32 1, %s4
  %s7 = scalar_select 0, %s6, %s4
  loop: start=0, step=1, limit=8
  $region2: #{mil_forward.6} parent=0 // loop_pre_header
    _
  $region3: #{mil_forward.6} parent=0 // loop_header
    %s9 = sphi 0, %s13
    %p10 = scmp.ge.s32.totalorder %s9, 8
    %s19 = sphi 0, %s21
    %s22 = sphi 0, %s19
    %s23 = sphi 0, %s22
    %s39 = sphi 0, %s23
    %s43 = sphi 0, %s43
    %s45 = sphi 0, %s43
    %s46 = sphi 0, %s45
    %s60 = sphi 0, %s46
    %s64 = sphi 0, %s64
    %s66 = sphi 0, %s64
    %s67 = sphi 0, %s66
    %s81 = sphi 0, %s67
    %s87 = sphi 0, %s89
    %s90 = sphi 0, %s87
    %s91 = sphi 0, %s90
    %s107 = sphi 0, %s91
  $region4: #{mil_forward.6} parent=0 // loop_header_branch
    %12 = sbr.rel (%p10) target = $region8
  $region5: #{mil_forward.6} parent=0 // loop_body
    %s14 = ssub.s32 %s9, 1
    %s15 = ssub.s32 %s9, 2
    %s16 = sadd.s32 %s9, 1
    %s17 = ssub.s32 %s9, %s16
    %p18 = scmp.eq.s32.totalorder %s17, 0
    %s20 = sadd.s32 %s19, 1
    %s21 = scalar_select %p18, %s19, %s20
    %p24 = pneg %p18
    %p25 = scmp.eq.s32.totalorder %s9, 5
    %p26 = por %p24, %p25
    %p27 = scmp.ne.s32.totalorder %s19, %s22
    %p28 = scmp.eq.s32.totalorder %s9, 0
    %p29 = por %p27, %p28
    %p30 = scmp.ne.s32.totalorder %s19, %s22
    %p31 = scmp.eq.s32.totalorder %s14, 5
    %p32 = por %p30, %p31
    %p33 = scmp.ne.s32.totalorder %s22, %s23
    %p34 = scmp.eq.s32.totalorder %s14, 0
    %p35 = por %p33, %p34
    %p36 = scmp.ne.s32.totalorder %s22, %s23
    %p37 = scmp.eq.s32.totalorder %s15, 5
    %p38 = por %p36, %p37
    %p40 = scmp.ne.s32.totalorder %s23, %s39
    %p41 = scmp.eq.s32.totalorder %s15, 0
    %p42 = por %p40, %p41
    %s44 = sadd.s32 %s43, 1
    %p47 = scmp.eq.s32.totalorder %s9, 5
    %p48 = scmp.ne.s32.totalorder %s43, %s45
    %p49 = scmp.eq.s32.totalorder %s9, 0
    %p50 = por %p48, %p49
    %p51 = scmp.ne.s32.totalorder %s43, %s45
    %p52 = scmp.eq.s32.totalorder %s14, 5
    %p53 = por %p51, %p52
    %p54 = scmp.ne.s32.totalorder %s45, %s46
    %p55 = scmp.eq.s32.totalorder %s14, 0
    %p56 = por %p54, %p55
    %p57 = scmp.ne.s32.totalorder %s45, %s46
    %p58 = scmp.eq.s32.totalorder %s15, 5
    %p59 = por %p57, %p58
    %p61 = scmp.ne.s32.totalorder %s46, %s60
    %p62 = scmp.eq.s32.totalorder %s15, 0
    %p63 = por %p61, %p62
    %s65 = sadd.s32 %s64, 1
    %p68 = scmp.eq.s32.totalorder %s9, 5
    %p69 = scmp.ne.s32.totalorder %s64, %s66
    %p70 = scmp.eq.s32.totalorder %s9, 0
    %p71 = por %p69, %p70
    %p72 = scmp.ne.s32.totalorder %s64, %s66
    %p73 = scmp.eq.s32.totalorder %s14, 5
    %p74 = por %p72, %p73
    %p75 = scmp.ne.s32.totalorder %s66, %s67
    %p76 = scmp.eq.s32.totalorder %s14, 0
    %p77 = por %p75, %p76
    %p78 = scmp.ne.s32.totalorder %s66, %s67
    %p79 = scmp.eq.s32.totalorder %s15, 5
    %p80 = por %p78, %p79
    %p82 = scmp.ne.s32.totalorder %s67, %s81
    %p83 = scmp.eq.s32.totalorder %s15, 0
    %p84 = por %p82, %p83
    %s85 = ssub.s32 %s9, %s16
    %p86 = scmp.eq.s32.totalorder %s85, 0
    %s88 = sadd.s32 %s87, 1
    %s89 = scalar_select %p86, %s87, %s88
    %p92 = pneg %p86
    %p93 = scmp.eq.s32.totalorder %s9, 5
    %p94 = por %p92, %p93
    %p95 = scmp.ne.s32.totalorder %s87, %s90
    %p96 = scmp.eq.s32.totalorder %s9, 0
    %p97 = por %p95, %p96
    %p98 = scmp.ne.s32.totalorder %s87, %s90
    %p99 = scmp.eq.s32.totalorder %s14, 5
    %p100 = por %p98, %p99
    %p101 = scmp.ne.s32.totalorder %s90, %s91
    %p102 = scmp.eq.s32.totalorder %s14, 0
    %p103 = por %p101, %p102
    %p104 = scmp.ne.s32.totalorder %s90, %s91
    %p105 = scmp.eq.s32.totalorder %s15, 5
    %p106 = por %p104, %p105
    %p108 = scmp.ne.s32.totalorder %s91, %s107
    %p109 = scmp.eq.s32.totalorder %s15, 0
    %p110 = por %p108, %p109
    %p111 = scmp.le.s32.totalorder 1, %s9
    %p112 = scmp.lt.s32.totalorder %s9, 7
    %p113 = pnand %p111, %p112
    %p114 = pneg %p113
    // Predicated region
    $region9: #{mil_forward.6} parent=5 // pred_check
      _
    $region10: #{mil_forward.6} parent=5 // pred_check_branch
      %116 = sbr.rel (%p113) target = $region12
    $region11: #{mil_forward.6} parent=5 // pred_region
      %s117 = ssub.s32 %s9, 1
      // Predicated region
      $region13: #{mil_forward.6} parent=11 // pred_check
        %p118 = pneg %p56
      $region14: #{mil_forward.6} parent=11 // pred_check_branch
        %120 = sbr.rel (%p118) target = $region16
      $region15: #{mil_forward.6} parent=11 // pred_region
        _
      $region16: #{mil_forward.6} parent=11 // pred_fallthru
        _
      // Predicated region
      $region17: #{mil_forward.6} parent=11 // pred_check
        %p121 = pneg %p77
      $region18: #{mil_forward.6} parent=11 // pred_check_branch
        %123 = sbr.rel (%p121) target = $region20
      $region19: #{mil_forward.6} parent=11 // pred_region
        _
      $region20: #{mil_forward.6} parent=11 // pred_fallthru
        _
    $region12: #{mil_forward.6} parent=5 // pred_fallthru
      _
    %p124 = scmp.lt.s32.totalorder %s9, 6
    // Predicated region
    $region21: #{mil_forward.6} parent=5 // pred_check
      %p125 = pneg %p124
    $region22: #{mil_forward.6} parent=5 // pred_check_branch
      %127 = sbr.rel (%p125) target = $region24
    $region23: #{mil_forward.6} parent=5 // pred_region
      // Predicated region
      $region25: #{mil_forward.6} parent=23 // pred_check
        %p128 = pneg %p29
      $region26: #{mil_forward.6} parent=23 // pred_check_branch
        %130 = sbr.rel (%p128) target = $region28
      $region27: #{mil_forward.6} parent=23 // pred_region
        %p131 = scmp.lt.s32.totalorder %s9, 5
        %s132 = scalar_select %p131, %s9, 5
        %s133 = smul.addr %s132, 1248
        %s134 = smul.addr %s133, 4
        %s135 = scalar_lea.vmem %s0, %s134
      $region28: #{mil_forward.6} parent=23 // pred_fallthru
        _
    $region24: #{mil_forward.6} parent=5 // pred_fallthru
      _
    %p136 = scmp.le.s32.totalorder 1, %s9
    %p137 = scmp.lt.s32.totalorder %s9, 7
    %p138 = pnand %p136, %p137
    %p139 = pneg %p138
    // Predicated region
    $region29: #{mil_forward.6} parent=5 // pred_check
      _
    $region30: #{mil_forward.6} parent=5 // pred_check_branch
      %141 = sbr.rel (%p138) target = $region32
    $region31: #{mil_forward.6} parent=5 // pred_region
      %s142 = ssub.s32 %s9, 1
      %p143 = scmp.lt.s32.totalorder %s14, 5
      %s144 = scalar_select %p143, %s14, 5
      %s145 = smul.addr %s144, 1248
      %s146 = smul.addr %s145, 4
      %s147 = scalar_lea.vmem %s0, %s146
      %p148 = pneg %p35
      %p149 = pneg %p32
      %p150 = pneg %p56
      %p151 = pneg %p53
      %p152 = pneg %p77
      %p153 = pneg %p74
      %p154 = pneg %p103
      %p155 = pneg %p100
      %p156 = scmp.lt.s32.totalorder %s14, 5
      %s157 = scalar_select %p156, %s14, 5
      %s158 = smul.addr %s157, 1152
      %s159 = smul.addr %s158, 4
      %s160 = scalar_lea.vmem %s3, %s159
      %p161 = scmp.lt.s32.totalorder %s14, 5
      %s162 = scalar_select %p161, %s14, 5
      %s163 = smul.addr %s162, 1248
      %s164 = smul.addr %s163, 4
      %s165 = scalar_lea.vmem %s0, %s164
      %p166 = scmp.lt.s32.totalorder %s14, 5
      %s167 = scalar_select %p166, %s14, 5
      %s168 = smul.addr %s167, 1152
      %s169 = smul.addr %s168, 4
      %s170 = scalar_lea.vmem %s3, %s169
      %v172 = vld [vmem:[%s2] sm:$0x1]
      loop: start=0, step=1, limit=48
      $region33: #{mil_forward.6} parent=31 // loop_pre_header
        _
      $region34: #{mil_forward.6} parent=31 // loop_header
        %s174 = sphi 0, %s178
        %p175 = scmp.ge.s32.totalorder %s174, 48
      $region35: #{mil_forward.6} parent=31 // loop_header_branch
        %177 = sbr.rel (%p175) target = $region39
      $region36: #{mil_forward.6} parent=31 // loop_body
        %s179 = smul.u32 %s174, 2
        %s180 = smul.u32 %s179, 13
        %s181 = smul.addr %s180, 4
        %s182 = scalar_lea.vmem %s165, %s181
        %v183 = vld [vmem:[%s182] sm:$0xf]
        %v184 = vld [vmem:[%s182 + $0x4] sm:$0xf]
        %v185 = vld [vmem:[%s182 + $0x8] sm:$0xf]
        %v186 = vld [vmem:[%s182 + $0xc] sm:$0xf]
        %v187 = vld [vmem:[%s182 + $0x10] sm:$0xf]
        %v188 = vld [vmem:[%s182 + $0x14] sm:$0xf]
        %v189 = vld [vmem:[%s182 + $0x18] sm:$0xf]
        %v190 = vld [vmem:[%s182 + $0x1c] sm:$0xf]
        %v191 = vld [vmem:[%s182 + $0x20] sm:$0xf]
        %v192 = vld [vmem:[%s182 + $0x24] sm:$0xf]
        %v193 = vld [vmem:[%s182 + $0x28] sm:$0xf]
        %v194 = vld [vmem:[%s182 + $0x2c] sm:$0xf]
        %v195 = vld [vmem:[%s182 + $0x34] sm:$0xf]
        %v196 = vld [vmem:[%s182 + $0x38] sm:$0xf]
        %v197 = vld [vmem:[%s182 + $0x3c] sm:$0xf]
        %v198 = vld [vmem:[%s182 + $0x40] sm:$0xf]
        %v199 = vld [vmem:[%s182 + $0x44] sm:$0xf]
        %v200 = vld [vmem:[%s182 + $0x48] sm:$0xf]
        %v201 = vld [vmem:[%s182 + $0x4c] sm:$0xf]
        %v202 = vld [vmem:[%s182 + $0x50] sm:$0xf]
        %v203 = vld [vmem:[%s182 + $0x54] sm:$0xf]
        %v204 = vld [vmem:[%s182 + $0x58] sm:$0xf]
        %v205 = vld [vmem:[%s182 + $0x5c] sm:$0xf]
        %v206 = vld [vmem:[%s182 + $0x60] sm:$0xf]
        %v207 = vld [vmem:[%s1] sm:$0xf]
        %v208 = vld [vmem:[%s1 + $0x4] sm:$0x1]
        %v209 = vld [vmem:[%s182 + $0x30] sm:$0x1]
        %v210 = vld [vmem:[%s182 + $0x64] sm:$0x1]
        %vm211 = vsmask.f32 3328
        %vm212 = vsmask.f32 7440
        %vm213 = vmor %vm211, %vm212
        %v215 = vshrl.u32 %v183, 16
        %v217 = vrot.slane %v215, 4
        %v218 = vshll.u32 %v183, 16
        %v220 = vrot.slane %v218, 5
        %v221 = vor.u32 %v217, %v220
        %v222 = vrot.slane %v221, 4
        %v224 = vshll.u32 %v184, 16
        %v226 = vrot.slane %v224, 5
        %v227 = vsel %vm213, %v222, %v226
        %v228 = vshrl.u32 %v184, 16
        %v230 = vrot.slane %v228, 4
        %v231 = vor.u32 %v230, %v226
        %v232 = vrot.slane %v231, 4
        %v234 = vshll.u32 %v185, 16
        %v236 = vrot.slane %v234, 5
        %v237 = vsel %vm213, %v232, %v236
        %v238 = vshrl.u32 %v185, 16
        %v240 = vrot.slane %v238, 4
        %v241 = vor.u32 %v240, %v236
        %v242 = vrot.slane %v241, 4
        %v244 = vshll.u32 %v186, 16
        %v246 = vrot.slane %v244, 5
        %v247 = vsel %vm213, %v242, %v246
        %v248 = vshrl.u32 %v186, 16
        %v250 = vrot.slane %v248, 4
        %v251 = vor.u32 %v250, %v246
        %v252 = vrot.slane %v251, 4
        %v254 = vshll.u32 %v187, 16
        %v256 = vrot.slane %v254, 5
        %v257 = vsel %vm213, %v252, %v256
        %v258 = vshrl.u32 %v187, 16
        %v260 = vrot.slane %v258, 4
        %v261 = vor.u32 %v260, %v256
        %v262 = vrot.slane %v261, 4
        %v264 = vshll.u32 %v188, 16
        %v266 = vrot.slane %v264, 5
        %v267 = vsel %vm213, %v262, %v266
        %v268 = vshrl.u32 %v188, 16
        %v270 = vrot.slane %v268, 4
        %v271 = vor.u32 %v270, %v266
        %v272 = vrot.slane %v271, 4
        %v274 = vshll.u32 %v189, 16
        %v276 = vrot.slane %v274, 5
        %v277 = vsel %vm213, %v272, %v276
        %v278 = vshrl.u32 %v189, 16
        %v280 = vrot.slane %v278, 4
        %v281 = vor.u32 %v280, %v276
        %v282 = vrot.slane %v281, 4
        %v284 = vshll.u32 %v190, 16
        %v286 = vrot.slane %v284, 5
        %v287 = vsel %vm213, %v282, %v286
        %v288 = vshrl.u32 %v190, 16
        %v290 = vrot.slane %v288, 4
        %v291 = vor.u32 %v290, %v286
        %v292 = vrot.slane %v291, 4
        %v294 = vshll.u32 %v191, 16
        %v296 = vrot.slane %v294, 5
        %v297 = vsel %vm213, %v292, %v296
        %v298 = vshrl.u32 %v191, 16
        %v300 = vrot.slane %v298, 4
        %v301 = vor.u32 %v300, %v296
        %v302 = vrot.slane %v301, 4
        %v304 = vshll.u32 %v192, 16
        %v306 = vrot.slane %v304, 5
        %v307 = vsel %vm213, %v302, %v306
        %v308 = vshrl.u32 %v192, 16
        %v310 = vrot.slane %v308, 4
        %v311 = vor.u32 %v310, %v306
        %v312 = vrot.slane %v311, 4
        %v314 = vshll.u32 %v193, 16
        %v316 = vrot.slane %v314, 5
        %v317 = vsel %vm213, %v312, %v316
        %v318 = vshrl.u32 %v193, 16
        %v320 = vrot.slane %v318, 4
        %v321 = vor.u32 %v320, %v316
        %v322 = vrot.slane %v321, 4
        %v324 = vshll.u32 %v194, 16
        %v326 = vrot.slane %v324, 5
        %v327 = vsel %vm213, %v322, %v326
        %v328 = vshrl.u32 %v194, 16
        %v330 = vrot.slane %v328, 4
        %v331 = vor.u32 %v330, %v326
        %v332 = vrot.slane %v331, 4
        %v334 = vshll.u32 %v209, 16
        %v336 = vrot.slane %v334, 5
        %v337 = vsel %vm213, %v332, %v336
        %v339 = vshrl.u32 %v195, 16
        %v341 = vrot.slane %v339, 4
        %v342 = vshll.u32 %v195, 16
        %v344 = vrot.slane %v342, 5
        %v345 = vor.u32 %v341, %v344
        %v346 = vrot.slane %v345, 4
        %v348 = vshll.u32 %v196, 16
        %v350 = vrot.slane %v348, 5
        %v351 = vsel %vm213, %v346, %v350
        %v352 = vshrl.u32 %v196, 16
        %v354 = vrot.slane %v352, 4
        %v355 = vor.u32 %v354, %v350
        %v356 = vrot.slane %v355, 4
        %v358 = vshll.u32 %v197, 16
        %v360 = vrot.slane %v358, 5
        %v361 = vsel %vm213, %v356, %v360
        %v362 = vshrl.u32 %v197, 16
        %v364 = vrot.slane %v362, 4
        %v365 = vor.u32 %v364, %v360
        %v366 = vrot.slane %v365, 4
        %v368 = vshll.u32 %v198, 16
        %v370 = vrot.slane %v368, 5
        %v371 = vsel %vm213, %v366, %v370
        %v372 = vshrl.u32 %v198, 16
        %v374 = vrot.slane %v372, 4
        %v375 = vor.u32 %v374, %v370
        %v376 = vrot.slane %v375, 4
        %v378 = vshll.u32 %v199, 16
        %v380 = vrot.slane %v378, 5
        %v381 = vsel %vm213, %v376, %v380
        %v382 = vshrl.u32 %v199, 16
        %v384 = vrot.slane %v382, 4
        %v385 = vor.u32 %v384, %v380
        %v386 = vrot.slane %v385, 4
        %v388 = vshll.u32 %v200, 16
        %v390 = vrot.slane %v388, 5
        %v391 = vsel %vm213, %v386, %v390
        %v392 = vshrl.u32 %v200, 16
        %v394 = vrot.slane %v392, 4
        %v395 = vor.u32 %v394, %v390
        %v396 = vrot.slane %v395, 4
        %v398 = vshll.u32 %v201, 16
        %v400 = vrot.slane %v398, 5
        %v401 = vsel %vm213, %v396, %v400
        %v402 = vshrl.u32 %v201, 16
        %v404 = vrot.slane %v402, 4
        %v405 = vor.u32 %v404, %v400
        %v406 = vrot.slane %v405, 4
        %v408 = vshll.u32 %v202, 16
        %v410 = vrot.slane %v408, 5
        %v411 = vsel %vm213, %v406, %v410
        %v412 = vshrl.u32 %v202, 16
        %v414 = vrot.slane %v412, 4
        %v415 = vor.u32 %v414, %v410
        %v416 = vrot.slane %v415, 4
        %v418 = vshll.u32 %v203, 16
        %v420 = vrot.slane %v418, 5
        %v421 = vsel %vm213, %v416, %v420
        %v422 = vshrl.u32 %v203, 16
        %v424 = vrot.slane %v422, 4
        %v425 = vor.u32 %v424, %v420
        %v426 = vrot.slane %v425, 4
        %v428 = vshll.u32 %v204, 16
        %v430 = vrot.slane %v428, 5
        %v431 = vsel %vm213, %v426, %v430
        %v432 = vshrl.u32 %v204, 16
        %v434 = vrot.slane %v432, 4
        %v435 = vor.u32 %v434, %v430
        %v436 = vrot.slane %v435, 4
        %v438 = vshll.u32 %v205, 16
        %v440 = vrot.slane %v438, 5
        %v441 = vsel %vm213, %v436, %v440
        %v442 = vshrl.u32 %v205, 16
        %v444 = vrot.slane %v442, 4
        %v445 = vor.u32 %v444, %v440
        %v446 = vrot.slane %v445, 4
        %v448 = vshll.u32 %v206, 16
        %v450 = vrot.slane %v448, 5
        %v451 = vsel %vm213, %v446, %v450
        %v452 = vshrl.u32 %v206, 16
        %v454 = vrot.slane %v452, 4
        %v455 = vor.u32 %v454, %v450
        %v456 = vrot.slane %v455, 4
        %v458 = vshll.u32 %v210, 16
        %v460 = vrot.slane %v458, 5
        %v461 = vsel %vm213, %v456, %v460
        %s462 = scalar_lea.vmem %s1, 8
        %v463 = vld [vmem:[%s462] sm:$0xf]
        %v464 = vld [vmem:[%s462 + $0x4] sm:$0x1]
        %v465 = vunpack.c.l.b16 %v227
        %v466 = vunpack.c.l.b16 %v237
        %v467 = vunpack.c.l.b16 %v247
        %v468 = vunpack.c.l.b16 %v257
        %v469 = vunpack.c.l.b16 %v267
        %v470 = vunpack.c.l.b16 %v277
        %v471 = vunpack.c.l.b16 %v287
        %v472 = vunpack.c.l.b16 %v297
        %v473 = vunpack.c.l.b16 %v307
        %v474 = vunpack.c.l.b16 %v317
        %v475 = vunpack.c.l.b16 %v327
        %v476 = vunpack.c.l.b16 %v337
        %v477 = vunpack.c.l.b16 %v351
        %v478 = vunpack.c.l.b16 %v361
        %v479 = vunpack.c.l.b16 %v371
        %v480 = vunpack.c.l.b16 %v381
        %v481 = vunpack.c.l.b16 %v391
        %v482 = vunpack.c.l.b16 %v401
        %v483 = vunpack.c.l.b16 %v411
        %v484 = vunpack.c.l.b16 %v421
        %v485 = vunpack.c.l.b16 %v431
        %v486 = vunpack.c.l.b16 %v441
        %v487 = vunpack.c.l.b16 %v451
        %v488 = vunpack.c.l.b16 %v461
        %v489 = vpack.c.b16 %v466, %v465
        %v490 = vpack.c.b16 %v468, %v467
        %v491 = vpack.c.b16 %v470, %v469
        %v492 = vpack.c.b16 %v472, %v471
        %v493 = vpack.c.b16 %v474, %v473
        %v494 = vpack.c.b16 %v476, %v475
        %v495 = vpack.c.b16 %v478, %v477
        %v496 = vpack.c.b16 %v480, %v479
        %v497 = vpack.c.b16 %v482, %v481
        %v498 = vpack.c.b16 %v484, %v483
        %v499 = vpack.c.b16 %v486, %v485
        %v500 = vpack.c.b16 %v488, %v487
        %v503 = vunpack.c.l.b16 %v463
        %v504 = vunpack.c.l.b16 %v464
        %v505 = vpack.c.b16 %v504, %v503
        %vm506 = vcmask 72704
        %v508 = vsel %vm506, %v489, 0
        %v511 = vsel %vm506, %v490, 0
        %v514 = vsel %vm506, %v491, 0
        %v517 = vsel %vm506, %v492, 0
        %v520 = vsel %vm506, %v493, 0
        %v523 = vsel %vm506, %v494, 0
        %v526 = vsel %vm506, %v495, 0
        %v529 = vsel %vm506, %v496, 0
        %v532 = vsel %vm506, %v497, 0
        %v535 = vsel %vm506, %v498, 0
        %v538 = vsel %vm506, %v499, 0
        %v541 = vsel %vm506, %v500, 0
        %vm543 = vcmask 1043456
        %vm544 = vcmask 1044480
        %v545 = vsel %vm543, 4294967295, 65535
        %v546 = vsel %vm544, %v545, 0
        %v548 = vand.u32 %v505, %v546
        %550 = vmatprep.subr.bf16.mxu0 0
        %551 = vmatpush1.bf16.msra.mxu0 0
        %552 = vmatprep.subr.bf16.mxu0 0
        %553 = vmatpush1.bf16.msra.mxu0 0
        %554 = vmatprep.subr.bf16.mxu0 0
        %555 = vmatpush1.bf16.msra.mxu0 0
        %556 = vmatprep.subr.bf16.mxu0 0
        %557 = vmatpush1.bf16.msra.mxu0 0
        %558 = vmatprep.subr.bf16.mxu0 0
        %559 = vmatpush1.bf16.msra.mxu0 0
        %560 = vmatprep.subr.bf16.mxu0 0
        %561 = vmatpush1.bf16.msra.mxu0 0
        %562 = vmatprep.subr.bf16.mxu0 0
        %563 = vmatpush1.bf16.msra.mxu0 0
        %564 = vmatprep.subr.bf16.mxu0 0
        %565 = vmatpush1.bf16.msra.mxu0 %v548
        %566 = vmatprep.subr.bf16.mxu0 0
        %567 = vmatpush2.bf16.msra.mxu0 0
        %568 = vmatprep.subr.bf16.mxu0 0
        %569 = vmatpush2.bf16.msra.mxu0 0
        %570 = vmatprep.subr.bf16.mxu0 0
        %571 = vmatpush2.bf16.msra.mxu0 0
        %572 = vmatprep.subr.bf16.mxu0 0
        %573 = vmatpush2.bf16.msra.mxu0 0
        %574 = vmatprep.subr.bf16.mxu0 0
        %575 = vmatpush2.bf16.msra.mxu0 0
        %576 = vmatprep.subr.bf16.mxu0 0
        %577 = vmatpush2.bf16.msra.mxu0 0
        %578 = vmatprep.subr.bf16.mxu0 0
        %579 = vmatpush2.bf16.msra.mxu0 0
        %580 = vmatprep.subr.bf16.mxu0 0
        %581 = vmatpush2.bf16.msra.mxu0 0
        %582 = vmatprep.mubr.bf16.mxu0 0
        %583 = vmatmul.mubr.bf16.gmra.mxu0 %v508
        %v584 = vpop.f32.mrf.mxu0
        %v585 = vadd.f32 0.0, %v584
        %v586 = vpop.f32.mrf.mxu0
        %v587 = vpop.f32.mrf.mxu0
        %v588 = vadd.f32 0.0, %v587
        %v589 = vpop.f32.mrf.mxu0
        %590 = vmatprep.mubr.bf16.mxu0 0
        %591 = vmatmul.mubr.bf16.gmra.mxu0 %v511
        %v592 = vpop.f32.mrf.mxu0
        %v593 = vadd.f32 0.0, %v592
        %v594 = vpop.f32.mrf.mxu0
        %v595 = vpop.f32.mrf.mxu0
        %v596 = vadd.f32 0.0, %v595
        %v597 = vpop.f32.mrf.mxu0
        %598 = vmatprep.mubr.bf16.mxu0 0
        %599 = vmatmul.mubr.bf16.gmra.mxu0 %v514
        %v600 = vpop.f32.mrf.mxu0
        %v601 = vadd.f32 0.0, %v600
        %v602 = vpop.f32.mrf.mxu0
        %v603 = vpop.f32.mrf.mxu0
        %v604 = vadd.f32 0.0, %v603
        %v605 = vpop.f32.mrf.mxu0
        %606 = vmatprep.mubr.bf16.mxu0 0
        %607 = vmatmul.mubr.bf16.gmra.mxu0 %v517
        %v608 = vpop.f32.mrf.mxu0
        %v609 = vadd.f32 0.0, %v608
        %v610 = vpop.f32.mrf.mxu0
        %v611 = vpop.f32.mrf.mxu0
        %v612 = vadd.f32 0.0, %v611
        %v613 = vpop.f32.mrf.mxu0
        %614 = vmatprep.mubr.bf16.mxu0 0
        %615 = vmatmul.mubr.bf16.gmra.mxu0 %v520
        %v616 = vpop.f32.mrf.mxu0
        %v617 = vadd.f32 0.0, %v616
        %v618 = vpop.f32.mrf.mxu0
        %v619 = vpop.f32.mrf.mxu0
        %v620 = vadd.f32 0.0, %v619
        %v621 = vpop.f32.mrf.mxu0
        %622 = vmatprep.mubr.bf16.mxu0 0
        %623 = vmatmul.mubr.bf16.gmra.mxu0 %v523
        %v624 = vpop.f32.mrf.mxu0
        %v625 = vadd.f32 0.0, %v624
        %v626 = vpop.f32.mrf.mxu0
        %v627 = vpop.f32.mrf.mxu0
        %v628 = vadd.f32 0.0, %v627
        %v629 = vpop.f32.mrf.mxu0
        %630 = vmatprep.mubr.bf16.mxu0 0
        %631 = vmatmul.mubr.bf16.gmra.mxu0 %v526
        %v632 = vpop.f32.mrf.mxu0
        %v633 = vadd.f32 0.0, %v632
        %v634 = vpop.f32.mrf.mxu0
        %v635 = vpop.f32.mrf.mxu0
        %v636 = vadd.f32 0.0, %v635
        %v637 = vpop.f32.mrf.mxu0
        %638 = vmatprep.mubr.bf16.mxu0 0
        %639 = vmatmul.mubr.bf16.gmra.mxu0 %v529
        %v640 = vpop.f32.mrf.mxu0
        %v641 = vadd.f32 0.0, %v640
        %v642 = vpop.f32.mrf.mxu0
        %v643 = vpop.f32.mrf.mxu0
        %v644 = vadd.f32 0.0, %v643
        %v645 = vpop.f32.mrf.mxu0
        %646 = vmatprep.mubr.bf16.mxu0 0
        %647 = vmatmul.mubr.bf16.gmra.mxu0 %v532
        %v648 = vpop.f32.mrf.mxu0
        %v649 = vadd.f32 0.0, %v648
        %v650 = vpop.f32.mrf.mxu0
        %v651 = vpop.f32.mrf.mxu0
        %v652 = vadd.f32 0.0, %v651
        %v653 = vpop.f32.mrf.mxu0
        %654 = vmatprep.mubr.bf16.mxu0 0
        %655 = vmatmul.mubr.bf16.gmra.mxu0 %v535
        %v656 = vpop.f32.mrf.mxu0
        %v657 = vadd.f32 0.0, %v656
        %v658 = vpop.f32.mrf.mxu0
        %v659 = vpop.f32.mrf.mxu0
        %v660 = vadd.f32 0.0, %v659
        %v661 = vpop.f32.mrf.mxu0
        %662 = vmatprep.mubr.bf16.mxu0 0
        %663 = vmatmul.mubr.bf16.gmra.mxu0 %v538
        %v664 = vpop.f32.mrf.mxu0
        %v665 = vadd.f32 0.0, %v664
        %v666 = vpop.f32.mrf.mxu0
        %v667 = vpop.f32.mrf.mxu0
        %v668 = vadd.f32 0.0, %v667
        %v669 = vpop.f32.mrf.mxu0
        %670 = vmatprep.mubr.bf16.mxu0 0
        %671 = vmatmul.mubr.bf16.gmra.mxu0 %v541
        %v672 = vpop.f32.mrf.mxu0
        %v673 = vadd.f32 0.0, %v672
        %v674 = vpop.f32.mrf.mxu0
        %v675 = vpop.f32.mrf.mxu0
        %v676 = vadd.f32 0.0, %v675
        %v677 = vpop.f32.mrf.mxu0
        %678 = vdwg.mxu0
        %v703 = vunpack.c.l.b16 %v183
        %v704 = vunpack.c.l.b16 %v184
        %v705 = vunpack.c.l.b16 %v185
        %v706 = vunpack.c.l.b16 %v186
        %v707 = vunpack.c.l.b16 %v187
        %v708 = vunpack.c.l.b16 %v188
        %v709 = vunpack.c.l.b16 %v189
        %v710 = vunpack.c.l.b16 %v190
        %v711 = vunpack.c.l.b16 %v191
        %v712 = vunpack.c.l.b16 %v192
        %v713 = vunpack.c.l.b16 %v193
        %v714 = vunpack.c.l.b16 %v194
        %v715 = vunpack.c.l.b16 %v195
        %v716 = vunpack.c.l.b16 %v196
        %v717 = vunpack.c.l.b16 %v197
        %v718 = vunpack.c.l.b16 %v198
        %v719 = vunpack.c.l.b16 %v199
        %v720 = vunpack.c.l.b16 %v200
        %v721 = vunpack.c.l.b16 %v201
        %v722 = vunpack.c.l.b16 %v202
        %v723 = vunpack.c.l.b16 %v203
        %v724 = vunpack.c.l.b16 %v204
        %v725 = vunpack.c.l.b16 %v205
        %v726 = vunpack.c.l.b16 %v206
        %v727 = vpack.c.b16 %v704, %v703
        %v728 = vpack.c.b16 %v706, %v705
        %v729 = vpack.c.b16 %v708, %v707
        %v730 = vpack.c.b16 %v710, %v709
        %v731 = vpack.c.b16 %v712, %v711
        %v732 = vpack.c.b16 %v714, %v713
        %v733 = vpack.c.b16 %v716, %v715
        %v734 = vpack.c.b16 %v718, %v717
        %v735 = vpack.c.b16 %v720, %v719
        %v736 = vpack.c.b16 %v722, %v721
        %v737 = vpack.c.b16 %v724, %v723
        %v738 = vpack.c.b16 %v726, %v725
        %v741 = vunpack.c.l.b16 %v207
        %v742 = vunpack.c.l.b16 %v208
        %v743 = vpack.c.b16 %v742, %v741
        %v745 = vsel %vm506, %v727, 0
        %v748 = vsel %vm506, %v728, 0
        %v751 = vsel %vm506, %v729, 0
        %v754 = vsel %vm506, %v730, 0
        %v757 = vsel %vm506, %v731, 0
        %v760 = vsel %vm506, %v732, 0
        %v763 = vsel %vm506, %v733, 0
        %v766 = vsel %vm506, %v734, 0
        %v769 = vsel %vm506, %v735, 0
        %v772 = vsel %vm506, %v736, 0
        %v775 = vsel %vm506, %v737, 0
        %v778 = vsel %vm506, %v738, 0
        %v781 = vand.u32 %v743, %v546
        %783 = vmatprep.subr.bf16.mxu0 0
        %784 = vmatpush1.bf16.msra.mxu0 0
        %785 = vmatprep.subr.bf16.mxu0 0
        %786 = vmatpush1.bf16.msra.mxu0 0
        %787 = vmatprep.subr.bf16.mxu0 0
        %788 = vmatpush1.bf16.msra.mxu0 0
        %789 = vmatprep.subr.bf16.mxu0 0
        %790 = vmatpush1.bf16.msra.mxu0 0
        %791 = vmatprep.subr.bf16.mxu0 0
        %792 = vmatpush1.bf16.msra.mxu0 0
        %793 = vmatprep.subr.bf16.mxu0 0
        %794 = vmatpush1.bf16.msra.mxu0 0
        %795 = vmatprep.subr.bf16.mxu0 0
        %796 = vmatpush1.bf16.msra.mxu0 0
        %797 = vmatprep.subr.bf16.mxu0 0
        %798 = vmatpush1.bf16.msra.mxu0 %v781
        %799 = vmatprep.subr.bf16.mxu0 0
        %800 = vmatpush2.bf16.msra.mxu0 0
        %801 = vmatprep.subr.bf16.mxu0 0
        %802 = vmatpush2.bf16.msra.mxu0 0
        %803 = vmatprep.subr.bf16.mxu0 0
        %804 = vmatpush2.bf16.msra.mxu0 0
        %805 = vmatprep.subr.bf16.mxu0 0
        %806 = vmatpush2.bf16.msra.mxu0 0
        %807 = vmatprep.subr.bf16.mxu0 0
        %808 = vmatpush2.bf16.msra.mxu0 0
        %809 = vmatprep.subr.bf16.mxu0 0
        %810 = vmatpush2.bf16.msra.mxu0 0
        %811 = vmatprep.subr.bf16.mxu0 0
        %812 = vmatpush2.bf16.msra.mxu0 0
        %813 = vmatprep.subr.bf16.mxu0 0
        %814 = vmatpush2.bf16.msra.mxu0 0
        %815 = vmatprep.mubr.bf16.mxu0 0
        %816 = vmatmul.mubr.bf16.gmra.mxu0 %v745
        %v817 = vpop.f32.mrf.mxu0
        %v818 = vadd.f32 %v585, %v817
        %v819 = vpop.f32.mrf.mxu0
        %v820 = vpop.f32.mrf.mxu0
        %v821 = vadd.f32 %v588, %v820
        %v822 = vpop.f32.mrf.mxu0
        %823 = vmatprep.mubr.bf16.mxu0 0
        %824 = vmatmul.mubr.bf16.gmra.mxu0 %v748
        %v825 = vpop.f32.mrf.mxu0
        %v826 = vadd.f32 %v593, %v825
        %v827 = vpop.f32.mrf.mxu0
        %v828 = vpop.f32.mrf.mxu0
        %v829 = vadd.f32 %v596, %v828
        %v830 = vpop.f32.mrf.mxu0
        %831 = vmatprep.mubr.bf16.mxu0 0
        %832 = vmatmul.mubr.bf16.gmra.mxu0 %v751
        %v833 = vpop.f32.mrf.mxu0
        %v834 = vadd.f32 %v601, %v833
        %v835 = vpop.f32.mrf.mxu0
        %v836 = vpop.f32.mrf.mxu0
        %v837 = vadd.f32 %v604, %v836
        %v838 = vpop.f32.mrf.mxu0
        %839 = vmatprep.mubr.bf16.mxu0 0
        %840 = vmatmul.mubr.bf16.gmra.mxu0 %v754
        %v841 = vpop.f32.mrf.mxu0
        %v842 = vadd.f32 %v609, %v841
        %v843 = vpop.f32.mrf.mxu0
        %v844 = vpop.f32.mrf.mxu0
        %v845 = vadd.f32 %v612, %v844
        %v846 = vpop.f32.mrf.mxu0
        %847 = vmatprep.mubr.bf16.mxu0 0
        %848 = vmatmul.mubr.bf16.gmra.mxu0 %v757
        %v849 = vpop.f32.mrf.mxu0
        %v850 = vadd.f32 %v617, %v849
        %v851 = vpop.f32.mrf.mxu0
        %v852 = vpop.f32.mrf.mxu0
        %v853 = vadd.f32 %v620, %v852
        %v854 = vpop.f32.mrf.mxu0
        %855 = vmatprep.mubr.bf16.mxu0 0
        %856 = vmatmul.mubr.bf16.gmra.mxu0 %v760
        %v857 = vpop.f32.mrf.mxu0
        %v858 = vadd.f32 %v625, %v857
        %v859 = vpop.f32.mrf.mxu0
        %v860 = vpop.f32.mrf.mxu0
        %v861 = vadd.f32 %v628, %v860
        %v862 = vpop.f32.mrf.mxu0
        %863 = vmatprep.mubr.bf16.mxu0 0
        %864 = vmatmul.mubr.bf16.gmra.mxu0 %v763
        %v865 = vpop.f32.mrf.mxu0
        %v866 = vadd.f32 %v633, %v865
        %v867 = vpop.f32.mrf.mxu0
        %v868 = vpop.f32.mrf.mxu0
        %v869 = vadd.f32 %v636, %v868
        %v870 = vpop.f32.mrf.mxu0
        %871 = vmatprep.mubr.bf16.mxu0 0
        %872 = vmatmul.mubr.bf16.gmra.mxu0 %v766
        %v873 = vpop.f32.mrf.mxu0
        %v874 = vadd.f32 %v641, %v873
        %v875 = vpop.f32.mrf.mxu0
        %v876 = vpop.f32.mrf.mxu0
        %v877 = vadd.f32 %v644, %v876
        %v878 = vpop.f32.mrf.mxu0
        %879 = vmatprep.mubr.bf16.mxu0 0
        %880 = vmatmul.mubr.bf16.gmra.mxu0 %v769
        %v881 = vpop.f32.mrf.mxu0
        %v882 = vadd.f32 %v649, %v881
        %v883 = vpop.f32.mrf.mxu0
        %v884 = vpop.f32.mrf.mxu0
        %v885 = vadd.f32 %v652, %v884
        %v886 = vpop.f32.mrf.mxu0
        %887 = vmatprep.mubr.bf16.mxu0 0
        %888 = vmatmul.mubr.bf16.gmra.mxu0 %v772
        %v889 = vpop.f32.mrf.mxu0
        %v890 = vadd.f32 %v657, %v889
        %v891 = vpop.f32.mrf.mxu0
        %v892 = vpop.f32.mrf.mxu0
        %v893 = vadd.f32 %v660, %v892
        %v894 = vpop.f32.mrf.mxu0
        %895 = vmatprep.mubr.bf16.mxu0 0
        %896 = vmatmul.mubr.bf16.gmra.mxu0 %v775
        %v897 = vpop.f32.mrf.mxu0
        %v898 = vadd.f32 %v665, %v897
        %v899 = vpop.f32.mrf.mxu0
        %v900 = vpop.f32.mrf.mxu0
        %v901 = vadd.f32 %v668, %v900
        %v902 = vpop.f32.mrf.mxu0
        %903 = vmatprep.mubr.bf16.mxu0 0
        %904 = vmatmul.mubr.bf16.gmra.mxu0 %v778
        %v905 = vpop.f32.mrf.mxu0
        %v906 = vadd.f32 %v673, %v905
        %v907 = vpop.f32.mrf.mxu0
        %v908 = vpop.f32.mrf.mxu0
        %v909 = vadd.f32 %v676, %v908
        %v910 = vpop.f32.mrf.mxu0
        %911 = vdwg.mxu0
        %v912 = vld [vmem:[%s182] sm:$0xe]
        %v913 = vld [vmem:[%s182 + $0x34] sm:$0xe]
        %vm918 = vcmask 1042432
        %vm919 = vcmask 1046532
        %vm920 = vmor %vm918, %vm919
        %v921 = vrot.slane %v912, 5
        %v922 = vrot.slane %v921, 4
        %v923 = vrot.slane %v184, 5
        %v924 = vsel %vm920, %v922, %v923
        %v925 = vrot.slane %v923, 4
        %v926 = vrot.slane %v185, 5
        %v927 = vsel %vm920, %v925, %v926
        %v928 = vrot.slane %v926, 4
        %v929 = vrot.slane %v186, 5
        %v930 = vsel %vm920, %v928, %v929
        %v931 = vrot.slane %v929, 4
        %v932 = vrot.slane %v187, 5
        %v933 = vsel %vm920, %v931, %v932
        %v934 = vrot.slane %v932, 4
        %v935 = vrot.slane %v188, 5
        %v936 = vsel %vm920, %v934, %v935
        %v937 = vrot.slane %v935, 4
        %v938 = vrot.slane %v189, 5
        %v939 = vsel %vm920, %v937, %v938
        %v940 = vrot.slane %v938, 4
        %v941 = vrot.slane %v190, 5
        %v942 = vsel %vm920, %v940, %v941
        %v943 = vrot.slane %v941, 4
        %v944 = vrot.slane %v191, 5
        %v945 = vsel %vm920, %v943, %v944
        %v946 = vrot.slane %v944, 4
        %v947 = vrot.slane %v192, 5
        %v948 = vsel %vm920, %v946, %v947
        %v949 = vrot.slane %v947, 4
        %v950 = vrot.slane %v193, 5
        %v951 = vsel %vm920, %v949, %v950
        %v952 = vrot.slane %v950, 4
        %v953 = vrot.slane %v194, 5
        %v954 = vsel %vm920, %v952, %v953
        %v955 = vrot.slane %v953, 4
        %v956 = vrot.slane %v209, 5
        %v957 = vsel %vm920, %v955, %v956
        %v958 = vrot.slane %v913, 5
        %v959 = vrot.slane %v958, 4
        %v960 = vrot.slane %v196, 5
        %v961 = vsel %vm920, %v959, %v960
        %v962 = vrot.slane %v960, 4
        %v963 = vrot.slane %v197, 5
        %v964 = vsel %vm920, %v962, %v963
        %v965 = vrot.slane %v963, 4
        %v966 = vrot.slane %v198, 5
        %v967 = vsel %vm920, %v965, %v966
        %v968 = vrot.slane %v966, 4
        %v969 = vrot.slane %v199, 5
        %v970 = vsel %vm920, %v968, %v969
        %v971 = vrot.slane %v969, 4
        %v972 = vrot.slane %v200, 5
        %v973 = vsel %vm920, %v971, %v972
        %v974 = vrot.slane %v972, 4
        %v975 = vrot.slane %v201, 5
        %v976 = vsel %vm920, %v974, %v975
        %v977 = vrot.slane %v975, 4
        %v978 = vrot.slane %v202, 5
        %v979 = vsel %vm920, %v977, %v978
        %v980 = vrot.slane %v978, 4
        %v981 = vrot.slane %v203, 5
        %v982 = vsel %vm920, %v980, %v981
        %v983 = vrot.slane %v981, 4
        %v984 = vrot.slane %v204, 5
        %v985 = vsel %vm920, %v983, %v984
        %v986 = vrot.slane %v984, 4
        %v987 = vrot.slane %v205, 5
        %v988 = vsel %vm920, %v986, %v987
        %v989 = vrot.slane %v987, 4
        %v990 = vrot.slane %v206, 5
        %v991 = vsel %vm920, %v989, %v990
        %v992 = vrot.slane %v990, 4
        %v993 = vrot.slane %v210, 5
        %v994 = vsel %vm920, %v992, %v993
        %s995 = scalar_lea.vmem %s1, 16
        %v996 = vld [vmem:[%s995] sm:$0xf]
        %v997 = vld [vmem:[%s995 + $0x4] sm:$0x1]
        %v998 = vunpack.c.l.b16 %v924
        %v999 = vunpack.c.l.b16 %v927
        %v1000 = vunpack.c.l.b16 %v930
        %v1001 = vunpack.c.l.b16 %v933
        %v1002 = vunpack.c.l.b16 %v936
        %v1003 = vunpack.c.l.b16 %v939
        %v1004 = vunpack.c.l.b16 %v942
        %v1005 = vunpack.c.l.b16 %v945
        %v1006 = vunpack.c.l.b16 %v948
        %v1007 = vunpack.c.l.b16 %v951
        %v1008 = vunpack.c.l.b16 %v954
        %v1009 = vunpack.c.l.b16 %v957
        %v1010 = vunpack.c.l.b16 %v961
        %v1011 = vunpack.c.l.b16 %v964
        %v1012 = vunpack.c.l.b16 %v967
        %v1013 = vunpack.c.l.b16 %v970
        %v1014 = vunpack.c.l.b16 %v973
        %v1015 = vunpack.c.l.b16 %v976
        %v1016 = vunpack.c.l.b16 %v979
        %v1017 = vunpack.c.l.b16 %v982
        %v1018 = vunpack.c.l.b16 %v985
        %v1019 = vunpack.c.l.b16 %v988
        %v1020 = vunpack.c.l.b16 %v991
        %v1021 = vunpack.c.l.b16 %v994
        %v1022 = vpack.c.b16 %v999, %v998
        %v1023 = vpack.c.b16 %v1001, %v1000
        %v1024 = vpack.c.b16 %v1003, %v1002
        %v1025 = vpack.c.b16 %v1005, %v1004
        %v1026 = vpack.c.b16 %v1007, %v1006
        %v1027 = vpack.c.b16 %v1009, %v1008
        %v1028 = vpack.c.b16 %v1011, %v1010
        %v1029 = vpack.c.b16 %v1013, %v1012
        %v1030 = vpack.c.b16 %v1015, %v1014
        %v1031 = vpack.c.b16 %v1017, %v1016
        %v1032 = vpack.c.b16 %v1019, %v1018
        %v1033 = vpack.c.b16 %v1021, %v1020
        %v1036 = vunpack.c.l.b16 %v996
        %v1037 = vunpack.c.l.b16 %v997
        %v1038 = vpack.c.b16 %v1037, %v1036
        %v1040 = vsel %vm506, %v1022, 0
        %v1043 = vsel %vm506, %v1023, 0
        %v1046 = vsel %vm506, %v1024, 0
        %v1049 = vsel %vm506, %v1025, 0
        %v1052 = vsel %vm506, %v1026, 0
        %v1055 = vsel %vm506, %v1027, 0
        %v1058 = vsel %vm506, %v1028, 0
        %v1061 = vsel %vm506, %v1029, 0
        %v1064 = vsel %vm506, %v1030, 0
        %v1067 = vsel %vm506, %v1031, 0
        %v1070 = vsel %vm506, %v1032, 0
        %v1073 = vsel %vm506, %v1033, 0
        %v1076 = vand.u32 %v1038, %v546
        %1078 = vmatprep.subr.bf16.mxu0 0
        %1079 = vmatpush1.bf16.msra.mxu0 0
        %1080 = vmatprep.subr.bf16.mxu0 0
        %1081 = vmatpush1.bf16.msra.mxu0 0
        %1082 = vmatprep.subr.bf16.mxu0 0
        %1083 = vmatpush1.bf16.msra.mxu0 0
        %1084 = vmatprep.subr.bf16.mxu0 0
        %1085 = vmatpush1.bf16.msra.mxu0 0
        %1086 = vmatprep.subr.bf16.mxu0 0
        %1087 = vmatpush1.bf16.msra.mxu0 0
        %1088 = vmatprep.subr.bf16.mxu0 0
        %1089 = vmatpush1.bf16.msra.mxu0 0
        %1090 = vmatprep.subr.bf16.mxu0 0
        %1091 = vmatpush1.bf16.msra.mxu0 0
        %1092 = vmatprep.subr.bf16.mxu0 0
        %1093 = vmatpush1.bf16.msra.mxu0 %v1076
        %1094 = vmatprep.subr.bf16.mxu0 0
        %1095 = vmatpush2.bf16.msra.mxu0 0
        %1096 = vmatprep.subr.bf16.mxu0 0
        %1097 = vmatpush2.bf16.msra.mxu0 0
        %1098 = vmatprep.subr.bf16.mxu0 0
        %1099 = vmatpush2.bf16.msra.mxu0 0
        %1100 = vmatprep.subr.bf16.mxu0 0
        %1101 = vmatpush2.bf16.msra.mxu0 0
        %1102 = vmatprep.subr.bf16.mxu0 0
        %1103 = vmatpush2.bf16.msra.mxu0 0
        %1104 = vmatprep.subr.bf16.mxu0 0
        %1105 = vmatpush2.bf16.msra.mxu0 0
        %1106 = vmatprep.subr.bf16.mxu0 0
        %1107 = vmatpush2.bf16.msra.mxu0 0
        %1108 = vmatprep.subr.bf16.mxu0 0
        %1109 = vmatpush2.bf16.msra.mxu0 0
        %1110 = vmatprep.mubr.bf16.mxu0 0
        %1111 = vmatmul.mubr.bf16.gmra.mxu0 %v1040
        %v1112 = vpop.f32.mrf.mxu0
        %v1113 = vadd.f32 0.0, %v1112
        %v1114 = vpop.f32.mrf.mxu0
        %v1115 = vpop.f32.mrf.mxu0
        %v1116 = vadd.f32 0.0, %v1115
        %v1117 = vpop.f32.mrf.mxu0
        %1118 = vmatprep.mubr.bf16.mxu0 0
        %1119 = vmatmul.mubr.bf16.gmra.mxu0 %v1043
        %v1120 = vpop.f32.mrf.mxu0
        %v1121 = vadd.f32 0.0, %v1120
        %v1122 = vpop.f32.mrf.mxu0
        %v1123 = vpop.f32.mrf.mxu0
        %v1124 = vadd.f32 0.0, %v1123
        %v1125 = vpop.f32.mrf.mxu0
        %1126 = vmatprep.mubr.bf16.mxu0 0
        %1127 = vmatmul.mubr.bf16.gmra.mxu0 %v1046
        %v1128 = vpop.f32.mrf.mxu0
        %v1129 = vadd.f32 0.0, %v1128
        %v1130 = vpop.f32.mrf.mxu0
        %v1131 = vpop.f32.mrf.mxu0
        %v1132 = vadd.f32 0.0, %v1131
        %v1133 = vpop.f32.mrf.mxu0
        %1134 = vmatprep.mubr.bf16.mxu0 0
        %1135 = vmatmul.mubr.bf16.gmra.mxu0 %v1049
        %v1136 = vpop.f32.mrf.mxu0
        %v1137 = vadd.f32 0.0, %v1136
        %v1138 = vpop.f32.mrf.mxu0
        %v1139 = vpop.f32.mrf.mxu0
        %v1140 = vadd.f32 0.0, %v1139
        %v1141 = vpop.f32.mrf.mxu0
        %1142 = vmatprep.mubr.bf16.mxu0 0
        %1143 = vmatmul.mubr.bf16.gmra.mxu0 %v1052
        %v1144 = vpop.f32.mrf.mxu0
        %v1145 = vadd.f32 0.0, %v1144
        %v1146 = vpop.f32.mrf.mxu0
        %v1147 = vpop.f32.mrf.mxu0
        %v1148 = vadd.f32 0.0, %v1147
        %v1149 = vpop.f32.mrf.mxu0
        %1150 = vmatprep.mubr.bf16.mxu0 0
        %1151 = vmatmul.mubr.bf16.gmra.mxu0 %v1055
        %v1152 = vpop.f32.mrf.mxu0
        %v1153 = vadd.f32 0.0, %v1152
        %v1154 = vpop.f32.mrf.mxu0
        %v1155 = vpop.f32.mrf.mxu0
        %v1156 = vadd.f32 0.0, %v1155
        %v1157 = vpop.f32.mrf.mxu0
        %1158 = vmatprep.mubr.bf16.mxu0 0
        %1159 = vmatmul.mubr.bf16.gmra.mxu0 %v1058
        %v1160 = vpop.f32.mrf.mxu0
        %v1161 = vadd.f32 0.0, %v1160
        %v1162 = vpop.f32.mrf.mxu0
        %v1163 = vpop.f32.mrf.mxu0
        %v1164 = vadd.f32 0.0, %v1163
        %v1165 = vpop.f32.mrf.mxu0
        %1166 = vmatprep.mubr.bf16.mxu0 0
        %1167 = vmatmul.mubr.bf16.gmra.mxu0 %v1061
        %v1168 = vpop.f32.mrf.mxu0
        %v1169 = vadd.f32 0.0, %v1168
        %v1170 = vpop.f32.mrf.mxu0
        %v1171 = vpop.f32.mrf.mxu0
        %v1172 = vadd.f32 0.0, %v1171
        %v1173 = vpop.f32.mrf.mxu0
        %1174 = vmatprep.mubr.bf16.mxu0 0
        %1175 = vmatmul.mubr.bf16.gmra.mxu0 %v1064
        %v1176 = vpop.f32.mrf.mxu0
        %v1177 = vadd.f32 0.0, %v1176
        %v1178 = vpop.f32.mrf.mxu0
        %v1179 = vpop.f32.mrf.mxu0
        %v1180 = vadd.f32 0.0, %v1179
        %v1181 = vpop.f32.mrf.mxu0
        %1182 = vmatprep.mubr.bf16.mxu0 0
        %1183 = vmatmul.mubr.bf16.gmra.mxu0 %v1067
        %v1184 = vpop.f32.mrf.mxu0
        %v1185 = vadd.f32 0.0, %v1184
        %v1186 = vpop.f32.mrf.mxu0
        %v1187 = vpop.f32.mrf.mxu0
        %v1188 = vadd.f32 0.0, %v1187
        %v1189 = vpop.f32.mrf.mxu0
        %1190 = vmatprep.mubr.bf16.mxu0 0
        %1191 = vmatmul.mubr.bf16.gmra.mxu0 %v1070
        %v1192 = vpop.f32.mrf.mxu0
        %v1193 = vadd.f32 0.0, %v1192
        %v1194 = vpop.f32.mrf.mxu0
        %v1195 = vpop.f32.mrf.mxu0
        %v1196 = vadd.f32 0.0, %v1195
        %v1197 = vpop.f32.mrf.mxu0
        %1198 = vmatprep.mubr.bf16.mxu0 0
        %1199 = vmatmul.mubr.bf16.gmra.mxu0 %v1073
        %v1200 = vpop.f32.mrf.mxu0
        %v1201 = vadd.f32 0.0, %v1200
        %v1202 = vpop.f32.mrf.mxu0
        %v1203 = vpop.f32.mrf.mxu0
        %v1204 = vadd.f32 0.0, %v1203
        %v1205 = vpop.f32.mrf.mxu0
        %1206 = vdwg.mxu0
        %v1207 = vadd.f32 %v818, %v1113
        %v1208 = vadd.f32 %v821, %v1116
        %v1209 = vadd.f32 %v826, %v1121
        %v1210 = vadd.f32 %v829, %v1124
        %v1211 = vadd.f32 %v834, %v1129
        %v1212 = vadd.f32 %v837, %v1132
        %v1213 = vadd.f32 %v842, %v1137
        %v1214 = vadd.f32 %v845, %v1140
        %v1215 = vadd.f32 %v850, %v1145
        %v1216 = vadd.f32 %v853, %v1148
        %v1217 = vadd.f32 %v858, %v1153
        %v1218 = vadd.f32 %v861, %v1156
        %v1219 = vadd.f32 %v866, %v1161
        %v1220 = vadd.f32 %v869, %v1164
        %v1221 = vadd.f32 %v874, %v1169
        %v1222 = vadd.f32 %v877, %v1172
        %v1223 = vadd.f32 %v882, %v1177
        %v1224 = vadd.f32 %v885, %v1180
        %v1225 = vadd.f32 %v890, %v1185
        %v1226 = vadd.f32 %v893, %v1188
        %v1227 = vadd.f32 %v898, %v1193
        %v1228 = vadd.f32 %v901, %v1196
        %v1229 = vadd.f32 %v906, %v1201
        %v1230 = vadd.f32 %v909, %v1204
        %v1232 = vlaneseq
        %v1233 = vshrl.u32 %v1232, 7
        %v1234 = vsub.s32 0, %v1233
        %v1235 = vrot.slane %v172, %v1234
        %v1237 = vadd.f32 %v1207, %v1235
        %v1238 = vadd.f32 %v1208, %v1235
        %v1239 = vadd.f32 %v1209, %v1235
        %v1240 = vadd.f32 %v1210, %v1235
        %v1241 = vadd.f32 %v1211, %v1235
        %v1242 = vadd.f32 %v1212, %v1235
        %v1243 = vadd.f32 %v1213, %v1235
        %v1244 = vadd.f32 %v1214, %v1235
        %v1245 = vadd.f32 %v1215, %v1235
        %v1246 = vadd.f32 %v1216, %v1235
        %v1247 = vadd.f32 %v1217, %v1235
        %v1248 = vadd.f32 %v1218, %v1235
        %v1249 = vadd.f32 %v1219, %v1235
        %v1250 = vadd.f32 %v1220, %v1235
        %v1251 = vadd.f32 %v1221, %v1235
        %v1252 = vadd.f32 %v1222, %v1235
        %v1253 = vadd.f32 %v1223, %v1235
        %v1254 = vadd.f32 %v1224, %v1235
        %v1255 = vadd.f32 %v1225, %v1235
        %v1256 = vadd.f32 %v1226, %v1235
        %v1257 = vadd.f32 %v1227, %v1235
        %v1258 = vadd.f32 %v1228, %v1235
        %v1259 = vadd.f32 %v1229, %v1235
        %v1260 = vadd.f32 %v1230, %v1235
        %v1261 = vmax.f32 %v1237, 0.0
        %v1262 = vmax.f32 %v1238, 0.0
        %v1263 = vmax.f32 %v1239, 0.0
        %v1264 = vmax.f32 %v1240, 0.0
        %v1265 = vmax.f32 %v1241, 0.0
        %v1266 = vmax.f32 %v1242, 0.0
        %v1267 = vmax.f32 %v1243, 0.0
        %v1268 = vmax.f32 %v1244, 0.0
        %v1269 = vmax.f32 %v1245, 0.0
        %v1270 = vmax.f32 %v1246, 0.0
        %v1271 = vmax.f32 %v1247, 0.0
        %v1272 = vmax.f32 %v1248, 0.0
        %v1273 = vmax.f32 %v1249, 0.0
        %v1274 = vmax.f32 %v1250, 0.0
        %v1275 = vmax.f32 %v1251, 0.0
        %v1276 = vmax.f32 %v1252, 0.0
        %v1277 = vmax.f32 %v1253, 0.0
        %v1278 = vmax.f32 %v1254, 0.0
        %v1279 = vmax.f32 %v1255, 0.0
        %v1280 = vmax.f32 %v1256, 0.0
        %v1281 = vmax.f32 %v1257, 0.0
        %v1282 = vmax.f32 %v1258, 0.0
        %v1283 = vmax.f32 %v1259, 0.0
        %v1284 = vmax.f32 %v1260, 0.0
        %v1285 = vpack.c.bf16 %v1262, %v1261
        %v1286 = vpack.c.bf16 %v1264, %v1263
        %v1287 = vpack.c.bf16 %v1266, %v1265
        %v1288 = vpack.c.bf16 %v1268, %v1267
        %v1289 = vpack.c.bf16 %v1270, %v1269
        %v1290 = vpack.c.bf16 %v1272, %v1271
        %v1291 = vpack.c.bf16 %v1274, %v1273
        %v1292 = vpack.c.bf16 %v1276, %v1275
        %v1293 = vpack.c.bf16 %v1278, %v1277
        %v1294 = vpack.c.bf16 %v1280, %v1279
        %v1295 = vpack.c.bf16 %v1282, %v1281
        %v1296 = vpack.c.bf16 %v1284, %v1283
        %v1309 = vunpack.c.l.b16 %v1285
        %v1310 = vunpack.c.h.b16 %v1285
        %v1311 = vunpack.c.l.b16 %v1286
        %v1312 = vunpack.c.h.b16 %v1286
        %v1313 = vunpack.c.l.b16 %v1287
        %v1314 = vunpack.c.h.b16 %v1287
        %v1315 = vunpack.c.l.b16 %v1288
        %v1316 = vunpack.c.h.b16 %v1288
        %v1317 = vunpack.c.l.b16 %v1289
        %v1318 = vunpack.c.h.b16 %v1289
        %v1319 = vunpack.c.l.b16 %v1290
        %v1320 = vunpack.c.h.b16 %v1290
        %v1321 = vunpack.c.l.b16 %v1291
        %v1322 = vunpack.c.h.b16 %v1291
        %v1323 = vunpack.c.l.b16 %v1292
        %v1324 = vunpack.c.h.b16 %v1292
        %v1325 = vunpack.c.l.b16 %v1293
        %v1326 = vunpack.c.h.b16 %v1293
        %v1327 = vunpack.c.l.b16 %v1294
        %v1328 = vunpack.c.h.b16 %v1294
        %v1329 = vunpack.c.l.b16 %v1295
        %v1330 = vunpack.c.h.b16 %v1295
        %v1331 = vunpack.c.l.b16 %v1296
        %v1332 = vunpack.c.h.b16 %v1296
        %v1333 = vpack.c.b16 %v1309, %v1309
        %v1334 = vpack.c.b16 %v1310, %v1310
        %v1335 = vpack.c.b16 %v1311, %v1311
        %v1336 = vpack.c.b16 %v1312, %v1312
        %v1337 = vpack.c.b16 %v1313, %v1313
        %v1338 = vpack.c.b16 %v1314, %v1314
        %v1339 = vpack.c.b16 %v1315, %v1315
        %v1340 = vpack.c.b16 %v1316, %v1316
        %v1341 = vpack.c.b16 %v1317, %v1317
        %v1342 = vpack.c.b16 %v1318, %v1318
        %v1343 = vpack.c.b16 %v1319, %v1319
        %v1344 = vpack.c.b16 %v1320, %v1320
        %v1345 = vpack.c.b16 %v1321, %v1321
        %v1346 = vpack.c.b16 %v1322, %v1322
        %v1347 = vpack.c.b16 %v1323, %v1323
        %v1348 = vpack.c.b16 %v1324, %v1324
        %v1349 = vpack.c.b16 %v1325, %v1325
        %v1350 = vpack.c.b16 %v1326, %v1326
        %v1351 = vpack.c.b16 %v1327, %v1327
        %v1352 = vpack.c.b16 %v1328, %v1328
        %v1353 = vpack.c.b16 %v1329, %v1329
        %v1354 = vpack.c.b16 %v1330, %v1330
        %v1355 = vpack.c.b16 %v1331, %v1331
        %v1356 = vpack.c.b16 %v1332, %v1332
        %s1381 = smul.u32 %s179, 12
        %s1382 = smul.addr %s1381, 4
        %s1383 = scalar_lea.vmem %s170, %s1382
        %vm1384 = vcmask 257024
        %1385 = vst.msk [vmem:[%s1383] sm:$0xf] %vm1384, %v1333
        %1386 = vst.msk [vmem:[%s1383 + $0x4] sm:$0xf] %vm1384, %v1334
        %1387 = vst.msk [vmem:[%s1383 + $0x8] sm:$0xf] %vm1384, %v1335
        %1388 = vst.msk [vmem:[%s1383 + $0xc] sm:$0xf] %vm1384, %v1336
        %1389 = vst.msk [vmem:[%s1383 + $0x10] sm:$0xf] %vm1384, %v1337
        %1390 = vst.msk [vmem:[%s1383 + $0x14] sm:$0xf] %vm1384, %v1338
        %1391 = vst.msk [vmem:[%s1383 + $0x18] sm:$0xf] %vm1384, %v1339
        %1392 = vst.msk [vmem:[%s1383 + $0x1c] sm:$0xf] %vm1384, %v1340
        %1393 = vst.msk [vmem:[%s1383 + $0x20] sm:$0xf] %vm1384, %v1341
        %1394 = vst.msk [vmem:[%s1383 + $0x24] sm:$0xf] %vm1384, %v1342
        %1395 = vst.msk [vmem:[%s1383 + $0x28] sm:$0xf] %vm1384, %v1343
        %1396 = vst.msk [vmem:[%s1383 + $0x2c] sm:$0xf] %vm1384, %v1344
        %1397 = vst.msk [vmem:[%s1383 + $0x30] sm:$0xf] %vm1384, %v1345
        %1398 = vst.msk [vmem:[%s1383 + $0x34] sm:$0xf] %vm1384, %v1346
        %1399 = vst.msk [vmem:[%s1383 + $0x38] sm:$0xf] %vm1384, %v1347
        %1400 = vst.msk [vmem:[%s1383 + $0x3c] sm:$0xf] %vm1384, %v1348
        %1401 = vst.msk [vmem:[%s1383 + $0x40] sm:$0xf] %vm1384, %v1349
        %1402 = vst.msk [vmem:[%s1383 + $0x44] sm:$0xf] %vm1384, %v1350
        %1403 = vst.msk [vmem:[%s1383 + $0x48] sm:$0xf] %vm1384, %v1351
        %1404 = vst.msk [vmem:[%s1383 + $0x4c] sm:$0xf] %vm1384, %v1352
        %1405 = vst.msk [vmem:[%s1383 + $0x50] sm:$0xf] %vm1384, %v1353
        %1406 = vst.msk [vmem:[%s1383 + $0x54] sm:$0xf] %vm1384, %v1354
        %1407 = vst.msk [vmem:[%s1383 + $0x58] sm:$0xf] %vm1384, %v1355
        %1408 = vst.msk [vmem:[%s1383 + $0x5c] sm:$0xf] %vm1384, %v1356
      $region37: #{mil_forward.6} parent=31 // loop_footer
        %s178 = sadd.s32 1, %s174
      $region38: #{mil_forward.6} parent=31 // loop_footer_branch
        %173 = sbr.rel target = $region34
      $region39: #{mil_forward.6} parent=31 // loop_exit
        _
      %p1409 = scmp.lt.s32.totalorder %s14, 5
      %s1410 = scalar_select %p1409, %s14, 5
      %s1411 = smul.addr %s1410, 1152
      %s1412 = smul.addr %s1411, 4
      %s1413 = scalar_lea.vmem %s3, %s1412
      // Predicated region
      $region40: #{mil_forward.6} parent=31 // pred_check
        %p1414 = pneg %p100
      $region41: #{mil_forward.6} parent=31 // pred_check_branch
        %1416 = sbr.rel (%p1414) target = $region43
      $region42: #{mil_forward.6} parent=31 // pred_region
        _
      $region43: #{mil_forward.6} parent=31 // pred_fallthru
        _
    $region32: #{mil_forward.6} parent=5 // pred_fallthru
      _
    %p1417 = scmp.le.s32.totalorder 2, %s9
    // Predicated region
    $region44: #{mil_forward.6} parent=5 // pred_check
      %p1418 = pneg %p1417
    $region45: #{mil_forward.6} parent=5 // pred_check_branch
      %1420 = sbr.rel (%p1418) target = $region47
    $region46: #{mil_forward.6} parent=5 // pred_region
      %s1421 = ssub.s32 %s9, 2
      // Predicated region
      $region48: #{mil_forward.6} parent=46 // pred_check
        %p1422 = pneg %p106
      $region49: #{mil_forward.6} parent=46 // pred_check_branch
        %1424 = sbr.rel (%p1422) target = $region51
      $region50: #{mil_forward.6} parent=46 // pred_region
        %p1425 = scmp.lt.s32.totalorder %s15, 5
        %s1426 = scalar_select %p1425, %s15, 5
        %s1427 = smul.addr %s1426, 1152
        %s1428 = smul.addr %s1427, 4
        %s1429 = scalar_lea.vmem %s3, %s1428
      $region51: #{mil_forward.6} parent=46 // pred_fallthru
        _
    $region47: #{mil_forward.6} parent=5 // pred_fallthru
      _
  $region6: #{mil_forward.6} parent=0 // loop_footer
    %s13 = sadd.s32 1, %s9
  $region7: #{mil_forward.6} parent=0 // loop_footer_branch
    %8 = sbr.rel target = $region3
  $region8: #{mil_forward.6} parent=0 // loop_exit
    _

// kernel: mil_forward.7
$region0: #{mil_forward.7}
  #allocation0 [shape = 'u32[]', space=smem, size = 0x4, offset = 0x4, fixed_abs, tag = 'smem constant byte address 0x4 - core index']
  #allocation1 [shape = 'u32[144,128]{1,0:T(1,128)}', space=vmem, size = 0x12000, scoped, tag = 'internal scratch']
  %s0 = inlined_call_operand.vmem [shape: bf16[6,48,50,96], index: 0, kind: input, shape index: {}]
  %s1 = inlined_call_operand.vmem [shape: bf16[3,96,64], index: 1, kind: input, shape index: {}]
  %s2 = inlined_call_operand.vmem [shape: f32[1,64], index: 2, kind: input, shape index: {}]
  %s3 = inlined_call_operand.vmem [shape: bf16[6,48,48,64], index: 3, kind: output, shape index: {}]
  %s4 = sld [smem:[#allocation0]]
  $region52: #{mil_forward.7} parent=0
    _
  %s6 = ssub.s32 1, %s4
  %s7 = scalar_select 0, %s6, %s4
  loop: start=0, step=1, limit=8
  $region2: #{mil_forward.7} parent=0 // loop_pre_header
    _
  $region3: #{mil_forward.7} parent=0 // loop_header
    %s9 = sphi 0, %s13
    %p10 = scmp.ge.s32.totalorder %s9, 8
    %s19 = sphi 0, %s21
    %s22 = sphi 0, %s19
    %s23 = sphi 0, %s22
    %s39 = sphi 0, %s23
    %s43 = sphi 0, %s43
    %s45 = sphi 0, %s43
    %s46 = sphi 0, %s45
    %s60 = sphi 0, %s46
    %s64 = sphi 0, %s64
    %s66 = sphi 0, %s64
    %s67 = sphi 0, %s66
    %s81 = sphi 0, %s67
    %s87 = sphi 0, %s89
    %s90 = sphi 0, %s87
    %s91 = sphi 0, %s90
    %s107 = sphi 0, %s91
  $region4: #{mil_forward.7} parent=0 // loop_header_branch
    %12 = sbr.rel (%p10) target = $region8
  $region5: #{mil_forward.7} parent=0 // loop_body
    %s14 = ssub.s32 %s9, 1
    %s15 = ssub.s32 %s9, 2
    %s16 = sadd.s32 %s9, 1
    %s17 = ssub.s32 %s9, %s16
    %p18 = scmp.eq.s32.totalorder %s17, 0
    %s20 = sadd.s32 %s19, 1
    %s21 = scalar_select %p18, %s19, %s20
    %p24 = pneg %p18
    %p25 = scmp.eq.s32.totalorder %s9, 5
    %p26 = por %p24, %p25
    %p27 = scmp.ne.s32.totalorder %s19, %s22
    %p28 = scmp.eq.s32.totalorder %s9, 0
    %p29 = por %p27, %p28
    %p30 = scmp.ne.s32.totalorder %s19, %s22
    %p31 = scmp.eq.s32.totalorder %s14, 5
    %p32 = por %p30, %p31
    %p33 = scmp.ne.s32.totalorder %s22, %s23
    %p34 = scmp.eq.s32.totalorder %s14, 0
    %p35 = por %p33, %p34
    %p36 = scmp.ne.s32.totalorder %s22, %s23
    %p37 = scmp.eq.s32.totalorder %s15, 5
    %p38 = por %p36, %p37
    %p40 = scmp.ne.s32.totalorder %s23, %s39
    %p41 = scmp.eq.s32.totalorder %s15, 0
    %p42 = por %p40, %p41
    %s44 = sadd.s32 %s43, 1
    %p47 = scmp.eq.s32.totalorder %s9, 5
    %p48 = scmp.ne.s32.totalorder %s43, %s45
    %p49 = scmp.eq.s32.totalorder %s9, 0
    %p50 = por %p48, %p49
    %p51 = scmp.ne.s32.totalorder %s43, %s45
    %p52 = scmp.eq.s32.totalorder %s14, 5
    %p53 = por %p51, %p52
    %p54 = scmp.ne.s32.totalorder %s45, %s46
    %p55 = scmp.eq.s32.totalorder %s14, 0
    %p56 = por %p54, %p55
    %p57 = scmp.ne.s32.totalorder %s45, %s46
    %p58 = scmp.eq.s32.totalorder %s15, 5
    %p59 = por %p57, %p58
    %p61 = scmp.ne.s32.totalorder %s46, %s60
    %p62 = scmp.eq.s32.totalorder %s15, 0
    %p63 = por %p61, %p62
    %s65 = sadd.s32 %s64, 1
    %p68 = scmp.eq.s32.totalorder %s9, 5
    %p69 = scmp.ne.s32.totalorder %s64, %s66
    %p70 = scmp.eq.s32.totalorder %s9, 0
    %p71 = por %p69, %p70
    %p72 = scmp.ne.s32.totalorder %s64, %s66
    %p73 = scmp.eq.s32.totalorder %s14, 5
    %p74 = por %p72, %p73
    %p75 = scmp.ne.s32.totalorder %s66, %s67
    %p76 = scmp.eq.s32.totalorder %s14, 0
    %p77 = por %p75, %p76
    %p78 = scmp.ne.s32.totalorder %s66, %s67
    %p79 = scmp.eq.s32.totalorder %s15, 5
    %p80 = por %p78, %p79
    %p82 = scmp.ne.s32.totalorder %s67, %s81
    %p83 = scmp.eq.s32.totalorder %s15, 0
    %p84 = por %p82, %p83
    %s85 = ssub.s32 %s9, %s16
    %p86 = scmp.eq.s32.totalorder %s85, 0
    %s88 = sadd.s32 %s87, 1
    %s89 = scalar_select %p86, %s87, %s88
    %p92 = pneg %p86
    %p93 = scmp.eq.s32.totalorder %s9, 5
    %p94 = por %p92, %p93
    %p95 = scmp.ne.s32.totalorder %s87, %s90
    %p96 = scmp.eq.s32.totalorder %s9, 0
    %p97 = por %p95, %p96
    %p98 = scmp.ne.s32.totalorder %s87, %s90
    %p99 = scmp.eq.s32.totalorder %s14, 5
    %p100 = por %p98, %p99
    %p101 = scmp.ne.s32.totalorder %s90, %s91
    %p102 = scmp.eq.s32.totalorder %s14, 0
    %p103 = por %p101, %p102
    %p104 = scmp.ne.s32.totalorder %s90, %s91
    %p105 = scmp.eq.s32.totalorder %s15, 5
    %p106 = por %p104, %p105
    %p108 = scmp.ne.s32.totalorder %s91, %s107
    %p109 = scmp.eq.s32.totalorder %s15, 0
    %p110 = por %p108, %p109
    %p111 = scmp.le.s32.totalorder 1, %s9
    %p112 = scmp.lt.s32.totalorder %s9, 7
    %p113 = pnand %p111, %p112
    %p114 = pneg %p113
    // Predicated region
    $region9: #{mil_forward.7} parent=5 // pred_check
      _
    $region10: #{mil_forward.7} parent=5 // pred_check_branch
      %116 = sbr.rel (%p113) target = $region12
    $region11: #{mil_forward.7} parent=5 // pred_region
      %s117 = ssub.s32 %s9, 1
      // Predicated region
      $region13: #{mil_forward.7} parent=11 // pred_check
        %p118 = pneg %p56
      $region14: #{mil_forward.7} parent=11 // pred_check_branch
        %120 = sbr.rel (%p118) target = $region16
      $region15: #{mil_forward.7} parent=11 // pred_region
        _
      $region16: #{mil_forward.7} parent=11 // pred_fallthru
        _
      // Predicated region
      $region17: #{mil_forward.7} parent=11 // pred_check
        %p121 = pneg %p77
      $region18: #{mil_forward.7} parent=11 // pred_check_branch
        %123 = sbr.rel (%p121) target = $region20
      $region19: #{mil_forward.7} parent=11 // pred_region
        _
      $region20: #{mil_forward.7} parent=11 // pred_fallthru
        _
    $region12: #{mil_forward.7} parent=5 // pred_fallthru
      _
    %p124 = scmp.lt.s32.totalorder %s9, 6
    // Predicated region
    $region21: #{mil_forward.7} parent=5 // pred_check
      %p125 = pneg %p124
    $region22: #{mil_forward.7} parent=5 // pred_check_branch
      %127 = sbr.rel (%p125) target = $region24
    $region23: #{mil_forward.7} parent=5 // pred_region
      // Predicated region
      $region25: #{mil_forward.7} parent=23 // pred_check
        %p128 = pneg %p29
      $region26: #{mil_forward.7} parent=23 // pred_check_branch
        %130 = sbr.rel (%p128) target = $region28
      $region27: #{mil_forward.7} parent=23 // pred_region
        %p131 = scmp.lt.s32.totalorder %s9, 5
        %s132 = scalar_select %p131, %s9, 5
        %s133 = smul.addr %s132, 336
        %s134 = smul.addr %s133, 4
        %s135 = scalar_lea.vmem %s0, %s134
      $region28: #{mil_forward.7} parent=23 // pred_fallthru
        _
    $region24: #{mil_forward.7} parent=5 // pred_fallthru
      _
    %p136 = scmp.le.s32.totalorder 1, %s9
    %p137 = scmp.lt.s32.totalorder %s9, 7
    %p138 = pnand %p136, %p137
    %p139 = pneg %p138
    // Predicated region
    $region29: #{mil_forward.7} parent=5 // pred_check
      _
    $region30: #{mil_forward.7} parent=5 // pred_check_branch
      %141 = sbr.rel (%p138) target = $region32
    $region31: #{mil_forward.7} parent=5 // pred_region
      %s142 = ssub.s32 %s9, 1
      %p143 = scmp.lt.s32.totalorder %s14, 5
      %s144 = scalar_select %p143, %s14, 5
      %s145 = smul.addr %s144, 336
      %s146 = smul.addr %s145, 4
      %s147 = scalar_lea.vmem %s0, %s146
      %p148 = pneg %p35
      %p149 = pneg %p32
      %p150 = pneg %p56
      %p151 = pneg %p53
      %p152 = pneg %p77
      %p153 = pneg %p74
      %p154 = pneg %p103
      %p155 = pneg %p100
      %p156 = scmp.lt.s32.totalorder %s14, 5
      %s157 = scalar_select %p156, %s14, 5
      %s158 = smul.addr %s157, 288
      %s159 = smul.addr %s158, 4
      %s160 = scalar_lea.vmem %s3, %s159
      %p161 = scmp.lt.s32.totalorder %s14, 5
      %s162 = scalar_select %p161, %s14, 5
      %s163 = smul.addr %s162, 336
      %s164 = smul.addr %s163, 4
      %s165 = scalar_lea.vmem %s0, %s164
      %p166 = scmp.lt.s32.totalorder %s14, 5
      %s167 = scalar_select %p166, %s14, 5
      %s168 = smul.addr %s167, 288
      %s169 = smul.addr %s168, 4
      %s170 = scalar_lea.vmem %s3, %s169
      %v172 = vld [vmem:[%s2] sm:$0x1]
      loop: start=0, step=1, limit=12
      $region33: #{mil_forward.7} parent=31 // loop_pre_header
        _
      $region34: #{mil_forward.7} parent=31 // loop_header
        %s174 = sphi 0, %s178
        %p175 = scmp.ge.s32.totalorder %s174, 12
      $region35: #{mil_forward.7} parent=31 // loop_header_branch
        %177 = sbr.rel (%p175) target = $region39
      $region36: #{mil_forward.7} parent=31 // loop_body
        %s179 = smul.u32 %s174, 4
        %s180 = smul.u32 %s179, 7
        %s181 = smul.addr %s180, 4
        %s182 = scalar_lea.vmem %s165, %s181
        %v183 = vld [vmem:[%s182] sm:$0xf]
        %v184 = vld [vmem:[%s182 + $0x4] sm:$0xf]
        %v185 = vld [vmem:[%s182 + $0x8] sm:$0xf]
        %v186 = vld [vmem:[%s182 + $0xc] sm:$0xf]
        %v187 = vld [vmem:[%s182 + $0x10] sm:$0xf]
        %v188 = vld [vmem:[%s182 + $0x14] sm:$0xf]
        %v189 = vld [vmem:[%s182 + $0x1c] sm:$0xf]
        %v190 = vld [vmem:[%s182 + $0x20] sm:$0xf]
        %v191 = vld [vmem:[%s182 + $0x24] sm:$0xf]
        %v192 = vld [vmem:[%s182 + $0x28] sm:$0xf]
        %v193 = vld [vmem:[%s182 + $0x2c] sm:$0xf]
        %v194 = vld [vmem:[%s182 + $0x30] sm:$0xf]
        %v195 = vld [vmem:[%s182 + $0x38] sm:$0xf]
        %v196 = vld [vmem:[%s182 + $0x3c] sm:$0xf]
        %v197 = vld [vmem:[%s182 + $0x40] sm:$0xf]
        %v198 = vld [vmem:[%s182 + $0x44] sm:$0xf]
        %v199 = vld [vmem:[%s182 + $0x48] sm:$0xf]
        %v200 = vld [vmem:[%s182 + $0x4c] sm:$0xf]
        %v201 = vld [vmem:[%s182 + $0x54] sm:$0xf]
        %v202 = vld [vmem:[%s182 + $0x58] sm:$0xf]
        %v203 = vld [vmem:[%s182 + $0x5c] sm:$0xf]
        %v204 = vld [vmem:[%s182 + $0x60] sm:$0xf]
        %v205 = vld [vmem:[%s182 + $0x64] sm:$0xf]
        %v206 = vld [vmem:[%s182 + $0x68] sm:$0xf]
        %v207 = vld [vmem:[%s1] sm:$0xf]
        %v208 = vld [vmem:[%s1 + $0x4] sm:$0xf]
        %v209 = vld [vmem:[%s1 + $0x8] sm:$0xf]
        %v210 = vld [vmem:[%s1 + $0xc] sm:$0xf]
        %v211 = vld [vmem:[%s1 + $0x10] sm:$0xf]
        %v212 = vld [vmem:[%s1 + $0x14] sm:$0xf]
        %v213 = vld [vmem:[%s1 + $0x18] sm:$0xf]
        %v214 = vld [vmem:[%s1 + $0x1c] sm:$0xf]
        %v215 = vld [vmem:[%s1 + $0x20] sm:$0xf]
        %v216 = vld [vmem:[%s1 + $0x24] sm:$0xf]
        %v217 = vld [vmem:[%s1 + $0x28] sm:$0xf]
        %v218 = vld [vmem:[%s1 + $0x2c] sm:$0xf]
        %v219 = vld [vmem:[%s182 + $0x18] sm:$0x1]
        %v220 = vld [vmem:[%s182 + $0x34] sm:$0x1]
        %v221 = vld [vmem:[%s182 + $0x50] sm:$0x1]
        %v222 = vld [vmem:[%s182 + $0x6c] sm:$0x1]
        %vm223 = vsmask.f32 3328
        %vm224 = vsmask.f32 7440
        %vm225 = vmor %vm223, %vm224
        %v227 = vshrl.u32 %v183, 16
        %v229 = vrot.slane %v227, 4
        %v230 = vshll.u32 %v183, 16
        %v232 = vrot.slane %v230, 5
        %v233 = vor.u32 %v229, %v232
        %v234 = vrot.slane %v233, 4
        %v236 = vshll.u32 %v184, 16
        %v238 = vrot.slane %v236, 5
        %v239 = vsel %vm225, %v234, %v238
        %v240 = vshrl.u32 %v184, 16
        %v242 = vrot.slane %v240, 4
        %v243 = vor.u32 %v242, %v238
        %v244 = vrot.slane %v243, 4
        %v246 = vshll.u32 %v185, 16
        %v248 = vrot.slane %v246, 5
        %v249 = vsel %vm225, %v244, %v248
        %v250 = vshrl.u32 %v185, 16
        %v252 = vrot.slane %v250, 4
        %v253 = vor.u32 %v252, %v248
        %v254 = vrot.slane %v253, 4
        %v256 = vshll.u32 %v186, 16
        %v258 = vrot.slane %v256, 5
        %v259 = vsel %vm225, %v254, %v258
        %v260 = vshrl.u32 %v186, 16
        %v262 = vrot.slane %v260, 4
        %v263 = vor.u32 %v262, %v258
        %v264 = vrot.slane %v263, 4
        %v266 = vshll.u32 %v187, 16
        %v268 = vrot.slane %v266, 5
        %v269 = vsel %vm225, %v264, %v268
        %v270 = vshrl.u32 %v187, 16
        %v272 = vrot.slane %v270, 4
        %v273 = vor.u32 %v272, %v268
        %v274 = vrot.slane %v273, 4
        %v276 = vshll.u32 %v188, 16
        %v278 = vrot.slane %v276, 5
        %v279 = vsel %vm225, %v274, %v278
        %v280 = vshrl.u32 %v188, 16
        %v282 = vrot.slane %v280, 4
        %v283 = vor.u32 %v282, %v278
        %v284 = vrot.slane %v283, 4
        %v286 = vshll.u32 %v219, 16
        %v288 = vrot.slane %v286, 5
        %v289 = vsel %vm225, %v284, %v288
        %v291 = vshrl.u32 %v189, 16
        %v293 = vrot.slane %v291, 4
        %v294 = vshll.u32 %v189, 16
        %v296 = vrot.slane %v294, 5
        %v297 = vor.u32 %v293, %v296
        %v298 = vrot.slane %v297, 4
        %v300 = vshll.u32 %v190, 16
        %v302 = vrot.slane %v300, 5
        %v303 = vsel %vm225, %v298, %v302
        %v304 = vshrl.u32 %v190, 16
        %v306 = vrot.slane %v304, 4
        %v307 = vor.u32 %v306, %v302
        %v308 = vrot.slane %v307, 4
        %v310 = vshll.u32 %v191, 16
        %v312 = vrot.slane %v310, 5
        %v313 = vsel %vm225, %v308, %v312
        %v314 = vshrl.u32 %v191, 16
        %v316 = vrot.slane %v314, 4
        %v317 = vor.u32 %v316, %v312
        %v318 = vrot.slane %v317, 4
        %v320 = vshll.u32 %v192, 16
        %v322 = vrot.slane %v320, 5
        %v323 = vsel %vm225, %v318, %v322
        %v324 = vshrl.u32 %v192, 16
        %v326 = vrot.slane %v324, 4
        %v327 = vor.u32 %v326, %v322
        %v328 = vrot.slane %v327, 4
        %v330 = vshll.u32 %v193, 16
        %v332 = vrot.slane %v330, 5
        %v333 = vsel %vm225, %v328, %v332
        %v334 = vshrl.u32 %v193, 16
        %v336 = vrot.slane %v334, 4
        %v337 = vor.u32 %v336, %v332
        %v338 = vrot.slane %v337, 4
        %v340 = vshll.u32 %v194, 16
        %v342 = vrot.slane %v340, 5
        %v343 = vsel %vm225, %v338, %v342
        %v344 = vshrl.u32 %v194, 16
        %v346 = vrot.slane %v344, 4
        %v347 = vor.u32 %v346, %v342
        %v348 = vrot.slane %v347, 4
        %v350 = vshll.u32 %v220, 16
        %v352 = vrot.slane %v350, 5
        %v353 = vsel %vm225, %v348, %v352
        %v355 = vshrl.u32 %v195, 16
        %v357 = vrot.slane %v355, 4
        %v358 = vshll.u32 %v195, 16
        %v360 = vrot.slane %v358, 5
        %v361 = vor.u32 %v357, %v360
        %v362 = vrot.slane %v361, 4
        %v364 = vshll.u32 %v196, 16
        %v366 = vrot.slane %v364, 5
        %v367 = vsel %vm225, %v362, %v366
        %v368 = vshrl.u32 %v196, 16
        %v370 = vrot.slane %v368, 4
        %v371 = vor.u32 %v370, %v366
        %v372 = vrot.slane %v371, 4
        %v374 = vshll.u32 %v197, 16
        %v376 = vrot.slane %v374, 5
        %v377 = vsel %vm225, %v372, %v376
        %v378 = vshrl.u32 %v197, 16
        %v380 = vrot.slane %v378, 4
        %v381 = vor.u32 %v380, %v376
        %v382 = vrot.slane %v381, 4
        %v384 = vshll.u32 %v198, 16
        %v386 = vrot.slane %v384, 5
        %v387 = vsel %vm225, %v382, %v386
        %v388 = vshrl.u32 %v198, 16
        %v390 = vrot.slane %v388, 4
        %v391 = vor.u32 %v390, %v386
        %v392 = vrot.slane %v391, 4
        %v394 = vshll.u32 %v199, 16
        %v396 = vrot.slane %v394, 5
        %v397 = vsel %vm225, %v392, %v396
        %v398 = vshrl.u32 %v199, 16
        %v400 = vrot.slane %v398, 4
        %v401 = vor.u32 %v400, %v396
        %v402 = vrot.slane %v401, 4
        %v404 = vshll.u32 %v200, 16
        %v406 = vrot.slane %v404, 5
        %v407 = vsel %vm225, %v402, %v406
        %v408 = vshrl.u32 %v200, 16
        %v410 = vrot.slane %v408, 4
        %v411 = vor.u32 %v410, %v406
        %v412 = vrot.slane %v411, 4
        %v414 = vshll.u32 %v221, 16
        %v416 = vrot.slane %v414, 5
        %v417 = vsel %vm225, %v412, %v416
        %v419 = vshrl.u32 %v201, 16
        %v421 = vrot.slane %v419, 4
        %v422 = vshll.u32 %v201, 16
        %v424 = vrot.slane %v422, 5
        %v425 = vor.u32 %v421, %v424
        %v426 = vrot.slane %v425, 4
        %v428 = vshll.u32 %v202, 16
        %v430 = vrot.slane %v428, 5
        %v431 = vsel %vm225, %v426, %v430
        %v432 = vshrl.u32 %v202, 16
        %v434 = vrot.slane %v432, 4
        %v435 = vor.u32 %v434, %v430
        %v436 = vrot.slane %v435, 4
        %v438 = vshll.u32 %v203, 16
        %v440 = vrot.slane %v438, 5
        %v441 = vsel %vm225, %v436, %v440
        %v442 = vshrl.u32 %v203, 16
        %v444 = vrot.slane %v442, 4
        %v445 = vor.u32 %v444, %v440
        %v446 = vrot.slane %v445, 4
        %v448 = vshll.u32 %v204, 16
        %v450 = vrot.slane %v448, 5
        %v451 = vsel %vm225, %v446, %v450
        %v452 = vshrl.u32 %v204, 16
        %v454 = vrot.slane %v452, 4
        %v455 = vor.u32 %v454, %v450
        %v456 = vrot.slane %v455, 4
        %v458 = vshll.u32 %v205, 16
        %v460 = vrot.slane %v458, 5
        %v461 = vsel %vm225, %v456, %v460
        %v462 = vshrl.u32 %v205, 16
        %v464 = vrot.slane %v462, 4
        %v465 = vor.u32 %v464, %v460
        %v466 = vrot.slane %v465, 4
        %v468 = vshll.u32 %v206, 16
        %v470 = vrot.slane %v468, 5
        %v471 = vsel %vm225, %v466, %v470
        %v472 = vshrl.u32 %v206, 16
        %v474 = vrot.slane %v472, 4
        %v475 = vor.u32 %v474, %v470
        %v476 = vrot.slane %v475, 4
        %v478 = vshll.u32 %v222, 16
        %v480 = vrot.slane %v478, 5
        %v481 = vsel %vm225, %v476, %v480
        %s482 = scalar_lea.vmem %s1, 48
        %v483 = vld [vmem:[%s482] sm:$0xf]
        %v484 = vld [vmem:[%s482 + $0x4] sm:$0xf]
        %v485 = vld [vmem:[%s482 + $0x8] sm:$0xf]
        %v486 = vld [vmem:[%s482 + $0xc] sm:$0xf]
        %v487 = vld [vmem:[%s482 + $0x10] sm:$0xf]
        %v488 = vld [vmem:[%s482 + $0x14] sm:$0xf]
        %v489 = vld [vmem:[%s482 + $0x18] sm:$0xf]
        %v490 = vld [vmem:[%s482 + $0x1c] sm:$0xf]
        %v491 = vld [vmem:[%s482 + $0x20] sm:$0xf]
        %v492 = vld [vmem:[%s482 + $0x24] sm:$0xf]
        %v493 = vld [vmem:[%s482 + $0x28] sm:$0xf]
        %v494 = vld [vmem:[%s482 + $0x2c] sm:$0xf]
        %v495 = vunpack.c.l.b16 %v239
        %v496 = vunpack.c.l.b16 %v249
        %v497 = vunpack.c.l.b16 %v259
        %v498 = vunpack.c.l.b16 %v269
        %v499 = vunpack.c.l.b16 %v279
        %v500 = vunpack.c.l.b16 %v289
        %v501 = vunpack.c.l.b16 %v303
        %v502 = vunpack.c.l.b16 %v313
        %v503 = vunpack.c.l.b16 %v323
        %v504 = vunpack.c.l.b16 %v333
        %v505 = vunpack.c.l.b16 %v343
        %v506 = vunpack.c.l.b16 %v353
        %v507 = vunpack.c.l.b16 %v367
        %v508 = vunpack.c.l.b16 %v377
        %v509 = vunpack.c.l.b16 %v387
        %v510 = vunpack.c.l.b16 %v397
        %v511 = vunpack.c.l.b16 %v407
        %v512 = vunpack.c.l.b16 %v417
        %v513 = vunpack.c.l.b16 %v431
        %v514 = vunpack.c.l.b16 %v441
        %v515 = vunpack.c.l.b16 %v451
        %v516 = vunpack.c.l.b16 %v461
        %v517 = vunpack.c.l.b16 %v471
        %v518 = vunpack.c.l.b16 %v481
        %v519 = vpack.c.b16 %v496, %v495
        %v520 = vpack.c.b16 %v498, %v497
        %v521 = vpack.c.b16 %v500, %v499
        %v522 = vpack.c.b16 %v502, %v501
        %v523 = vpack.c.b16 %v504, %v503
        %v524 = vpack.c.b16 %v506, %v505
        %v525 = vpack.c.b16 %v508, %v507
        %v526 = vpack.c.b16 %v510, %v509
        %v527 = vpack.c.b16 %v512, %v511
        %v528 = vpack.c.b16 %v514, %v513
        %v529 = vpack.c.b16 %v516, %v515
        %v530 = vpack.c.b16 %v518, %v517
        %v543 = vunpack.c.l.b16 %v483
        %v544 = vunpack.c.l.b16 %v484
        %v545 = vunpack.c.l.b16 %v485
        %v546 = vunpack.c.l.b16 %v486
        %v547 = vunpack.c.l.b16 %v487
        %v548 = vunpack.c.l.b16 %v488
        %v549 = vunpack.c.l.b16 %v489
        %v550 = vunpack.c.l.b16 %v490
        %v551 = vunpack.c.l.b16 %v491
        %v552 = vunpack.c.l.b16 %v492
        %v553 = vunpack.c.l.b16 %v493
        %v554 = vunpack.c.l.b16 %v494
        %v555 = vpack.c.b16 %v544, %v543
        %v556 = vpack.c.b16 %v546, %v545
        %v557 = vpack.c.b16 %v548, %v547
        %v558 = vpack.c.b16 %v550, %v549
        %v559 = vpack.c.b16 %v552, %v551
        %v560 = vpack.c.b16 %v554, %v553
        %vm567 = vcmask 785408
        %v569 = vsel %vm567, %v519, 0
        %v572 = vsel %vm567, %v520, 0
        %v575 = vsel %vm567, %v521, 0
        %v578 = vsel %vm567, %v522, 0
        %v581 = vsel %vm567, %v523, 0
        %v584 = vsel %vm567, %v524, 0
        %v587 = vsel %vm567, %v525, 0
        %v590 = vsel %vm567, %v526, 0
        %v593 = vsel %vm567, %v527, 0
        %v596 = vsel %vm567, %v528, 0
        %v599 = vsel %vm567, %v529, 0
        %v602 = vsel %vm567, %v530, 0
        %604 = vmatprep.subr.bf16.mxu0 0
        %605 = vmatpush1.bf16.msra.mxu0 0
        %606 = vmatprep.subr.bf16.mxu0 0
        %607 = vmatpush1.bf16.msra.mxu0 0
        %608 = vmatprep.subr.bf16.mxu0 0
        %609 = vmatpush1.bf16.msra.mxu0 %v560
        %610 = vmatprep.subr.bf16.mxu0 0
        %611 = vmatpush1.bf16.msra.mxu0 %v559
        %612 = vmatprep.subr.bf16.mxu0 0
        %613 = vmatpush1.bf16.msra.mxu0 %v558
        %614 = vmatprep.subr.bf16.mxu0 0
        %615 = vmatpush1.bf16.msra.mxu0 %v557
        %616 = vmatprep.subr.bf16.mxu0 0
        %617 = vmatpush1.bf16.msra.mxu0 %v556
        %618 = vmatprep.subr.bf16.mxu0 0
        %619 = vmatpush1.bf16.msra.mxu0 %v555
        %620 = vmatprep.subr.bf16.mxu0 0
        %621 = vmatpush2.bf16.msra.mxu0 0
        %622 = vmatprep.subr.bf16.mxu0 0
        %623 = vmatpush2.bf16.msra.mxu0 0
        %624 = vmatprep.subr.bf16.mxu0 0
        %625 = vmatpush2.bf16.msra.mxu0 0
        %626 = vmatprep.subr.bf16.mxu0 0
        %627 = vmatpush2.bf16.msra.mxu0 0
        %628 = vmatprep.subr.bf16.mxu0 0
        %629 = vmatpush2.bf16.msra.mxu0 0
        %630 = vmatprep.subr.bf16.mxu0 0
        %631 = vmatpush2.bf16.msra.mxu0 0
        %632 = vmatprep.subr.bf16.mxu0 0
        %633 = vmatpush2.bf16.msra.mxu0 0
        %634 = vmatprep.subr.bf16.mxu0 0
        %635 = vmatpush2.bf16.msra.mxu0 0
        %636 = vmatprep.mubr.bf16.mxu0 0
        %637 = vmatmul.mubr.bf16.gmra.mxu0 %v569
        %v638 = vpop.f32.mrf.mxu0
        %v639 = vadd.f32 0.0, %v638
        %v640 = vpop.f32.mrf.mxu0
        %v641 = vpop.f32.mrf.mxu0
        %v642 = vadd.f32 0.0, %v641
        %v643 = vpop.f32.mrf.mxu0
        %644 = vmatprep.mubr.bf16.mxu0 0
        %645 = vmatmul.mubr.bf16.gmra.mxu0 %v572
        %v646 = vpop.f32.mrf.mxu0
        %v647 = vadd.f32 0.0, %v646
        %v648 = vpop.f32.mrf.mxu0
        %v649 = vpop.f32.mrf.mxu0
        %v650 = vadd.f32 0.0, %v649
        %v651 = vpop.f32.mrf.mxu0
        %652 = vmatprep.mubr.bf16.mxu0 0
        %653 = vmatmul.mubr.bf16.gmra.mxu0 %v575
        %v654 = vpop.f32.mrf.mxu0
        %v655 = vadd.f32 0.0, %v654
        %v656 = vpop.f32.mrf.mxu0
        %v657 = vpop.f32.mrf.mxu0
        %v658 = vadd.f32 0.0, %v657
        %v659 = vpop.f32.mrf.mxu0
        %660 = vmatprep.mubr.bf16.mxu0 0
        %661 = vmatmul.mubr.bf16.gmra.mxu0 %v578
        %v662 = vpop.f32.mrf.mxu0
        %v663 = vadd.f32 0.0, %v662
        %v664 = vpop.f32.mrf.mxu0
        %v665 = vpop.f32.mrf.mxu0
        %v666 = vadd.f32 0.0, %v665
        %v667 = vpop.f32.mrf.mxu0
        %668 = vmatprep.mubr.bf16.mxu0 0
        %669 = vmatmul.mubr.bf16.gmra.mxu0 %v581
        %v670 = vpop.f32.mrf.mxu0
        %v671 = vadd.f32 0.0, %v670
        %v672 = vpop.f32.mrf.mxu0
        %v673 = vpop.f32.mrf.mxu0
        %v674 = vadd.f32 0.0, %v673
        %v675 = vpop.f32.mrf.mxu0
        %676 = vmatprep.mubr.bf16.mxu0 0
        %677 = vmatmul.mubr.bf16.gmra.mxu0 %v584
        %v678 = vpop.f32.mrf.mxu0
        %v679 = vadd.f32 0.0, %v678
        %v680 = vpop.f32.mrf.mxu0
        %v681 = vpop.f32.mrf.mxu0
        %v682 = vadd.f32 0.0, %v681
        %v683 = vpop.f32.mrf.mxu0
        %684 = vmatprep.mubr.bf16.mxu0 0
        %685 = vmatmul.mubr.bf16.gmra.mxu0 %v587
        %v686 = vpop.f32.mrf.mxu0
        %v687 = vadd.f32 0.0, %v686
        %v688 = vpop.f32.mrf.mxu0
        %v689 = vpop.f32.mrf.mxu0
        %v690 = vadd.f32 0.0, %v689
        %v691 = vpop.f32.mrf.mxu0
        %692 = vmatprep.mubr.bf16.mxu0 0
        %693 = vmatmul.mubr.bf16.gmra.mxu0 %v590
        %v694 = vpop.f32.mrf.mxu0
        %v695 = vadd.f32 0.0, %v694
        %v696 = vpop.f32.mrf.mxu0
        %v697 = vpop.f32.mrf.mxu0
        %v698 = vadd.f32 0.0, %v697
        %v699 = vpop.f32.mrf.mxu0
        %700 = vmatprep.mubr.bf16.mxu0 0
        %701 = vmatmul.mubr.bf16.gmra.mxu0 %v593
        %v702 = vpop.f32.mrf.mxu0
        %v703 = vadd.f32 0.0, %v702
        %v704 = vpop.f32.mrf.mxu0
        %v705 = vpop.f32.mrf.mxu0
        %v706 = vadd.f32 0.0, %v705
        %v707 = vpop.f32.mrf.mxu0
        %708 = vmatprep.mubr.bf16.mxu0 0
        %709 = vmatmul.mubr.bf16.gmra.mxu0 %v596
        %v710 = vpop.f32.mrf.mxu0
        %v711 = vadd.f32 0.0, %v710
        %v712 = vpop.f32.mrf.mxu0
        %v713 = vpop.f32.mrf.mxu0
        %v714 = vadd.f32 0.0, %v713
        %v715 = vpop.f32.mrf.mxu0
        %716 = vmatprep.mubr.bf16.mxu0 0
        %717 = vmatmul.mubr.bf16.gmra.mxu0 %v599
        %v718 = vpop.f32.mrf.mxu0
        %v719 = vadd.f32 0.0, %v718
        %v720 = vpop.f32.mrf.mxu0
        %v721 = vpop.f32.mrf.mxu0
        %v722 = vadd.f32 0.0, %v721
        %v723 = vpop.f32.mrf.mxu0
        %724 = vmatprep.mubr.bf16.mxu0 0
        %725 = vmatmul.mubr.bf16.gmra.mxu0 %v602
        %v726 = vpop.f32.mrf.mxu0
        %v727 = vadd.f32 0.0, %v726
        %v728 = vpop.f32.mrf.mxu0
        %v729 = vpop.f32.mrf.mxu0
        %v730 = vadd.f32 0.0, %v729
        %v731 = vpop.f32.mrf.mxu0
        %732 = vdwg.mxu0
        %v757 = vunpack.c.l.b16 %v183
        %v758 = vunpack.c.l.b16 %v184
        %v759 = vunpack.c.l.b16 %v185
        %v760 = vunpack.c.l.b16 %v186
        %v761 = vunpack.c.l.b16 %v187
        %v762 = vunpack.c.l.b16 %v188
        %v763 = vunpack.c.l.b16 %v189
        %v764 = vunpack.c.l.b16 %v190
        %v765 = vunpack.c.l.b16 %v191
        %v766 = vunpack.c.l.b16 %v192
        %v767 = vunpack.c.l.b16 %v193
        %v768 = vunpack.c.l.b16 %v194
        %v769 = vunpack.c.l.b16 %v195
        %v770 = vunpack.c.l.b16 %v196
        %v771 = vunpack.c.l.b16 %v197
        %v772 = vunpack.c.l.b16 %v198
        %v773 = vunpack.c.l.b16 %v199
        %v774 = vunpack.c.l.b16 %v200
        %v775 = vunpack.c.l.b16 %v201
        %v776 = vunpack.c.l.b16 %v202
        %v777 = vunpack.c.l.b16 %v203
        %v778 = vunpack.c.l.b16 %v204
        %v779 = vunpack.c.l.b16 %v205
        %v780 = vunpack.c.l.b16 %v206
        %v781 = vpack.c.b16 %v758, %v757
        %v782 = vpack.c.b16 %v760, %v759
        %v783 = vpack.c.b16 %v762, %v761
        %v784 = vpack.c.b16 %v764, %v763
        %v785 = vpack.c.b16 %v766, %v765
        %v786 = vpack.c.b16 %v768, %v767
        %v787 = vpack.c.b16 %v770, %v769
        %v788 = vpack.c.b16 %v772, %v771
        %v789 = vpack.c.b16 %v774, %v773
        %v790 = vpack.c.b16 %v776, %v775
        %v791 = vpack.c.b16 %v778, %v777
        %v792 = vpack.c.b16 %v780, %v779
        %v805 = vunpack.c.l.b16 %v207
        %v806 = vunpack.c.l.b16 %v208
        %v807 = vunpack.c.l.b16 %v209
        %v808 = vunpack.c.l.b16 %v210
        %v809 = vunpack.c.l.b16 %v211
        %v810 = vunpack.c.l.b16 %v212
        %v811 = vunpack.c.l.b16 %v213
        %v812 = vunpack.c.l.b16 %v214
        %v813 = vunpack.c.l.b16 %v215
        %v814 = vunpack.c.l.b16 %v216
        %v815 = vunpack.c.l.b16 %v217
        %v816 = vunpack.c.l.b16 %v218
        %v817 = vpack.c.b16 %v806, %v805
        %v818 = vpack.c.b16 %v808, %v807
        %v819 = vpack.c.b16 %v810, %v809
        %v820 = vpack.c.b16 %v812, %v811
        %v821 = vpack.c.b16 %v814, %v813
        %v822 = vpack.c.b16 %v816, %v815
        %v830 = vsel %vm567, %v781, 0
        %v833 = vsel %vm567, %v782, 0
        %v836 = vsel %vm567, %v783, 0
        %v839 = vsel %vm567, %v784, 0
        %v842 = vsel %vm567, %v785, 0
        %v845 = vsel %vm567, %v786, 0
        %v848 = vsel %vm567, %v787, 0
        %v851 = vsel %vm567, %v788, 0
        %v854 = vsel %vm567, %v789, 0
        %v857 = vsel %vm567, %v790, 0
        %v860 = vsel %vm567, %v791, 0
        %v863 = vsel %vm567, %v792, 0
        %865 = vmatprep.subr.bf16.mxu0 0
        %866 = vmatpush1.bf16.msra.mxu0 0
        %867 = vmatprep.subr.bf16.mxu0 0
        %868 = vmatpush1.bf16.msra.mxu0 0
        %869 = vmatprep.subr.bf16.mxu0 0
        %870 = vmatpush1.bf16.msra.mxu0 %v822
        %871 = vmatprep.subr.bf16.mxu0 0
        %872 = vmatpush1.bf16.msra.mxu0 %v821
        %873 = vmatprep.subr.bf16.mxu0 0
        %874 = vmatpush1.bf16.msra.mxu0 %v820
        %875 = vmatprep.subr.bf16.mxu0 0
        %876 = vmatpush1.bf16.msra.mxu0 %v819
        %877 = vmatprep.subr.bf16.mxu0 0
        %878 = vmatpush1.bf16.msra.mxu0 %v818
        %879 = vmatprep.subr.bf16.mxu0 0
        %880 = vmatpush1.bf16.msra.mxu0 %v817
        %881 = vmatprep.subr.bf16.mxu0 0
        %882 = vmatpush2.bf16.msra.mxu0 0
        %883 = vmatprep.subr.bf16.mxu0 0
        %884 = vmatpush2.bf16.msra.mxu0 0
        %885 = vmatprep.subr.bf16.mxu0 0
        %886 = vmatpush2.bf16.msra.mxu0 0
        %887 = vmatprep.subr.bf16.mxu0 0
        %888 = vmatpush2.bf16.msra.mxu0 0
        %889 = vmatprep.subr.bf16.mxu0 0
        %890 = vmatpush2.bf16.msra.mxu0 0
        %891 = vmatprep.subr.bf16.mxu0 0
        %892 = vmatpush2.bf16.msra.mxu0 0
        %893 = vmatprep.subr.bf16.mxu0 0
        %894 = vmatpush2.bf16.msra.mxu0 0
        %895 = vmatprep.subr.bf16.mxu0 0
        %896 = vmatpush2.bf16.msra.mxu0 0
        %897 = vmatprep.mubr.bf16.mxu0 0
        %898 = vmatmul.mubr.bf16.gmra.mxu0 %v830
        %v899 = vpop.f32.mrf.mxu0
        %v900 = vadd.f32 %v639, %v899
        %v901 = vpop.f32.mrf.mxu0
        %v902 = vpop.f32.mrf.mxu0
        %v903 = vadd.f32 %v642, %v902
        %v904 = vpop.f32.mrf.mxu0
        %905 = vmatprep.mubr.bf16.mxu0 0
        %906 = vmatmul.mubr.bf16.gmra.mxu0 %v833
        %v907 = vpop.f32.mrf.mxu0
        %v908 = vadd.f32 %v647, %v907
        %v909 = vpop.f32.mrf.mxu0
        %v910 = vpop.f32.mrf.mxu0
        %v911 = vadd.f32 %v650, %v910
        %v912 = vpop.f32.mrf.mxu0
        %913 = vmatprep.mubr.bf16.mxu0 0
        %914 = vmatmul.mubr.bf16.gmra.mxu0 %v836
        %v915 = vpop.f32.mrf.mxu0
        %v916 = vadd.f32 %v655, %v915
        %v917 = vpop.f32.mrf.mxu0
        %v918 = vpop.f32.mrf.mxu0
        %v919 = vadd.f32 %v658, %v918
        %v920 = vpop.f32.mrf.mxu0
        %921 = vmatprep.mubr.bf16.mxu0 0
        %922 = vmatmul.mubr.bf16.gmra.mxu0 %v839
        %v923 = vpop.f32.mrf.mxu0
        %v924 = vadd.f32 %v663, %v923
        %v925 = vpop.f32.mrf.mxu0
        %v926 = vpop.f32.mrf.mxu0
        %v927 = vadd.f32 %v666, %v926
        %v928 = vpop.f32.mrf.mxu0
        %929 = vmatprep.mubr.bf16.mxu0 0
        %930 = vmatmul.mubr.bf16.gmra.mxu0 %v842
        %v931 = vpop.f32.mrf.mxu0
        %v932 = vadd.f32 %v671, %v931
        %v933 = vpop.f32.mrf.mxu0
        %v934 = vpop.f32.mrf.mxu0
        %v935 = vadd.f32 %v674, %v934
        %v936 = vpop.f32.mrf.mxu0
        %937 = vmatprep.mubr.bf16.mxu0 0
        %938 = vmatmul.mubr.bf16.gmra.mxu0 %v845
        %v939 = vpop.f32.mrf.mxu0
        %v940 = vadd.f32 %v679, %v939
        %v941 = vpop.f32.mrf.mxu0
        %v942 = vpop.f32.mrf.mxu0
        %v943 = vadd.f32 %v682, %v942
        %v944 = vpop.f32.mrf.mxu0
        %945 = vmatprep.mubr.bf16.mxu0 0
        %946 = vmatmul.mubr.bf16.gmra.mxu0 %v848
        %v947 = vpop.f32.mrf.mxu0
        %v948 = vadd.f32 %v687, %v947
        %v949 = vpop.f32.mrf.mxu0
        %v950 = vpop.f32.mrf.mxu0
        %v951 = vadd.f32 %v690, %v950
        %v952 = vpop.f32.mrf.mxu0
        %953 = vmatprep.mubr.bf16.mxu0 0
        %954 = vmatmul.mubr.bf16.gmra.mxu0 %v851
        %v955 = vpop.f32.mrf.mxu0
        %v956 = vadd.f32 %v695, %v955
        %v957 = vpop.f32.mrf.mxu0
        %v958 = vpop.f32.mrf.mxu0
        %v959 = vadd.f32 %v698, %v958
        %v960 = vpop.f32.mrf.mxu0
        %961 = vmatprep.mubr.bf16.mxu0 0
        %962 = vmatmul.mubr.bf16.gmra.mxu0 %v854
        %v963 = vpop.f32.mrf.mxu0
        %v964 = vadd.f32 %v703, %v963
        %v965 = vpop.f32.mrf.mxu0
        %v966 = vpop.f32.mrf.mxu0
        %v967 = vadd.f32 %v706, %v966
        %v968 = vpop.f32.mrf.mxu0
        %969 = vmatprep.mubr.bf16.mxu0 0
        %970 = vmatmul.mubr.bf16.gmra.mxu0 %v857
        %v971 = vpop.f32.mrf.mxu0
        %v972 = vadd.f32 %v711, %v971
        %v973 = vpop.f32.mrf.mxu0
        %v974 = vpop.f32.mrf.mxu0
        %v975 = vadd.f32 %v714, %v974
        %v976 = vpop.f32.mrf.mxu0
        %977 = vmatprep.mubr.bf16.mxu0 0
        %978 = vmatmul.mubr.bf16.gmra.mxu0 %v860
        %v979 = vpop.f32.mrf.mxu0
        %v980 = vadd.f32 %v719, %v979
        %v981 = vpop.f32.mrf.mxu0
        %v982 = vpop.f32.mrf.mxu0
        %v983 = vadd.f32 %v722, %v982
        %v984 = vpop.f32.mrf.mxu0
        %985 = vmatprep.mubr.bf16.mxu0 0
        %986 = vmatmul.mubr.bf16.gmra.mxu0 %v863
        %v987 = vpop.f32.mrf.mxu0
        %v988 = vadd.f32 %v727, %v987
        %v989 = vpop.f32.mrf.mxu0
        %v990 = vpop.f32.mrf.mxu0
        %v991 = vadd.f32 %v730, %v990
        %v992 = vpop.f32.mrf.mxu0
        %993 = vdwg.mxu0
        %v994 = vld [vmem:[%s182] sm:$0xe]
        %v995 = vld [vmem:[%s182 + $0x1c] sm:$0xe]
        %v996 = vld [vmem:[%s182 + $0x38] sm:$0xe]
        %v997 = vld [vmem:[%s182 + $0x54] sm:$0xe]
        %vm1006 = vcmask 1042432
        %vm1007 = vcmask 1046532
        %vm1008 = vmor %vm1006, %vm1007
        %v1009 = vrot.slane %v994, 5
        %v1010 = vrot.slane %v1009, 4
        %v1011 = vrot.slane %v184, 5
        %v1012 = vsel %vm1008, %v1010, %v1011
        %v1013 = vrot.slane %v1011, 4
        %v1014 = vrot.slane %v185, 5
        %v1015 = vsel %vm1008, %v1013, %v1014
        %v1016 = vrot.slane %v1014, 4
        %v1017 = vrot.slane %v186, 5
        %v1018 = vsel %vm1008, %v1016, %v1017
        %v1019 = vrot.slane %v1017, 4
        %v1020 = vrot.slane %v187, 5
        %v1021 = vsel %vm1008, %v1019, %v1020
        %v1022 = vrot.slane %v1020, 4
        %v1023 = vrot.slane %v188, 5
        %v1024 = vsel %vm1008, %v1022, %v1023
        %v1025 = vrot.slane %v1023, 4
        %v1026 = vrot.slane %v219, 5
        %v1027 = vsel %vm1008, %v1025, %v1026
        %v1028 = vrot.slane %v995, 5
        %v1029 = vrot.slane %v1028, 4
        %v1030 = vrot.slane %v190, 5
        %v1031 = vsel %vm1008, %v1029, %v1030
        %v1032 = vrot.slane %v1030, 4
        %v1033 = vrot.slane %v191, 5
        %v1034 = vsel %vm1008, %v1032, %v1033
        %v1035 = vrot.slane %v1033, 4
        %v1036 = vrot.slane %v192, 5
        %v1037 = vsel %vm1008, %v1035, %v1036
        %v1038 = vrot.slane %v1036, 4
        %v1039 = vrot.slane %v193, 5
        %v1040 = vsel %vm1008, %v1038, %v1039
        %v1041 = vrot.slane %v1039, 4
        %v1042 = vrot.slane %v194, 5
        %v1043 = vsel %vm1008, %v1041, %v1042
        %v1044 = vrot.slane %v1042, 4
        %v1045 = vrot.slane %v220, 5
        %v1046 = vsel %vm1008, %v1044, %v1045
        %v1047 = vrot.slane %v996, 5
        %v1048 = vrot.slane %v1047, 4
        %v1049 = vrot.slane %v196, 5
        %v1050 = vsel %vm1008, %v1048, %v1049
        %v1051 = vrot.slane %v1049, 4
        %v1052 = vrot.slane %v197, 5
        %v1053 = vsel %vm1008, %v1051, %v1052
        %v1054 = vrot.slane %v1052, 4
        %v1055 = vrot.slane %v198, 5
        %v1056 = vsel %vm1008, %v1054, %v1055
        %v1057 = vrot.slane %v1055, 4
        %v1058 = vrot.slane %v199, 5
        %v1059 = vsel %vm1008, %v1057, %v1058
        %v1060 = vrot.slane %v1058, 4
        %v1061 = vrot.slane %v200, 5
        %v1062 = vsel %vm1008, %v1060, %v1061
        %v1063 = vrot.slane %v1061, 4
        %v1064 = vrot.slane %v221, 5
        %v1065 = vsel %vm1008, %v1063, %v1064
        %v1066 = vrot.slane %v997, 5
        %v1067 = vrot.slane %v1066, 4
        %v1068 = vrot.slane %v202, 5
        %v1069 = vsel %vm1008, %v1067, %v1068
        %v1070 = vrot.slane %v1068, 4
        %v1071 = vrot.slane %v203, 5
        %v1072 = vsel %vm1008, %v1070, %v1071
        %v1073 = vrot.slane %v1071, 4
        %v1074 = vrot.slane %v204, 5
        %v1075 = vsel %vm1008, %v1073, %v1074
        %v1076 = vrot.slane %v1074, 4
        %v1077 = vrot.slane %v205, 5
        %v1078 = vsel %vm1008, %v1076, %v1077
        %v1079 = vrot.slane %v1077, 4
        %v1080 = vrot.slane %v206, 5
        %v1081 = vsel %vm1008, %v1079, %v1080
        %v1082 = vrot.slane %v1080, 4
        %v1083 = vrot.slane %v222, 5
        %v1084 = vsel %vm1008, %v1082, %v1083
        %s1085 = scalar_lea.vmem %s1, 96
        %v1086 = vld [vmem:[%s1085] sm:$0xf]
        %v1087 = vld [vmem:[%s1085 + $0x4] sm:$0xf]
        %v1088 = vld [vmem:[%s1085 + $0x8] sm:$0xf]
        %v1089 = vld [vmem:[%s1085 + $0xc] sm:$0xf]
        %v1090 = vld [vmem:[%s1085 + $0x10] sm:$0xf]
        %v1091 = vld [vmem:[%s1085 + $0x14] sm:$0xf]
        %v1092 = vld [vmem:[%s1085 + $0x18] sm:$0xf]
        %v1093 = vld [vmem:[%s1085 + $0x1c] sm:$0xf]
        %v1094 = vld [vmem:[%s1085 + $0x20] sm:$0xf]
        %v1095 = vld [vmem:[%s1085 + $0x24] sm:$0xf]
        %v1096 = vld [vmem:[%s1085 + $0x28] sm:$0xf]
        %v1097 = vld [vmem:[%s1085 + $0x2c] sm:$0xf]
        %v1098 = vunpack.c.l.b16 %v1012
        %v1099 = vunpack.c.l.b16 %v1015
        %v1100 = vunpack.c.l.b16 %v1018
        %v1101 = vunpack.c.l.b16 %v1021
        %v1102 = vunpack.c.l.b16 %v1024
        %v1103 = vunpack.c.l.b16 %v1027
        %v1104 = vunpack.c.l.b16 %v1031
        %v1105 = vunpack.c.l.b16 %v1034
        %v1106 = vunpack.c.l.b16 %v1037
        %v1107 = vunpack.c.l.b16 %v1040
        %v1108 = vunpack.c.l.b16 %v1043
        %v1109 = vunpack.c.l.b16 %v1046
        %v1110 = vunpack.c.l.b16 %v1050
        %v1111 = vunpack.c.l.b16 %v1053
        %v1112 = vunpack.c.l.b16 %v1056
        %v1113 = vunpack.c.l.b16 %v1059
        %v1114 = vunpack.c.l.b16 %v1062
        %v1115 = vunpack.c.l.b16 %v1065
        %v1116 = vunpack.c.l.b16 %v1069
        %v1117 = vunpack.c.l.b16 %v1072
        %v1118 = vunpack.c.l.b16 %v1075
        %v1119 = vunpack.c.l.b16 %v1078
        %v1120 = vunpack.c.l.b16 %v1081
        %v1121 = vunpack.c.l.b16 %v1084
        %v1122 = vpack.c.b16 %v1099, %v1098
        %v1123 = vpack.c.b16 %v1101, %v1100
        %v1124 = vpack.c.b16 %v1103, %v1102
        %v1125 = vpack.c.b16 %v1105, %v1104
        %v1126 = vpack.c.b16 %v1107, %v1106
        %v1127 = vpack.c.b16 %v1109, %v1108
        %v1128 = vpack.c.b16 %v1111, %v1110
        %v1129 = vpack.c.b16 %v1113, %v1112
        %v1130 = vpack.c.b16 %v1115, %v1114
        %v1131 = vpack.c.b16 %v1117, %v1116
        %v1132 = vpack.c.b16 %v1119, %v1118
        %v1133 = vpack.c.b16 %v1121, %v1120
        %v1146 = vunpack.c.l.b16 %v1086
        %v1147 = vunpack.c.l.b16 %v1087
        %v1148 = vunpack.c.l.b16 %v1088
        %v1149 = vunpack.c.l.b16 %v1089
        %v1150 = vunpack.c.l.b16 %v1090
        %v1151 = vunpack.c.l.b16 %v1091
        %v1152 = vunpack.c.l.b16 %v1092
        %v1153 = vunpack.c.l.b16 %v1093
        %v1154 = vunpack.c.l.b16 %v1094
        %v1155 = vunpack.c.l.b16 %v1095
        %v1156 = vunpack.c.l.b16 %v1096
        %v1157 = vunpack.c.l.b16 %v1097
        %v1158 = vpack.c.b16 %v1147, %v1146
        %v1159 = vpack.c.b16 %v1149, %v1148
        %v1160 = vpack.c.b16 %v1151, %v1150
        %v1161 = vpack.c.b16 %v1153, %v1152
        %v1162 = vpack.c.b16 %v1155, %v1154
        %v1163 = vpack.c.b16 %v1157, %v1156
        %v1171 = vsel %vm567, %v1122, 0
        %v1174 = vsel %vm567, %v1123, 0
        %v1177 = vsel %vm567, %v1124, 0
        %v1180 = vsel %vm567, %v1125, 0
        %v1183 = vsel %vm567, %v1126, 0
        %v1186 = vsel %vm567, %v1127, 0
        %v1189 = vsel %vm567, %v1128, 0
        %v1192 = vsel %vm567, %v1129, 0
        %v1195 = vsel %vm567, %v1130, 0
        %v1198 = vsel %vm567, %v1131, 0
        %v1201 = vsel %vm567, %v1132, 0
        %v1204 = vsel %vm567, %v1133, 0
        %1206 = vmatprep.subr.bf16.mxu0 0
        %1207 = vmatpush1.bf16.msra.mxu0 0
        %1208 = vmatprep.subr.bf16.mxu0 0
        %1209 = vmatpush1.bf16.msra.mxu0 0
        %1210 = vmatprep.subr.bf16.mxu0 0
        %1211 = vmatpush1.bf16.msra.mxu0 %v1163
        %1212 = vmatprep.subr.bf16.mxu0 0
        %1213 = vmatpush1.bf16.msra.mxu0 %v1162
        %1214 = vmatprep.subr.bf16.mxu0 0
        %1215 = vmatpush1.bf16.msra.mxu0 %v1161
        %1216 = vmatprep.subr.bf16.mxu0 0
        %1217 = vmatpush1.bf16.msra.mxu0 %v1160
        %1218 = vmatprep.subr.bf16.mxu0 0
        %1219 = vmatpush1.bf16.msra.mxu0 %v1159
        %1220 = vmatprep.subr.bf16.mxu0 0
        %1221 = vmatpush1.bf16.msra.mxu0 %v1158
        %1222 = vmatprep.subr.bf16.mxu0 0
        %1223 = vmatpush2.bf16.msra.mxu0 0
        %1224 = vmatprep.subr.bf16.mxu0 0
        %1225 = vmatpush2.bf16.msra.mxu0 0
        %1226 = vmatprep.subr.bf16.mxu0 0
        %1227 = vmatpush2.bf16.msra.mxu0 0
        %1228 = vmatprep.subr.bf16.mxu0 0
        %1229 = vmatpush2.bf16.msra.mxu0 0
        %1230 = vmatprep.subr.bf16.mxu0 0
        %1231 = vmatpush2.bf16.msra.mxu0 0
        %1232 = vmatprep.subr.bf16.mxu0 0
        %1233 = vmatpush2.bf16.msra.mxu0 0
        %1234 = vmatprep.subr.bf16.mxu0 0
        %1235 = vmatpush2.bf16.msra.mxu0 0
        %1236 = vmatprep.subr.bf16.mxu0 0
        %1237 = vmatpush2.bf16.msra.mxu0 0
        %1238 = vmatprep.mubr.bf16.mxu0 0
        %1239 = vmatmul.mubr.bf16.gmra.mxu0 %v1171
        %v1240 = vpop.f32.mrf.mxu0
        %v1241 = vadd.f32 0.0, %v1240
        %v1242 = vpop.f32.mrf.mxu0
        %v1243 = vpop.f32.mrf.mxu0
        %v1244 = vadd.f32 0.0, %v1243
        %v1245 = vpop.f32.mrf.mxu0
        %1246 = vmatprep.mubr.bf16.mxu0 0
        %1247 = vmatmul.mubr.bf16.gmra.mxu0 %v1174
        %v1248 = vpop.f32.mrf.mxu0
        %v1249 = vadd.f32 0.0, %v1248
        %v1250 = vpop.f32.mrf.mxu0
        %v1251 = vpop.f32.mrf.mxu0
        %v1252 = vadd.f32 0.0, %v1251
        %v1253 = vpop.f32.mrf.mxu0
        %1254 = vmatprep.mubr.bf16.mxu0 0
        %1255 = vmatmul.mubr.bf16.gmra.mxu0 %v1177
        %v1256 = vpop.f32.mrf.mxu0
        %v1257 = vadd.f32 0.0, %v1256
        %v1258 = vpop.f32.mrf.mxu0
        %v1259 = vpop.f32.mrf.mxu0
        %v1260 = vadd.f32 0.0, %v1259
        %v1261 = vpop.f32.mrf.mxu0
        %1262 = vmatprep.mubr.bf16.mxu0 0
        %1263 = vmatmul.mubr.bf16.gmra.mxu0 %v1180
        %v1264 = vpop.f32.mrf.mxu0
        %v1265 = vadd.f32 0.0, %v1264
        %v1266 = vpop.f32.mrf.mxu0
        %v1267 = vpop.f32.mrf.mxu0
        %v1268 = vadd.f32 0.0, %v1267
        %v1269 = vpop.f32.mrf.mxu0
        %1270 = vmatprep.mubr.bf16.mxu0 0
        %1271 = vmatmul.mubr.bf16.gmra.mxu0 %v1183
        %v1272 = vpop.f32.mrf.mxu0
        %v1273 = vadd.f32 0.0, %v1272
        %v1274 = vpop.f32.mrf.mxu0
        %v1275 = vpop.f32.mrf.mxu0
        %v1276 = vadd.f32 0.0, %v1275
        %v1277 = vpop.f32.mrf.mxu0
        %1278 = vmatprep.mubr.bf16.mxu0 0
        %1279 = vmatmul.mubr.bf16.gmra.mxu0 %v1186
        %v1280 = vpop.f32.mrf.mxu0
        %v1281 = vadd.f32 0.0, %v1280
        %v1282 = vpop.f32.mrf.mxu0
        %v1283 = vpop.f32.mrf.mxu0
        %v1284 = vadd.f32 0.0, %v1283
        %v1285 = vpop.f32.mrf.mxu0
        %1286 = vmatprep.mubr.bf16.mxu0 0
        %1287 = vmatmul.mubr.bf16.gmra.mxu0 %v1189
        %v1288 = vpop.f32.mrf.mxu0
        %v1289 = vadd.f32 0.0, %v1288
        %v1290 = vpop.f32.mrf.mxu0
        %v1291 = vpop.f32.mrf.mxu0
        %v1292 = vadd.f32 0.0, %v1291
        %v1293 = vpop.f32.mrf.mxu0
        %1294 = vmatprep.mubr.bf16.mxu0 0
        %1295 = vmatmul.mubr.bf16.gmra.mxu0 %v1192
        %v1296 = vpop.f32.mrf.mxu0
        %v1297 = vadd.f32 0.0, %v1296
        %v1298 = vpop.f32.mrf.mxu0
        %v1299 = vpop.f32.mrf.mxu0
        %v1300 = vadd.f32 0.0, %v1299
        %v1301 = vpop.f32.mrf.mxu0
        %1302 = vmatprep.mubr.bf16.mxu0 0
        %1303 = vmatmul.mubr.bf16.gmra.mxu0 %v1195
        %v1304 = vpop.f32.mrf.mxu0
        %v1305 = vadd.f32 0.0, %v1304
        %v1306 = vpop.f32.mrf.mxu0
        %v1307 = vpop.f32.mrf.mxu0
        %v1308 = vadd.f32 0.0, %v1307
        %v1309 = vpop.f32.mrf.mxu0
        %1310 = vmatprep.mubr.bf16.mxu0 0
        %1311 = vmatmul.mubr.bf16.gmra.mxu0 %v1198
        %v1312 = vpop.f32.mrf.mxu0
        %v1313 = vadd.f32 0.0, %v1312
        %v1314 = vpop.f32.mrf.mxu0
        %v1315 = vpop.f32.mrf.mxu0
        %v1316 = vadd.f32 0.0, %v1315
        %v1317 = vpop.f32.mrf.mxu0
        %1318 = vmatprep.mubr.bf16.mxu0 0
        %1319 = vmatmul.mubr.bf16.gmra.mxu0 %v1201
        %v1320 = vpop.f32.mrf.mxu0
        %v1321 = vadd.f32 0.0, %v1320
        %v1322 = vpop.f32.mrf.mxu0
        %v1323 = vpop.f32.mrf.mxu0
        %v1324 = vadd.f32 0.0, %v1323
        %v1325 = vpop.f32.mrf.mxu0
        %1326 = vmatprep.mubr.bf16.mxu0 0
        %1327 = vmatmul.mubr.bf16.gmra.mxu0 %v1204
        %v1328 = vpop.f32.mrf.mxu0
        %v1329 = vadd.f32 0.0, %v1328
        %v1330 = vpop.f32.mrf.mxu0
        %v1331 = vpop.f32.mrf.mxu0
        %v1332 = vadd.f32 0.0, %v1331
        %v1333 = vpop.f32.mrf.mxu0
        %1334 = vdwg.mxu0
        %v1335 = vadd.f32 %v900, %v1241
        %v1336 = vadd.f32 %v903, %v1244
        %v1337 = vadd.f32 %v908, %v1249
        %v1338 = vadd.f32 %v911, %v1252
        %v1339 = vadd.f32 %v916, %v1257
        %v1340 = vadd.f32 %v919, %v1260
        %v1341 = vadd.f32 %v924, %v1265
        %v1342 = vadd.f32 %v927, %v1268
        %v1343 = vadd.f32 %v932, %v1273
        %v1344 = vadd.f32 %v935, %v1276
        %v1345 = vadd.f32 %v940, %v1281
        %v1346 = vadd.f32 %v943, %v1284
        %v1347 = vadd.f32 %v948, %v1289
        %v1348 = vadd.f32 %v951, %v1292
        %v1349 = vadd.f32 %v956, %v1297
        %v1350 = vadd.f32 %v959, %v1300
        %v1351 = vadd.f32 %v964, %v1305
        %v1352 = vadd.f32 %v967, %v1308
        %v1353 = vadd.f32 %v972, %v1313
        %v1354 = vadd.f32 %v975, %v1316
        %v1355 = vadd.f32 %v980, %v1321
        %v1356 = vadd.f32 %v983, %v1324
        %v1357 = vadd.f32 %v988, %v1329
        %v1358 = vadd.f32 %v991, %v1332
        %v1360 = vlaneseq
        %v1361 = vshrl.u32 %v1360, 7
        %v1362 = vsub.s32 0, %v1361
        %v1363 = vrot.slane %v172, %v1362
        %v1365 = vadd.f32 %v1335, %v1363
        %v1366 = vadd.f32 %v1336, %v1363
        %v1367 = vadd.f32 %v1337, %v1363
        %v1368 = vadd.f32 %v1338, %v1363
        %v1369 = vadd.f32 %v1339, %v1363
        %v1370 = vadd.f32 %v1340, %v1363
        %v1371 = vadd.f32 %v1341, %v1363
        %v1372 = vadd.f32 %v1342, %v1363
        %v1373 = vadd.f32 %v1343, %v1363
        %v1374 = vadd.f32 %v1344, %v1363
        %v1375 = vadd.f32 %v1345, %v1363
        %v1376 = vadd.f32 %v1346, %v1363
        %v1377 = vadd.f32 %v1347, %v1363
        %v1378 = vadd.f32 %v1348, %v1363
        %v1379 = vadd.f32 %v1349, %v1363
        %v1380 = vadd.f32 %v1350, %v1363
        %v1381 = vadd.f32 %v1351, %v1363
        %v1382 = vadd.f32 %v1352, %v1363
        %v1383 = vadd.f32 %v1353, %v1363
        %v1384 = vadd.f32 %v1354, %v1363
        %v1385 = vadd.f32 %v1355, %v1363
        %v1386 = vadd.f32 %v1356, %v1363
        %v1387 = vadd.f32 %v1357, %v1363
        %v1388 = vadd.f32 %v1358, %v1363
        %v1389 = vmax.f32 %v1365, 0.0
        %v1390 = vmax.f32 %v1366, 0.0
        %v1391 = vmax.f32 %v1367, 0.0
        %v1392 = vmax.f32 %v1368, 0.0
        %v1393 = vmax.f32 %v1369, 0.0
        %v1394 = vmax.f32 %v1370, 0.0
        %v1395 = vmax.f32 %v1371, 0.0
        %v1396 = vmax.f32 %v1372, 0.0
        %v1397 = vmax.f32 %v1373, 0.0
        %v1398 = vmax.f32 %v1374, 0.0
        %v1399 = vmax.f32 %v1375, 0.0
        %v1400 = vmax.f32 %v1376, 0.0
        %v1401 = vmax.f32 %v1377, 0.0
        %v1402 = vmax.f32 %v1378, 0.0
        %v1403 = vmax.f32 %v1379, 0.0
        %v1404 = vmax.f32 %v1380, 0.0
        %v1405 = vmax.f32 %v1381, 0.0
        %v1406 = vmax.f32 %v1382, 0.0
        %v1407 = vmax.f32 %v1383, 0.0
        %v1408 = vmax.f32 %v1384, 0.0
        %v1409 = vmax.f32 %v1385, 0.0
        %v1410 = vmax.f32 %v1386, 0.0
        %v1411 = vmax.f32 %v1387, 0.0
        %v1412 = vmax.f32 %v1388, 0.0
        %v1413 = vpack.c.bf16 %v1390, %v1389
        %v1414 = vpack.c.bf16 %v1392, %v1391
        %v1415 = vpack.c.bf16 %v1394, %v1393
        %v1416 = vpack.c.bf16 %v1396, %v1395
        %v1417 = vpack.c.bf16 %v1398, %v1397
        %v1418 = vpack.c.bf16 %v1400, %v1399
        %v1419 = vpack.c.bf16 %v1402, %v1401
        %v1420 = vpack.c.bf16 %v1404, %v1403
        %v1421 = vpack.c.bf16 %v1406, %v1405
        %v1422 = vpack.c.bf16 %v1408, %v1407
        %v1423 = vpack.c.bf16 %v1410, %v1409
        %v1424 = vpack.c.bf16 %v1412, %v1411
        %v1437 = vunpack.c.l.b16 %v1413
        %v1438 = vunpack.c.h.b16 %v1413
        %v1439 = vunpack.c.l.b16 %v1414
        %v1440 = vunpack.c.h.b16 %v1414
        %v1441 = vunpack.c.l.b16 %v1415
        %v1442 = vunpack.c.h.b16 %v1415
        %v1443 = vunpack.c.l.b16 %v1416
        %v1444 = vunpack.c.h.b16 %v1416
        %v1445 = vunpack.c.l.b16 %v1417
        %v1446 = vunpack.c.h.b16 %v1417
        %v1447 = vunpack.c.l.b16 %v1418
        %v1448 = vunpack.c.h.b16 %v1418
        %v1449 = vunpack.c.l.b16 %v1419
        %v1450 = vunpack.c.h.b16 %v1419
        %v1451 = vunpack.c.l.b16 %v1420
        %v1452 = vunpack.c.h.b16 %v1420
        %v1453 = vunpack.c.l.b16 %v1421
        %v1454 = vunpack.c.h.b16 %v1421
        %v1455 = vunpack.c.l.b16 %v1422
        %v1456 = vunpack.c.h.b16 %v1422
        %v1457 = vunpack.c.l.b16 %v1423
        %v1458 = vunpack.c.h.b16 %v1423
        %v1459 = vunpack.c.l.b16 %v1424
        %v1460 = vunpack.c.h.b16 %v1424
        %v1461 = vpack.c.b16 %v1437, %v1437
        %v1462 = vpack.c.b16 %v1438, %v1438
        %v1463 = vpack.c.b16 %v1439, %v1439
        %v1464 = vpack.c.b16 %v1440, %v1440
        %v1465 = vpack.c.b16 %v1441, %v1441
        %v1466 = vpack.c.b16 %v1442, %v1442
        %v1467 = vpack.c.b16 %v1443, %v1443
        %v1468 = vpack.c.b16 %v1444, %v1444
        %v1469 = vpack.c.b16 %v1445, %v1445
        %v1470 = vpack.c.b16 %v1446, %v1446
        %v1471 = vpack.c.b16 %v1447, %v1447
        %v1472 = vpack.c.b16 %v1448, %v1448
        %v1473 = vpack.c.b16 %v1449, %v1449
        %v1474 = vpack.c.b16 %v1450, %v1450
        %v1475 = vpack.c.b16 %v1451, %v1451
        %v1476 = vpack.c.b16 %v1452, %v1452
        %v1477 = vpack.c.b16 %v1453, %v1453
        %v1478 = vpack.c.b16 %v1454, %v1454
        %v1479 = vpack.c.b16 %v1455, %v1455
        %v1480 = vpack.c.b16 %v1456, %v1456
        %v1481 = vpack.c.b16 %v1457, %v1457
        %v1482 = vpack.c.b16 %v1458, %v1458
        %v1483 = vpack.c.b16 %v1459, %v1459
        %v1484 = vpack.c.b16 %v1460, %v1460
        %s1509 = smul.u32 %s179, 6
        %s1510 = smul.addr %s1509, 4
        %s1511 = scalar_lea.vmem %s170, %s1510
        %vm1512 = vcmask 519168
        %1513 = vst.msk [vmem:[%s1511] sm:$0xf] %vm1512, %v1461
        %1514 = vst.msk [vmem:[%s1511 + $0x4] sm:$0xf] %vm1512, %v1462
        %1515 = vst.msk [vmem:[%s1511 + $0x8] sm:$0xf] %vm1512, %v1463
        %1516 = vst.msk [vmem:[%s1511 + $0xc] sm:$0xf] %vm1512, %v1464
        %1517 = vst.msk [vmem:[%s1511 + $0x10] sm:$0xf] %vm1512, %v1465
        %1518 = vst.msk [vmem:[%s1511 + $0x14] sm:$0xf] %vm1512, %v1466
        %1519 = vst.msk [vmem:[%s1511 + $0x18] sm:$0xf] %vm1512, %v1467
        %1520 = vst.msk [vmem:[%s1511 + $0x1c] sm:$0xf] %vm1512, %v1468
        %1521 = vst.msk [vmem:[%s1511 + $0x20] sm:$0xf] %vm1512, %v1469
        %1522 = vst.msk [vmem:[%s1511 + $0x24] sm:$0xf] %vm1512, %v1470
        %1523 = vst.msk [vmem:[%s1511 + $0x28] sm:$0xf] %vm1512, %v1471
        %1524 = vst.msk [vmem:[%s1511 + $0x2c] sm:$0xf] %vm1512, %v1472
        %1525 = vst.msk [vmem:[%s1511 + $0x30] sm:$0xf] %vm1512, %v1473
        %1526 = vst.msk [vmem:[%s1511 + $0x34] sm:$0xf] %vm1512, %v1474
        %1527 = vst.msk [vmem:[%s1511 + $0x38] sm:$0xf] %vm1512, %v1475
        %1528 = vst.msk [vmem:[%s1511 + $0x3c] sm:$0xf] %vm1512, %v1476
        %1529 = vst.msk [vmem:[%s1511 + $0x40] sm:$0xf] %vm1512, %v1477
        %1530 = vst.msk [vmem:[%s1511 + $0x44] sm:$0xf] %vm1512, %v1478
        %1531 = vst.msk [vmem:[%s1511 + $0x48] sm:$0xf] %vm1512, %v1479
        %1532 = vst.msk [vmem:[%s1511 + $0x4c] sm:$0xf] %vm1512, %v1480
        %1533 = vst.msk [vmem:[%s1511 + $0x50] sm:$0xf] %vm1512, %v1481
        %1534 = vst.msk [vmem:[%s1511 + $0x54] sm:$0xf] %vm1512, %v1482
        %1535 = vst.msk [vmem:[%s1511 + $0x58] sm:$0xf] %vm1512, %v1483
        %1536 = vst.msk [vmem:[%s1511 + $0x5c] sm:$0xf] %vm1512, %v1484
      $region37: #{mil_forward.7} parent=31 // loop_footer
        %s178 = sadd.s32 1, %s174
      $region38: #{mil_forward.7} parent=31 // loop_footer_branch
        %173 = sbr.rel target = $region34
      $region39: #{mil_forward.7} parent=31 // loop_exit
        _
      %p1537 = scmp.lt.s32.totalorder %s14, 5
      %s1538 = scalar_select %p1537, %s14, 5
      %s1539 = smul.addr %s1538, 288
      %s1540 = smul.addr %s1539, 4
      %s1541 = scalar_lea.vmem %s3, %s1540
      // Predicated region
      $region40: #{mil_forward.7} parent=31 // pred_check
        %p1542 = pneg %p100
      $region41: #{mil_forward.7} parent=31 // pred_check_branch
        %1544 = sbr.rel (%p1542) target = $region43
      $region42: #{mil_forward.7} parent=31 // pred_region
        _
      $region43: #{mil_forward.7} parent=31 // pred_fallthru
        _
    $region32: #{mil_forward.7} parent=5 // pred_fallthru
      _
    %p1545 = scmp.le.s32.totalorder 2, %s9
    // Predicated region
    $region44: #{mil_forward.7} parent=5 // pred_check
      %p1546 = pneg %p1545
    $region45: #{mil_forward.7} parent=5 // pred_check_branch
      %1548 = sbr.rel (%p1546) target = $region47
    $region46: #{mil_forward.7} parent=5 // pred_region
      %s1549 = ssub.s32 %s9, 2
      // Predicated region
      $region48: #{mil_forward.7} parent=46 // pred_check
        %p1550 = pneg %p106
      $region49: #{mil_forward.7} parent=46 // pred_check_branch
        %1552 = sbr.rel (%p1550) target = $region51
      $region50: #{mil_forward.7} parent=46 // pred_region
        %p1553 = scmp.lt.s32.totalorder %s15, 5
        %s1554 = scalar_select %p1553, %s15, 5
        %s1555 = smul.addr %s1554, 288
        %s1556 = smul.addr %s1555, 4
        %s1557 = scalar_lea.vmem %s3, %s1556
      $region51: #{mil_forward.7} parent=46 // pred_fallthru
        _
    $region47: #{mil_forward.7} parent=5 // pred_fallthru
      _
  $region6: #{mil_forward.7} parent=0 // loop_footer
    %s13 = sadd.s32 1, %s9
  $region7: #{mil_forward.7} parent=0 // loop_footer_branch
    %8 = sbr.rel target = $region3
  $region8: #{mil_forward.7} parent=0 // loop_exit
    _

// kernel: mil_forward.8
$region0: #{mil_forward.8}
  #allocation0 [shape = 'u32[]', space=smem, size = 0x4, offset = 0x4, fixed_abs, tag = 'smem constant byte address 0x4 - core index']
  #allocation1 [shape = 'u32[144,128]{1,0:T(1,128)}', space=vmem, size = 0x12000, scoped, tag = 'internal scratch']
  %s0 = inlined_call_operand.vmem [shape: bf16[6,24,34,192], index: 0, kind: input, shape index: {}]
  %s1 = inlined_call_operand.vmem [shape: bf16[3,192,128], index: 1, kind: input, shape index: {}]
  %s2 = inlined_call_operand.vmem [shape: f32[1,128], index: 2, kind: input, shape index: {}]
  %s3 = inlined_call_operand.vmem [shape: bf16[6,24,24,128], index: 3, kind: output, shape index: {}]
  %s4 = sld [smem:[#allocation0]]
  $region52: #{mil_forward.8} parent=0
    _
  %s6 = ssub.s32 1, %s4
  %s7 = scalar_select 0, %s6, %s4
  loop: start=0, step=1, limit=8
  $region2: #{mil_forward.8} parent=0 // loop_pre_header
    _
  $region3: #{mil_forward.8} parent=0 // loop_header
    %s9 = sphi 0, %s13
    %p10 = scmp.ge.s32.totalorder %s9, 8
    %s19 = sphi 0, %s21
    %s22 = sphi 0, %s19
    %s23 = sphi 0, %s22
    %s39 = sphi 0, %s23
    %s43 = sphi 0, %s43
    %s45 = sphi 0, %s43
    %s46 = sphi 0, %s45
    %s60 = sphi 0, %s46
    %s64 = sphi 0, %s64
    %s66 = sphi 0, %s64
    %s67 = sphi 0, %s66
    %s81 = sphi 0, %s67
    %s87 = sphi 0, %s89
    %s90 = sphi 0, %s87
    %s91 = sphi 0, %s90
    %s107 = sphi 0, %s91
  $region4: #{mil_forward.8} parent=0 // loop_header_branch
    %12 = sbr.rel (%p10) target = $region8
  $region5: #{mil_forward.8} parent=0 // loop_body
    %s14 = ssub.s32 %s9, 1
    %s15 = ssub.s32 %s9, 2
    %s16 = sadd.s32 %s9, 1
    %s17 = ssub.s32 %s9, %s16
    %p18 = scmp.eq.s32.totalorder %s17, 0
    %s20 = sadd.s32 %s19, 1
    %s21 = scalar_select %p18, %s19, %s20
    %p24 = pneg %p18
    %p25 = scmp.eq.s32.totalorder %s9, 5
    %p26 = por %p24, %p25
    %p27 = scmp.ne.s32.totalorder %s19, %s22
    %p28 = scmp.eq.s32.totalorder %s9, 0
    %p29 = por %p27, %p28
    %p30 = scmp.ne.s32.totalorder %s19, %s22
    %p31 = scmp.eq.s32.totalorder %s14, 5
    %p32 = por %p30, %p31
    %p33 = scmp.ne.s32.totalorder %s22, %s23
    %p34 = scmp.eq.s32.totalorder %s14, 0
    %p35 = por %p33, %p34
    %p36 = scmp.ne.s32.totalorder %s22, %s23
    %p37 = scmp.eq.s32.totalorder %s15, 5
    %p38 = por %p36, %p37
    %p40 = scmp.ne.s32.totalorder %s23, %s39
    %p41 = scmp.eq.s32.totalorder %s15, 0
    %p42 = por %p40, %p41
    %s44 = sadd.s32 %s43, 1
    %p47 = scmp.eq.s32.totalorder %s9, 5
    %p48 = scmp.ne.s32.totalorder %s43, %s45
    %p49 = scmp.eq.s32.totalorder %s9, 0
    %p50 = por %p48, %p49
    %p51 = scmp.ne.s32.totalorder %s43, %s45
    %p52 = scmp.eq.s32.totalorder %s14, 5
    %p53 = por %p51, %p52
    %p54 = scmp.ne.s32.totalorder %s45, %s46
    %p55 = scmp.eq.s32.totalorder %s14, 0
    %p56 = por %p54, %p55
    %p57 = scmp.ne.s32.totalorder %s45, %s46
    %p58 = scmp.eq.s32.totalorder %s15, 5
    %p59 = por %p57, %p58
    %p61 = scmp.ne.s32.totalorder %s46, %s60
    %p62 = scmp.eq.s32.totalorder %s15, 0
    %p63 = por %p61, %p62
    %s65 = sadd.s32 %s64, 1
    %p68 = scmp.eq.s32.totalorder %s9, 5
    %p69 = scmp.ne.s32.totalorder %s64, %s66
    %p70 = scmp.eq.s32.totalorder %s9, 0
    %p71 = por %p69, %p70
    %p72 = scmp.ne.s32.totalorder %s64, %s66
    %p73 = scmp.eq.s32.totalorder %s14, 5
    %p74 = por %p72, %p73
    %p75 = scmp.ne.s32.totalorder %s66, %s67
    %p76 = scmp.eq.s32.totalorder %s14, 0
    %p77 = por %p75, %p76
    %p78 = scmp.ne.s32.totalorder %s66, %s67
    %p79 = scmp.eq.s32.totalorder %s15, 5
    %p80 = por %p78, %p79
    %p82 = scmp.ne.s32.totalorder %s67, %s81
    %p83 = scmp.eq.s32.totalorder %s15, 0
    %p84 = por %p82, %p83
    %s85 = ssub.s32 %s9, %s16
    %p86 = scmp.eq.s32.totalorder %s85, 0
    %s88 = sadd.s32 %s87, 1
    %s89 = scalar_select %p86, %s87, %s88
    %p92 = pneg %p86
    %p93 = scmp.eq.s32.totalorder %s9, 5
    %p94 = por %p92, %p93
    %p95 = scmp.ne.s32.totalorder %s87, %s90
    %p96 = scmp.eq.s32.totalorder %s9, 0
    %p97 = por %p95, %p96
    %p98 = scmp.ne.s32.totalorder %s87, %s90
    %p99 = scmp.eq.s32.totalorder %s14, 5
    %p100 = por %p98, %p99
    %p101 = scmp.ne.s32.totalorder %s90, %s91
    %p102 = scmp.eq.s32.totalorder %s14, 0
    %p103 = por %p101, %p102
    %p104 = scmp.ne.s32.totalorder %s90, %s91
    %p105 = scmp.eq.s32.totalorder %s15, 5
    %p106 = por %p104, %p105
    %p108 = scmp.ne.s32.totalorder %s91, %s107
    %p109 = scmp.eq.s32.totalorder %s15, 0
    %p110 = por %p108, %p109
    %p111 = scmp.le.s32.totalorder 1, %s9
    %p112 = scmp.lt.s32.totalorder %s9, 7
    %p113 = pnand %p111, %p112
    %p114 = pneg %p113
    // Predicated region
    $region9: #{mil_forward.8} parent=5 // pred_check
      _
    $region10: #{mil_forward.8} parent=5 // pred_check_branch
      %116 = sbr.rel (%p113) target = $region12
    $region11: #{mil_forward.8} parent=5 // pred_region
      %s117 = ssub.s32 %s9, 1
      // Predicated region
      $region13: #{mil_forward.8} parent=11 // pred_check
        %p118 = pneg %p56
      $region14: #{mil_forward.8} parent=11 // pred_check_branch
        %120 = sbr.rel (%p118) target = $region16
      $region15: #{mil_forward.8} parent=11 // pred_region
        _
      $region16: #{mil_forward.8} parent=11 // pred_fallthru
        _
      // Predicated region
      $region17: #{mil_forward.8} parent=11 // pred_check
        %p121 = pneg %p77
      $region18: #{mil_forward.8} parent=11 // pred_check_branch
        %123 = sbr.rel (%p121) target = $region20
      $region19: #{mil_forward.8} parent=11 // pred_region
        _
      $region20: #{mil_forward.8} parent=11 // pred_fallthru
        _
    $region12: #{mil_forward.8} parent=5 // pred_fallthru
      _
    %p124 = scmp.lt.s32.totalorder %s9, 6
    // Predicated region
    $region21: #{mil_forward.8} parent=5 // pred_check
      %p125 = pneg %p124
    $region22: #{mil_forward.8} parent=5 // pred_check_branch
      %127 = sbr.rel (%p125) target = $region24
    $region23: #{mil_forward.8} parent=5 // pred_region
      // Predicated region
      $region25: #{mil_forward.8} parent=23 // pred_check
        %p128 = pneg %p29
      $region26: #{mil_forward.8} parent=23 // pred_check_branch
        %130 = sbr.rel (%p128) target = $region28
      $region27: #{mil_forward.8} parent=23 // pred_region
        %p131 = scmp.lt.s32.totalorder %s9, 5
        %s132 = scalar_select %p131, %s9, 5
        %s133 = smul.addr %s132, 240
        %s134 = smul.addr %s133, 4
        %s135 = scalar_lea.vmem %s0, %s134
      $region28: #{mil_forward.8} parent=23 // pred_fallthru
        _
    $region24: #{mil_forward.8} parent=5 // pred_fallthru
      _
    %p136 = scmp.le.s32.totalorder 1, %s9
    %p137 = scmp.lt.s32.totalorder %s9, 7
    %p138 = pnand %p136, %p137
    %p139 = pneg %p138
    // Predicated region
    $region29: #{mil_forward.8} parent=5 // pred_check
      _
    $region30: #{mil_forward.8} parent=5 // pred_check_branch
      %141 = sbr.rel (%p138) target = $region32
    $region31: #{mil_forward.8} parent=5 // pred_region
      %s142 = ssub.s32 %s9, 1
      %p143 = scmp.lt.s32.totalorder %s14, 5
      %s144 = scalar_select %p143, %s14, 5
      %s145 = smul.addr %s144, 240
      %s146 = smul.addr %s145, 4
      %s147 = scalar_lea.vmem %s0, %s146
      %p148 = pneg %p35
      %p149 = pneg %p32
      %p150 = pneg %p56
      %p151 = pneg %p53
      %p152 = pneg %p77
      %p153 = pneg %p74
      %p154 = pneg %p103
      %p155 = pneg %p100
      %p156 = scmp.lt.s32.totalorder %s14, 5
      %s157 = scalar_select %p156, %s14, 5
      %s158 = smul.addr %s157, 72
      %s159 = smul.addr %s158, 4
      %s160 = scalar_lea.vmem %s3, %s159
      %p161 = scmp.lt.s32.totalorder %s14, 5
      %s162 = scalar_select %p161, %s14, 5
      %s163 = smul.addr %s162, 240
      %s164 = smul.addr %s163, 4
      %s165 = scalar_lea.vmem %s0, %s164
      %p166 = scmp.lt.s32.totalorder %s14, 5
      %s167 = scalar_select %p166, %s14, 5
      %s168 = smul.addr %s167, 72
      %s169 = smul.addr %s168, 4
      %s170 = scalar_lea.vmem %s3, %s169
      %v172 = vld [vmem:[%s2] sm:$0x1]
      loop: start=0, step=1, limit=6
      $region33: #{mil_forward.8} parent=31 // loop_pre_header
        _
      $region34: #{mil_forward.8} parent=31 // loop_header
        %s174 = sphi 0, %s178
        %p175 = scmp.ge.s32.totalorder %s174, 6
      $region35: #{mil_forward.8} parent=31 // loop_header_branch
        %177 = sbr.rel (%p175) target = $region39
      $region36: #{mil_forward.8} parent=31 // loop_body
        %s179 = smul.u32 %s174, 4
        %s180 = smul.u32 %s179, 10
        %s181 = smul.addr %s180, 4
        %s182 = scalar_lea.vmem %s165, %s181
        %v183 = vld [vmem:[%s182] sm:$0xff]
        %v184 = vld [vmem:[%s182 + $0x8] sm:$0xff]
        %v185 = vld [vmem:[%s182 + $0x10] sm:$0xff]
        %v186 = vld [vmem:[%s182 + $0x18] sm:$0xff]
        %v187 = vld [vmem:[%s182 + $0x28] sm:$0xff]
        %v188 = vld [vmem:[%s182 + $0x30] sm:$0xff]
        %v189 = vld [vmem:[%s182 + $0x38] sm:$0xff]
        %v190 = vld [vmem:[%s182 + $0x40] sm:$0xff]
        %v191 = vld [vmem:[%s182 + $0x50] sm:$0xff]
        %v192 = vld [vmem:[%s182 + $0x58] sm:$0xff]
        %v193 = vld [vmem:[%s182 + $0x60] sm:$0xff]
        %v194 = vld [vmem:[%s182 + $0x68] sm:$0xff]
        %v195 = vld [vmem:[%s182 + $0x78] sm:$0xff]
        %v196 = vld [vmem:[%s182 + $0x80] sm:$0xff]
        %v197 = vld [vmem:[%s182 + $0x88] sm:$0xff]
        %v198 = vld [vmem:[%s182 + $0x90] sm:$0xff]
        %v199 = vld [vmem:[%s1] sm:$0xf]
        %v200 = vld [vmem:[%s1 + $0x4] sm:$0xf]
        %v201 = vld [vmem:[%s1 + $0x8] sm:$0xf]
        %v202 = vld [vmem:[%s1 + $0xc] sm:$0xf]
        %v203 = vld [vmem:[%s1 + $0x10] sm:$0xf]
        %v204 = vld [vmem:[%s1 + $0x14] sm:$0xf]
        %v205 = vld [vmem:[%s1 + $0x18] sm:$0xf]
        %v206 = vld [vmem:[%s1 + $0x1c] sm:$0xf]
        %v207 = vld [vmem:[%s1 + $0x20] sm:$0xf]
        %v208 = vld [vmem:[%s1 + $0x24] sm:$0xf]
        %v209 = vld [vmem:[%s1 + $0x28] sm:$0xf]
        %v210 = vld [vmem:[%s1 + $0x2c] sm:$0xf]
        %v211 = vld [vmem:[%s1 + $0x30] sm:$0xf]
        %v212 = vld [vmem:[%s1 + $0x34] sm:$0xf]
        %v213 = vld [vmem:[%s1 + $0x38] sm:$0xf]
        %v214 = vld [vmem:[%s1 + $0x3c] sm:$0xf]
        %v215 = vld [vmem:[%s1 + $0x40] sm:$0xf]
        %v216 = vld [vmem:[%s1 + $0x44] sm:$0xf]
        %v217 = vld [vmem:[%s1 + $0x48] sm:$0xf]
        %v218 = vld [vmem:[%s1 + $0x4c] sm:$0xf]
        %v219 = vld [vmem:[%s1 + $0x50] sm:$0xf]
        %v220 = vld [vmem:[%s1 + $0x54] sm:$0xf]
        %v221 = vld [vmem:[%s1 + $0x58] sm:$0xf]
        %v222 = vld [vmem:[%s1 + $0x5c] sm:$0xf]
        %v223 = vld [vmem:[%s182 + $0x20] sm:$0x11]
        %v224 = vld [vmem:[%s182 + $0x48] sm:$0x11]
        %v225 = vld [vmem:[%s182 + $0x70] sm:$0x11]
        %v226 = vld [vmem:[%s182 + $0x98] sm:$0x11]
        %vm227 = vsmask.f32 3328
        %vm228 = vsmask.f32 7440
        %vm229 = vmor %vm227, %vm228
        %v231 = vshrl.u32 %v183, 16
        %v233 = vrot.slane %v231, 4
        %v234 = vshll.u32 %v183, 16
        %v236 = vrot.slane %v234, 5
        %v237 = vor.u32 %v233, %v236
        %v238 = vrot.slane %v237, 4
        %v240 = vshll.u32 %v184, 16
        %v242 = vrot.slane %v240, 5
        %v243 = vsel %vm229, %v238, %v242
        %v244 = vshrl.u32 %v184, 16
        %v246 = vrot.slane %v244, 4
        %v247 = vor.u32 %v246, %v242
        %v248 = vrot.slane %v247, 4
        %v250 = vshll.u32 %v185, 16
        %v252 = vrot.slane %v250, 5
        %v253 = vsel %vm229, %v248, %v252
        %v254 = vshrl.u32 %v185, 16
        %v256 = vrot.slane %v254, 4
        %v257 = vor.u32 %v256, %v252
        %v258 = vrot.slane %v257, 4
        %v260 = vshll.u32 %v186, 16
        %v262 = vrot.slane %v260, 5
        %v263 = vsel %vm229, %v258, %v262
        %v264 = vshrl.u32 %v186, 16
        %v266 = vrot.slane %v264, 4
        %v267 = vor.u32 %v266, %v262
        %v268 = vrot.slane %v267, 4
        %v270 = vshll.u32 %v223, 16
        %v272 = vrot.slane %v270, 5
        %v273 = vsel %vm229, %v268, %v272
        %v275 = vshrl.u32 %v187, 16
        %v277 = vrot.slane %v275, 4
        %v278 = vshll.u32 %v187, 16
        %v280 = vrot.slane %v278, 5
        %v281 = vor.u32 %v277, %v280
        %v282 = vrot.slane %v281, 4
        %v284 = vshll.u32 %v188, 16
        %v286 = vrot.slane %v284, 5
        %v287 = vsel %vm229, %v282, %v286
        %v288 = vshrl.u32 %v188, 16
        %v290 = vrot.slane %v288, 4
        %v291 = vor.u32 %v290, %v286
        %v292 = vrot.slane %v291, 4
        %v294 = vshll.u32 %v189, 16
        %v296 = vrot.slane %v294, 5
        %v297 = vsel %vm229, %v292, %v296
        %v298 = vshrl.u32 %v189, 16
        %v300 = vrot.slane %v298, 4
        %v301 = vor.u32 %v300, %v296
        %v302 = vrot.slane %v301, 4
        %v304 = vshll.u32 %v190, 16
        %v306 = vrot.slane %v304, 5
        %v307 = vsel %vm229, %v302, %v306
        %v308 = vshrl.u32 %v190, 16
        %v310 = vrot.slane %v308, 4
        %v311 = vor.u32 %v310, %v306
        %v312 = vrot.slane %v311, 4
        %v314 = vshll.u32 %v224, 16
        %v316 = vrot.slane %v314, 5
        %v317 = vsel %vm229, %v312, %v316
        %v319 = vshrl.u32 %v191, 16
        %v321 = vrot.slane %v319, 4
        %v322 = vshll.u32 %v191, 16
        %v324 = vrot.slane %v322, 5
        %v325 = vor.u32 %v321, %v324
        %v326 = vrot.slane %v325, 4
        %v328 = vshll.u32 %v192, 16
        %v330 = vrot.slane %v328, 5
        %v331 = vsel %vm229, %v326, %v330
        %v332 = vshrl.u32 %v192, 16
        %v334 = vrot.slane %v332, 4
        %v335 = vor.u32 %v334, %v330
        %v336 = vrot.slane %v335, 4
        %v338 = vshll.u32 %v193, 16
        %v340 = vrot.slane %v338, 5
        %v341 = vsel %vm229, %v336, %v340
        %v342 = vshrl.u32 %v193, 16
        %v344 = vrot.slane %v342, 4
        %v345 = vor.u32 %v344, %v340
        %v346 = vrot.slane %v345, 4
        %v348 = vshll.u32 %v194, 16
        %v350 = vrot.slane %v348, 5
        %v351 = vsel %vm229, %v346, %v350
        %v352 = vshrl.u32 %v194, 16
        %v354 = vrot.slane %v352, 4
        %v355 = vor.u32 %v354, %v350
        %v356 = vrot.slane %v355, 4
        %v358 = vshll.u32 %v225, 16
        %v360 = vrot.slane %v358, 5
        %v361 = vsel %vm229, %v356, %v360
        %v363 = vshrl.u32 %v195, 16
        %v365 = vrot.slane %v363, 4
        %v366 = vshll.u32 %v195, 16
        %v368 = vrot.slane %v366, 5
        %v369 = vor.u32 %v365, %v368
        %v370 = vrot.slane %v369, 4
        %v372 = vshll.u32 %v196, 16
        %v374 = vrot.slane %v372, 5
        %v375 = vsel %vm229, %v370, %v374
        %v376 = vshrl.u32 %v196, 16
        %v378 = vrot.slane %v376, 4
        %v379 = vor.u32 %v378, %v374
        %v380 = vrot.slane %v379, 4
        %v382 = vshll.u32 %v197, 16
        %v384 = vrot.slane %v382, 5
        %v385 = vsel %vm229, %v380, %v384
        %v386 = vshrl.u32 %v197, 16
        %v388 = vrot.slane %v386, 4
        %v389 = vor.u32 %v388, %v384
        %v390 = vrot.slane %v389, 4
        %v392 = vshll.u32 %v198, 16
        %v394 = vrot.slane %v392, 5
        %v395 = vsel %vm229, %v390, %v394
        %v396 = vshrl.u32 %v198, 16
        %v398 = vrot.slane %v396, 4
        %v399 = vor.u32 %v398, %v394
        %v400 = vrot.slane %v399, 4
        %v402 = vshll.u32 %v226, 16
        %v404 = vrot.slane %v402, 5
        %v405 = vsel %vm229, %v400, %v404
        %s406 = scalar_lea.vmem %s1, 96
        %v407 = vld [vmem:[%s406] sm:$0xf]
        %v408 = vld [vmem:[%s406 + $0x4] sm:$0xf]
        %v409 = vld [vmem:[%s406 + $0x8] sm:$0xf]
        %v410 = vld [vmem:[%s406 + $0xc] sm:$0xf]
        %v411 = vld [vmem:[%s406 + $0x10] sm:$0xf]
        %v412 = vld [vmem:[%s406 + $0x14] sm:$0xf]
        %v413 = vld [vmem:[%s406 + $0x18] sm:$0xf]
        %v414 = vld [vmem:[%s406 + $0x1c] sm:$0xf]
        %v415 = vld [vmem:[%s406 + $0x20] sm:$0xf]
        %v416 = vld [vmem:[%s406 + $0x24] sm:$0xf]
        %v417 = vld [vmem:[%s406 + $0x28] sm:$0xf]
        %v418 = vld [vmem:[%s406 + $0x2c] sm:$0xf]
        %v419 = vld [vmem:[%s406 + $0x30] sm:$0xf]
        %v420 = vld [vmem:[%s406 + $0x34] sm:$0xf]
        %v421 = vld [vmem:[%s406 + $0x38] sm:$0xf]
        %v422 = vld [vmem:[%s406 + $0x3c] sm:$0xf]
        %v423 = vld [vmem:[%s406 + $0x40] sm:$0xf]
        %v424 = vld [vmem:[%s406 + $0x44] sm:$0xf]
        %v425 = vld [vmem:[%s406 + $0x48] sm:$0xf]
        %v426 = vld [vmem:[%s406 + $0x4c] sm:$0xf]
        %v427 = vld [vmem:[%s406 + $0x50] sm:$0xf]
        %v428 = vld [vmem:[%s406 + $0x54] sm:$0xf]
        %v429 = vld [vmem:[%s406 + $0x58] sm:$0xf]
        %v430 = vld [vmem:[%s406 + $0x5c] sm:$0xf]
        %v431 = vunpack.c.l.b16 %v243
        %v432 = vunpack.c.h.b16 %v243
        %v433 = vunpack.c.l.b16 %v253
        %v434 = vunpack.c.h.b16 %v253
        %v435 = vunpack.c.l.b16 %v263
        %v436 = vunpack.c.h.b16 %v263
        %v437 = vunpack.c.l.b16 %v273
        %v438 = vunpack.c.h.b16 %v273
        %v439 = vunpack.c.l.b16 %v287
        %v440 = vunpack.c.h.b16 %v287
        %v441 = vunpack.c.l.b16 %v297
        %v442 = vunpack.c.h.b16 %v297
        %v443 = vunpack.c.l.b16 %v307
        %v444 = vunpack.c.h.b16 %v307
        %v445 = vunpack.c.l.b16 %v317
        %v446 = vunpack.c.h.b16 %v317
        %v447 = vunpack.c.l.b16 %v331
        %v448 = vunpack.c.h.b16 %v331
        %v449 = vunpack.c.l.b16 %v341
        %v450 = vunpack.c.h.b16 %v341
        %v451 = vunpack.c.l.b16 %v351
        %v452 = vunpack.c.h.b16 %v351
        %v453 = vunpack.c.l.b16 %v361
        %v454 = vunpack.c.h.b16 %v361
        %v455 = vunpack.c.l.b16 %v375
        %v456 = vunpack.c.h.b16 %v375
        %v457 = vunpack.c.l.b16 %v385
        %v458 = vunpack.c.h.b16 %v385
        %v459 = vunpack.c.l.b16 %v395
        %v460 = vunpack.c.h.b16 %v395
        %v461 = vunpack.c.l.b16 %v405
        %v462 = vunpack.c.h.b16 %v405
        %v463 = vpack.c.b16 %v433, %v431
        %v464 = vpack.c.b16 %v434, %v432
        %v465 = vpack.c.b16 %v437, %v435
        %v466 = vpack.c.b16 %v438, %v436
        %v467 = vpack.c.b16 %v441, %v439
        %v468 = vpack.c.b16 %v442, %v440
        %v469 = vpack.c.b16 %v445, %v443
        %v470 = vpack.c.b16 %v446, %v444
        %v471 = vpack.c.b16 %v449, %v447
        %v472 = vpack.c.b16 %v450, %v448
        %v473 = vpack.c.b16 %v453, %v451
        %v474 = vpack.c.b16 %v454, %v452
        %v475 = vpack.c.b16 %v457, %v455
        %v476 = vpack.c.b16 %v458, %v456
        %v477 = vpack.c.b16 %v461, %v459
        %v478 = vpack.c.b16 %v462, %v460
        %v511 = vunpack.c.l.b16 %v407
        %v512 = vunpack.c.l.b16 %v408
        %v513 = vunpack.c.l.b16 %v409
        %v514 = vunpack.c.l.b16 %v410
        %v515 = vunpack.c.l.b16 %v411
        %v516 = vunpack.c.l.b16 %v412
        %v517 = vunpack.c.l.b16 %v413
        %v518 = vunpack.c.l.b16 %v414
        %v519 = vunpack.c.l.b16 %v415
        %v520 = vunpack.c.l.b16 %v416
        %v521 = vunpack.c.l.b16 %v417
        %v522 = vunpack.c.l.b16 %v418
        %v523 = vunpack.c.l.b16 %v419
        %v524 = vunpack.c.l.b16 %v420
        %v525 = vunpack.c.l.b16 %v421
        %v526 = vunpack.c.l.b16 %v422
        %v527 = vunpack.c.l.b16 %v423
        %v528 = vunpack.c.l.b16 %v424
        %v529 = vunpack.c.l.b16 %v425
        %v530 = vunpack.c.l.b16 %v426
        %v531 = vunpack.c.l.b16 %v427
        %v532 = vunpack.c.l.b16 %v428
        %v533 = vunpack.c.l.b16 %v429
        %v534 = vunpack.c.l.b16 %v430
        %v535 = vpack.c.b16 %v512, %v511
        %v536 = vpack.c.b16 %v514, %v513
        %v537 = vpack.c.b16 %v516, %v515
        %v538 = vpack.c.b16 %v518, %v517
        %v539 = vpack.c.b16 %v520, %v519
        %v540 = vpack.c.b16 %v522, %v521
        %v541 = vpack.c.b16 %v524, %v523
        %v542 = vpack.c.b16 %v526, %v525
        %v543 = vpack.c.b16 %v528, %v527
        %v544 = vpack.c.b16 %v530, %v529
        %v545 = vpack.c.b16 %v532, %v531
        %v546 = vpack.c.b16 %v534, %v533
        %vm559 = vcmask 523264
        %v561 = vsel %vm559, %v464, 0
        %v564 = vsel %vm559, %v466, 0
        %v567 = vsel %vm559, %v468, 0
        %v570 = vsel %vm559, %v470, 0
        %v573 = vsel %vm559, %v472, 0
        %v576 = vsel %vm559, %v474, 0
        %v579 = vsel %vm559, %v476, 0
        %v582 = vsel %vm559, %v478, 0
        %584 = vmatprep.subr.bf16.mxu0 0
        %585 = vmatpush1.bf16.msra.mxu0 %v542
        %586 = vmatprep.subr.bf16.mxu0 0
        %587 = vmatpush1.bf16.msra.mxu0 %v541
        %588 = vmatprep.subr.bf16.mxu0 0
        %589 = vmatpush1.bf16.msra.mxu0 %v540
        %590 = vmatprep.subr.bf16.mxu0 0
        %591 = vmatpush1.bf16.msra.mxu0 %v539
        %592 = vmatprep.subr.bf16.mxu0 0
        %593 = vmatpush1.bf16.msra.mxu0 %v538
        %594 = vmatprep.subr.bf16.mxu0 0
        %595 = vmatpush1.bf16.msra.mxu0 %v537
        %596 = vmatprep.subr.bf16.mxu0 0
        %597 = vmatpush1.bf16.msra.mxu0 %v536
        %598 = vmatprep.subr.bf16.mxu0 0
        %599 = vmatpush1.bf16.msra.mxu0 %v535
        %600 = vmatprep.subr.bf16.mxu0 0
        %601 = vmatpush2.bf16.msra.mxu0 0
        %602 = vmatprep.subr.bf16.mxu0 0
        %603 = vmatpush2.bf16.msra.mxu0 0
        %604 = vmatprep.subr.bf16.mxu0 0
        %605 = vmatpush2.bf16.msra.mxu0 0
        %606 = vmatprep.subr.bf16.mxu0 0
        %607 = vmatpush2.bf16.msra.mxu0 0
        %608 = vmatprep.subr.bf16.mxu0 0
        %609 = vmatpush2.bf16.msra.mxu0 %v546
        %610 = vmatprep.subr.bf16.mxu0 0
        %611 = vmatpush2.bf16.msra.mxu0 %v545
        %612 = vmatprep.subr.bf16.mxu0 0
        %613 = vmatpush2.bf16.msra.mxu0 %v544
        %614 = vmatprep.subr.bf16.mxu0 0
        %615 = vmatpush2.bf16.msra.mxu0 %v543
        %616 = vmatprep.mubr.bf16.mxu0 %v561
        %617 = vmatmul.mubr.bf16.gmra.mxu0 %v463
        %v618 = vpop.f32.mrf.mxu0
        %v619 = vadd.f32 0.0, %v618
        %v620 = vpop.f32.mrf.mxu0
        %v621 = vpop.f32.mrf.mxu0
        %v622 = vadd.f32 0.0, %v621
        %v623 = vpop.f32.mrf.mxu0
        %624 = vmatprep.mubr.bf16.mxu0 %v564
        %625 = vmatmul.mubr.bf16.gmra.mxu0 %v465
        %v626 = vpop.f32.mrf.mxu0
        %v627 = vadd.f32 0.0, %v626
        %v628 = vpop.f32.mrf.mxu0
        %v629 = vpop.f32.mrf.mxu0
        %v630 = vadd.f32 0.0, %v629
        %v631 = vpop.f32.mrf.mxu0
        %632 = vmatprep.mubr.bf16.mxu0 %v567
        %633 = vmatmul.mubr.bf16.gmra.mxu0 %v467
        %v634 = vpop.f32.mrf.mxu0
        %v635 = vadd.f32 0.0, %v634
        %v636 = vpop.f32.mrf.mxu0
        %v637 = vpop.f32.mrf.mxu0
        %v638 = vadd.f32 0.0, %v637
        %v639 = vpop.f32.mrf.mxu0
        %640 = vmatprep.mubr.bf16.mxu0 %v570
        %641 = vmatmul.mubr.bf16.gmra.mxu0 %v469
        %v642 = vpop.f32.mrf.mxu0
        %v643 = vadd.f32 0.0, %v642
        %v644 = vpop.f32.mrf.mxu0
        %v645 = vpop.f32.mrf.mxu0
        %v646 = vadd.f32 0.0, %v645
        %v647 = vpop.f32.mrf.mxu0
        %648 = vmatprep.mubr.bf16.mxu0 %v573
        %649 = vmatmul.mubr.bf16.gmra.mxu0 %v471
        %v650 = vpop.f32.mrf.mxu0
        %v651 = vadd.f32 0.0, %v650
        %v652 = vpop.f32.mrf.mxu0
        %v653 = vpop.f32.mrf.mxu0
        %v654 = vadd.f32 0.0, %v653
        %v655 = vpop.f32.mrf.mxu0
        %656 = vmatprep.mubr.bf16.mxu0 %v576
        %657 = vmatmul.mubr.bf16.gmra.mxu0 %v473
        %v658 = vpop.f32.mrf.mxu0
        %v659 = vadd.f32 0.0, %v658
        %v660 = vpop.f32.mrf.mxu0
        %v661 = vpop.f32.mrf.mxu0
        %v662 = vadd.f32 0.0, %v661
        %v663 = vpop.f32.mrf.mxu0
        %664 = vmatprep.mubr.bf16.mxu0 %v579
        %665 = vmatmul.mubr.bf16.gmra.mxu0 %v475
        %v666 = vpop.f32.mrf.mxu0
        %v667 = vadd.f32 0.0, %v666
        %v668 = vpop.f32.mrf.mxu0
        %v669 = vpop.f32.mrf.mxu0
        %v670 = vadd.f32 0.0, %v669
        %v671 = vpop.f32.mrf.mxu0
        %672 = vmatprep.mubr.bf16.mxu0 %v582
        %673 = vmatmul.mubr.bf16.gmra.mxu0 %v477
        %v674 = vpop.f32.mrf.mxu0
        %v675 = vadd.f32 0.0, %v674
        %v676 = vpop.f32.mrf.mxu0
        %v677 = vpop.f32.mrf.mxu0
        %v678 = vadd.f32 0.0, %v677
        %v679 = vpop.f32.mrf.mxu0
        %680 = vdwg.mxu0
        %v697 = vunpack.c.l.b16 %v183
        %v698 = vunpack.c.h.b16 %v183
        %v699 = vunpack.c.l.b16 %v184
        %v700 = vunpack.c.h.b16 %v184
        %v701 = vunpack.c.l.b16 %v185
        %v702 = vunpack.c.h.b16 %v185
        %v703 = vunpack.c.l.b16 %v186
        %v704 = vunpack.c.h.b16 %v186
        %v705 = vunpack.c.l.b16 %v187
        %v706 = vunpack.c.h.b16 %v187
        %v707 = vunpack.c.l.b16 %v188
        %v708 = vunpack.c.h.b16 %v188
        %v709 = vunpack.c.l.b16 %v189
        %v710 = vunpack.c.h.b16 %v189
        %v711 = vunpack.c.l.b16 %v190
        %v712 = vunpack.c.h.b16 %v190
        %v713 = vunpack.c.l.b16 %v191
        %v714 = vunpack.c.h.b16 %v191
        %v715 = vunpack.c.l.b16 %v192
        %v716 = vunpack.c.h.b16 %v192
        %v717 = vunpack.c.l.b16 %v193
        %v718 = vunpack.c.h.b16 %v193
        %v719 = vunpack.c.l.b16 %v194
        %v720 = vunpack.c.h.b16 %v194
        %v721 = vunpack.c.l.b16 %v195
        %v722 = vunpack.c.h.b16 %v195
        %v723 = vunpack.c.l.b16 %v196
        %v724 = vunpack.c.h.b16 %v196
        %v725 = vunpack.c.l.b16 %v197
        %v726 = vunpack.c.h.b16 %v197
        %v727 = vunpack.c.l.b16 %v198
        %v728 = vunpack.c.h.b16 %v198
        %v729 = vpack.c.b16 %v699, %v697
        %v730 = vpack.c.b16 %v700, %v698
        %v731 = vpack.c.b16 %v703, %v701
        %v732 = vpack.c.b16 %v704, %v702
        %v733 = vpack.c.b16 %v707, %v705
        %v734 = vpack.c.b16 %v708, %v706
        %v735 = vpack.c.b16 %v711, %v709
        %v736 = vpack.c.b16 %v712, %v710
        %v737 = vpack.c.b16 %v715, %v713
        %v738 = vpack.c.b16 %v716, %v714
        %v739 = vpack.c.b16 %v719, %v717
        %v740 = vpack.c.b16 %v720, %v718
        %v741 = vpack.c.b16 %v723, %v721
        %v742 = vpack.c.b16 %v724, %v722
        %v743 = vpack.c.b16 %v727, %v725
        %v744 = vpack.c.b16 %v728, %v726
        %v777 = vunpack.c.l.b16 %v199
        %v778 = vunpack.c.l.b16 %v200
        %v779 = vunpack.c.l.b16 %v201
        %v780 = vunpack.c.l.b16 %v202
        %v781 = vunpack.c.l.b16 %v203
        %v782 = vunpack.c.l.b16 %v204
        %v783 = vunpack.c.l.b16 %v205
        %v784 = vunpack.c.l.b16 %v206
        %v785 = vunpack.c.l.b16 %v207
        %v786 = vunpack.c.l.b16 %v208
        %v787 = vunpack.c.l.b16 %v209
        %v788 = vunpack.c.l.b16 %v210
        %v789 = vunpack.c.l.b16 %v211
        %v790 = vunpack.c.l.b16 %v212
        %v791 = vunpack.c.l.b16 %v213
        %v792 = vunpack.c.l.b16 %v214
        %v793 = vunpack.c.l.b16 %v215
        %v794 = vunpack.c.l.b16 %v216
        %v795 = vunpack.c.l.b16 %v217
        %v796 = vunpack.c.l.b16 %v218
        %v797 = vunpack.c.l.b16 %v219
        %v798 = vunpack.c.l.b16 %v220
        %v799 = vunpack.c.l.b16 %v221
        %v800 = vunpack.c.l.b16 %v222
        %v801 = vpack.c.b16 %v778, %v777
        %v802 = vpack.c.b16 %v780, %v779
        %v803 = vpack.c.b16 %v782, %v781
        %v804 = vpack.c.b16 %v784, %v783
        %v805 = vpack.c.b16 %v786, %v785
        %v806 = vpack.c.b16 %v788, %v787
        %v807 = vpack.c.b16 %v790, %v789
        %v808 = vpack.c.b16 %v792, %v791
        %v809 = vpack.c.b16 %v794, %v793
        %v810 = vpack.c.b16 %v796, %v795
        %v811 = vpack.c.b16 %v798, %v797
        %v812 = vpack.c.b16 %v800, %v799
        %v826 = vsel %vm559, %v730, 0
        %v829 = vsel %vm559, %v732, 0
        %v832 = vsel %vm559, %v734, 0
        %v835 = vsel %vm559, %v736, 0
        %v838 = vsel %vm559, %v738, 0
        %v841 = vsel %vm559, %v740, 0
        %v844 = vsel %vm559, %v742, 0
        %v847 = vsel %vm559, %v744, 0
        %849 = vmatprep.subr.bf16.mxu0 0
        %850 = vmatpush1.bf16.msra.mxu0 %v808
        %851 = vmatprep.subr.bf16.mxu0 0
        %852 = vmatpush1.bf16.msra.mxu0 %v807
        %853 = vmatprep.subr.bf16.mxu0 0
        %854 = vmatpush1.bf16.msra.mxu0 %v806
        %855 = vmatprep.subr.bf16.mxu0 0
        %856 = vmatpush1.bf16.msra.mxu0 %v805
        %857 = vmatprep.subr.bf16.mxu0 0
        %858 = vmatpush1.bf16.msra.mxu0 %v804
        %859 = vmatprep.subr.bf16.mxu0 0
        %860 = vmatpush1.bf16.msra.mxu0 %v803
        %861 = vmatprep.subr.bf16.mxu0 0
        %862 = vmatpush1.bf16.msra.mxu0 %v802
        %863 = vmatprep.subr.bf16.mxu0 0
        %864 = vmatpush1.bf16.msra.mxu0 %v801
        %865 = vmatprep.subr.bf16.mxu0 0
        %866 = vmatpush2.bf16.msra.mxu0 0
        %867 = vmatprep.subr.bf16.mxu0 0
        %868 = vmatpush2.bf16.msra.mxu0 0
        %869 = vmatprep.subr.bf16.mxu0 0
        %870 = vmatpush2.bf16.msra.mxu0 0
        %871 = vmatprep.subr.bf16.mxu0 0
        %872 = vmatpush2.bf16.msra.mxu0 0
        %873 = vmatprep.subr.bf16.mxu0 0
        %874 = vmatpush2.bf16.msra.mxu0 %v812
        %875 = vmatprep.subr.bf16.mxu0 0
        %876 = vmatpush2.bf16.msra.mxu0 %v811
        %877 = vmatprep.subr.bf16.mxu0 0
        %878 = vmatpush2.bf16.msra.mxu0 %v810
        %879 = vmatprep.subr.bf16.mxu0 0
        %880 = vmatpush2.bf16.msra.mxu0 %v809
        %881 = vmatprep.mubr.bf16.mxu0 %v826
        %882 = vmatmul.mubr.bf16.gmra.mxu0 %v729
        %v883 = vpop.f32.mrf.mxu0
        %v884 = vadd.f32 %v619, %v883
        %v885 = vpop.f32.mrf.mxu0
        %v886 = vpop.f32.mrf.mxu0
        %v887 = vadd.f32 %v622, %v886
        %v888 = vpop.f32.mrf.mxu0
        %889 = vmatprep.mubr.bf16.mxu0 %v829
        %890 = vmatmul.mubr.bf16.gmra.mxu0 %v731
        %v891 = vpop.f32.mrf.mxu0
        %v892 = vadd.f32 %v627, %v891
        %v893 = vpop.f32.mrf.mxu0
        %v894 = vpop.f32.mrf.mxu0
        %v895 = vadd.f32 %v630, %v894
        %v896 = vpop.f32.mrf.mxu0
        %897 = vmatprep.mubr.bf16.mxu0 %v832
        %898 = vmatmul.mubr.bf16.gmra.mxu0 %v733
        %v899 = vpop.f32.mrf.mxu0
        %v900 = vadd.f32 %v635, %v899
        %v901 = vpop.f32.mrf.mxu0
        %v902 = vpop.f32.mrf.mxu0
        %v903 = vadd.f32 %v638, %v902
        %v904 = vpop.f32.mrf.mxu0
        %905 = vmatprep.mubr.bf16.mxu0 %v835
        %906 = vmatmul.mubr.bf16.gmra.mxu0 %v735
        %v907 = vpop.f32.mrf.mxu0
        %v908 = vadd.f32 %v643, %v907
        %v909 = vpop.f32.mrf.mxu0
        %v910 = vpop.f32.mrf.mxu0
        %v911 = vadd.f32 %v646, %v910
        %v912 = vpop.f32.mrf.mxu0
        %913 = vmatprep.mubr.bf16.mxu0 %v838
        %914 = vmatmul.mubr.bf16.gmra.mxu0 %v737
        %v915 = vpop.f32.mrf.mxu0
        %v916 = vadd.f32 %v651, %v915
        %v917 = vpop.f32.mrf.mxu0
        %v918 = vpop.f32.mrf.mxu0
        %v919 = vadd.f32 %v654, %v918
        %v920 = vpop.f32.mrf.mxu0
        %921 = vmatprep.mubr.bf16.mxu0 %v841
        %922 = vmatmul.mubr.bf16.gmra.mxu0 %v739
        %v923 = vpop.f32.mrf.mxu0
        %v924 = vadd.f32 %v659, %v923
        %v925 = vpop.f32.mrf.mxu0
        %v926 = vpop.f32.mrf.mxu0
        %v927 = vadd.f32 %v662, %v926
        %v928 = vpop.f32.mrf.mxu0
        %929 = vmatprep.mubr.bf16.mxu0 %v844
        %930 = vmatmul.mubr.bf16.gmra.mxu0 %v741
        %v931 = vpop.f32.mrf.mxu0
        %v932 = vadd.f32 %v667, %v931
        %v933 = vpop.f32.mrf.mxu0
        %v934 = vpop.f32.mrf.mxu0
        %v935 = vadd.f32 %v670, %v934
        %v936 = vpop.f32.mrf.mxu0
        %937 = vmatprep.mubr.bf16.mxu0 %v847
        %938 = vmatmul.mubr.bf16.gmra.mxu0 %v743
        %v939 = vpop.f32.mrf.mxu0
        %v940 = vadd.f32 %v675, %v939
        %v941 = vpop.f32.mrf.mxu0
        %v942 = vpop.f32.mrf.mxu0
        %v943 = vadd.f32 %v678, %v942
        %v944 = vpop.f32.mrf.mxu0
        %945 = vdwg.mxu0
        %v946 = vld [vmem:[%s182] sm:$0xee]
        %v947 = vld [vmem:[%s182 + $0x28] sm:$0xee]
        %v948 = vld [vmem:[%s182 + $0x50] sm:$0xee]
        %v949 = vld [vmem:[%s182 + $0x78] sm:$0xee]
        %vm958 = vcmask 1042432
        %vm959 = vcmask 1046532
        %vm960 = vmor %vm958, %vm959
        %v961 = vrot.slane %v946, 5
        %v962 = vrot.slane %v961, 4
        %v963 = vrot.slane %v184, 5
        %v964 = vsel %vm960, %v962, %v963
        %v965 = vrot.slane %v963, 4
        %v966 = vrot.slane %v185, 5
        %v967 = vsel %vm960, %v965, %v966
        %v968 = vrot.slane %v966, 4
        %v969 = vrot.slane %v186, 5
        %v970 = vsel %vm960, %v968, %v969
        %v971 = vrot.slane %v969, 4
        %v972 = vrot.slane %v223, 5
        %v973 = vsel %vm960, %v971, %v972
        %v974 = vrot.slane %v947, 5
        %v975 = vrot.slane %v974, 4
        %v976 = vrot.slane %v188, 5
        %v977 = vsel %vm960, %v975, %v976
        %v978 = vrot.slane %v976, 4
        %v979 = vrot.slane %v189, 5
        %v980 = vsel %vm960, %v978, %v979
        %v981 = vrot.slane %v979, 4
        %v982 = vrot.slane %v190, 5
        %v983 = vsel %vm960, %v981, %v982
        %v984 = vrot.slane %v982, 4
        %v985 = vrot.slane %v224, 5
        %v986 = vsel %vm960, %v984, %v985
        %v987 = vrot.slane %v948, 5
        %v988 = vrot.slane %v987, 4
        %v989 = vrot.slane %v192, 5
        %v990 = vsel %vm960, %v988, %v989
        %v991 = vrot.slane %v989, 4
        %v992 = vrot.slane %v193, 5
        %v993 = vsel %vm960, %v991, %v992
        %v994 = vrot.slane %v992, 4
        %v995 = vrot.slane %v194, 5
        %v996 = vsel %vm960, %v994, %v995
        %v997 = vrot.slane %v995, 4
        %v998 = vrot.slane %v225, 5
        %v999 = vsel %vm960, %v997, %v998
        %v1000 = vrot.slane %v949, 5
        %v1001 = vrot.slane %v1000, 4
        %v1002 = vrot.slane %v196, 5
        %v1003 = vsel %vm960, %v1001, %v1002
        %v1004 = vrot.slane %v1002, 4
        %v1005 = vrot.slane %v197, 5
        %v1006 = vsel %vm960, %v1004, %v1005
        %v1007 = vrot.slane %v1005, 4
        %v1008 = vrot.slane %v198, 5
        %v1009 = vsel %vm960, %v1007, %v1008
        %v1010 = vrot.slane %v1008, 4
        %v1011 = vrot.slane %v226, 5
        %v1012 = vsel %vm960, %v1010, %v1011
        %s1013 = scalar_lea.vmem %s1, 192
        %v1014 = vld [vmem:[%s1013] sm:$0xf]
        %v1015 = vld [vmem:[%s1013 + $0x4] sm:$0xf]
        %v1016 = vld [vmem:[%s1013 + $0x8] sm:$0xf]
        %v1017 = vld [vmem:[%s1013 + $0xc] sm:$0xf]
        %v1018 = vld [vmem:[%s1013 + $0x10] sm:$0xf]
        %v1019 = vld [vmem:[%s1013 + $0x14] sm:$0xf]
        %v1020 = vld [vmem:[%s1013 + $0x18] sm:$0xf]
        %v1021 = vld [vmem:[%s1013 + $0x1c] sm:$0xf]
        %v1022 = vld [vmem:[%s1013 + $0x20] sm:$0xf]
        %v1023 = vld [vmem:[%s1013 + $0x24] sm:$0xf]
        %v1024 = vld [vmem:[%s1013 + $0x28] sm:$0xf]
        %v1025 = vld [vmem:[%s1013 + $0x2c] sm:$0xf]
        %v1026 = vld [vmem:[%s1013 + $0x30] sm:$0xf]
        %v1027 = vld [vmem:[%s1013 + $0x34] sm:$0xf]
        %v1028 = vld [vmem:[%s1013 + $0x38] sm:$0xf]
        %v1029 = vld [vmem:[%s1013 + $0x3c] sm:$0xf]
        %v1030 = vld [vmem:[%s1013 + $0x40] sm:$0xf]
        %v1031 = vld [vmem:[%s1013 + $0x44] sm:$0xf]
        %v1032 = vld [vmem:[%s1013 + $0x48] sm:$0xf]
        %v1033 = vld [vmem:[%s1013 + $0x4c] sm:$0xf]
        %v1034 = vld [vmem:[%s1013 + $0x50] sm:$0xf]
        %v1035 = vld [vmem:[%s1013 + $0x54] sm:$0xf]
        %v1036 = vld [vmem:[%s1013 + $0x58] sm:$0xf]
        %v1037 = vld [vmem:[%s1013 + $0x5c] sm:$0xf]
        %v1038 = vunpack.c.l.b16 %v964
        %v1039 = vunpack.c.h.b16 %v964
        %v1040 = vunpack.c.l.b16 %v967
        %v1041 = vunpack.c.h.b16 %v967
        %v1042 = vunpack.c.l.b16 %v970
        %v1043 = vunpack.c.h.b16 %v970
        %v1044 = vunpack.c.l.b16 %v973
        %v1045 = vunpack.c.h.b16 %v973
        %v1046 = vunpack.c.l.b16 %v977
        %v1047 = vunpack.c.h.b16 %v977
        %v1048 = vunpack.c.l.b16 %v980
        %v1049 = vunpack.c.h.b16 %v980
        %v1050 = vunpack.c.l.b16 %v983
        %v1051 = vunpack.c.h.b16 %v983
        %v1052 = vunpack.c.l.b16 %v986
        %v1053 = vunpack.c.h.b16 %v986
        %v1054 = vunpack.c.l.b16 %v990
        %v1055 = vunpack.c.h.b16 %v990
        %v1056 = vunpack.c.l.b16 %v993
        %v1057 = vunpack.c.h.b16 %v993
        %v1058 = vunpack.c.l.b16 %v996
        %v1059 = vunpack.c.h.b16 %v996
        %v1060 = vunpack.c.l.b16 %v999
        %v1061 = vunpack.c.h.b16 %v999
        %v1062 = vunpack.c.l.b16 %v1003
        %v1063 = vunpack.c.h.b16 %v1003
        %v1064 = vunpack.c.l.b16 %v1006
        %v1065 = vunpack.c.h.b16 %v1006
        %v1066 = vunpack.c.l.b16 %v1009
        %v1067 = vunpack.c.h.b16 %v1009
        %v1068 = vunpack.c.l.b16 %v1012
        %v1069 = vunpack.c.h.b16 %v1012
        %v1070 = vpack.c.b16 %v1040, %v1038
        %v1071 = vpack.c.b16 %v1041, %v1039
        %v1072 = vpack.c.b16 %v1044, %v1042
        %v1073 = vpack.c.b16 %v1045, %v1043
        %v1074 = vpack.c.b16 %v1048, %v1046
        %v1075 = vpack.c.b16 %v1049, %v1047
        %v1076 = vpack.c.b16 %v1052, %v1050
        %v1077 = vpack.c.b16 %v1053, %v1051
        %v1078 = vpack.c.b16 %v1056, %v1054
        %v1079 = vpack.c.b16 %v1057, %v1055
        %v1080 = vpack.c.b16 %v1060, %v1058
        %v1081 = vpack.c.b16 %v1061, %v1059
        %v1082 = vpack.c.b16 %v1064, %v1062
        %v1083 = vpack.c.b16 %v1065, %v1063
        %v1084 = vpack.c.b16 %v1068, %v1066
        %v1085 = vpack.c.b16 %v1069, %v1067
        %v1118 = vunpack.c.l.b16 %v1014
        %v1119 = vunpack.c.l.b16 %v1015
        %v1120 = vunpack.c.l.b16 %v1016
        %v1121 = vunpack.c.l.b16 %v1017
        %v1122 = vunpack.c.l.b16 %v1018
        %v1123 = vunpack.c.l.b16 %v1019
        %v1124 = vunpack.c.l.b16 %v1020
        %v1125 = vunpack.c.l.b16 %v1021
        %v1126 = vunpack.c.l.b16 %v1022
        %v1127 = vunpack.c.l.b16 %v1023
        %v1128 = vunpack.c.l.b16 %v1024
        %v1129 = vunpack.c.l.b16 %v1025
        %v1130 = vunpack.c.l.b16 %v1026
        %v1131 = vunpack.c.l.b16 %v1027
        %v1132 = vunpack.c.l.b16 %v1028
        %v1133 = vunpack.c.l.b16 %v1029
        %v1134 = vunpack.c.l.b16 %v1030
        %v1135 = vunpack.c.l.b16 %v1031
        %v1136 = vunpack.c.l.b16 %v1032
        %v1137 = vunpack.c.l.b16 %v1033
        %v1138 = vunpack.c.l.b16 %v1034
        %v1139 = vunpack.c.l.b16 %v1035
        %v1140 = vunpack.c.l.b16 %v1036
        %v1141 = vunpack.c.l.b16 %v1037
        %v1142 = vpack.c.b16 %v1119, %v1118
        %v1143 = vpack.c.b16 %v1121, %v1120
        %v1144 = vpack.c.b16 %v1123, %v1122
        %v1145 = vpack.c.b16 %v1125, %v1124
        %v1146 = vpack.c.b16 %v1127, %v1126
        %v1147 = vpack.c.b16 %v1129, %v1128
        %v1148 = vpack.c.b16 %v1131, %v1130
        %v1149 = vpack.c.b16 %v1133, %v1132
        %v1150 = vpack.c.b16 %v1135, %v1134
        %v1151 = vpack.c.b16 %v1137, %v1136
        %v1152 = vpack.c.b16 %v1139, %v1138
        %v1153 = vpack.c.b16 %v1141, %v1140
        %v1167 = vsel %vm559, %v1071, 0
        %v1170 = vsel %vm559, %v1073, 0
        %v1173 = vsel %vm559, %v1075, 0
        %v1176 = vsel %vm559, %v1077, 0
        %v1179 = vsel %vm559, %v1079, 0
        %v1182 = vsel %vm559, %v1081, 0
        %v1185 = vsel %vm559, %v1083, 0
        %v1188 = vsel %vm559, %v1085, 0
        %1190 = vmatprep.subr.bf16.mxu0 0
        %1191 = vmatpush1.bf16.msra.mxu0 %v1149
        %1192 = vmatprep.subr.bf16.mxu0 0
        %1193 = vmatpush1.bf16.msra.mxu0 %v1148
        %1194 = vmatprep.subr.bf16.mxu0 0
        %1195 = vmatpush1.bf16.msra.mxu0 %v1147
        %1196 = vmatprep.subr.bf16.mxu0 0
        %1197 = vmatpush1.bf16.msra.mxu0 %v1146
        %1198 = vmatprep.subr.bf16.mxu0 0
        %1199 = vmatpush1.bf16.msra.mxu0 %v1145
        %1200 = vmatprep.subr.bf16.mxu0 0
        %1201 = vmatpush1.bf16.msra.mxu0 %v1144
        %1202 = vmatprep.subr.bf16.mxu0 0
        %1203 = vmatpush1.bf16.msra.mxu0 %v1143
        %1204 = vmatprep.subr.bf16.mxu0 0
        %1205 = vmatpush1.bf16.msra.mxu0 %v1142
        %1206 = vmatprep.subr.bf16.mxu0 0
        %1207 = vmatpush2.bf16.msra.mxu0 0
        %1208 = vmatprep.subr.bf16.mxu0 0
        %1209 = vmatpush2.bf16.msra.mxu0 0
        %1210 = vmatprep.subr.bf16.mxu0 0
        %1211 = vmatpush2.bf16.msra.mxu0 0
        %1212 = vmatprep.subr.bf16.mxu0 0
        %1213 = vmatpush2.bf16.msra.mxu0 0
        %1214 = vmatprep.subr.bf16.mxu0 0
        %1215 = vmatpush2.bf16.msra.mxu0 %v1153
        %1216 = vmatprep.subr.bf16.mxu0 0
        %1217 = vmatpush2.bf16.msra.mxu0 %v1152
        %1218 = vmatprep.subr.bf16.mxu0 0
        %1219 = vmatpush2.bf16.msra.mxu0 %v1151
        %1220 = vmatprep.subr.bf16.mxu0 0
        %1221 = vmatpush2.bf16.msra.mxu0 %v1150
        %1222 = vmatprep.mubr.bf16.mxu0 %v1167
        %1223 = vmatmul.mubr.bf16.gmra.mxu0 %v1070
        %v1224 = vpop.f32.mrf.mxu0
        %v1225 = vadd.f32 0.0, %v1224
        %v1226 = vpop.f32.mrf.mxu0
        %v1227 = vpop.f32.mrf.mxu0
        %v1228 = vadd.f32 0.0, %v1227
        %v1229 = vpop.f32.mrf.mxu0
        %1230 = vmatprep.mubr.bf16.mxu0 %v1170
        %1231 = vmatmul.mubr.bf16.gmra.mxu0 %v1072
        %v1232 = vpop.f32.mrf.mxu0
        %v1233 = vadd.f32 0.0, %v1232
        %v1234 = vpop.f32.mrf.mxu0
        %v1235 = vpop.f32.mrf.mxu0
        %v1236 = vadd.f32 0.0, %v1235
        %v1237 = vpop.f32.mrf.mxu0
        %1238 = vmatprep.mubr.bf16.mxu0 %v1173
        %1239 = vmatmul.mubr.bf16.gmra.mxu0 %v1074
        %v1240 = vpop.f32.mrf.mxu0
        %v1241 = vadd.f32 0.0, %v1240
        %v1242 = vpop.f32.mrf.mxu0
        %v1243 = vpop.f32.mrf.mxu0
        %v1244 = vadd.f32 0.0, %v1243
        %v1245 = vpop.f32.mrf.mxu0
        %1246 = vmatprep.mubr.bf16.mxu0 %v1176
        %1247 = vmatmul.mubr.bf16.gmra.mxu0 %v1076
        %v1248 = vpop.f32.mrf.mxu0
        %v1249 = vadd.f32 0.0, %v1248
        %v1250 = vpop.f32.mrf.mxu0
        %v1251 = vpop.f32.mrf.mxu0
        %v1252 = vadd.f32 0.0, %v1251
        %v1253 = vpop.f32.mrf.mxu0
        %1254 = vmatprep.mubr.bf16.mxu0 %v1179
        %1255 = vmatmul.mubr.bf16.gmra.mxu0 %v1078
        %v1256 = vpop.f32.mrf.mxu0
        %v1257 = vadd.f32 0.0, %v1256
        %v1258 = vpop.f32.mrf.mxu0
        %v1259 = vpop.f32.mrf.mxu0
        %v1260 = vadd.f32 0.0, %v1259
        %v1261 = vpop.f32.mrf.mxu0
        %1262 = vmatprep.mubr.bf16.mxu0 %v1182
        %1263 = vmatmul.mubr.bf16.gmra.mxu0 %v1080
        %v1264 = vpop.f32.mrf.mxu0
        %v1265 = vadd.f32 0.0, %v1264
        %v1266 = vpop.f32.mrf.mxu0
        %v1267 = vpop.f32.mrf.mxu0
        %v1268 = vadd.f32 0.0, %v1267
        %v1269 = vpop.f32.mrf.mxu0
        %1270 = vmatprep.mubr.bf16.mxu0 %v1185
        %1271 = vmatmul.mubr.bf16.gmra.mxu0 %v1082
        %v1272 = vpop.f32.mrf.mxu0
        %v1273 = vadd.f32 0.0, %v1272
        %v1274 = vpop.f32.mrf.mxu0
        %v1275 = vpop.f32.mrf.mxu0
        %v1276 = vadd.f32 0.0, %v1275
        %v1277 = vpop.f32.mrf.mxu0
        %1278 = vmatprep.mubr.bf16.mxu0 %v1188
        %1279 = vmatmul.mubr.bf16.gmra.mxu0 %v1084
        %v1280 = vpop.f32.mrf.mxu0
        %v1281 = vadd.f32 0.0, %v1280
        %v1282 = vpop.f32.mrf.mxu0
        %v1283 = vpop.f32.mrf.mxu0
        %v1284 = vadd.f32 0.0, %v1283
        %v1285 = vpop.f32.mrf.mxu0
        %1286 = vdwg.mxu0
        %v1287 = vadd.f32 %v884, %v1225
        %v1288 = vadd.f32 %v887, %v1228
        %v1289 = vadd.f32 %v892, %v1233
        %v1290 = vadd.f32 %v895, %v1236
        %v1291 = vadd.f32 %v900, %v1241
        %v1292 = vadd.f32 %v903, %v1244
        %v1293 = vadd.f32 %v908, %v1249
        %v1294 = vadd.f32 %v911, %v1252
        %v1295 = vadd.f32 %v916, %v1257
        %v1296 = vadd.f32 %v919, %v1260
        %v1297 = vadd.f32 %v924, %v1265
        %v1298 = vadd.f32 %v927, %v1268
        %v1299 = vadd.f32 %v932, %v1273
        %v1300 = vadd.f32 %v935, %v1276
        %v1301 = vadd.f32 %v940, %v1281
        %v1302 = vadd.f32 %v943, %v1284
        %v1304 = vlaneseq
        %v1305 = vshrl.u32 %v1304, 7
        %v1306 = vsub.s32 0, %v1305
        %v1307 = vrot.slane %v172, %v1306
        %v1309 = vadd.f32 %v1287, %v1307
        %v1310 = vadd.f32 %v1288, %v1307
        %v1311 = vadd.f32 %v1289, %v1307
        %v1312 = vadd.f32 %v1290, %v1307
        %v1313 = vadd.f32 %v1291, %v1307
        %v1314 = vadd.f32 %v1292, %v1307
        %v1315 = vadd.f32 %v1293, %v1307
        %v1316 = vadd.f32 %v1294, %v1307
        %v1317 = vadd.f32 %v1295, %v1307
        %v1318 = vadd.f32 %v1296, %v1307
        %v1319 = vadd.f32 %v1297, %v1307
        %v1320 = vadd.f32 %v1298, %v1307
        %v1321 = vadd.f32 %v1299, %v1307
        %v1322 = vadd.f32 %v1300, %v1307
        %v1323 = vadd.f32 %v1301, %v1307
        %v1324 = vadd.f32 %v1302, %v1307
        %v1325 = vmax.f32 %v1309, 0.0
        %v1326 = vmax.f32 %v1310, 0.0
        %v1327 = vmax.f32 %v1311, 0.0
        %v1328 = vmax.f32 %v1312, 0.0
        %v1329 = vmax.f32 %v1313, 0.0
        %v1330 = vmax.f32 %v1314, 0.0
        %v1331 = vmax.f32 %v1315, 0.0
        %v1332 = vmax.f32 %v1316, 0.0
        %v1333 = vmax.f32 %v1317, 0.0
        %v1334 = vmax.f32 %v1318, 0.0
        %v1335 = vmax.f32 %v1319, 0.0
        %v1336 = vmax.f32 %v1320, 0.0
        %v1337 = vmax.f32 %v1321, 0.0
        %v1338 = vmax.f32 %v1322, 0.0
        %v1339 = vmax.f32 %v1323, 0.0
        %v1340 = vmax.f32 %v1324, 0.0
        %v1341 = vpack.c.bf16 %v1326, %v1325
        %v1342 = vpack.c.bf16 %v1328, %v1327
        %v1343 = vpack.c.bf16 %v1330, %v1329
        %v1344 = vpack.c.bf16 %v1332, %v1331
        %v1345 = vpack.c.bf16 %v1334, %v1333
        %v1346 = vpack.c.bf16 %v1336, %v1335
        %v1347 = vpack.c.bf16 %v1338, %v1337
        %v1348 = vpack.c.bf16 %v1340, %v1339
        %v1357 = vunpack.c.l.b16 %v1341
        %v1358 = vunpack.c.h.b16 %v1341
        %v1359 = vunpack.c.l.b16 %v1342
        %v1360 = vunpack.c.l.b16 %v1343
        %v1361 = vunpack.c.h.b16 %v1343
        %v1362 = vunpack.c.l.b16 %v1344
        %v1363 = vunpack.c.l.b16 %v1345
        %v1364 = vunpack.c.h.b16 %v1345
        %v1365 = vunpack.c.l.b16 %v1346
        %v1366 = vunpack.c.l.b16 %v1347
        %v1367 = vunpack.c.h.b16 %v1347
        %v1368 = vunpack.c.l.b16 %v1348
        %v1369 = vpack.c.b16 %v1357, %v1357
        %v1370 = vpack.c.b16 %v1358, %v1358
        %v1371 = vpack.c.b16 %v1359, %v1359
        %v1372 = vpack.c.b16 %v1360, %v1360
        %v1373 = vpack.c.b16 %v1361, %v1361
        %v1374 = vpack.c.b16 %v1362, %v1362
        %v1375 = vpack.c.b16 %v1363, %v1363
        %v1376 = vpack.c.b16 %v1364, %v1364
        %v1377 = vpack.c.b16 %v1365, %v1365
        %v1378 = vpack.c.b16 %v1366, %v1366
        %v1379 = vpack.c.b16 %v1367, %v1367
        %v1380 = vpack.c.b16 %v1368, %v1368
        %s1393 = smul.u32 %s179, 3
        %s1394 = smul.addr %s1393, 4
        %s1395 = scalar_lea.vmem %s170, %s1394
        %1396 = vst [vmem:[%s1395] sm:$0xf] %v1369
        %1397 = vst [vmem:[%s1395 + $0x4] sm:$0xf] %v1370
        %1398 = vst [vmem:[%s1395 + $0x8] sm:$0xf] %v1371
        %1399 = vst [vmem:[%s1395 + $0xc] sm:$0xf] %v1372
        %1400 = vst [vmem:[%s1395 + $0x10] sm:$0xf] %v1373
        %1401 = vst [vmem:[%s1395 + $0x14] sm:$0xf] %v1374
        %1402 = vst [vmem:[%s1395 + $0x18] sm:$0xf] %v1375
        %1403 = vst [vmem:[%s1395 + $0x1c] sm:$0xf] %v1376
        %1404 = vst [vmem:[%s1395 + $0x20] sm:$0xf] %v1377
        %1405 = vst [vmem:[%s1395 + $0x24] sm:$0xf] %v1378
        %1406 = vst [vmem:[%s1395 + $0x28] sm:$0xf] %v1379
        %1407 = vst [vmem:[%s1395 + $0x2c] sm:$0xf] %v1380
      $region37: #{mil_forward.8} parent=31 // loop_footer
        %s178 = sadd.s32 1, %s174
      $region38: #{mil_forward.8} parent=31 // loop_footer_branch
        %173 = sbr.rel target = $region34
      $region39: #{mil_forward.8} parent=31 // loop_exit
        _
      %p1408 = scmp.lt.s32.totalorder %s14, 5
      %s1409 = scalar_select %p1408, %s14, 5
      %s1410 = smul.addr %s1409, 72
      %s1411 = smul.addr %s1410, 4
      %s1412 = scalar_lea.vmem %s3, %s1411
      // Predicated region
      $region40: #{mil_forward.8} parent=31 // pred_check
        %p1413 = pneg %p100
      $region41: #{mil_forward.8} parent=31 // pred_check_branch
        %1415 = sbr.rel (%p1413) target = $region43
      $region42: #{mil_forward.8} parent=31 // pred_region
        _
      $region43: #{mil_forward.8} parent=31 // pred_fallthru
        _
    $region32: #{mil_forward.8} parent=5 // pred_fallthru
      _
    %p1416 = scmp.le.s32.totalorder 2, %s9
    // Predicated region
    $region44: #{mil_forward.8} parent=5 // pred_check
      %p1417 = pneg %p1416
    $region45: #{mil_forward.8} parent=5 // pred_check_branch
      %1419 = sbr.rel (%p1417) target = $region47
    $region46: #{mil_forward.8} parent=5 // pred_region
      %s1420 = ssub.s32 %s9, 2
      // Predicated region
      $region48: #{mil_forward.8} parent=46 // pred_check
        %p1421 = pneg %p106
      $region49: #{mil_forward.8} parent=46 // pred_check_branch
        %1423 = sbr.rel (%p1421) target = $region51
      $region50: #{mil_forward.8} parent=46 // pred_region
        %p1424 = scmp.lt.s32.totalorder %s15, 5
        %s1425 = scalar_select %p1424, %s15, 5
        %s1426 = smul.addr %s1425, 72
        %s1427 = smul.addr %s1426, 4
        %s1428 = scalar_lea.vmem %s3, %s1427
      $region51: #{mil_forward.8} parent=46 // pred_fallthru
        _
    $region47: #{mil_forward.8} parent=5 // pred_fallthru
      _
  $region6: #{mil_forward.8} parent=0 // loop_footer
    %s13 = sadd.s32 1, %s9
  $region7: #{mil_forward.8} parent=0 // loop_footer_branch
    %8 = sbr.rel target = $region3
  $region8: #{mil_forward.8} parent=0 // loop_exit
    _

// kernel: mil_forward.9
$region0: #{mil_forward.9}
  #allocation0 [shape = 'u32[]', space=smem, size = 0x4, offset = 0x4, fixed_abs, tag = 'smem constant byte address 0x4 - core index']
  #allocation1 [shape = 'u32[144,128]{1,0:T(1,128)}', space=vmem, size = 0x12000, scoped, tag = 'internal scratch']
  %s0 = inlined_call_operand.vmem [shape: bf16[6,12,18,384], index: 0, kind: input, shape index: {}]
  %s1 = inlined_call_operand.vmem [shape: bf16[3,384,256], index: 1, kind: input, shape index: {}]
  %s2 = inlined_call_operand.vmem [shape: f32[1,256], index: 2, kind: input, shape index: {}]
  %s3 = inlined_call_operand.vmem [shape: bf16[6,12,12,256], index: 3, kind: output, shape index: {}]
  %s4 = sld [smem:[#allocation0]]
  $region52: #{mil_forward.9} parent=0
    _
  %s6 = ssub.s32 1, %s4
  %s7 = scalar_select 0, %s6, %s4
  loop: start=0, step=1, limit=8
  $region2: #{mil_forward.9} parent=0 // loop_pre_header
    _
  $region3: #{mil_forward.9} parent=0 // loop_header
    %s9 = sphi 0, %s13
    %p10 = scmp.ge.s32.totalorder %s9, 8
    %s19 = sphi 0, %s21
    %s22 = sphi 0, %s19
    %s23 = sphi 0, %s22
    %s39 = sphi 0, %s23
    %s43 = sphi 0, %s43
    %s45 = sphi 0, %s43
    %s46 = sphi 0, %s45
    %s60 = sphi 0, %s46
    %s64 = sphi 0, %s64
    %s66 = sphi 0, %s64
    %s67 = sphi 0, %s66
    %s81 = sphi 0, %s67
    %s87 = sphi 0, %s89
    %s90 = sphi 0, %s87
    %s91 = sphi 0, %s90
    %s107 = sphi 0, %s91
  $region4: #{mil_forward.9} parent=0 // loop_header_branch
    %12 = sbr.rel (%p10) target = $region8
  $region5: #{mil_forward.9} parent=0 // loop_body
    %s14 = ssub.s32 %s9, 1
    %s15 = ssub.s32 %s9, 2
    %s16 = sadd.s32 %s9, 1
    %s17 = ssub.s32 %s9, %s16
    %p18 = scmp.eq.s32.totalorder %s17, 0
    %s20 = sadd.s32 %s19, 1
    %s21 = scalar_select %p18, %s19, %s20
    %p24 = pneg %p18
    %p25 = scmp.eq.s32.totalorder %s9, 5
    %p26 = por %p24, %p25
    %p27 = scmp.ne.s32.totalorder %s19, %s22
    %p28 = scmp.eq.s32.totalorder %s9, 0
    %p29 = por %p27, %p28
    %p30 = scmp.ne.s32.totalorder %s19, %s22
    %p31 = scmp.eq.s32.totalorder %s14, 5
    %p32 = por %p30, %p31
    %p33 = scmp.ne.s32.totalorder %s22, %s23
    %p34 = scmp.eq.s32.totalorder %s14, 0
    %p35 = por %p33, %p34
    %p36 = scmp.ne.s32.totalorder %s22, %s23
    %p37 = scmp.eq.s32.totalorder %s15, 5
    %p38 = por %p36, %p37
    %p40 = scmp.ne.s32.totalorder %s23, %s39
    %p41 = scmp.eq.s32.totalorder %s15, 0
    %p42 = por %p40, %p41
    %s44 = sadd.s32 %s43, 1
    %p47 = scmp.eq.s32.totalorder %s9, 5
    %p48 = scmp.ne.s32.totalorder %s43, %s45
    %p49 = scmp.eq.s32.totalorder %s9, 0
    %p50 = por %p48, %p49
    %p51 = scmp.ne.s32.totalorder %s43, %s45
    %p52 = scmp.eq.s32.totalorder %s14, 5
    %p53 = por %p51, %p52
    %p54 = scmp.ne.s32.totalorder %s45, %s46
    %p55 = scmp.eq.s32.totalorder %s14, 0
    %p56 = por %p54, %p55
    %p57 = scmp.ne.s32.totalorder %s45, %s46
    %p58 = scmp.eq.s32.totalorder %s15, 5
    %p59 = por %p57, %p58
    %p61 = scmp.ne.s32.totalorder %s46, %s60
    %p62 = scmp.eq.s32.totalorder %s15, 0
    %p63 = por %p61, %p62
    %s65 = sadd.s32 %s64, 1
    %p68 = scmp.eq.s32.totalorder %s9, 5
    %p69 = scmp.ne.s32.totalorder %s64, %s66
    %p70 = scmp.eq.s32.totalorder %s9, 0
    %p71 = por %p69, %p70
    %p72 = scmp.ne.s32.totalorder %s64, %s66
    %p73 = scmp.eq.s32.totalorder %s14, 5
    %p74 = por %p72, %p73
    %p75 = scmp.ne.s32.totalorder %s66, %s67
    %p76 = scmp.eq.s32.totalorder %s14, 0
    %p77 = por %p75, %p76
    %p78 = scmp.ne.s32.totalorder %s66, %s67
    %p79 = scmp.eq.s32.totalorder %s15, 5
    %p80 = por %p78, %p79
    %p82 = scmp.ne.s32.totalorder %s67, %s81
    %p83 = scmp.eq.s32.totalorder %s15, 0
    %p84 = por %p82, %p83
    %s85 = ssub.s32 %s9, %s16
    %p86 = scmp.eq.s32.totalorder %s85, 0
    %s88 = sadd.s32 %s87, 1
    %s89 = scalar_select %p86, %s87, %s88
    %p92 = pneg %p86
    %p93 = scmp.eq.s32.totalorder %s9, 5
    %p94 = por %p92, %p93
    %p95 = scmp.ne.s32.totalorder %s87, %s90
    %p96 = scmp.eq.s32.totalorder %s9, 0
    %p97 = por %p95, %p96
    %p98 = scmp.ne.s32.totalorder %s87, %s90
    %p99 = scmp.eq.s32.totalorder %s14, 5
    %p100 = por %p98, %p99
    %p101 = scmp.ne.s32.totalorder %s90, %s91
    %p102 = scmp.eq.s32.totalorder %s14, 0
    %p103 = por %p101, %p102
    %p104 = scmp.ne.s32.totalorder %s90, %s91
    %p105 = scmp.eq.s32.totalorder %s15, 5
    %p106 = por %p104, %p105
    %p108 = scmp.ne.s32.totalorder %s91, %s107
    %p109 = scmp.eq.s32.totalorder %s15, 0
    %p110 = por %p108, %p109
    %p111 = scmp.le.s32.totalorder 1, %s9
    %p112 = scmp.lt.s32.totalorder %s9, 7
    %p113 = pnand %p111, %p112
    %p114 = pneg %p113
    // Predicated region
    $region9: #{mil_forward.9} parent=5 // pred_check
      _
    $region10: #{mil_forward.9} parent=5 // pred_check_branch
      %116 = sbr.rel (%p113) target = $region12
    $region11: #{mil_forward.9} parent=5 // pred_region
      %s117 = ssub.s32 %s9, 1
      // Predicated region
      $region13: #{mil_forward.9} parent=11 // pred_check
        %p118 = pneg %p56
      $region14: #{mil_forward.9} parent=11 // pred_check_branch
        %120 = sbr.rel (%p118) target = $region16
      $region15: #{mil_forward.9} parent=11 // pred_region
        _
      $region16: #{mil_forward.9} parent=11 // pred_fallthru
        _
      // Predicated region
      $region17: #{mil_forward.9} parent=11 // pred_check
        %p121 = pneg %p77
      $region18: #{mil_forward.9} parent=11 // pred_check_branch
        %123 = sbr.rel (%p121) target = $region20
      $region19: #{mil_forward.9} parent=11 // pred_region
        _
      $region20: #{mil_forward.9} parent=11 // pred_fallthru
        _
    $region12: #{mil_forward.9} parent=5 // pred_fallthru
      _
    %p124 = scmp.lt.s32.totalorder %s9, 6
    // Predicated region
    $region21: #{mil_forward.9} parent=5 // pred_check
      %p125 = pneg %p124
    $region22: #{mil_forward.9} parent=5 // pred_check_branch
      %127 = sbr.rel (%p125) target = $region24
    $region23: #{mil_forward.9} parent=5 // pred_region
      // Predicated region
      $region25: #{mil_forward.9} parent=23 // pred_check
        %p128 = pneg %p29
      $region26: #{mil_forward.9} parent=23 // pred_check_branch
        %130 = sbr.rel (%p128) target = $region28
      $region27: #{mil_forward.9} parent=23 // pred_region
        %p131 = scmp.lt.s32.totalorder %s9, 5
        %s132 = scalar_select %p131, %s9, 5
        %s133 = smul.addr %s132, 108
        %s134 = smul.addr %s133, 4
        %s135 = scalar_lea.vmem %s0, %s134
      $region28: #{mil_forward.9} parent=23 // pred_fallthru
        _
    $region24: #{mil_forward.9} parent=5 // pred_fallthru
      _
    %p136 = scmp.le.s32.totalorder 1, %s9
    %p137 = scmp.lt.s32.totalorder %s9, 7
    %p138 = pnand %p136, %p137
    %p139 = pneg %p138
    // Predicated region
    $region29: #{mil_forward.9} parent=5 // pred_check
      _
    $region30: #{mil_forward.9} parent=5 // pred_check_branch
      %141 = sbr.rel (%p138) target = $region32
    $region31: #{mil_forward.9} parent=5 // pred_region
      %s142 = ssub.s32 %s9, 1
      %p143 = scmp.lt.s32.totalorder %s14, 5
      %s144 = scalar_select %p143, %s14, 5
      %s145 = smul.addr %s144, 108
      %s146 = smul.addr %s145, 4
      %s147 = scalar_lea.vmem %s0, %s146
      %p148 = pneg %p35
      %p149 = pneg %p32
      %p150 = pneg %p56
      %p151 = pneg %p53
      %p152 = pneg %p77
      %p153 = pneg %p74
      %p154 = pneg %p103
      %p155 = pneg %p100
      %p156 = scmp.lt.s32.totalorder %s14, 5
      %s157 = scalar_select %p156, %s14, 5
      %s158 = smul.addr %s157, 48
      %s159 = smul.addr %s158, 4
      %s160 = scalar_lea.vmem %s3, %s159
      %p161 = scmp.lt.s32.totalorder %s14, 5
      %s162 = scalar_select %p161, %s14, 5
      %s163 = smul.addr %s162, 108
      %s164 = smul.addr %s163, 4
      %s165 = scalar_lea.vmem %s0, %s164
      %p166 = scmp.lt.s32.totalorder %s14, 5
      %s167 = scalar_select %p166, %s14, 5
      %s168 = smul.addr %s167, 48
      %s169 = smul.addr %s168, 4
      %s170 = scalar_lea.vmem %s3, %s169
      %v172 = vld [vmem:[%s2] sm:$0x3]
      loop: start=0, step=1, limit=3
      $region33: #{mil_forward.9} parent=31 // loop_pre_header
        _
      $region34: #{mil_forward.9} parent=31 // loop_header
        %s174 = sphi 0, %s178
        %p175 = scmp.ge.s32.totalorder %s174, 3
      $region35: #{mil_forward.9} parent=31 // loop_header_branch
        %177 = sbr.rel (%p175) target = $region39
      $region36: #{mil_forward.9} parent=31 // loop_body
        %s179 = smul.u32 %s174, 4
        %s180 = smul.u32 %s179, 9
        %s181 = smul.addr %s180, 4
        %s182 = scalar_lea.vmem %s165, %s181
        %v183 = vld [vmem:[%s182] sm:$0xff]
        %v184 = vld [vmem:[%s182 + $0x8] sm:$0xf]
        %v185 = vld [vmem:[%s182 + $0xc] sm:$0xff]
        %v186 = vld [vmem:[%s182 + $0x14] sm:$0xf]
        %v187 = vld [vmem:[%s182 + $0x24] sm:$0xff]
        %v188 = vld [vmem:[%s182 + $0x2c] sm:$0xf]
        %v189 = vld [vmem:[%s182 + $0x30] sm:$0xff]
        %v190 = vld [vmem:[%s182 + $0x38] sm:$0xf]
        %v191 = vld [vmem:[%s182 + $0x48] sm:$0xff]
        %v192 = vld [vmem:[%s182 + $0x50] sm:$0xf]
        %v193 = vld [vmem:[%s182 + $0x54] sm:$0xff]
        %v194 = vld [vmem:[%s182 + $0x5c] sm:$0xf]
        %v195 = vld [vmem:[%s182 + $0x6c] sm:$0xff]
        %v196 = vld [vmem:[%s182 + $0x74] sm:$0xf]
        %v197 = vld [vmem:[%s182 + $0x78] sm:$0xff]
        %v198 = vld [vmem:[%s182 + $0x80] sm:$0xf]
        %v199 = vld [vmem:[%s1] sm:$0xff]
        %v200 = vld [vmem:[%s1 + $0x8] sm:$0xff]
        %v201 = vld [vmem:[%s1 + $0x10] sm:$0xff]
        %v202 = vld [vmem:[%s1 + $0x18] sm:$0xff]
        %v203 = vld [vmem:[%s1 + $0x20] sm:$0xff]
        %v204 = vld [vmem:[%s1 + $0x28] sm:$0xff]
        %v205 = vld [vmem:[%s1 + $0x30] sm:$0xff]
        %v206 = vld [vmem:[%s1 + $0x38] sm:$0xff]
        %v207 = vld [vmem:[%s1 + $0x40] sm:$0xff]
        %v208 = vld [vmem:[%s1 + $0x48] sm:$0xff]
        %v209 = vld [vmem:[%s1 + $0x50] sm:$0xff]
        %v210 = vld [vmem:[%s1 + $0x58] sm:$0xff]
        %v211 = vld [vmem:[%s1 + $0x60] sm:$0xff]
        %v212 = vld [vmem:[%s1 + $0x68] sm:$0xff]
        %v213 = vld [vmem:[%s1 + $0x70] sm:$0xff]
        %v214 = vld [vmem:[%s1 + $0x78] sm:$0xff]
        %v215 = vld [vmem:[%s1 + $0x80] sm:$0xff]
        %v216 = vld [vmem:[%s1 + $0x88] sm:$0xff]
        %v217 = vld [vmem:[%s1 + $0x90] sm:$0xff]
        %v218 = vld [vmem:[%s1 + $0x98] sm:$0xff]
        %v219 = vld [vmem:[%s1 + $0xa0] sm:$0xff]
        %v220 = vld [vmem:[%s1 + $0xa8] sm:$0xff]
        %v221 = vld [vmem:[%s1 + $0xb0] sm:$0xff]
        %v222 = vld [vmem:[%s1 + $0xb8] sm:$0xff]
        %v223 = vld [vmem:[%s1 + $0xc0] sm:$0xff]
        %v224 = vld [vmem:[%s1 + $0xc8] sm:$0xff]
        %v225 = vld [vmem:[%s1 + $0xd0] sm:$0xff]
        %v226 = vld [vmem:[%s1 + $0xd8] sm:$0xff]
        %v227 = vld [vmem:[%s1 + $0xe0] sm:$0xff]
        %v228 = vld [vmem:[%s1 + $0xe8] sm:$0xff]
        %v229 = vld [vmem:[%s1 + $0xf0] sm:$0xff]
        %v230 = vld [vmem:[%s1 + $0xf8] sm:$0xff]
        %v231 = vld [vmem:[%s1 + $0x100] sm:$0xff]
        %v232 = vld [vmem:[%s1 + $0x108] sm:$0xff]
        %v233 = vld [vmem:[%s1 + $0x110] sm:$0xff]
        %v234 = vld [vmem:[%s1 + $0x118] sm:$0xff]
        %v235 = vld [vmem:[%s1 + $0x120] sm:$0xff]
        %v236 = vld [vmem:[%s1 + $0x128] sm:$0xff]
        %v237 = vld [vmem:[%s1 + $0x130] sm:$0xff]
        %v238 = vld [vmem:[%s1 + $0x138] sm:$0xff]
        %v239 = vld [vmem:[%s1 + $0x140] sm:$0xff]
        %v240 = vld [vmem:[%s1 + $0x148] sm:$0xff]
        %v241 = vld [vmem:[%s1 + $0x150] sm:$0xff]
        %v242 = vld [vmem:[%s1 + $0x158] sm:$0xff]
        %v243 = vld [vmem:[%s1 + $0x160] sm:$0xff]
        %v244 = vld [vmem:[%s1 + $0x168] sm:$0xff]
        %v245 = vld [vmem:[%s1 + $0x170] sm:$0xff]
        %v246 = vld [vmem:[%s1 + $0x178] sm:$0xff]
        %v247 = vld [vmem:[%s182 + $0x18] sm:$0x11]
        %v248 = vld [vmem:[%s182 + $0x20] sm:$0x1]
        %v249 = vld [vmem:[%s182 + $0x3c] sm:$0x11]
        %v250 = vld [vmem:[%s182 + $0x44] sm:$0x1]
        %v251 = vld [vmem:[%s182 + $0x60] sm:$0x11]
        %v252 = vld [vmem:[%s182 + $0x68] sm:$0x1]
        %v253 = vld [vmem:[%s182 + $0x84] sm:$0x11]
        %v254 = vld [vmem:[%s182 + $0x8c] sm:$0x1]
        %vm255 = vsmask.f32 3328
        %vm256 = vsmask.f32 7440
        %vm257 = vmor %vm255, %vm256
        %v259 = vshrl.u32 %v183, 16
        %v261 = vrot.slane %v259, 4
        %v262 = vshll.u32 %v183, 16
        %v264 = vrot.slane %v262, 5
        %v265 = vor.u32 %v261, %v264
        %v266 = vrot.slane %v265, 4
        %v268 = vshll.u32 %v185, 16
        %v270 = vrot.slane %v268, 5
        %v271 = vsel %vm257, %v266, %v270
        %v273 = vshrl.u32 %v184, 16
        %v275 = vrot.slane %v273, 4
        %v276 = vshll.u32 %v184, 16
        %v278 = vrot.slane %v276, 5
        %v279 = vor.u32 %v275, %v278
        %v280 = vrot.slane %v279, 4
        %v282 = vshll.u32 %v186, 16
        %v284 = vrot.slane %v282, 5
        %v285 = vsel %vm257, %v280, %v284
        %v286 = vshrl.u32 %v185, 16
        %v288 = vrot.slane %v286, 4
        %v289 = vor.u32 %v288, %v270
        %v290 = vrot.slane %v289, 4
        %v292 = vshll.u32 %v247, 16
        %v294 = vrot.slane %v292, 5
        %v295 = vsel %vm257, %v290, %v294
        %v296 = vshrl.u32 %v186, 16
        %v298 = vrot.slane %v296, 4
        %v299 = vor.u32 %v298, %v284
        %v300 = vrot.slane %v299, 4
        %v302 = vshll.u32 %v248, 16
        %v304 = vrot.slane %v302, 5
        %v305 = vsel %vm257, %v300, %v304
        %v307 = vshrl.u32 %v187, 16
        %v309 = vrot.slane %v307, 4
        %v310 = vshll.u32 %v187, 16
        %v312 = vrot.slane %v310, 5
        %v313 = vor.u32 %v309, %v312
        %v314 = vrot.slane %v313, 4
        %v316 = vshll.u32 %v189, 16
        %v318 = vrot.slane %v316, 5
        %v319 = vsel %vm257, %v314, %v318
        %v321 = vshrl.u32 %v188, 16
        %v323 = vrot.slane %v321, 4
        %v324 = vshll.u32 %v188, 16
        %v326 = vrot.slane %v324, 5
        %v327 = vor.u32 %v323, %v326
        %v328 = vrot.slane %v327, 4
        %v330 = vshll.u32 %v190, 16
        %v332 = vrot.slane %v330, 5
        %v333 = vsel %vm257, %v328, %v332
        %v334 = vshrl.u32 %v189, 16
        %v336 = vrot.slane %v334, 4
        %v337 = vor.u32 %v336, %v318
        %v338 = vrot.slane %v337, 4
        %v340 = vshll.u32 %v249, 16
        %v342 = vrot.slane %v340, 5
        %v343 = vsel %vm257, %v338, %v342
        %v344 = vshrl.u32 %v190, 16
        %v346 = vrot.slane %v344, 4
        %v347 = vor.u32 %v346, %v332
        %v348 = vrot.slane %v347, 4
        %v350 = vshll.u32 %v250, 16
        %v352 = vrot.slane %v350, 5
        %v353 = vsel %vm257, %v348, %v352
        %v355 = vshrl.u32 %v191, 16
        %v357 = vrot.slane %v355, 4
        %v358 = vshll.u32 %v191, 16
        %v360 = vrot.slane %v358, 5
        %v361 = vor.u32 %v357, %v360
        %v362 = vrot.slane %v361, 4
        %v364 = vshll.u32 %v193, 16
        %v366 = vrot.slane %v364, 5
        %v367 = vsel %vm257, %v362, %v366
        %v369 = vshrl.u32 %v192, 16
        %v371 = vrot.slane %v369, 4
        %v372 = vshll.u32 %v192, 16
        %v374 = vrot.slane %v372, 5
        %v375 = vor.u32 %v371, %v374
        %v376 = vrot.slane %v375, 4
        %v378 = vshll.u32 %v194, 16
        %v380 = vrot.slane %v378, 5
        %v381 = vsel %vm257, %v376, %v380
        %v382 = vshrl.u32 %v193, 16
        %v384 = vrot.slane %v382, 4
        %v385 = vor.u32 %v384, %v366
        %v386 = vrot.slane %v385, 4
        %v388 = vshll.u32 %v251, 16
        %v390 = vrot.slane %v388, 5
        %v391 = vsel %vm257, %v386, %v390
        %v392 = vshrl.u32 %v194, 16
        %v394 = vrot.slane %v392, 4
        %v395 = vor.u32 %v394, %v380
        %v396 = vrot.slane %v395, 4
        %v398 = vshll.u32 %v252, 16
        %v400 = vrot.slane %v398, 5
        %v401 = vsel %vm257, %v396, %v400
        %v403 = vshrl.u32 %v195, 16
        %v405 = vrot.slane %v403, 4
        %v406 = vshll.u32 %v195, 16
        %v408 = vrot.slane %v406, 5
        %v409 = vor.u32 %v405, %v408
        %v410 = vrot.slane %v409, 4
        %v412 = vshll.u32 %v197, 16
        %v414 = vrot.slane %v412, 5
        %v415 = vsel %vm257, %v410, %v414
        %v417 = vshrl.u32 %v196, 16
        %v419 = vrot.slane %v417, 4
        %v420 = vshll.u32 %v196, 16
        %v422 = vrot.slane %v420, 5
        %v423 = vor.u32 %v419, %v422
        %v424 = vrot.slane %v423, 4
        %v426 = vshll.u32 %v198, 16
        %v428 = vrot.slane %v426, 5
        %v429 = vsel %vm257, %v424, %v428
        %v430 = vshrl.u32 %v197, 16
        %v432 = vrot.slane %v430, 4
        %v433 = vor.u32 %v432, %v414
        %v434 = vrot.slane %v433, 4
        %v436 = vshll.u32 %v253, 16
        %v438 = vrot.slane %v436, 5
        %v439 = vsel %vm257, %v434, %v438
        %v440 = vshrl.u32 %v198, 16
        %v442 = vrot.slane %v440, 4
        %v443 = vor.u32 %v442, %v428
        %v444 = vrot.slane %v443, 4
        %v446 = vshll.u32 %v254, 16
        %v448 = vrot.slane %v446, 5
        %v449 = vsel %vm257, %v444, %v448
        %s450 = scalar_lea.vmem %s1, 384
        %v451 = vld [vmem:[%s450] sm:$0xff]
        %v452 = vld [vmem:[%s450 + $0x8] sm:$0xff]
        %v453 = vld [vmem:[%s450 + $0x10] sm:$0xff]
        %v454 = vld [vmem:[%s450 + $0x18] sm:$0xff]
        %v455 = vld [vmem:[%s450 + $0x20] sm:$0xff]
        %v456 = vld [vmem:[%s450 + $0x28] sm:$0xff]
        %v457 = vld [vmem:[%s450 + $0x30] sm:$0xff]
        %v458 = vld [vmem:[%s450 + $0x38] sm:$0xff]
        %v459 = vld [vmem:[%s450 + $0x40] sm:$0xff]
        %v460 = vld [vmem:[%s450 + $0x48] sm:$0xff]
        %v461 = vld [vmem:[%s450 + $0x50] sm:$0xff]
        %v462 = vld [vmem:[%s450 + $0x58] sm:$0xff]
        %v463 = vld [vmem:[%s450 + $0x60] sm:$0xff]
        %v464 = vld [vmem:[%s450 + $0x68] sm:$0xff]
        %v465 = vld [vmem:[%s450 + $0x70] sm:$0xff]
        %v466 = vld [vmem:[%s450 + $0x78] sm:$0xff]
        %v467 = vld [vmem:[%s450 + $0x80] sm:$0xff]
        %v468 = vld [vmem:[%s450 + $0x88] sm:$0xff]
        %v469 = vld [vmem:[%s450 + $0x90] sm:$0xff]
        %v470 = vld [vmem:[%s450 + $0x98] sm:$0xff]
        %v471 = vld [vmem:[%s450 + $0xa0] sm:$0xff]
        %v472 = vld [vmem:[%s450 + $0xa8] sm:$0xff]
        %v473 = vld [vmem:[%s450 + $0xb0] sm:$0xff]
        %v474 = vld [vmem:[%s450 + $0xb8] sm:$0xff]
        %v475 = vld [vmem:[%s450 + $0xc0] sm:$0xff]
        %v476 = vld [vmem:[%s450 + $0xc8] sm:$0xff]
        %v477 = vld [vmem:[%s450 + $0xd0] sm:$0xff]
        %v478 = vld [vmem:[%s450 + $0xd8] sm:$0xff]
        %v479 = vld [vmem:[%s450 + $0xe0] sm:$0xff]
        %v480 = vld [vmem:[%s450 + $0xe8] sm:$0xff]
        %v481 = vld [vmem:[%s450 + $0xf0] sm:$0xff]
        %v482 = vld [vmem:[%s450 + $0xf8] sm:$0xff]
        %v483 = vld [vmem:[%s450 + $0x100] sm:$0xff]
        %v484 = vld [vmem:[%s450 + $0x108] sm:$0xff]
        %v485 = vld [vmem:[%s450 + $0x110] sm:$0xff]
        %v486 = vld [vmem:[%s450 + $0x118] sm:$0xff]
        %v487 = vld [vmem:[%s450 + $0x120] sm:$0xff]
        %v488 = vld [vmem:[%s450 + $0x128] sm:$0xff]
        %v489 = vld [vmem:[%s450 + $0x130] sm:$0xff]
        %v490 = vld [vmem:[%s450 + $0x138] sm:$0xff]
        %v491 = vld [vmem:[%s450 + $0x140] sm:$0xff]
        %v492 = vld [vmem:[%s450 + $0x148] sm:$0xff]
        %v493 = vld [vmem:[%s450 + $0x150] sm:$0xff]
        %v494 = vld [vmem:[%s450 + $0x158] sm:$0xff]
        %v495 = vld [vmem:[%s450 + $0x160] sm:$0xff]
        %v496 = vld [vmem:[%s450 + $0x168] sm:$0xff]
        %v497 = vld [vmem:[%s450 + $0x170] sm:$0xff]
        %v498 = vld [vmem:[%s450 + $0x178] sm:$0xff]
        %v499 = vunpack.c.l.b16 %v271
        %v500 = vunpack.c.h.b16 %v271
        %v501 = vunpack.c.l.b16 %v285
        %v502 = vunpack.c.l.b16 %v295
        %v503 = vunpack.c.h.b16 %v295
        %v504 = vunpack.c.l.b16 %v305
        %v505 = vunpack.c.l.b16 %v319
        %v506 = vunpack.c.h.b16 %v319
        %v507 = vunpack.c.l.b16 %v333
        %v508 = vunpack.c.l.b16 %v343
        %v509 = vunpack.c.h.b16 %v343
        %v510 = vunpack.c.l.b16 %v353
        %v511 = vunpack.c.l.b16 %v367
        %v512 = vunpack.c.h.b16 %v367
        %v513 = vunpack.c.l.b16 %v381
        %v514 = vunpack.c.l.b16 %v391
        %v515 = vunpack.c.h.b16 %v391
        %v516 = vunpack.c.l.b16 %v401
        %v517 = vunpack.c.l.b16 %v415
        %v518 = vunpack.c.h.b16 %v415
        %v519 = vunpack.c.l.b16 %v429
        %v520 = vunpack.c.l.b16 %v439
        %v521 = vunpack.c.h.b16 %v439
        %v522 = vunpack.c.l.b16 %v449
        %v523 = vpack.c.b16 %v502, %v499
        %v524 = vpack.c.b16 %v503, %v500
        %v525 = vpack.c.b16 %v504, %v501
        %v526 = vpack.c.b16 %v508, %v505
        %v527 = vpack.c.b16 %v509, %v506
        %v528 = vpack.c.b16 %v510, %v507
        %v529 = vpack.c.b16 %v514, %v511
        %v530 = vpack.c.b16 %v515, %v512
        %v531 = vpack.c.b16 %v516, %v513
        %v532 = vpack.c.b16 %v520, %v517
        %v533 = vpack.c.b16 %v521, %v518
        %v534 = vpack.c.b16 %v522, %v519
        %v595 = vunpack.c.l.b16 %v451
        %v596 = vunpack.c.h.b16 %v451
        %v597 = vunpack.c.l.b16 %v452
        %v598 = vunpack.c.h.b16 %v452
        %v599 = vunpack.c.l.b16 %v453
        %v600 = vunpack.c.h.b16 %v453
        %v601 = vunpack.c.l.b16 %v454
        %v602 = vunpack.c.h.b16 %v454
        %v603 = vunpack.c.l.b16 %v455
        %v604 = vunpack.c.h.b16 %v455
        %v605 = vunpack.c.l.b16 %v456
        %v606 = vunpack.c.h.b16 %v456
        %v607 = vunpack.c.l.b16 %v457
        %v608 = vunpack.c.h.b16 %v457
        %v609 = vunpack.c.l.b16 %v458
        %v610 = vunpack.c.h.b16 %v458
        %v611 = vunpack.c.l.b16 %v459
        %v612 = vunpack.c.h.b16 %v459
        %v613 = vunpack.c.l.b16 %v460
        %v614 = vunpack.c.h.b16 %v460
        %v615 = vunpack.c.l.b16 %v461
        %v616 = vunpack.c.h.b16 %v461
        %v617 = vunpack.c.l.b16 %v462
        %v618 = vunpack.c.h.b16 %v462
        %v619 = vunpack.c.l.b16 %v463
        %v620 = vunpack.c.h.b16 %v463
        %v621 = vunpack.c.l.b16 %v464
        %v622 = vunpack.c.h.b16 %v464
        %v623 = vunpack.c.l.b16 %v465
        %v624 = vunpack.c.h.b16 %v465
        %v625 = vunpack.c.l.b16 %v466
        %v626 = vunpack.c.h.b16 %v466
        %v627 = vunpack.c.l.b16 %v467
        %v628 = vunpack.c.h.b16 %v467
        %v629 = vunpack.c.l.b16 %v468
        %v630 = vunpack.c.h.b16 %v468
        %v631 = vunpack.c.l.b16 %v469
        %v632 = vunpack.c.h.b16 %v469
        %v633 = vunpack.c.l.b16 %v470
        %v634 = vunpack.c.h.b16 %v470
        %v635 = vunpack.c.l.b16 %v471
        %v636 = vunpack.c.h.b16 %v471
        %v637 = vunpack.c.l.b16 %v472
        %v638 = vunpack.c.h.b16 %v472
        %v639 = vunpack.c.l.b16 %v473
        %v640 = vunpack.c.h.b16 %v473
        %v641 = vunpack.c.l.b16 %v474
        %v642 = vunpack.c.h.b16 %v474
        %v643 = vunpack.c.l.b16 %v475
        %v644 = vunpack.c.h.b16 %v475
        %v645 = vunpack.c.l.b16 %v476
        %v646 = vunpack.c.h.b16 %v476
        %v647 = vunpack.c.l.b16 %v477
        %v648 = vunpack.c.h.b16 %v477
        %v649 = vunpack.c.l.b16 %v478
        %v650 = vunpack.c.h.b16 %v478
        %v651 = vunpack.c.l.b16 %v479
        %v652 = vunpack.c.h.b16 %v479
        %v653 = vunpack.c.l.b16 %v480
        %v654 = vunpack.c.h.b16 %v480
        %v655 = vunpack.c.l.b16 %v481
        %v656 = vunpack.c.h.b16 %v481
        %v657 = vunpack.c.l.b16 %v482
        %v658 = vunpack.c.h.b16 %v482
        %v659 = vunpack.c.l.b16 %v483
        %v660 = vunpack.c.h.b16 %v483
        %v661 = vunpack.c.l.b16 %v484
        %v662 = vunpack.c.h.b16 %v484
        %v663 = vunpack.c.l.b16 %v485
        %v664 = vunpack.c.h.b16 %v485
        %v665 = vunpack.c.l.b16 %v486
        %v666 = vunpack.c.h.b16 %v486
        %v667 = vunpack.c.l.b16 %v487
        %v668 = vunpack.c.h.b16 %v487
        %v669 = vunpack.c.l.b16 %v488
        %v670 = vunpack.c.h.b16 %v488
        %v671 = vunpack.c.l.b16 %v489
        %v672 = vunpack.c.h.b16 %v489
        %v673 = vunpack.c.l.b16 %v490
        %v674 = vunpack.c.h.b16 %v490
        %v675 = vunpack.c.l.b16 %v491
        %v676 = vunpack.c.h.b16 %v491
        %v677 = vunpack.c.l.b16 %v492
        %v678 = vunpack.c.h.b16 %v492
        %v679 = vunpack.c.l.b16 %v493
        %v680 = vunpack.c.h.b16 %v493
        %v681 = vunpack.c.l.b16 %v494
        %v682 = vunpack.c.h.b16 %v494
        %v683 = vunpack.c.l.b16 %v495
        %v684 = vunpack.c.h.b16 %v495
        %v685 = vunpack.c.l.b16 %v496
        %v686 = vunpack.c.h.b16 %v496
        %v687 = vunpack.c.l.b16 %v497
        %v688 = vunpack.c.h.b16 %v497
        %v689 = vunpack.c.l.b16 %v498
        %v690 = vunpack.c.h.b16 %v498
        %v691 = vpack.c.b16 %v597, %v595
        %v692 = vpack.c.b16 %v598, %v596
        %v693 = vpack.c.b16 %v601, %v599
        %v694 = vpack.c.b16 %v602, %v600
        %v695 = vpack.c.b16 %v605, %v603
        %v696 = vpack.c.b16 %v606, %v604
        %v697 = vpack.c.b16 %v609, %v607
        %v698 = vpack.c.b16 %v610, %v608
        %v699 = vpack.c.b16 %v613, %v611
        %v700 = vpack.c.b16 %v614, %v612
        %v701 = vpack.c.b16 %v617, %v615
        %v702 = vpack.c.b16 %v618, %v616
        %v703 = vpack.c.b16 %v621, %v619
        %v704 = vpack.c.b16 %v622, %v620
        %v705 = vpack.c.b16 %v625, %v623
        %v706 = vpack.c.b16 %v626, %v624
        %v707 = vpack.c.b16 %v629, %v627
        %v708 = vpack.c.b16 %v630, %v628
        %v709 = vpack.c.b16 %v633, %v631
        %v710 = vpack.c.b16 %v634, %v632
        %v711 = vpack.c.b16 %v637, %v635
        %v712 = vpack.c.b16 %v638, %v636
        %v713 = vpack.c.b16 %v641, %v639
        %v714 = vpack.c.b16 %v642, %v640
        %v715 = vpack.c.b16 %v645, %v643
        %v716 = vpack.c.b16 %v646, %v644
        %v717 = vpack.c.b16 %v649, %v647
        %v718 = vpack.c.b16 %v650, %v648
        %v719 = vpack.c.b16 %v653, %v651
        %v720 = vpack.c.b16 %v654, %v652
        %v721 = vpack.c.b16 %v657, %v655
        %v722 = vpack.c.b16 %v658, %v656
        %v723 = vpack.c.b16 %v661, %v659
        %v724 = vpack.c.b16 %v662, %v660
        %v725 = vpack.c.b16 %v665, %v663
        %v726 = vpack.c.b16 %v666, %v664
        %v727 = vpack.c.b16 %v669, %v667
        %v728 = vpack.c.b16 %v670, %v668
        %v729 = vpack.c.b16 %v673, %v671
        %v730 = vpack.c.b16 %v674, %v672
        %v731 = vpack.c.b16 %v677, %v675
        %v732 = vpack.c.b16 %v678, %v676
        %v733 = vpack.c.b16 %v681, %v679
        %v734 = vpack.c.b16 %v682, %v680
        %v735 = vpack.c.b16 %v685, %v683
        %v736 = vpack.c.b16 %v686, %v684
        %v737 = vpack.c.b16 %v689, %v687
        %v738 = vpack.c.b16 %v690, %v688
        %787 = vmatprep.subr.bf16.mxu0 %v706
        %788 = vmatpush1.bf16.msra.mxu0 %v705
        %789 = vmatprep.subr.bf16.mxu0 %v704
        %790 = vmatpush1.bf16.msra.mxu0 %v703
        %791 = vmatprep.subr.bf16.mxu0 %v702
        %792 = vmatpush1.bf16.msra.mxu0 %v701
        %793 = vmatprep.subr.bf16.mxu0 %v700
        %794 = vmatpush1.bf16.msra.mxu0 %v699
        %795 = vmatprep.subr.bf16.mxu0 %v698
        %796 = vmatpush1.bf16.msra.mxu0 %v697
        %797 = vmatprep.subr.bf16.mxu0 %v696
        %798 = vmatpush1.bf16.msra.mxu0 %v695
        %799 = vmatprep.subr.bf16.mxu0 %v694
        %800 = vmatpush1.bf16.msra.mxu0 %v693
        %801 = vmatprep.subr.bf16.mxu0 %v692
        %802 = vmatpush1.bf16.msra.mxu0 %v691
        %803 = vmatprep.subr.bf16.mxu0 %v722
        %804 = vmatpush2.bf16.msra.mxu0 %v721
        %805 = vmatprep.subr.bf16.mxu0 %v720
        %806 = vmatpush2.bf16.msra.mxu0 %v719
        %807 = vmatprep.subr.bf16.mxu0 %v718
        %808 = vmatpush2.bf16.msra.mxu0 %v717
        %809 = vmatprep.subr.bf16.mxu0 %v716
        %810 = vmatpush2.bf16.msra.mxu0 %v715
        %811 = vmatprep.subr.bf16.mxu0 %v714
        %812 = vmatpush2.bf16.msra.mxu0 %v713
        %813 = vmatprep.subr.bf16.mxu0 %v712
        %814 = vmatpush2.bf16.msra.mxu0 %v711
        %815 = vmatprep.subr.bf16.mxu0 %v710
        %816 = vmatpush2.bf16.msra.mxu0 %v709
        %817 = vmatprep.subr.bf16.mxu0 %v708
        %818 = vmatpush2.bf16.msra.mxu0 %v707
        %819 = vmatprep.mubr.bf16.mxu0 %v524
        %820 = vmatmul.mubr.bf16.gmra.mxu0 %v523
        %v821 = vpop.f32.mrf.mxu0
        %v822 = vadd.f32 0.0, %v821
        %v823 = vpop.f32.mrf.mxu0
        %v824 = vadd.f32 0.0, %v823
        %v825 = vpop.f32.mrf.mxu0
        %v826 = vadd.f32 0.0, %v825
        %v827 = vpop.f32.mrf.mxu0
        %v828 = vadd.f32 0.0, %v827
        %829 = vmatprep.mubr.bf16.mxu0 %v527
        %830 = vmatmul.mubr.bf16.gmra.mxu0 %v526
        %v831 = vpop.f32.mrf.mxu0
        %v832 = vadd.f32 0.0, %v831
        %v833 = vpop.f32.mrf.mxu0
        %v834 = vadd.f32 0.0, %v833
        %v835 = vpop.f32.mrf.mxu0
        %v836 = vadd.f32 0.0, %v835
        %v837 = vpop.f32.mrf.mxu0
        %v838 = vadd.f32 0.0, %v837
        %839 = vmatprep.mubr.bf16.mxu0 %v530
        %840 = vmatmul.mubr.bf16.gmra.mxu0 %v529
        %v841 = vpop.f32.mrf.mxu0
        %v842 = vadd.f32 0.0, %v841
        %v843 = vpop.f32.mrf.mxu0
        %v844 = vadd.f32 0.0, %v843
        %v845 = vpop.f32.mrf.mxu0
        %v846 = vadd.f32 0.0, %v845
        %v847 = vpop.f32.mrf.mxu0
        %v848 = vadd.f32 0.0, %v847
        %849 = vmatprep.mubr.bf16.mxu0 %v533
        %850 = vmatmul.mubr.bf16.gmra.mxu0 %v532
        %v851 = vpop.f32.mrf.mxu0
        %v852 = vadd.f32 0.0, %v851
        %v853 = vpop.f32.mrf.mxu0
        %v854 = vadd.f32 0.0, %v853
        %v855 = vpop.f32.mrf.mxu0
        %v856 = vadd.f32 0.0, %v855
        %v857 = vpop.f32.mrf.mxu0
        %v858 = vadd.f32 0.0, %v857
        %859 = vdwg.mxu0
        %860 = vmatprep.subr.bf16.mxu0 %v738
        %861 = vmatpush1.bf16.msra.mxu0 %v737
        %862 = vmatprep.subr.bf16.mxu0 %v736
        %863 = vmatpush1.bf16.msra.mxu0 %v735
        %864 = vmatprep.subr.bf16.mxu0 %v734
        %865 = vmatpush1.bf16.msra.mxu0 %v733
        %866 = vmatprep.subr.bf16.mxu0 %v732
        %867 = vmatpush1.bf16.msra.mxu0 %v731
        %868 = vmatprep.subr.bf16.mxu0 %v730
        %869 = vmatpush1.bf16.msra.mxu0 %v729
        %870 = vmatprep.subr.bf16.mxu0 %v728
        %871 = vmatpush1.bf16.msra.mxu0 %v727
        %872 = vmatprep.subr.bf16.mxu0 %v726
        %873 = vmatpush1.bf16.msra.mxu0 %v725
        %874 = vmatprep.subr.bf16.mxu0 %v724
        %875 = vmatpush1.bf16.msra.mxu0 %v723
        %876 = vmatprep.subr.bf16.mxu0 0
        %877 = vmatpush2.bf16.msra.mxu0 0
        %878 = vmatprep.subr.bf16.mxu0 0
        %879 = vmatpush2.bf16.msra.mxu0 0
        %880 = vmatprep.subr.bf16.mxu0 0
        %881 = vmatpush2.bf16.msra.mxu0 0
        %882 = vmatprep.subr.bf16.mxu0 0
        %883 = vmatpush2.bf16.msra.mxu0 0
        %884 = vmatprep.subr.bf16.mxu0 0
        %885 = vmatpush2.bf16.msra.mxu0 0
        %886 = vmatprep.subr.bf16.mxu0 0
        %887 = vmatpush2.bf16.msra.mxu0 0
        %888 = vmatprep.subr.bf16.mxu0 0
        %889 = vmatpush2.bf16.msra.mxu0 0
        %890 = vmatprep.subr.bf16.mxu0 0
        %891 = vmatpush2.bf16.msra.mxu0 0
        %892 = vmatprep.mubr.bf16.mxu0 0
        %893 = vmatmul.mubr.bf16.gmra.mxu0 %v525
        %v894 = vpop.f32.mrf.mxu0
        %v895 = vadd.f32 %v822, %v894
        %v896 = vpop.f32.mrf.mxu0
        %v897 = vadd.f32 %v824, %v896
        %v898 = vpop.f32.mrf.mxu0
        %v899 = vadd.f32 %v826, %v898
        %v900 = vpop.f32.mrf.mxu0
        %v901 = vadd.f32 %v828, %v900
        %902 = vmatprep.mubr.bf16.mxu0 0
        %903 = vmatmul.mubr.bf16.gmra.mxu0 %v528
        %v904 = vpop.f32.mrf.mxu0
        %v905 = vadd.f32 %v832, %v904
        %v906 = vpop.f32.mrf.mxu0
        %v907 = vadd.f32 %v834, %v906
        %v908 = vpop.f32.mrf.mxu0
        %v909 = vadd.f32 %v836, %v908
        %v910 = vpop.f32.mrf.mxu0
        %v911 = vadd.f32 %v838, %v910
        %912 = vmatprep.mubr.bf16.mxu0 0
        %913 = vmatmul.mubr.bf16.gmra.mxu0 %v531
        %v914 = vpop.f32.mrf.mxu0
        %v915 = vadd.f32 %v842, %v914
        %v916 = vpop.f32.mrf.mxu0
        %v917 = vadd.f32 %v844, %v916
        %v918 = vpop.f32.mrf.mxu0
        %v919 = vadd.f32 %v846, %v918
        %v920 = vpop.f32.mrf.mxu0
        %v921 = vadd.f32 %v848, %v920
        %922 = vmatprep.mubr.bf16.mxu0 0
        %923 = vmatmul.mubr.bf16.gmra.mxu0 %v534
        %v924 = vpop.f32.mrf.mxu0
        %v925 = vadd.f32 %v852, %v924
        %v926 = vpop.f32.mrf.mxu0
        %v927 = vadd.f32 %v854, %v926
        %v928 = vpop.f32.mrf.mxu0
        %v929 = vadd.f32 %v856, %v928
        %v930 = vpop.f32.mrf.mxu0
        %v931 = vadd.f32 %v858, %v930
        %932 = vdwg.mxu0
        %v949 = vunpack.c.l.b16 %v183
        %v950 = vunpack.c.h.b16 %v183
        %v951 = vunpack.c.l.b16 %v184
        %v952 = vunpack.c.l.b16 %v185
        %v953 = vunpack.c.h.b16 %v185
        %v954 = vunpack.c.l.b16 %v186
        %v955 = vunpack.c.l.b16 %v187
        %v956 = vunpack.c.h.b16 %v187
        %v957 = vunpack.c.l.b16 %v188
        %v958 = vunpack.c.l.b16 %v189
        %v959 = vunpack.c.h.b16 %v189
        %v960 = vunpack.c.l.b16 %v190
        %v961 = vunpack.c.l.b16 %v191
        %v962 = vunpack.c.h.b16 %v191
        %v963 = vunpack.c.l.b16 %v192
        %v964 = vunpack.c.l.b16 %v193
        %v965 = vunpack.c.h.b16 %v193
        %v966 = vunpack.c.l.b16 %v194
        %v967 = vunpack.c.l.b16 %v195
        %v968 = vunpack.c.h.b16 %v195
        %v969 = vunpack.c.l.b16 %v196
        %v970 = vunpack.c.l.b16 %v197
        %v971 = vunpack.c.h.b16 %v197
        %v972 = vunpack.c.l.b16 %v198
        %v973 = vpack.c.b16 %v952, %v949
        %v974 = vpack.c.b16 %v953, %v950
        %v975 = vpack.c.b16 %v954, %v951
        %v976 = vpack.c.b16 %v958, %v955
        %v977 = vpack.c.b16 %v959, %v956
        %v978 = vpack.c.b16 %v960, %v957
        %v979 = vpack.c.b16 %v964, %v961
        %v980 = vpack.c.b16 %v965, %v962
        %v981 = vpack.c.b16 %v966, %v963
        %v982 = vpack.c.b16 %v970, %v967
        %v983 = vpack.c.b16 %v971, %v968
        %v984 = vpack.c.b16 %v972, %v969
        %v1045 = vunpack.c.l.b16 %v199
        %v1046 = vunpack.c.h.b16 %v199
        %v1047 = vunpack.c.l.b16 %v200
        %v1048 = vunpack.c.h.b16 %v200
        %v1049 = vunpack.c.l.b16 %v201
        %v1050 = vunpack.c.h.b16 %v201
        %v1051 = vunpack.c.l.b16 %v202
        %v1052 = vunpack.c.h.b16 %v202
        %v1053 = vunpack.c.l.b16 %v203
        %v1054 = vunpack.c.h.b16 %v203
        %v1055 = vunpack.c.l.b16 %v204
        %v1056 = vunpack.c.h.b16 %v204
        %v1057 = vunpack.c.l.b16 %v205
        %v1058 = vunpack.c.h.b16 %v205
        %v1059 = vunpack.c.l.b16 %v206
        %v1060 = vunpack.c.h.b16 %v206
        %v1061 = vunpack.c.l.b16 %v207
        %v1062 = vunpack.c.h.b16 %v207
        %v1063 = vunpack.c.l.b16 %v208
        %v1064 = vunpack.c.h.b16 %v208
        %v1065 = vunpack.c.l.b16 %v209
        %v1066 = vunpack.c.h.b16 %v209
        %v1067 = vunpack.c.l.b16 %v210
        %v1068 = vunpack.c.h.b16 %v210
        %v1069 = vunpack.c.l.b16 %v211
        %v1070 = vunpack.c.h.b16 %v211
        %v1071 = vunpack.c.l.b16 %v212
        %v1072 = vunpack.c.h.b16 %v212
        %v1073 = vunpack.c.l.b16 %v213
        %v1074 = vunpack.c.h.b16 %v213
        %v1075 = vunpack.c.l.b16 %v214
        %v1076 = vunpack.c.h.b16 %v214
        %v1077 = vunpack.c.l.b16 %v215
        %v1078 = vunpack.c.h.b16 %v215
        %v1079 = vunpack.c.l.b16 %v216
        %v1080 = vunpack.c.h.b16 %v216
        %v1081 = vunpack.c.l.b16 %v217
        %v1082 = vunpack.c.h.b16 %v217
        %v1083 = vunpack.c.l.b16 %v218
        %v1084 = vunpack.c.h.b16 %v218
        %v1085 = vunpack.c.l.b16 %v219
        %v1086 = vunpack.c.h.b16 %v219
        %v1087 = vunpack.c.l.b16 %v220
        %v1088 = vunpack.c.h.b16 %v220
        %v1089 = vunpack.c.l.b16 %v221
        %v1090 = vunpack.c.h.b16 %v221
        %v1091 = vunpack.c.l.b16 %v222
        %v1092 = vunpack.c.h.b16 %v222
        %v1093 = vunpack.c.l.b16 %v223
        %v1094 = vunpack.c.h.b16 %v223
        %v1095 = vunpack.c.l.b16 %v224
        %v1096 = vunpack.c.h.b16 %v224
        %v1097 = vunpack.c.l.b16 %v225
        %v1098 = vunpack.c.h.b16 %v225
        %v1099 = vunpack.c.l.b16 %v226
        %v1100 = vunpack.c.h.b16 %v226
        %v1101 = vunpack.c.l.b16 %v227
        %v1102 = vunpack.c.h.b16 %v227
        %v1103 = vunpack.c.l.b16 %v228
        %v1104 = vunpack.c.h.b16 %v228
        %v1105 = vunpack.c.l.b16 %v229
        %v1106 = vunpack.c.h.b16 %v229
        %v1107 = vunpack.c.l.b16 %v230
        %v1108 = vunpack.c.h.b16 %v230
        %v1109 = vunpack.c.l.b16 %v231
        %v1110 = vunpack.c.h.b16 %v231
        %v1111 = vunpack.c.l.b16 %v232
        %v1112 = vunpack.c.h.b16 %v232
        %v1113 = vunpack.c.l.b16 %v233
        %v1114 = vunpack.c.h.b16 %v233
        %v1115 = vunpack.c.l.b16 %v234
        %v1116 = vunpack.c.h.b16 %v234
        %v1117 = vunpack.c.l.b16 %v235
        %v1118 = vunpack.c.h.b16 %v235
        %v1119 = vunpack.c.l.b16 %v236
        %v1120 = vunpack.c.h.b16 %v236
        %v1121 = vunpack.c.l.b16 %v237
        %v1122 = vunpack.c.h.b16 %v237
        %v1123 = vunpack.c.l.b16 %v238
        %v1124 = vunpack.c.h.b16 %v238
        %v1125 = vunpack.c.l.b16 %v239
        %v1126 = vunpack.c.h.b16 %v239
        %v1127 = vunpack.c.l.b16 %v240
        %v1128 = vunpack.c.h.b16 %v240
        %v1129 = vunpack.c.l.b16 %v241
        %v1130 = vunpack.c.h.b16 %v241
        %v1131 = vunpack.c.l.b16 %v242
        %v1132 = vunpack.c.h.b16 %v242
        %v1133 = vunpack.c.l.b16 %v243
        %v1134 = vunpack.c.h.b16 %v243
        %v1135 = vunpack.c.l.b16 %v244
        %v1136 = vunpack.c.h.b16 %v244
        %v1137 = vunpack.c.l.b16 %v245
        %v1138 = vunpack.c.h.b16 %v245
        %v1139 = vunpack.c.l.b16 %v246
        %v1140 = vunpack.c.h.b16 %v246
        %v1141 = vpack.c.b16 %v1047, %v1045
        %v1142 = vpack.c.b16 %v1048, %v1046
        %v1143 = vpack.c.b16 %v1051, %v1049
        %v1144 = vpack.c.b16 %v1052, %v1050
        %v1145 = vpack.c.b16 %v1055, %v1053
        %v1146 = vpack.c.b16 %v1056, %v1054
        %v1147 = vpack.c.b16 %v1059, %v1057
        %v1148 = vpack.c.b16 %v1060, %v1058
        %v1149 = vpack.c.b16 %v1063, %v1061
        %v1150 = vpack.c.b16 %v1064, %v1062
        %v1151 = vpack.c.b16 %v1067, %v1065
        %v1152 = vpack.c.b16 %v1068, %v1066
        %v1153 = vpack.c.b16 %v1071, %v1069
        %v1154 = vpack.c.b16 %v1072, %v1070
        %v1155 = vpack.c.b16 %v1075, %v1073
        %v1156 = vpack.c.b16 %v1076, %v1074
        %v1157 = vpack.c.b16 %v1079, %v1077
        %v1158 = vpack.c.b16 %v1080, %v1078
        %v1159 = vpack.c.b16 %v1083, %v1081
        %v1160 = vpack.c.b16 %v1084, %v1082
        %v1161 = vpack.c.b16 %v1087, %v1085
        %v1162 = vpack.c.b16 %v1088, %v1086
        %v1163 = vpack.c.b16 %v1091, %v1089
        %v1164 = vpack.c.b16 %v1092, %v1090
        %v1165 = vpack.c.b16 %v1095, %v1093
        %v1166 = vpack.c.b16 %v1096, %v1094
        %v1167 = vpack.c.b16 %v1099, %v1097
        %v1168 = vpack.c.b16 %v1100, %v1098
        %v1169 = vpack.c.b16 %v1103, %v1101
        %v1170 = vpack.c.b16 %v1104, %v1102
        %v1171 = vpack.c.b16 %v1107, %v1105
        %v1172 = vpack.c.b16 %v1108, %v1106
        %v1173 = vpack.c.b16 %v1111, %v1109
        %v1174 = vpack.c.b16 %v1112, %v1110
        %v1175 = vpack.c.b16 %v1115, %v1113
        %v1176 = vpack.c.b16 %v1116, %v1114
        %v1177 = vpack.c.b16 %v1119, %v1117
        %v1178 = vpack.c.b16 %v1120, %v1118
        %v1179 = vpack.c.b16 %v1123, %v1121
        %v1180 = vpack.c.b16 %v1124, %v1122
        %v1181 = vpack.c.b16 %v1127, %v1125
        %v1182 = vpack.c.b16 %v1128, %v1126
        %v1183 = vpack.c.b16 %v1131, %v1129
        %v1184 = vpack.c.b16 %v1132, %v1130
        %v1185 = vpack.c.b16 %v1135, %v1133
        %v1186 = vpack.c.b16 %v1136, %v1134
        %v1187 = vpack.c.b16 %v1139, %v1137
        %v1188 = vpack.c.b16 %v1140, %v1138
        %1237 = vmatprep.subr.bf16.mxu0 %v1156
        %1238 = vmatpush1.bf16.msra.mxu0 %v1155
        %1239 = vmatprep.subr.bf16.mxu0 %v1154
        %1240 = vmatpush1.bf16.msra.mxu0 %v1153
        %1241 = vmatprep.subr.bf16.mxu0 %v1152
        %1242 = vmatpush1.bf16.msra.mxu0 %v1151
        %1243 = vmatprep.subr.bf16.mxu0 %v1150
        %1244 = vmatpush1.bf16.msra.mxu0 %v1149
        %1245 = vmatprep.subr.bf16.mxu0 %v1148
        %1246 = vmatpush1.bf16.msra.mxu0 %v1147
        %1247 = vmatprep.subr.bf16.mxu0 %v1146
        %1248 = vmatpush1.bf16.msra.mxu0 %v1145
        %1249 = vmatprep.subr.bf16.mxu0 %v1144
        %1250 = vmatpush1.bf16.msra.mxu0 %v1143
        %1251 = vmatprep.subr.bf16.mxu0 %v1142
        %1252 = vmatpush1.bf16.msra.mxu0 %v1141
        %1253 = vmatprep.subr.bf16.mxu0 %v1172
        %1254 = vmatpush2.bf16.msra.mxu0 %v1171
        %1255 = vmatprep.subr.bf16.mxu0 %v1170
        %1256 = vmatpush2.bf16.msra.mxu0 %v1169
        %1257 = vmatprep.subr.bf16.mxu0 %v1168
        %1258 = vmatpush2.bf16.msra.mxu0 %v1167
        %1259 = vmatprep.subr.bf16.mxu0 %v1166
        %1260 = vmatpush2.bf16.msra.mxu0 %v1165
        %1261 = vmatprep.subr.bf16.mxu0 %v1164
        %1262 = vmatpush2.bf16.msra.mxu0 %v1163
        %1263 = vmatprep.subr.bf16.mxu0 %v1162
        %1264 = vmatpush2.bf16.msra.mxu0 %v1161
        %1265 = vmatprep.subr.bf16.mxu0 %v1160
        %1266 = vmatpush2.bf16.msra.mxu0 %v1159
        %1267 = vmatprep.subr.bf16.mxu0 %v1158
        %1268 = vmatpush2.bf16.msra.mxu0 %v1157
        %1269 = vmatprep.mubr.bf16.mxu0 %v974
        %1270 = vmatmul.mubr.bf16.gmra.mxu0 %v973
        %v1271 = vpop.f32.mrf.mxu0
        %v1272 = vadd.f32 %v895, %v1271
        %v1273 = vpop.f32.mrf.mxu0
        %v1274 = vadd.f32 %v897, %v1273
        %v1275 = vpop.f32.mrf.mxu0
        %v1276 = vadd.f32 %v899, %v1275
        %v1277 = vpop.f32.mrf.mxu0
        %v1278 = vadd.f32 %v901, %v1277
        %1279 = vmatprep.mubr.bf16.mxu0 %v977
        %1280 = vmatmul.mubr.bf16.gmra.mxu0 %v976
        %v1281 = vpop.f32.mrf.mxu0
        %v1282 = vadd.f32 %v905, %v1281
        %v1283 = vpop.f32.mrf.mxu0
        %v1284 = vadd.f32 %v907, %v1283
        %v1285 = vpop.f32.mrf.mxu0
        %v1286 = vadd.f32 %v909, %v1285
        %v1287 = vpop.f32.mrf.mxu0
        %v1288 = vadd.f32 %v911, %v1287
        %1289 = vmatprep.mubr.bf16.mxu0 %v980
        %1290 = vmatmul.mubr.bf16.gmra.mxu0 %v979
        %v1291 = vpop.f32.mrf.mxu0
        %v1292 = vadd.f32 %v915, %v1291
        %v1293 = vpop.f32.mrf.mxu0
        %v1294 = vadd.f32 %v917, %v1293
        %v1295 = vpop.f32.mrf.mxu0
        %v1296 = vadd.f32 %v919, %v1295
        %v1297 = vpop.f32.mrf.mxu0
        %v1298 = vadd.f32 %v921, %v1297
        %1299 = vmatprep.mubr.bf16.mxu0 %v983
        %1300 = vmatmul.mubr.bf16.gmra.mxu0 %v982
        %v1301 = vpop.f32.mrf.mxu0
        %v1302 = vadd.f32 %v925, %v1301
        %v1303 = vpop.f32.mrf.mxu0
        %v1304 = vadd.f32 %v927, %v1303
        %v1305 = vpop.f32.mrf.mxu0
        %v1306 = vadd.f32 %v929, %v1305
        %v1307 = vpop.f32.mrf.mxu0
        %v1308 = vadd.f32 %v931, %v1307
        %1309 = vdwg.mxu0
        %1310 = vmatprep.subr.bf16.mxu0 %v1188
        %1311 = vmatpush1.bf16.msra.mxu0 %v1187
        %1312 = vmatprep.subr.bf16.mxu0 %v1186
        %1313 = vmatpush1.bf16.msra.mxu0 %v1185
        %1314 = vmatprep.subr.bf16.mxu0 %v1184
        %1315 = vmatpush1.bf16.msra.mxu0 %v1183
        %1316 = vmatprep.subr.bf16.mxu0 %v1182
        %1317 = vmatpush1.bf16.msra.mxu0 %v1181
        %1318 = vmatprep.subr.bf16.mxu0 %v1180
        %1319 = vmatpush1.bf16.msra.mxu0 %v1179
        %1320 = vmatprep.subr.bf16.mxu0 %v1178
        %1321 = vmatpush1.bf16.msra.mxu0 %v1177
        %1322 = vmatprep.subr.bf16.mxu0 %v1176
        %1323 = vmatpush1.bf16.msra.mxu0 %v1175
        %1324 = vmatprep.subr.bf16.mxu0 %v1174
        %1325 = vmatpush1.bf16.msra.mxu0 %v1173
        %1326 = vmatprep.subr.bf16.mxu0 0
        %1327 = vmatpush2.bf16.msra.mxu0 0
        %1328 = vmatprep.subr.bf16.mxu0 0
        %1329 = vmatpush2.bf16.msra.mxu0 0
        %1330 = vmatprep.subr.bf16.mxu0 0
        %1331 = vmatpush2.bf16.msra.mxu0 0
        %1332 = vmatprep.subr.bf16.mxu0 0
        %1333 = vmatpush2.bf16.msra.mxu0 0
        %1334 = vmatprep.subr.bf16.mxu0 0
        %1335 = vmatpush2.bf16.msra.mxu0 0
        %1336 = vmatprep.subr.bf16.mxu0 0
        %1337 = vmatpush2.bf16.msra.mxu0 0
        %1338 = vmatprep.subr.bf16.mxu0 0
        %1339 = vmatpush2.bf16.msra.mxu0 0
        %1340 = vmatprep.subr.bf16.mxu0 0
        %1341 = vmatpush2.bf16.msra.mxu0 0
        %1342 = vmatprep.mubr.bf16.mxu0 0
        %1343 = vmatmul.mubr.bf16.gmra.mxu0 %v975
        %v1344 = vpop.f32.mrf.mxu0
        %v1345 = vadd.f32 %v1272, %v1344
        %v1346 = vpop.f32.mrf.mxu0
        %v1347 = vadd.f32 %v1274, %v1346
        %v1348 = vpop.f32.mrf.mxu0
        %v1349 = vadd.f32 %v1276, %v1348
        %v1350 = vpop.f32.mrf.mxu0
        %v1351 = vadd.f32 %v1278, %v1350
        %1352 = vmatprep.mubr.bf16.mxu0 0
        %1353 = vmatmul.mubr.bf16.gmra.mxu0 %v978
        %v1354 = vpop.f32.mrf.mxu0
        %v1355 = vadd.f32 %v1282, %v1354
        %v1356 = vpop.f32.mrf.mxu0
        %v1357 = vadd.f32 %v1284, %v1356
        %v1358 = vpop.f32.mrf.mxu0
        %v1359 = vadd.f32 %v1286, %v1358
        %v1360 = vpop.f32.mrf.mxu0
        %v1361 = vadd.f32 %v1288, %v1360
        %1362 = vmatprep.mubr.bf16.mxu0 0
        %1363 = vmatmul.mubr.bf16.gmra.mxu0 %v981
        %v1364 = vpop.f32.mrf.mxu0
        %v1365 = vadd.f32 %v1292, %v1364
        %v1366 = vpop.f32.mrf.mxu0
        %v1367 = vadd.f32 %v1294, %v1366
        %v1368 = vpop.f32.mrf.mxu0
        %v1369 = vadd.f32 %v1296, %v1368
        %v1370 = vpop.f32.mrf.mxu0
        %v1371 = vadd.f32 %v1298, %v1370
        %1372 = vmatprep.mubr.bf16.mxu0 0
        %1373 = vmatmul.mubr.bf16.gmra.mxu0 %v984
        %v1374 = vpop.f32.mrf.mxu0
        %v1375 = vadd.f32 %v1302, %v1374
        %v1376 = vpop.f32.mrf.mxu0
        %v1377 = vadd.f32 %v1304, %v1376
        %v1378 = vpop.f32.mrf.mxu0
        %v1379 = vadd.f32 %v1306, %v1378
        %v1380 = vpop.f32.mrf.mxu0
        %v1381 = vadd.f32 %v1308, %v1380
        %1382 = vdwg.mxu0
        %v1383 = vld [vmem:[%s182] sm:$0xee]
        %v1384 = vld [vmem:[%s182 + $0x8] sm:$0xe]
        %v1385 = vld [vmem:[%s182 + $0x24] sm:$0xee]
        %v1386 = vld [vmem:[%s182 + $0x2c] sm:$0xe]
        %v1387 = vld [vmem:[%s182 + $0x48] sm:$0xee]
        %v1388 = vld [vmem:[%s182 + $0x50] sm:$0xe]
        %v1389 = vld [vmem:[%s182 + $0x6c] sm:$0xee]
        %v1390 = vld [vmem:[%s182 + $0x74] sm:$0xe]
        %vm1407 = vcmask 1042432
        %vm1408 = vcmask 1046532
        %vm1409 = vmor %vm1407, %vm1408
        %v1410 = vrot.slane %v1383, 5
        %v1411 = vrot.slane %v1410, 4
        %v1412 = vrot.slane %v185, 5
        %v1413 = vsel %vm1409, %v1411, %v1412
        %v1414 = vrot.slane %v1384, 5
        %v1415 = vrot.slane %v1414, 4
        %v1416 = vrot.slane %v186, 5
        %v1417 = vsel %vm1409, %v1415, %v1416
        %v1418 = vrot.slane %v1412, 4
        %v1419 = vrot.slane %v247, 5
        %v1420 = vsel %vm1409, %v1418, %v1419
        %v1421 = vrot.slane %v1416, 4
        %v1422 = vrot.slane %v248, 5
        %v1423 = vsel %vm1409, %v1421, %v1422
        %v1424 = vrot.slane %v1385, 5
        %v1425 = vrot.slane %v1424, 4
        %v1426 = vrot.slane %v189, 5
        %v1427 = vsel %vm1409, %v1425, %v1426
        %v1428 = vrot.slane %v1386, 5
        %v1429 = vrot.slane %v1428, 4
        %v1430 = vrot.slane %v190, 5
        %v1431 = vsel %vm1409, %v1429, %v1430
        %v1432 = vrot.slane %v1426, 4
        %v1433 = vrot.slane %v249, 5
        %v1434 = vsel %vm1409, %v1432, %v1433
        %v1435 = vrot.slane %v1430, 4
        %v1436 = vrot.slane %v250, 5
        %v1437 = vsel %vm1409, %v1435, %v1436
        %v1438 = vrot.slane %v1387, 5
        %v1439 = vrot.slane %v1438, 4
        %v1440 = vrot.slane %v193, 5
        %v1441 = vsel %vm1409, %v1439, %v1440
        %v1442 = vrot.slane %v1388, 5
        %v1443 = vrot.slane %v1442, 4
        %v1444 = vrot.slane %v194, 5
        %v1445 = vsel %vm1409, %v1443, %v1444
        %v1446 = vrot.slane %v1440, 4
        %v1447 = vrot.slane %v251, 5
        %v1448 = vsel %vm1409, %v1446, %v1447
        %v1449 = vrot.slane %v1444, 4
        %v1450 = vrot.slane %v252, 5
        %v1451 = vsel %vm1409, %v1449, %v1450
        %v1452 = vrot.slane %v1389, 5
        %v1453 = vrot.slane %v1452, 4
        %v1454 = vrot.slane %v197, 5
        %v1455 = vsel %vm1409, %v1453, %v1454
        %v1456 = vrot.slane %v1390, 5
        %v1457 = vrot.slane %v1456, 4
        %v1458 = vrot.slane %v198, 5
        %v1459 = vsel %vm1409, %v1457, %v1458
        %v1460 = vrot.slane %v1454, 4
        %v1461 = vrot.slane %v253, 5
        %v1462 = vsel %vm1409, %v1460, %v1461
        %v1463 = vrot.slane %v1458, 4
        %v1464 = vrot.slane %v254, 5
        %v1465 = vsel %vm1409, %v1463, %v1464
        %s1466 = scalar_lea.vmem %s1, 768
        %v1467 = vld [vmem:[%s1466] sm:$0xff]
        %v1468 = vld [vmem:[%s1466 + $0x8] sm:$0xff]
        %v1469 = vld [vmem:[%s1466 + $0x10] sm:$0xff]
        %v1470 = vld [vmem:[%s1466 + $0x18] sm:$0xff]
        %v1471 = vld [vmem:[%s1466 + $0x20] sm:$0xff]
        %v1472 = vld [vmem:[%s1466 + $0x28] sm:$0xff]
        %v1473 = vld [vmem:[%s1466 + $0x30] sm:$0xff]
        %v1474 = vld [vmem:[%s1466 + $0x38] sm:$0xff]
        %v1475 = vld [vmem:[%s1466 + $0x40] sm:$0xff]
        %v1476 = vld [vmem:[%s1466 + $0x48] sm:$0xff]
        %v1477 = vld [vmem:[%s1466 + $0x50] sm:$0xff]
        %v1478 = vld [vmem:[%s1466 + $0x58] sm:$0xff]
        %v1479 = vld [vmem:[%s1466 + $0x60] sm:$0xff]
        %v1480 = vld [vmem:[%s1466 + $0x68] sm:$0xff]
        %v1481 = vld [vmem:[%s1466 + $0x70] sm:$0xff]
        %v1482 = vld [vmem:[%s1466 + $0x78] sm:$0xff]
        %v1483 = vld [vmem:[%s1466 + $0x80] sm:$0xff]
        %v1484 = vld [vmem:[%s1466 + $0x88] sm:$0xff]
        %v1485 = vld [vmem:[%s1466 + $0x90] sm:$0xff]
        %v1486 = vld [vmem:[%s1466 + $0x98] sm:$0xff]
        %v1487 = vld [vmem:[%s1466 + $0xa0] sm:$0xff]
        %v1488 = vld [vmem:[%s1466 + $0xa8] sm:$0xff]
        %v1489 = vld [vmem:[%s1466 + $0xb0] sm:$0xff]
        %v1490 = vld [vmem:[%s1466 + $0xb8] sm:$0xff]
        %v1491 = vld [vmem:[%s1466 + $0xc0] sm:$0xff]
        %v1492 = vld [vmem:[%s1466 + $0xc8] sm:$0xff]
        %v1493 = vld [vmem:[%s1466 + $0xd0] sm:$0xff]
        %v1494 = vld [vmem:[%s1466 + $0xd8] sm:$0xff]
        %v1495 = vld [vmem:[%s1466 + $0xe0] sm:$0xff]
        %v1496 = vld [vmem:[%s1466 + $0xe8] sm:$0xff]
        %v1497 = vld [vmem:[%s1466 + $0xf0] sm:$0xff]
        %v1498 = vld [vmem:[%s1466 + $0xf8] sm:$0xff]
        %v1499 = vld [vmem:[%s1466 + $0x100] sm:$0xff]
        %v1500 = vld [vmem:[%s1466 + $0x108] sm:$0xff]
        %v1501 = vld [vmem:[%s1466 + $0x110] sm:$0xff]
        %v1502 = vld [vmem:[%s1466 + $0x118] sm:$0xff]
        %v1503 = vld [vmem:[%s1466 + $0x120] sm:$0xff]
        %v1504 = vld [vmem:[%s1466 + $0x128] sm:$0xff]
        %v1505 = vld [vmem:[%s1466 + $0x130] sm:$0xff]
        %v1506 = vld [vmem:[%s1466 + $0x138] sm:$0xff]
        %v1507 = vld [vmem:[%s1466 + $0x140] sm:$0xff]
        %v1508 = vld [vmem:[%s1466 + $0x148] sm:$0xff]
        %v1509 = vld [vmem:[%s1466 + $0x150] sm:$0xff]
        %v1510 = vld [vmem:[%s1466 + $0x158] sm:$0xff]
        %v1511 = vld [vmem:[%s1466 + $0x160] sm:$0xff]
        %v1512 = vld [vmem:[%s1466 + $0x168] sm:$0xff]
        %v1513 = vld [vmem:[%s1466 + $0x170] sm:$0xff]
        %v1514 = vld [vmem:[%s1466 + $0x178] sm:$0xff]
        %v1515 = vunpack.c.l.b16 %v1413
        %v1516 = vunpack.c.h.b16 %v1413
        %v1517 = vunpack.c.l.b16 %v1417
        %v1518 = vunpack.c.l.b16 %v1420
        %v1519 = vunpack.c.h.b16 %v1420
        %v1520 = vunpack.c.l.b16 %v1423
        %v1521 = vunpack.c.l.b16 %v1427
        %v1522 = vunpack.c.h.b16 %v1427
        %v1523 = vunpack.c.l.b16 %v1431
        %v1524 = vunpack.c.l.b16 %v1434
        %v1525 = vunpack.c.h.b16 %v1434
        %v1526 = vunpack.c.l.b16 %v1437
        %v1527 = vunpack.c.l.b16 %v1441
        %v1528 = vunpack.c.h.b16 %v1441
        %v1529 = vunpack.c.l.b16 %v1445
        %v1530 = vunpack.c.l.b16 %v1448
        %v1531 = vunpack.c.h.b16 %v1448
        %v1532 = vunpack.c.l.b16 %v1451
        %v1533 = vunpack.c.l.b16 %v1455
        %v1534 = vunpack.c.h.b16 %v1455
        %v1535 = vunpack.c.l.b16 %v1459
        %v1536 = vunpack.c.l.b16 %v1462
        %v1537 = vunpack.c.h.b16 %v1462
        %v1538 = vunpack.c.l.b16 %v1465
        %v1539 = vpack.c.b16 %v1518, %v1515
        %v1540 = vpack.c.b16 %v1519, %v1516
        %v1541 = vpack.c.b16 %v1520, %v1517
        %v1542 = vpack.c.b16 %v1524, %v1521
        %v1543 = vpack.c.b16 %v1525, %v1522
        %v1544 = vpack.c.b16 %v1526, %v1523
        %v1545 = vpack.c.b16 %v1530, %v1527
        %v1546 = vpack.c.b16 %v1531, %v1528
        %v1547 = vpack.c.b16 %v1532, %v1529
        %v1548 = vpack.c.b16 %v1536, %v1533
        %v1549 = vpack.c.b16 %v1537, %v1534
        %v1550 = vpack.c.b16 %v1538, %v1535
        %v1611 = vunpack.c.l.b16 %v1467
        %v1612 = vunpack.c.h.b16 %v1467
        %v1613 = vunpack.c.l.b16 %v1468
        %v1614 = vunpack.c.h.b16 %v1468
        %v1615 = vunpack.c.l.b16 %v1469
        %v1616 = vunpack.c.h.b16 %v1469
        %v1617 = vunpack.c.l.b16 %v1470
        %v1618 = vunpack.c.h.b16 %v1470
        %v1619 = vunpack.c.l.b16 %v1471
        %v1620 = vunpack.c.h.b16 %v1471
        %v1621 = vunpack.c.l.b16 %v1472
        %v1622 = vunpack.c.h.b16 %v1472
        %v1623 = vunpack.c.l.b16 %v1473
        %v1624 = vunpack.c.h.b16 %v1473
        %v1625 = vunpack.c.l.b16 %v1474
        %v1626 = vunpack.c.h.b16 %v1474
        %v1627 = vunpack.c.l.b16 %v1475
        %v1628 = vunpack.c.h.b16 %v1475
        %v1629 = vunpack.c.l.b16 %v1476
        %v1630 = vunpack.c.h.b16 %v1476
        %v1631 = vunpack.c.l.b16 %v1477
        %v1632 = vunpack.c.h.b16 %v1477
        %v1633 = vunpack.c.l.b16 %v1478
        %v1634 = vunpack.c.h.b16 %v1478
        %v1635 = vunpack.c.l.b16 %v1479
        %v1636 = vunpack.c.h.b16 %v1479
        %v1637 = vunpack.c.l.b16 %v1480
        %v1638 = vunpack.c.h.b16 %v1480
        %v1639 = vunpack.c.l.b16 %v1481
        %v1640 = vunpack.c.h.b16 %v1481
        %v1641 = vunpack.c.l.b16 %v1482
        %v1642 = vunpack.c.h.b16 %v1482
        %v1643 = vunpack.c.l.b16 %v1483
        %v1644 = vunpack.c.h.b16 %v1483
        %v1645 = vunpack.c.l.b16 %v1484
        %v1646 = vunpack.c.h.b16 %v1484
        %v1647 = vunpack.c.l.b16 %v1485
        %v1648 = vunpack.c.h.b16 %v1485
        %v1649 = vunpack.c.l.b16 %v1486
        %v1650 = vunpack.c.h.b16 %v1486
        %v1651 = vunpack.c.l.b16 %v1487
        %v1652 = vunpack.c.h.b16 %v1487
        %v1653 = vunpack.c.l.b16 %v1488
        %v1654 = vunpack.c.h.b16 %v1488
        %v1655 = vunpack.c.l.b16 %v1489
        %v1656 = vunpack.c.h.b16 %v1489
        %v1657 = vunpack.c.l.b16 %v1490
        %v1658 = vunpack.c.h.b16 %v1490
        %v1659 = vunpack.c.l.b16 %v1491
        %v1660 = vunpack.c.h.b16 %v1491
        %v1661 = vunpack.c.l.b16 %v1492
        %v1662 = vunpack.c.h.b16 %v1492
        %v1663 = vunpack.c.l.b16 %v1493
        %v1664 = vunpack.c.h.b16 %v1493
        %v1665 = vunpack.c.l.b16 %v1494
        %v1666 = vunpack.c.h.b16 %v1494
        %v1667 = vunpack.c.l.b16 %v1495
        %v1668 = vunpack.c.h.b16 %v1495
        %v1669 = vunpack.c.l.b16 %v1496
        %v1670 = vunpack.c.h.b16 %v1496
        %v1671 = vunpack.c.l.b16 %v1497
        %v1672 = vunpack.c.h.b16 %v1497
        %v1673 = vunpack.c.l.b16 %v1498
        %v1674 = vunpack.c.h.b16 %v1498
        %v1675 = vunpack.c.l.b16 %v1499
        %v1676 = vunpack.c.h.b16 %v1499
        %v1677 = vunpack.c.l.b16 %v1500
        %v1678 = vunpack.c.h.b16 %v1500
        %v1679 = vunpack.c.l.b16 %v1501
        %v1680 = vunpack.c.h.b16 %v1501
        %v1681 = vunpack.c.l.b16 %v1502
        %v1682 = vunpack.c.h.b16 %v1502
        %v1683 = vunpack.c.l.b16 %v1503
        %v1684 = vunpack.c.h.b16 %v1503
        %v1685 = vunpack.c.l.b16 %v1504
        %v1686 = vunpack.c.h.b16 %v1504
        %v1687 = vunpack.c.l.b16 %v1505
        %v1688 = vunpack.c.h.b16 %v1505
        %v1689 = vunpack.c.l.b16 %v1506
        %v1690 = vunpack.c.h.b16 %v1506
        %v1691 = vunpack.c.l.b16 %v1507
        %v1692 = vunpack.c.h.b16 %v1507
        %v1693 = vunpack.c.l.b16 %v1508
        %v1694 = vunpack.c.h.b16 %v1508
        %v1695 = vunpack.c.l.b16 %v1509
        %v1696 = vunpack.c.h.b16 %v1509
        %v1697 = vunpack.c.l.b16 %v1510
        %v1698 = vunpack.c.h.b16 %v1510
        %v1699 = vunpack.c.l.b16 %v1511
        %v1700 = vunpack.c.h.b16 %v1511
        %v1701 = vunpack.c.l.b16 %v1512
        %v1702 = vunpack.c.h.b16 %v1512
        %v1703 = vunpack.c.l.b16 %v1513
        %v1704 = vunpack.c.h.b16 %v1513
        %v1705 = vunpack.c.l.b16 %v1514
        %v1706 = vunpack.c.h.b16 %v1514
        %v1707 = vpack.c.b16 %v1613, %v1611
        %v1708 = vpack.c.b16 %v1614, %v1612
        %v1709 = vpack.c.b16 %v1617, %v1615
        %v1710 = vpack.c.b16 %v1618, %v1616
        %v1711 = vpack.c.b16 %v1621, %v1619
        %v1712 = vpack.c.b16 %v1622, %v1620
        %v1713 = vpack.c.b16 %v1625, %v1623
        %v1714 = vpack.c.b16 %v1626, %v1624
        %v1715 = vpack.c.b16 %v1629, %v1627
        %v1716 = vpack.c.b16 %v1630, %v1628
        %v1717 = vpack.c.b16 %v1633, %v1631
        %v1718 = vpack.c.b16 %v1634, %v1632
        %v1719 = vpack.c.b16 %v1637, %v1635
        %v1720 = vpack.c.b16 %v1638, %v1636
        %v1721 = vpack.c.b16 %v1641, %v1639
        %v1722 = vpack.c.b16 %v1642, %v1640
        %v1723 = vpack.c.b16 %v1645, %v1643
        %v1724 = vpack.c.b16 %v1646, %v1644
        %v1725 = vpack.c.b16 %v1649, %v1647
        %v1726 = vpack.c.b16 %v1650, %v1648
        %v1727 = vpack.c.b16 %v1653, %v1651
        %v1728 = vpack.c.b16 %v1654, %v1652
        %v1729 = vpack.c.b16 %v1657, %v1655
        %v1730 = vpack.c.b16 %v1658, %v1656
        %v1731 = vpack.c.b16 %v1661, %v1659
        %v1732 = vpack.c.b16 %v1662, %v1660
        %v1733 = vpack.c.b16 %v1665, %v1663
        %v1734 = vpack.c.b16 %v1666, %v1664
        %v1735 = vpack.c.b16 %v1669, %v1667
        %v1736 = vpack.c.b16 %v1670, %v1668
        %v1737 = vpack.c.b16 %v1673, %v1671
        %v1738 = vpack.c.b16 %v1674, %v1672
        %v1739 = vpack.c.b16 %v1677, %v1675
        %v1740 = vpack.c.b16 %v1678, %v1676
        %v1741 = vpack.c.b16 %v1681, %v1679
        %v1742 = vpack.c.b16 %v1682, %v1680
        %v1743 = vpack.c.b16 %v1685, %v1683
        %v1744 = vpack.c.b16 %v1686, %v1684
        %v1745 = vpack.c.b16 %v1689, %v1687
        %v1746 = vpack.c.b16 %v1690, %v1688
        %v1747 = vpack.c.b16 %v1693, %v1691
        %v1748 = vpack.c.b16 %v1694, %v1692
        %v1749 = vpack.c.b16 %v1697, %v1695
        %v1750 = vpack.c.b16 %v1698, %v1696
        %v1751 = vpack.c.b16 %v1701, %v1699
        %v1752 = vpack.c.b16 %v1702, %v1700
        %v1753 = vpack.c.b16 %v1705, %v1703
        %v1754 = vpack.c.b16 %v1706, %v1704
        %1803 = vmatprep.subr.bf16.mxu0 %v1722
        %1804 = vmatpush1.bf16.msra.mxu0 %v1721
        %1805 = vmatprep.subr.bf16.mxu0 %v1720
        %1806 = vmatpush1.bf16.msra.mxu0 %v1719
        %1807 = vmatprep.subr.bf16.mxu0 %v1718
        %1808 = vmatpush1.bf16.msra.mxu0 %v1717
        %1809 = vmatprep.subr.bf16.mxu0 %v1716
        %1810 = vmatpush1.bf16.msra.mxu0 %v1715
        %1811 = vmatprep.subr.bf16.mxu0 %v1714
        %1812 = vmatpush1.bf16.msra.mxu0 %v1713
        %1813 = vmatprep.subr.bf16.mxu0 %v1712
        %1814 = vmatpush1.bf16.msra.mxu0 %v1711
        %1815 = vmatprep.subr.bf16.mxu0 %v1710
        %1816 = vmatpush1.bf16.msra.mxu0 %v1709
        %1817 = vmatprep.subr.bf16.mxu0 %v1708
        %1818 = vmatpush1.bf16.msra.mxu0 %v1707
        %1819 = vmatprep.subr.bf16.mxu0 %v1738
        %1820 = vmatpush2.bf16.msra.mxu0 %v1737
        %1821 = vmatprep.subr.bf16.mxu0 %v1736
        %1822 = vmatpush2.bf16.msra.mxu0 %v1735
        %1823 = vmatprep.subr.bf16.mxu0 %v1734
        %1824 = vmatpush2.bf16.msra.mxu0 %v1733
        %1825 = vmatprep.subr.bf16.mxu0 %v1732
        %1826 = vmatpush2.bf16.msra.mxu0 %v1731
        %1827 = vmatprep.subr.bf16.mxu0 %v1730
        %1828 = vmatpush2.bf16.msra.mxu0 %v1729
        %1829 = vmatprep.subr.bf16.mxu0 %v1728
        %1830 = vmatpush2.bf16.msra.mxu0 %v1727
        %1831 = vmatprep.subr.bf16.mxu0 %v1726
        %1832 = vmatpush2.bf16.msra.mxu0 %v1725
        %1833 = vmatprep.subr.bf16.mxu0 %v1724
        %1834 = vmatpush2.bf16.msra.mxu0 %v1723
        %1835 = vmatprep.mubr.bf16.mxu0 %v1540
        %1836 = vmatmul.mubr.bf16.gmra.mxu0 %v1539
        %v1837 = vpop.f32.mrf.mxu0
        %v1838 = vadd.f32 0.0, %v1837
        %v1839 = vpop.f32.mrf.mxu0
        %v1840 = vadd.f32 0.0, %v1839
        %v1841 = vpop.f32.mrf.mxu0
        %v1842 = vadd.f32 0.0, %v1841
        %v1843 = vpop.f32.mrf.mxu0
        %v1844 = vadd.f32 0.0, %v1843
        %1845 = vmatprep.mubr.bf16.mxu0 %v1543
        %1846 = vmatmul.mubr.bf16.gmra.mxu0 %v1542
        %v1847 = vpop.f32.mrf.mxu0
        %v1848 = vadd.f32 0.0, %v1847
        %v1849 = vpop.f32.mrf.mxu0
        %v1850 = vadd.f32 0.0, %v1849
        %v1851 = vpop.f32.mrf.mxu0
        %v1852 = vadd.f32 0.0, %v1851
        %v1853 = vpop.f32.mrf.mxu0
        %v1854 = vadd.f32 0.0, %v1853
        %1855 = vmatprep.mubr.bf16.mxu0 %v1546
        %1856 = vmatmul.mubr.bf16.gmra.mxu0 %v1545
        %v1857 = vpop.f32.mrf.mxu0
        %v1858 = vadd.f32 0.0, %v1857
        %v1859 = vpop.f32.mrf.mxu0
        %v1860 = vadd.f32 0.0, %v1859
        %v1861 = vpop.f32.mrf.mxu0
        %v1862 = vadd.f32 0.0, %v1861
        %v1863 = vpop.f32.mrf.mxu0
        %v1864 = vadd.f32 0.0, %v1863
        %1865 = vmatprep.mubr.bf16.mxu0 %v1549
        %1866 = vmatmul.mubr.bf16.gmra.mxu0 %v1548
        %v1867 = vpop.f32.mrf.mxu0
        %v1868 = vadd.f32 0.0, %v1867
        %v1869 = vpop.f32.mrf.mxu0
        %v1870 = vadd.f32 0.0, %v1869
        %v1871 = vpop.f32.mrf.mxu0
        %v1872 = vadd.f32 0.0, %v1871
        %v1873 = vpop.f32.mrf.mxu0
        %v1874 = vadd.f32 0.0, %v1873
        %1875 = vdwg.mxu0
        %1876 = vmatprep.subr.bf16.mxu0 %v1754
        %1877 = vmatpush1.bf16.msra.mxu0 %v1753
        %1878 = vmatprep.subr.bf16.mxu0 %v1752
        %1879 = vmatpush1.bf16.msra.mxu0 %v1751
        %1880 = vmatprep.subr.bf16.mxu0 %v1750
        %1881 = vmatpush1.bf16.msra.mxu0 %v1749
        %1882 = vmatprep.subr.bf16.mxu0 %v1748
        %1883 = vmatpush1.bf16.msra.mxu0 %v1747
        %1884 = vmatprep.subr.bf16.mxu0 %v1746
        %1885 = vmatpush1.bf16.msra.mxu0 %v1745
        %1886 = vmatprep.subr.bf16.mxu0 %v1744
        %1887 = vmatpush1.bf16.msra.mxu0 %v1743
        %1888 = vmatprep.subr.bf16.mxu0 %v1742
        %1889 = vmatpush1.bf16.msra.mxu0 %v1741
        %1890 = vmatprep.subr.bf16.mxu0 %v1740
        %1891 = vmatpush1.bf16.msra.mxu0 %v1739
        %1892 = vmatprep.subr.bf16.mxu0 0
        %1893 = vmatpush2.bf16.msra.mxu0 0
        %1894 = vmatprep.subr.bf16.mxu0 0
        %1895 = vmatpush2.bf16.msra.mxu0 0
        %1896 = vmatprep.subr.bf16.mxu0 0
        %1897 = vmatpush2.bf16.msra.mxu0 0
        %1898 = vmatprep.subr.bf16.mxu0 0
        %1899 = vmatpush2.bf16.msra.mxu0 0
        %1900 = vmatprep.subr.bf16.mxu0 0
        %1901 = vmatpush2.bf16.msra.mxu0 0
        %1902 = vmatprep.subr.bf16.mxu0 0
        %1903 = vmatpush2.bf16.msra.mxu0 0
        %1904 = vmatprep.subr.bf16.mxu0 0
        %1905 = vmatpush2.bf16.msra.mxu0 0
        %1906 = vmatprep.subr.bf16.mxu0 0
        %1907 = vmatpush2.bf16.msra.mxu0 0
        %1908 = vmatprep.mubr.bf16.mxu0 0
        %1909 = vmatmul.mubr.bf16.gmra.mxu0 %v1541
        %v1910 = vpop.f32.mrf.mxu0
        %v1911 = vadd.f32 %v1838, %v1910
        %v1912 = vpop.f32.mrf.mxu0
        %v1913 = vadd.f32 %v1840, %v1912
        %v1914 = vpop.f32.mrf.mxu0
        %v1915 = vadd.f32 %v1842, %v1914
        %v1916 = vpop.f32.mrf.mxu0
        %v1917 = vadd.f32 %v1844, %v1916
        %1918 = vmatprep.mubr.bf16.mxu0 0
        %1919 = vmatmul.mubr.bf16.gmra.mxu0 %v1544
        %v1920 = vpop.f32.mrf.mxu0
        %v1921 = vadd.f32 %v1848, %v1920
        %v1922 = vpop.f32.mrf.mxu0
        %v1923 = vadd.f32 %v1850, %v1922
        %v1924 = vpop.f32.mrf.mxu0
        %v1925 = vadd.f32 %v1852, %v1924
        %v1926 = vpop.f32.mrf.mxu0
        %v1927 = vadd.f32 %v1854, %v1926
        %1928 = vmatprep.mubr.bf16.mxu0 0
        %1929 = vmatmul.mubr.bf16.gmra.mxu0 %v1547
        %v1930 = vpop.f32.mrf.mxu0
        %v1931 = vadd.f32 %v1858, %v1930
        %v1932 = vpop.f32.mrf.mxu0
        %v1933 = vadd.f32 %v1860, %v1932
        %v1934 = vpop.f32.mrf.mxu0
        %v1935 = vadd.f32 %v1862, %v1934
        %v1936 = vpop.f32.mrf.mxu0
        %v1937 = vadd.f32 %v1864, %v1936
        %1938 = vmatprep.mubr.bf16.mxu0 0
        %1939 = vmatmul.mubr.bf16.gmra.mxu0 %v1550
        %v1940 = vpop.f32.mrf.mxu0
        %v1941 = vadd.f32 %v1868, %v1940
        %v1942 = vpop.f32.mrf.mxu0
        %v1943 = vadd.f32 %v1870, %v1942
        %v1944 = vpop.f32.mrf.mxu0
        %v1945 = vadd.f32 %v1872, %v1944
        %v1946 = vpop.f32.mrf.mxu0
        %v1947 = vadd.f32 %v1874, %v1946
        %1948 = vdwg.mxu0
        %v1949 = vadd.f32 %v1345, %v1911
        %v1950 = vadd.f32 %v1347, %v1913
        %v1951 = vadd.f32 %v1349, %v1915
        %v1952 = vadd.f32 %v1351, %v1917
        %v1953 = vadd.f32 %v1355, %v1921
        %v1954 = vadd.f32 %v1357, %v1923
        %v1955 = vadd.f32 %v1359, %v1925
        %v1956 = vadd.f32 %v1361, %v1927
        %v1957 = vadd.f32 %v1365, %v1931
        %v1958 = vadd.f32 %v1367, %v1933
        %v1959 = vadd.f32 %v1369, %v1935
        %v1960 = vadd.f32 %v1371, %v1937
        %v1961 = vadd.f32 %v1375, %v1941
        %v1962 = vadd.f32 %v1377, %v1943
        %v1963 = vadd.f32 %v1379, %v1945
        %v1964 = vadd.f32 %v1381, %v1947
        %v1966 = vlaneseq
        %v1967 = vshrl.u32 %v1966, 7
        %v1968 = vsub.s32 0, %v1967
        %v1969 = vrot.slane %v172, %v1968
        %v1970 = vlaneseq
        %v1971 = vshrl.u32 %v1970, 7
        %v1972 = vsub.s32 1, %v1971
        %v1973 = vrot.slane %v172, %v1972
        %v1976 = vadd.f32 %v1949, %v1969
        %v1977 = vadd.f32 %v1950, %v1973
        %v1978 = vadd.f32 %v1951, %v1969
        %v1979 = vadd.f32 %v1952, %v1973
        %v1980 = vadd.f32 %v1953, %v1969
        %v1981 = vadd.f32 %v1954, %v1973
        %v1982 = vadd.f32 %v1955, %v1969
        %v1983 = vadd.f32 %v1956, %v1973
        %v1984 = vadd.f32 %v1957, %v1969
        %v1985 = vadd.f32 %v1958, %v1973
        %v1986 = vadd.f32 %v1959, %v1969
        %v1987 = vadd.f32 %v1960, %v1973
        %v1988 = vadd.f32 %v1961, %v1969
        %v1989 = vadd.f32 %v1962, %v1973
        %v1990 = vadd.f32 %v1963, %v1969
        %v1991 = vadd.f32 %v1964, %v1973
        %v1992 = vmax.f32 %v1976, 0.0
        %v1993 = vmax.f32 %v1977, 0.0
        %v1994 = vmax.f32 %v1978, 0.0
        %v1995 = vmax.f32 %v1979, 0.0
        %v1996 = vmax.f32 %v1980, 0.0
        %v1997 = vmax.f32 %v1981, 0.0
        %v1998 = vmax.f32 %v1982, 0.0
        %v1999 = vmax.f32 %v1983, 0.0
        %v2000 = vmax.f32 %v1984, 0.0
        %v2001 = vmax.f32 %v1985, 0.0
        %v2002 = vmax.f32 %v1986, 0.0
        %v2003 = vmax.f32 %v1987, 0.0
        %v2004 = vmax.f32 %v1988, 0.0
        %v2005 = vmax.f32 %v1989, 0.0
        %v2006 = vmax.f32 %v1990, 0.0
        %v2007 = vmax.f32 %v1991, 0.0
        %v2008 = vpack.c.bf16 %v1994, %v1992
        %v2009 = vpack.c.bf16 %v1995, %v1993
        %v2010 = vpack.c.bf16 %v1998, %v1996
        %v2011 = vpack.c.bf16 %v1999, %v1997
        %v2012 = vpack.c.bf16 %v2002, %v2000
        %v2013 = vpack.c.bf16 %v2003, %v2001
        %v2014 = vpack.c.bf16 %v2006, %v2004
        %v2015 = vpack.c.bf16 %v2007, %v2005
        %v2024 = vunpack.c.l.b16 %v2008
        %v2025 = vunpack.c.l.b16 %v2009
        %v2026 = vunpack.c.h.b16 %v2008
        %v2027 = vunpack.c.h.b16 %v2009
        %v2028 = vunpack.c.l.b16 %v2010
        %v2029 = vunpack.c.l.b16 %v2011
        %v2030 = vunpack.c.h.b16 %v2010
        %v2031 = vunpack.c.h.b16 %v2011
        %v2032 = vunpack.c.l.b16 %v2012
        %v2033 = vunpack.c.l.b16 %v2013
        %v2034 = vunpack.c.h.b16 %v2012
        %v2035 = vunpack.c.h.b16 %v2013
        %v2036 = vunpack.c.l.b16 %v2014
        %v2037 = vunpack.c.l.b16 %v2015
        %v2038 = vunpack.c.h.b16 %v2014
        %v2039 = vunpack.c.h.b16 %v2015
        %v2040 = vpack.c.b16 %v2025, %v2024
        %v2041 = vpack.c.b16 %v2027, %v2026
        %v2042 = vpack.c.b16 %v2029, %v2028
        %v2043 = vpack.c.b16 %v2031, %v2030
        %v2044 = vpack.c.b16 %v2033, %v2032
        %v2045 = vpack.c.b16 %v2035, %v2034
        %v2046 = vpack.c.b16 %v2037, %v2036
        %v2047 = vpack.c.b16 %v2039, %v2038
        %s2056 = smul.u32 %s179, 4
        %s2057 = smul.addr %s2056, 4
        %s2058 = scalar_lea.vmem %s170, %s2057
        %2059 = vst [vmem:[%s2058] sm:$0xff] %v2040
        %2060 = vst [vmem:[%s2058 + $0x8] sm:$0x33] %v2041
        %2061 = vst [vmem:[%s2058 + $0x10] sm:$0xff] %v2042
        %2062 = vst [vmem:[%s2058 + $0x18] sm:$0x33] %v2043
        %2063 = vst [vmem:[%s2058 + $0x20] sm:$0xff] %v2044
        %2064 = vst [vmem:[%s2058 + $0x28] sm:$0x33] %v2045
        %2065 = vst [vmem:[%s2058 + $0x30] sm:$0xff] %v2046
        %2066 = vst [vmem:[%s2058 + $0x38] sm:$0x33] %v2047
      $region37: #{mil_forward.9} parent=31 // loop_footer
        %s178 = sadd.s32 1, %s174
      $region38: #{mil_forward.9} parent=31 // loop_footer_branch
        %173 = sbr.rel target = $region34
      $region39: #{mil_forward.9} parent=31 // loop_exit
        _
      %p2067 = scmp.lt.s32.totalorder %s14, 5
      %s2068 = scalar_select %p2067, %s14, 5
      %s2069 = smul.addr %s2068, 48
      %s2070 = smul.addr %s2069, 4
      %s2071 = scalar_lea.vmem %s3, %s2070
      // Predicated region
      $region40: #{mil_forward.9} parent=31 // pred_check
        %p2072 = pneg %p100
      $region41: #{mil_forward.9} parent=31 // pred_check_branch
        %2074 = sbr.rel (%p2072) target = $region43
      $region42: #{mil_forward.9} parent=31 // pred_region
        _
      $region43: #{mil_forward.9} parent=31 // pred_fallthru
        _
    $region32: #{mil_forward.9} parent=5 // pred_fallthru
      _
    %p2075 = scmp.le.s32.totalorder 2, %s9
    // Predicated region
    $region44: #{mil_forward.9} parent=5 // pred_check
      %p2076 = pneg %p2075
    $region45: #{mil_forward.9} parent=5 // pred_check_branch
      %2078 = sbr.rel (%p2076) target = $region47
    $region46: #{mil_forward.9} parent=5 // pred_region
      %s2079 = ssub.s32 %s9, 2
      // Predicated region
      $region48: #{mil_forward.9} parent=46 // pred_check
        %p2080 = pneg %p106
      $region49: #{mil_forward.9} parent=46 // pred_check_branch
        %2082 = sbr.rel (%p2080) target = $region51
      $region50: #{mil_forward.9} parent=46 // pred_region
        %p2083 = scmp.lt.s32.totalorder %s15, 5
        %s2084 = scalar_select %p2083, %s15, 5
        %s2085 = smul.addr %s2084, 48
        %s2086 = smul.addr %s2085, 4
        %s2087 = scalar_lea.vmem %s3, %s2086
      $region51: #{mil_forward.9} parent=46 // pred_fallthru
        _
    $region47: #{mil_forward.9} parent=5 // pred_fallthru
      _
  $region6: #{mil_forward.9} parent=0 // loop_footer
    %s13 = sadd.s32 1, %s9
  $region7: #{mil_forward.9} parent=0 // loop_footer_branch
    %8 = sbr.rel target = $region3
  $region8: #{mil_forward.9} parent=0 // loop_exit
    _

// kernel: mil_forward.11
$region0: #{mil_forward.11}
  #allocation0 [shape = 'u32[]', space=smem, size = 0x4, offset = 0x4, fixed_abs, tag = 'smem constant byte address 0x4 - core index']
  #allocation1 [shape = 'u32[144,128]{1,0:T(1,128)}', space=vmem, size = 0x12000, scoped, tag = 'internal scratch']
  %s0 = inlined_call_operand.vmem [shape: f32[2,3], index: 0, kind: input, shape index: {}]
  %s1 = inlined_call_operand.vmem [shape: f32[2,3], index: 1, kind: input, shape index: {}]
  %s2 = inlined_call_operand.vmem [shape: f32[2,1], index: 2, kind: output, shape index: {}]
  %s3 = sld [smem:[#allocation0]]
  $region18: #{mil_forward.11} parent=0
    _
  %s5 = ssub.s32 1, %s3
  %s6 = scalar_select 0, %s5, %s3
  // Predicated region
  $region2: #{mil_forward.11} parent=0 // pred_check
    _
  $region3: #{mil_forward.11} parent=0 // pred_check_branch
    %8 = sbr.rel (0) target = $region5
  $region4: #{mil_forward.11} parent=0 // pred_region
    _
  $region5: #{mil_forward.11} parent=0 // pred_fallthru
    _
  // Predicated region
  $region6: #{mil_forward.11} parent=0 // pred_check
    _
  $region7: #{mil_forward.11} parent=0 // pred_check_branch
    %10 = sbr.rel (0) target = $region9
  $region8: #{mil_forward.11} parent=0 // pred_region
    _
  $region9: #{mil_forward.11} parent=0 // pred_fallthru
    _
  %v11 = vld [vmem:[%s0] sm:$0x3]
  %v12 = vld [vmem:[%s1] sm:$0x3]
  %vm13 = vcmp.eq.f32.partialorder %v12, 0.0
  %v14 = vsel %vm13, -inf, %v11
  %vm15 = vcmask 17408
  %v16 = vsel %vm15, %v14, -inf
  %17 = vmax.xlane.f32.xlu0 %v16
  %v18 = vpop.xlane.xlu0 %17
  %vm19 = vcmask 1024
  %20 = vst.msk [vmem:[%s2] sm:$0x3] %vm19, %v18
  // Predicated region
  $region10: #{mil_forward.11} parent=0 // pred_check
    _
  $region11: #{mil_forward.11} parent=0 // pred_check_branch
    %22 = sbr.rel (0) target = $region13
  $region12: #{mil_forward.11} parent=0 // pred_region
    _
  $region13: #{mil_forward.11} parent=0 // pred_fallthru
    _
  // Predicated region
  $region14: #{mil_forward.11} parent=0 // pred_check
    _
  $region15: #{mil_forward.11} parent=0 // pred_check_branch
    %24 = sbr.rel (0) target = $region17
  $region16: #{mil_forward.11} parent=0 // pred_region
    _
  $region17: #{mil_forward.11} parent=0 // pred_fallthru
    _

// kernel: mil_forward.10
$region0: #{mil_forward.10}
  #allocation0 [shape = 'u32[]', space=smem, size = 0x4, offset = 0x4, fixed_abs, tag = 'smem constant byte address 0x4 - core index']
  #allocation1 [shape = 'u32[144,128]{1,0:T(1,128)}', space=vmem, size = 0x12000, scoped, tag = 'internal scratch']
  #allocation2 [shape = 'f32[8,512]{1,0:T(8,128)}', space=vmem, size = 0x4000, scoped, tag = 'scratch operand']
  #allocation3 [shape = 'f32[1,1]{1,0:T(1,128)S(1)}', space=vmem, size = 0x200, scoped, tag = 'scoped memory for mil_forward.10']
  %s0 = inlined_call_operand.vmem [shape: bf16[8,9216], index: 0, kind: input, shape index: {}]
  %s1 = inlined_call_operand.vmem [shape: bf16[9216,512], index: 1, kind: input, shape index: {}]
  %s2 = inlined_call_operand.vmem [shape: f32[1,512], index: 2, kind: input, shape index: {}]
  %s3 = inlined_call_operand.vmem [shape: bf16[512,256], index: 3, kind: input, shape index: {}]
  %s4 = inlined_call_operand.vmem [shape: f32[1,256], index: 4, kind: input, shape index: {}]
  %s5 = inlined_call_operand.vmem [shape: bf16[256,32], index: 5, kind: input, shape index: {}]
  %s6 = inlined_call_operand.vmem [shape: f32[1,32], index: 6, kind: input, shape index: {}]
  %s7 = inlined_call_operand.vmem [shape: bf16[1,32], index: 7, kind: input, shape index: {}]
  %s8 = inlined_call_operand.<no memory space> [shape: f32[1,1], index: 8, kind: input, shape index: {}]
  %s9 = inlined_call_operand.vmem [shape: f32[8,1], index: 9, kind: output, shape index: {}]
  %s10 = sld [smem:[#allocation0]]
  $region77: #{mil_forward.10} parent=0
    _
  %s12 = ssub.s32 1, %s10
  %s13 = scalar_select 0, %s12, %s10
  %v14 = vstv %s8
  %15 = vst [vmem:[#allocation3] sm:$0x1] %v14
  loop: start=0, step=1, limit=10
  $region2: #{mil_forward.10} parent=0 // loop_pre_header
    _
  $region3: #{mil_forward.10} parent=0 // loop_header
    %s17 = sphi 0, %s21
    %p18 = scmp.ge.s32.totalorder %s17, 10
    %s27 = sphi 0, %s29
    %s30 = sphi 0, %s27
    %s31 = sphi 0, %s30
    %s47 = sphi 0, %s31
    %s53 = sphi 0, %s55
    %s56 = sphi 0, %s53
    %s57 = sphi 0, %s56
    %s73 = sphi 0, %s57
    %s77 = sphi 0, %s77
    %s79 = sphi 0, %s77
    %s80 = sphi 0, %s79
    %s94 = sphi 0, %s80
    %s98 = sphi 0, %s98
    %s100 = sphi 0, %s98
    %s101 = sphi 0, %s100
    %s115 = sphi 0, %s101
    %s119 = sphi 0, %s119
    %s121 = sphi 0, %s119
    %s122 = sphi 0, %s121
    %s136 = sphi 0, %s122
    %s140 = sphi 0, %s140
    %s142 = sphi 0, %s140
    %s143 = sphi 0, %s142
    %s157 = sphi 0, %s143
    %s161 = sphi 0, %s161
    %s163 = sphi 0, %s161
    %s164 = sphi 0, %s163
    %s178 = sphi 0, %s164
    %s182 = sphi 0, %s182
    %s184 = sphi 0, %s182
    %s185 = sphi 0, %s184
    %s199 = sphi 0, %s185
    %s203 = sphi 0, %s203
    %s205 = sphi 0, %s203
    %s206 = sphi 0, %s205
    %s220 = sphi 0, %s206
    %s224 = sphi 0, %s224
    %s226 = sphi 0, %s224
    %s227 = sphi 0, %s226
    %s241 = sphi 0, %s227
  $region4: #{mil_forward.10} parent=0 // loop_header_branch
    %20 = sbr.rel (%p18) target = $region8
  $region5: #{mil_forward.10} parent=0 // loop_body
    %s22 = ssub.s32 %s17, 1
    %s23 = ssub.s32 %s17, 2
    %s24 = sadd.s32 %s17, 1
    %s25 = ssub.s32 %s17, %s24
    %p26 = scmp.eq.s32.totalorder %s25, 0
    %s28 = sadd.s32 %s27, 1
    %s29 = scalar_select %p26, %s27, %s28
    %p32 = pneg %p26
    %p33 = scmp.eq.s32.totalorder %s17, 7
    %p34 = por %p32, %p33
    %p35 = scmp.ne.s32.totalorder %s27, %s30
    %p36 = scmp.eq.s32.totalorder %s17, 0
    %p37 = por %p35, %p36
    %p38 = scmp.ne.s32.totalorder %s27, %s30
    %p39 = scmp.eq.s32.totalorder %s22, 7
    %p40 = por %p38, %p39
    %p41 = scmp.ne.s32.totalorder %s30, %s31
    %p42 = scmp.eq.s32.totalorder %s22, 0
    %p43 = por %p41, %p42
    %p44 = scmp.ne.s32.totalorder %s30, %s31
    %p45 = scmp.eq.s32.totalorder %s23, 7
    %p46 = por %p44, %p45
    %p48 = scmp.ne.s32.totalorder %s31, %s47
    %p49 = scmp.eq.s32.totalorder %s23, 0
    %p50 = por %p48, %p49
    %s51 = ssub.s32 %s17, %s24
    %p52 = scmp.eq.s32.totalorder %s51, 0
    %s54 = sadd.s32 %s53, 1
    %s55 = scalar_select %p52, %s53, %s54
    %p58 = pneg %p52
    %p59 = scmp.eq.s32.totalorder %s17, 7
    %p60 = por %p58, %p59
    %p61 = scmp.ne.s32.totalorder %s53, %s56
    %p62 = scmp.eq.s32.totalorder %s17, 0
    %p63 = por %p61, %p62
    %p64 = scmp.ne.s32.totalorder %s53, %s56
    %p65 = scmp.eq.s32.totalorder %s22, 7
    %p66 = por %p64, %p65
    %p67 = scmp.ne.s32.totalorder %s56, %s57
    %p68 = scmp.eq.s32.totalorder %s22, 0
    %p69 = por %p67, %p68
    %p70 = scmp.ne.s32.totalorder %s56, %s57
    %p71 = scmp.eq.s32.totalorder %s23, 7
    %p72 = por %p70, %p71
    %p74 = scmp.ne.s32.totalorder %s57, %s73
    %p75 = scmp.eq.s32.totalorder %s23, 0
    %p76 = por %p74, %p75
    %s78 = sadd.s32 %s77, 1
    %p81 = scmp.eq.s32.totalorder %s17, 7
    %p82 = scmp.ne.s32.totalorder %s77, %s79
    %p83 = scmp.eq.s32.totalorder %s17, 0
    %p84 = por %p82, %p83
    %p85 = scmp.ne.s32.totalorder %s77, %s79
    %p86 = scmp.eq.s32.totalorder %s22, 7
    %p87 = por %p85, %p86
    %p88 = scmp.ne.s32.totalorder %s79, %s80
    %p89 = scmp.eq.s32.totalorder %s22, 0
    %p90 = por %p88, %p89
    %p91 = scmp.ne.s32.totalorder %s79, %s80
    %p92 = scmp.eq.s32.totalorder %s23, 7
    %p93 = por %p91, %p92
    %p95 = scmp.ne.s32.totalorder %s80, %s94
    %p96 = scmp.eq.s32.totalorder %s23, 0
    %p97 = por %p95, %p96
    %s99 = sadd.s32 %s98, 1
    %p102 = scmp.eq.s32.totalorder %s17, 7
    %p103 = scmp.ne.s32.totalorder %s98, %s100
    %p104 = scmp.eq.s32.totalorder %s17, 0
    %p105 = por %p103, %p104
    %p106 = scmp.ne.s32.totalorder %s98, %s100
    %p107 = scmp.eq.s32.totalorder %s22, 7
    %p108 = por %p106, %p107
    %p109 = scmp.ne.s32.totalorder %s100, %s101
    %p110 = scmp.eq.s32.totalorder %s22, 0
    %p111 = por %p109, %p110
    %p112 = scmp.ne.s32.totalorder %s100, %s101
    %p113 = scmp.eq.s32.totalorder %s23, 7
    %p114 = por %p112, %p113
    %p116 = scmp.ne.s32.totalorder %s101, %s115
    %p117 = scmp.eq.s32.totalorder %s23, 0
    %p118 = por %p116, %p117
    %s120 = sadd.s32 %s119, 1
    %p123 = scmp.eq.s32.totalorder %s17, 7
    %p124 = scmp.ne.s32.totalorder %s119, %s121
    %p125 = scmp.eq.s32.totalorder %s17, 0
    %p126 = por %p124, %p125
    %p127 = scmp.ne.s32.totalorder %s119, %s121
    %p128 = scmp.eq.s32.totalorder %s22, 7
    %p129 = por %p127, %p128
    %p130 = scmp.ne.s32.totalorder %s121, %s122
    %p131 = scmp.eq.s32.totalorder %s22, 0
    %p132 = por %p130, %p131
    %p133 = scmp.ne.s32.totalorder %s121, %s122
    %p134 = scmp.eq.s32.totalorder %s23, 7
    %p135 = por %p133, %p134
    %p137 = scmp.ne.s32.totalorder %s122, %s136
    %p138 = scmp.eq.s32.totalorder %s23, 0
    %p139 = por %p137, %p138
    %s141 = sadd.s32 %s140, 1
    %p144 = scmp.eq.s32.totalorder %s17, 7
    %p145 = scmp.ne.s32.totalorder %s140, %s142
    %p146 = scmp.eq.s32.totalorder %s17, 0
    %p147 = por %p145, %p146
    %p148 = scmp.ne.s32.totalorder %s140, %s142
    %p149 = scmp.eq.s32.totalorder %s22, 7
    %p150 = por %p148, %p149
    %p151 = scmp.ne.s32.totalorder %s142, %s143
    %p152 = scmp.eq.s32.totalorder %s22, 0
    %p153 = por %p151, %p152
    %p154 = scmp.ne.s32.totalorder %s142, %s143
    %p155 = scmp.eq.s32.totalorder %s23, 7
    %p156 = por %p154, %p155
    %p158 = scmp.ne.s32.totalorder %s143, %s157
    %p159 = scmp.eq.s32.totalorder %s23, 0
    %p160 = por %p158, %p159
    %s162 = sadd.s32 %s161, 1
    %p165 = scmp.eq.s32.totalorder %s17, 7
    %p166 = scmp.ne.s32.totalorder %s161, %s163
    %p167 = scmp.eq.s32.totalorder %s17, 0
    %p168 = por %p166, %p167
    %p169 = scmp.ne.s32.totalorder %s161, %s163
    %p170 = scmp.eq.s32.totalorder %s22, 7
    %p171 = por %p169, %p170
    %p172 = scmp.ne.s32.totalorder %s163, %s164
    %p173 = scmp.eq.s32.totalorder %s22, 0
    %p174 = por %p172, %p173
    %p175 = scmp.ne.s32.totalorder %s163, %s164
    %p176 = scmp.eq.s32.totalorder %s23, 7
    %p177 = por %p175, %p176
    %p179 = scmp.ne.s32.totalorder %s164, %s178
    %p180 = scmp.eq.s32.totalorder %s23, 0
    %p181 = por %p179, %p180
    %s183 = sadd.s32 %s182, 1
    %p186 = scmp.eq.s32.totalorder %s17, 7
    %p187 = scmp.ne.s32.totalorder %s182, %s184
    %p188 = scmp.eq.s32.totalorder %s17, 0
    %p189 = por %p187, %p188
    %p190 = scmp.ne.s32.totalorder %s182, %s184
    %p191 = scmp.eq.s32.totalorder %s22, 7
    %p192 = por %p190, %p191
    %p193 = scmp.ne.s32.totalorder %s184, %s185
    %p194 = scmp.eq.s32.totalorder %s22, 0
    %p195 = por %p193, %p194
    %p196 = scmp.ne.s32.totalorder %s184, %s185
    %p197 = scmp.eq.s32.totalorder %s23, 7
    %p198 = por %p196, %p197
    %p200 = scmp.ne.s32.totalorder %s185, %s199
    %p201 = scmp.eq.s32.totalorder %s23, 0
    %p202 = por %p200, %p201
    %s204 = sadd.s32 %s203, 1
    %p207 = scmp.eq.s32.totalorder %s17, 7
    %p208 = scmp.ne.s32.totalorder %s203, %s205
    %p209 = scmp.eq.s32.totalorder %s17, 0
    %p210 = por %p208, %p209
    %p211 = scmp.ne.s32.totalorder %s203, %s205
    %p212 = scmp.eq.s32.totalorder %s22, 7
    %p213 = por %p211, %p212
    %p214 = scmp.ne.s32.totalorder %s205, %s206
    %p215 = scmp.eq.s32.totalorder %s22, 0
    %p216 = por %p214, %p215
    %p217 = scmp.ne.s32.totalorder %s205, %s206
    %p218 = scmp.eq.s32.totalorder %s23, 7
    %p219 = por %p217, %p218
    %p221 = scmp.ne.s32.totalorder %s206, %s220
    %p222 = scmp.eq.s32.totalorder %s23, 0
    %p223 = por %p221, %p222
    %s225 = sadd.s32 %s224, 1
    %p228 = scmp.eq.s32.totalorder %s17, 7
    %p229 = scmp.ne.s32.totalorder %s224, %s226
    %p230 = scmp.eq.s32.totalorder %s17, 0
    %p231 = por %p229, %p230
    %p232 = scmp.ne.s32.totalorder %s224, %s226
    %p233 = scmp.eq.s32.totalorder %s22, 7
    %p234 = por %p232, %p233
    %p235 = scmp.ne.s32.totalorder %s226, %s227
    %p236 = scmp.eq.s32.totalorder %s22, 0
    %p237 = por %p235, %p236
    %p238 = scmp.ne.s32.totalorder %s226, %s227
    %p239 = scmp.eq.s32.totalorder %s23, 7
    %p240 = por %p238, %p239
    %p242 = scmp.ne.s32.totalorder %s227, %s241
    %p243 = scmp.eq.s32.totalorder %s23, 0
    %p244 = por %p242, %p243
    %p245 = scmp.le.s32.totalorder 1, %s17
    %p246 = scmp.lt.s32.totalorder %s17, 9
    %p247 = pnand %p245, %p246
    %p248 = pneg %p247
    // Predicated region
    $region9: #{mil_forward.10} parent=5 // pred_check
      _
    $region10: #{mil_forward.10} parent=5 // pred_check_branch
      %250 = sbr.rel (%p247) target = $region12
    $region11: #{mil_forward.10} parent=5 // pred_region
      %s251 = ssub.s32 %s17, 1
      // Predicated region
      $region13: #{mil_forward.10} parent=11 // pred_check
        %p252 = pneg %p90
      $region14: #{mil_forward.10} parent=11 // pred_check_branch
        %254 = sbr.rel (%p252) target = $region16
      $region15: #{mil_forward.10} parent=11 // pred_region
        _
      $region16: #{mil_forward.10} parent=11 // pred_fallthru
        _
      // Predicated region
      $region17: #{mil_forward.10} parent=11 // pred_check
        %p255 = pneg %p111
      $region18: #{mil_forward.10} parent=11 // pred_check_branch
        %257 = sbr.rel (%p255) target = $region20
      $region19: #{mil_forward.10} parent=11 // pred_region
        _
      $region20: #{mil_forward.10} parent=11 // pred_fallthru
        _
      // Predicated region
      $region21: #{mil_forward.10} parent=11 // pred_check
        %p258 = pneg %p132
      $region22: #{mil_forward.10} parent=11 // pred_check_branch
        %260 = sbr.rel (%p258) target = $region24
      $region23: #{mil_forward.10} parent=11 // pred_region
        _
      $region24: #{mil_forward.10} parent=11 // pred_fallthru
        _
      // Predicated region
      $region25: #{mil_forward.10} parent=11 // pred_check
        %p261 = pneg %p153
      $region26: #{mil_forward.10} parent=11 // pred_check_branch
        %263 = sbr.rel (%p261) target = $region28
      $region27: #{mil_forward.10} parent=11 // pred_region
        _
      $region28: #{mil_forward.10} parent=11 // pred_fallthru
        _
      // Predicated region
      $region29: #{mil_forward.10} parent=11 // pred_check
        %p264 = pneg %p174
      $region30: #{mil_forward.10} parent=11 // pred_check_branch
        %266 = sbr.rel (%p264) target = $region32
      $region31: #{mil_forward.10} parent=11 // pred_region
        _
      $region32: #{mil_forward.10} parent=11 // pred_fallthru
        _
      // Predicated region
      $region33: #{mil_forward.10} parent=11 // pred_check
        %p267 = pneg %p195
      $region34: #{mil_forward.10} parent=11 // pred_check_branch
        %269 = sbr.rel (%p267) target = $region36
      $region35: #{mil_forward.10} parent=11 // pred_region
        _
      $region36: #{mil_forward.10} parent=11 // pred_fallthru
        _
      // Predicated region
      $region37: #{mil_forward.10} parent=11 // pred_check
        %p270 = pneg %p216
      $region38: #{mil_forward.10} parent=11 // pred_check_branch
        %272 = sbr.rel (%p270) target = $region40
      $region39: #{mil_forward.10} parent=11 // pred_region
        _
      $region40: #{mil_forward.10} parent=11 // pred_fallthru
        _
    $region12: #{mil_forward.10} parent=5 // pred_fallthru
      _
    %p273 = scmp.lt.s32.totalorder %s17, 8
    // Predicated region
    $region41: #{mil_forward.10} parent=5 // pred_check
      %p274 = pneg %p273
    $region42: #{mil_forward.10} parent=5 // pred_check_branch
      %276 = sbr.rel (%p274) target = $region44
    $region43: #{mil_forward.10} parent=5 // pred_region
      // Predicated region
      $region45: #{mil_forward.10} parent=43 // pred_check
        %p277 = pneg %p37
      $region46: #{mil_forward.10} parent=43 // pred_check_branch
        %279 = sbr.rel (%p277) target = $region48
      $region47: #{mil_forward.10} parent=43 // pred_region
        %s280 = smul.u32 9, %s17
        %p281 = scmp.lt.s32.totalorder %s280, 71
        %s282 = scalar_select %p281, %s280, 71
        %s283 = smul.addr %s282, 4
        %s284 = scalar_lea.vmem %s0, %s283
        %s285 = smul.u32 9, %s17
      $region48: #{mil_forward.10} parent=43 // pred_fallthru
        _
      // Predicated region
      $region49: #{mil_forward.10} parent=43 // pred_check
        %p286 = pneg %p63
      $region50: #{mil_forward.10} parent=43 // pred_check_branch
        %288 = sbr.rel (%p286) target = $region52
      $region51: #{mil_forward.10} parent=43 // pred_region
        %s289 = smul.u32 144, %s17
        %p290 = scmp.lt.s32.totalorder %s289, 1151
        %s291 = scalar_select %p290, %s289, 1151
        %s292 = smul.addr %s291, 4
        %s293 = smul.addr %s292, 4
        %s294 = scalar_lea.vmem %s1, %s293
        %s295 = smul.u32 144, %s17
      $region52: #{mil_forward.10} parent=43 // pred_fallthru
        _
    $region44: #{mil_forward.10} parent=5 // pred_fallthru
      _
    %p296 = scmp.le.s32.totalorder 1, %s17
    %p297 = scmp.lt.s32.totalorder %s17, 9
    %p298 = pnand %p296, %p297
    %p299 = pneg %p298
    // Predicated region
    $region53: #{mil_forward.10} parent=5 // pred_check
      _
    $region54: #{mil_forward.10} parent=5 // pred_check_branch
      %301 = sbr.rel (%p298) target = $region56
    $region55: #{mil_forward.10} parent=5 // pred_region
      %s302 = ssub.s32 %s17, 1
      %s303 = smul.u32 9, %s22
      %p304 = scmp.lt.s32.totalorder %s303, 71
      %s305 = scalar_select %p304, %s303, 71
      %s306 = smul.addr %s305, 4
      %s307 = scalar_lea.vmem %s0, %s306
      %p308 = pneg %p43
      %p309 = pneg %p40
      %s310 = smul.u32 144, %s22
      %p311 = scmp.lt.s32.totalorder %s310, 1151
      %s312 = scalar_select %p311, %s310, 1151
      %s313 = smul.addr %s312, 4
      %s314 = smul.addr %s313, 4
      %s315 = scalar_lea.vmem %s1, %s314
      %p316 = pneg %p69
      %p317 = pneg %p66
      %p318 = pneg %p90
      %p319 = pneg %p87
      %p320 = pneg %p111
      %p321 = pneg %p108
      %p322 = pneg %p132
      %p323 = pneg %p129
      %p324 = pneg %p153
      %p325 = pneg %p150
      %p326 = pneg %p174
      %p327 = pneg %p171
      %p328 = pneg %p195
      %p329 = pneg %p192
      %p330 = pneg %p216
      %p331 = pneg %p213
      %p332 = pneg %p237
      %p333 = pneg %p234
      %s334 = smul.u32 9, %s22
      %p335 = scmp.lt.s32.totalorder %s334, 71
      %s336 = scalar_select %p335, %s334, 71
      %s337 = smul.addr %s336, 4
      %s338 = scalar_lea.vmem %s0, %s337
      %s339 = smul.u32 9, %s22
      %s340 = smul.u32 144, %s22
      %p341 = scmp.lt.s32.totalorder %s340, 1151
      %s342 = scalar_select %p341, %s340, 1151
      %s343 = smul.addr %s342, 4
      %s344 = smul.addr %s343, 4
      %s345 = scalar_lea.vmem %s1, %s344
      %s346 = smul.u32 144, %s22
      %p348 = scmp.eq.s32.totalorder %s22, 0
      // Predicated region
      $region57: #{mil_forward.10} parent=55 // pred_check
        %p349 = pneg %p348
      $region58: #{mil_forward.10} parent=55 // pred_check_branch
        %351 = sbr.rel (%p349) target = $region60
      $region59: #{mil_forward.10} parent=55 // pred_region
        %352 = vst [vmem:[#allocation2] sm:$0xff] 0.0
        %353 = vst [vmem:[#allocation2 + $0x8] sm:$0xff] 0.0
        %354 = vst [vmem:[#allocation2 + $0x10] sm:$0xff] 0.0
        %355 = vst [vmem:[#allocation2 + $0x18] sm:$0xff] 0.0
      $region60: #{mil_forward.10} parent=55 // pred_fallthru
        _
      %v356 = vld [vmem:[#allocation2] sm:$0xff]
      %v357 = vld [vmem:[#allocation2 + $0x8] sm:$0xff]
      %v358 = vld [vmem:[#allocation2 + $0x10] sm:$0xff]
      %v359 = vld [vmem:[#allocation2 + $0x18] sm:$0xff]
      %v360 = vld [vmem:[%s338] sm:$0xff]
      %v361 = vld [vmem:[%s338 + $0x8] sm:$0xff]
      %v362 = vld [vmem:[%s338 + $0x10] sm:$0xff]
      %v363 = vld [vmem:[%s338 + $0x18] sm:$0xff]
      %v364 = vld [vmem:[%s338 + $0x20] sm:$0xf]
      %v365 = vld [vmem:[%s345] sm:$0xff]
      %v366 = vld [vmem:[%s345 + $0x8] sm:$0xff]
      %v367 = vld [vmem:[%s345 + $0x10] sm:$0xff]
      %v368 = vld [vmem:[%s345 + $0x18] sm:$0xff]
      %v369 = vld [vmem:[%s345 + $0x20] sm:$0xff]
      %v370 = vld [vmem:[%s345 + $0x28] sm:$0xff]
      %v371 = vld [vmem:[%s345 + $0x30] sm:$0xff]
      %v372 = vld [vmem:[%s345 + $0x38] sm:$0xff]
      %v373 = vld [vmem:[%s345 + $0x40] sm:$0xff]
      %v374 = vld [vmem:[%s345 + $0x48] sm:$0xff]
      %v375 = vld [vmem:[%s345 + $0x50] sm:$0xff]
      %v376 = vld [vmem:[%s345 + $0x58] sm:$0xff]
      %v377 = vld [vmem:[%s345 + $0x60] sm:$0xff]
      %v378 = vld [vmem:[%s345 + $0x68] sm:$0xff]
      %v379 = vld [vmem:[%s345 + $0x70] sm:$0xff]
      %v380 = vld [vmem:[%s345 + $0x78] sm:$0xff]
      %v381 = vld [vmem:[%s345 + $0x80] sm:$0xff]
      %v382 = vld [vmem:[%s345 + $0x88] sm:$0xff]
      %v383 = vld [vmem:[%s345 + $0x90] sm:$0xff]
      %v384 = vld [vmem:[%s345 + $0x98] sm:$0xff]
      %v385 = vld [vmem:[%s345 + $0xa0] sm:$0xff]
      %v386 = vld [vmem:[%s345 + $0xa8] sm:$0xff]
      %v387 = vld [vmem:[%s345 + $0xb0] sm:$0xff]
      %v388 = vld [vmem:[%s345 + $0xb8] sm:$0xff]
      %v389 = vld [vmem:[%s345 + $0xc0] sm:$0xff]
      %v390 = vld [vmem:[%s345 + $0xc8] sm:$0xff]
      %v391 = vld [vmem:[%s345 + $0xd0] sm:$0xff]
      %v392 = vld [vmem:[%s345 + $0xd8] sm:$0xff]
      %v393 = vld [vmem:[%s345 + $0xe0] sm:$0xff]
      %v394 = vld [vmem:[%s345 + $0xe8] sm:$0xff]
      %v395 = vld [vmem:[%s345 + $0xf0] sm:$0xff]
      %v396 = vld [vmem:[%s345 + $0xf8] sm:$0xff]
      %v397 = vld [vmem:[%s345 + $0x100] sm:$0xff]
      %v398 = vld [vmem:[%s345 + $0x108] sm:$0xff]
      %v399 = vld [vmem:[%s345 + $0x110] sm:$0xff]
      %v400 = vld [vmem:[%s345 + $0x118] sm:$0xff]
      %v401 = vld [vmem:[%s345 + $0x120] sm:$0xff]
      %v402 = vld [vmem:[%s345 + $0x128] sm:$0xff]
      %v403 = vld [vmem:[%s345 + $0x130] sm:$0xff]
      %v404 = vld [vmem:[%s345 + $0x138] sm:$0xff]
      %v405 = vld [vmem:[%s345 + $0x140] sm:$0xff]
      %v406 = vld [vmem:[%s345 + $0x148] sm:$0xff]
      %v407 = vld [vmem:[%s345 + $0x150] sm:$0xff]
      %v408 = vld [vmem:[%s345 + $0x158] sm:$0xff]
      %v409 = vld [vmem:[%s345 + $0x160] sm:$0xff]
      %v410 = vld [vmem:[%s345 + $0x168] sm:$0xff]
      %v411 = vld [vmem:[%s345 + $0x170] sm:$0xff]
      %v412 = vld [vmem:[%s345 + $0x178] sm:$0xff]
      %v413 = vld [vmem:[%s345 + $0x180] sm:$0xff]
      %v414 = vld [vmem:[%s345 + $0x188] sm:$0xff]
      %v415 = vld [vmem:[%s345 + $0x190] sm:$0xff]
      %v416 = vld [vmem:[%s345 + $0x198] sm:$0xff]
      %v417 = vld [vmem:[%s345 + $0x1a0] sm:$0xff]
      %v418 = vld [vmem:[%s345 + $0x1a8] sm:$0xff]
      %v419 = vld [vmem:[%s345 + $0x1b0] sm:$0xff]
      %v420 = vld [vmem:[%s345 + $0x1b8] sm:$0xff]
      %v421 = vld [vmem:[%s345 + $0x1c0] sm:$0xff]
      %v422 = vld [vmem:[%s345 + $0x1c8] sm:$0xff]
      %v423 = vld [vmem:[%s345 + $0x1d0] sm:$0xff]
      %v424 = vld [vmem:[%s345 + $0x1d8] sm:$0xff]
      %v425 = vld [vmem:[%s345 + $0x1e0] sm:$0xff]
      %v426 = vld [vmem:[%s345 + $0x1e8] sm:$0xff]
      %v427 = vld [vmem:[%s345 + $0x1f0] sm:$0xff]
      %v428 = vld [vmem:[%s345 + $0x1f8] sm:$0xff]
      %v429 = vld [vmem:[%s345 + $0x200] sm:$0xff]
      %v430 = vld [vmem:[%s345 + $0x208] sm:$0xff]
      %v431 = vld [vmem:[%s345 + $0x210] sm:$0xff]
      %v432 = vld [vmem:[%s345 + $0x218] sm:$0xff]
      %v433 = vld [vmem:[%s345 + $0x220] sm:$0xff]
      %v434 = vld [vmem:[%s345 + $0x228] sm:$0xff]
      %v435 = vld [vmem:[%s345 + $0x230] sm:$0xff]
      %v436 = vld [vmem:[%s345 + $0x238] sm:$0xff]
      %v437 = vld [vmem:[%s345 + $0x240] sm:$0xff]
      %v438 = vld [vmem:[%s345 + $0x248] sm:$0xff]
      %v439 = vld [vmem:[%s345 + $0x250] sm:$0xff]
      %v440 = vld [vmem:[%s345 + $0x258] sm:$0xff]
      %v441 = vld [vmem:[%s345 + $0x260] sm:$0xff]
      %v442 = vld [vmem:[%s345 + $0x268] sm:$0xff]
      %v443 = vld [vmem:[%s345 + $0x270] sm:$0xff]
      %v444 = vld [vmem:[%s345 + $0x278] sm:$0xff]
      %v445 = vld [vmem:[%s345 + $0x280] sm:$0xff]
      %v446 = vld [vmem:[%s345 + $0x288] sm:$0xff]
      %v447 = vld [vmem:[%s345 + $0x290] sm:$0xff]
      %v448 = vld [vmem:[%s345 + $0x298] sm:$0xff]
      %v449 = vld [vmem:[%s345 + $0x2a0] sm:$0xff]
      %v450 = vld [vmem:[%s345 + $0x2a8] sm:$0xff]
      %v451 = vld [vmem:[%s345 + $0x2b0] sm:$0xff]
      %v452 = vld [vmem:[%s345 + $0x2b8] sm:$0xff]
      %v453 = vld [vmem:[%s345 + $0x2c0] sm:$0xff]
      %v454 = vld [vmem:[%s345 + $0x2c8] sm:$0xff]
      %v455 = vld [vmem:[%s345 + $0x2d0] sm:$0xff]
      %v456 = vld [vmem:[%s345 + $0x2d8] sm:$0xff]
      %v457 = vld [vmem:[%s345 + $0x2e0] sm:$0xff]
      %v458 = vld [vmem:[%s345 + $0x2e8] sm:$0xff]
      %v459 = vld [vmem:[%s345 + $0x2f0] sm:$0xff]
      %v460 = vld [vmem:[%s345 + $0x2f8] sm:$0xff]
      %v461 = vld [vmem:[%s345 + $0x300] sm:$0xff]
      %v462 = vld [vmem:[%s345 + $0x308] sm:$0xff]
      %v463 = vld [vmem:[%s345 + $0x310] sm:$0xff]
      %v464 = vld [vmem:[%s345 + $0x318] sm:$0xff]
      %v465 = vld [vmem:[%s345 + $0x320] sm:$0xff]
      %v466 = vld [vmem:[%s345 + $0x328] sm:$0xff]
      %v467 = vld [vmem:[%s345 + $0x330] sm:$0xff]
      %v468 = vld [vmem:[%s345 + $0x338] sm:$0xff]
      %v469 = vld [vmem:[%s345 + $0x340] sm:$0xff]
      %v470 = vld [vmem:[%s345 + $0x348] sm:$0xff]
      %v471 = vld [vmem:[%s345 + $0x350] sm:$0xff]
      %v472 = vld [vmem:[%s345 + $0x358] sm:$0xff]
      %v473 = vld [vmem:[%s345 + $0x360] sm:$0xff]
      %v474 = vld [vmem:[%s345 + $0x368] sm:$0xff]
      %v475 = vld [vmem:[%s345 + $0x370] sm:$0xff]
      %v476 = vld [vmem:[%s345 + $0x378] sm:$0xff]
      %v477 = vld [vmem:[%s345 + $0x380] sm:$0xff]
      %v478 = vld [vmem:[%s345 + $0x388] sm:$0xff]
      %v479 = vld [vmem:[%s345 + $0x390] sm:$0xff]
      %v480 = vld [vmem:[%s345 + $0x398] sm:$0xff]
      %v481 = vld [vmem:[%s345 + $0x3a0] sm:$0xff]
      %v482 = vld [vmem:[%s345 + $0x3a8] sm:$0xff]
      %v483 = vld [vmem:[%s345 + $0x3b0] sm:$0xff]
      %v484 = vld [vmem:[%s345 + $0x3b8] sm:$0xff]
      %v485 = vld [vmem:[%s345 + $0x3c0] sm:$0xff]
      %v486 = vld [vmem:[%s345 + $0x3c8] sm:$0xff]
      %v487 = vld [vmem:[%s345 + $0x3d0] sm:$0xff]
      %v488 = vld [vmem:[%s345 + $0x3d8] sm:$0xff]
      %v489 = vld [vmem:[%s345 + $0x3e0] sm:$0xff]
      %v490 = vld [vmem:[%s345 + $0x3e8] sm:$0xff]
      %v491 = vld [vmem:[%s345 + $0x3f0] sm:$0xff]
      %v492 = vld [vmem:[%s345 + $0x3f8] sm:$0xff]
      %v493 = vld [vmem:[%s345 + $0x400] sm:$0xff]
      %v494 = vld [vmem:[%s345 + $0x408] sm:$0xff]
      %v495 = vld [vmem:[%s345 + $0x410] sm:$0xff]
      %v496 = vld [vmem:[%s345 + $0x418] sm:$0xff]
      %v497 = vld [vmem:[%s345 + $0x420] sm:$0xff]
      %v498 = vld [vmem:[%s345 + $0x428] sm:$0xff]
      %v499 = vld [vmem:[%s345 + $0x430] sm:$0xff]
      %v500 = vld [vmem:[%s345 + $0x438] sm:$0xff]
      %v501 = vld [vmem:[%s345 + $0x440] sm:$0xff]
      %v502 = vld [vmem:[%s345 + $0x448] sm:$0xff]
      %v503 = vld [vmem:[%s345 + $0x450] sm:$0xff]
      %v504 = vld [vmem:[%s345 + $0x458] sm:$0xff]
      %v505 = vld [vmem:[%s345 + $0x460] sm:$0xff]
      %v506 = vld [vmem:[%s345 + $0x468] sm:$0xff]
      %v507 = vld [vmem:[%s345 + $0x470] sm:$0xff]
      %v508 = vld [vmem:[%s345 + $0x478] sm:$0xff]
      %v509 = vld [vmem:[%s345 + $0x480] sm:$0xff]
      %v510 = vld [vmem:[%s345 + $0x488] sm:$0xff]
      %v511 = vld [vmem:[%s345 + $0x490] sm:$0xff]
      %v512 = vld [vmem:[%s345 + $0x498] sm:$0xff]
      %v513 = vld [vmem:[%s345 + $0x4a0] sm:$0xff]
      %v514 = vld [vmem:[%s345 + $0x4a8] sm:$0xff]
      %v515 = vld [vmem:[%s345 + $0x4b0] sm:$0xff]
      %v516 = vld [vmem:[%s345 + $0x4b8] sm:$0xff]
      %v517 = vld [vmem:[%s345 + $0x4c0] sm:$0xff]
      %v518 = vld [vmem:[%s345 + $0x4c8] sm:$0xff]
      %v519 = vld [vmem:[%s345 + $0x4d0] sm:$0xff]
      %v520 = vld [vmem:[%s345 + $0x4d8] sm:$0xff]
      %v521 = vld [vmem:[%s345 + $0x4e0] sm:$0xff]
      %v522 = vld [vmem:[%s345 + $0x4e8] sm:$0xff]
      %v523 = vld [vmem:[%s345 + $0x4f0] sm:$0xff]
      %v524 = vld [vmem:[%s345 + $0x4f8] sm:$0xff]
      %v525 = vld [vmem:[%s345 + $0x500] sm:$0xff]
      %v526 = vld [vmem:[%s345 + $0x508] sm:$0xff]
      %v527 = vld [vmem:[%s345 + $0x510] sm:$0xff]
      %v528 = vld [vmem:[%s345 + $0x518] sm:$0xff]
      %v529 = vld [vmem:[%s345 + $0x520] sm:$0xff]
      %v530 = vld [vmem:[%s345 + $0x528] sm:$0xff]
      %v531 = vld [vmem:[%s345 + $0x530] sm:$0xff]
      %v532 = vld [vmem:[%s345 + $0x538] sm:$0xff]
      %v533 = vld [vmem:[%s345 + $0x540] sm:$0xff]
      %v534 = vld [vmem:[%s345 + $0x548] sm:$0xff]
      %v535 = vld [vmem:[%s345 + $0x550] sm:$0xff]
      %v536 = vld [vmem:[%s345 + $0x558] sm:$0xff]
      %v537 = vld [vmem:[%s345 + $0x560] sm:$0xff]
      %v538 = vld [vmem:[%s345 + $0x568] sm:$0xff]
      %v539 = vld [vmem:[%s345 + $0x570] sm:$0xff]
      %v540 = vld [vmem:[%s345 + $0x578] sm:$0xff]
      %v541 = vld [vmem:[%s345 + $0x580] sm:$0xff]
      %v542 = vld [vmem:[%s345 + $0x588] sm:$0xff]
      %v543 = vld [vmem:[%s345 + $0x590] sm:$0xff]
      %v544 = vld [vmem:[%s345 + $0x598] sm:$0xff]
      %v545 = vld [vmem:[%s345 + $0x5a0] sm:$0xff]
      %v546 = vld [vmem:[%s345 + $0x5a8] sm:$0xff]
      %v547 = vld [vmem:[%s345 + $0x5b0] sm:$0xff]
      %v548 = vld [vmem:[%s345 + $0x5b8] sm:$0xff]
      %v549 = vld [vmem:[%s345 + $0x5c0] sm:$0xff]
      %v550 = vld [vmem:[%s345 + $0x5c8] sm:$0xff]
      %v551 = vld [vmem:[%s345 + $0x5d0] sm:$0xff]
      %v552 = vld [vmem:[%s345 + $0x5d8] sm:$0xff]
      %v553 = vld [vmem:[%s345 + $0x5e0] sm:$0xff]
      %v554 = vld [vmem:[%s345 + $0x5e8] sm:$0xff]
      %v555 = vld [vmem:[%s345 + $0x5f0] sm:$0xff]
      %v556 = vld [vmem:[%s345 + $0x5f8] sm:$0xff]
      %v557 = vld [vmem:[%s345 + $0x600] sm:$0xff]
      %v558 = vld [vmem:[%s345 + $0x608] sm:$0xff]
      %v559 = vld [vmem:[%s345 + $0x610] sm:$0xff]
      %v560 = vld [vmem:[%s345 + $0x618] sm:$0xff]
      %v561 = vld [vmem:[%s345 + $0x620] sm:$0xff]
      %v562 = vld [vmem:[%s345 + $0x628] sm:$0xff]
      %v563 = vld [vmem:[%s345 + $0x630] sm:$0xff]
      %v564 = vld [vmem:[%s345 + $0x638] sm:$0xff]
      %v565 = vld [vmem:[%s345 + $0x640] sm:$0xff]
      %v566 = vld [vmem:[%s345 + $0x648] sm:$0xff]
      %v567 = vld [vmem:[%s345 + $0x650] sm:$0xff]
      %v568 = vld [vmem:[%s345 + $0x658] sm:$0xff]
      %v569 = vld [vmem:[%s345 + $0x660] sm:$0xff]
      %v570 = vld [vmem:[%s345 + $0x668] sm:$0xff]
      %v571 = vld [vmem:[%s345 + $0x670] sm:$0xff]
      %v572 = vld [vmem:[%s345 + $0x678] sm:$0xff]
      %v573 = vld [vmem:[%s345 + $0x680] sm:$0xff]
      %v574 = vld [vmem:[%s345 + $0x688] sm:$0xff]
      %v575 = vld [vmem:[%s345 + $0x690] sm:$0xff]
      %v576 = vld [vmem:[%s345 + $0x698] sm:$0xff]
      %v577 = vld [vmem:[%s345 + $0x6a0] sm:$0xff]
      %v578 = vld [vmem:[%s345 + $0x6a8] sm:$0xff]
      %v579 = vld [vmem:[%s345 + $0x6b0] sm:$0xff]
      %v580 = vld [vmem:[%s345 + $0x6b8] sm:$0xff]
      %v581 = vld [vmem:[%s345 + $0x6c0] sm:$0xff]
      %v582 = vld [vmem:[%s345 + $0x6c8] sm:$0xff]
      %v583 = vld [vmem:[%s345 + $0x6d0] sm:$0xff]
      %v584 = vld [vmem:[%s345 + $0x6d8] sm:$0xff]
      %v585 = vld [vmem:[%s345 + $0x6e0] sm:$0xff]
      %v586 = vld [vmem:[%s345 + $0x6e8] sm:$0xff]
      %v587 = vld [vmem:[%s345 + $0x6f0] sm:$0xff]
      %v588 = vld [vmem:[%s345 + $0x6f8] sm:$0xff]
      %v589 = vld [vmem:[%s345 + $0x700] sm:$0xff]
      %v590 = vld [vmem:[%s345 + $0x708] sm:$0xff]
      %v591 = vld [vmem:[%s345 + $0x710] sm:$0xff]
      %v592 = vld [vmem:[%s345 + $0x718] sm:$0xff]
      %v593 = vld [vmem:[%s345 + $0x720] sm:$0xff]
      %v594 = vld [vmem:[%s345 + $0x728] sm:$0xff]
      %v595 = vld [vmem:[%s345 + $0x730] sm:$0xff]
      %v596 = vld [vmem:[%s345 + $0x738] sm:$0xff]
      %v597 = vld [vmem:[%s345 + $0x740] sm:$0xff]
      %v598 = vld [vmem:[%s345 + $0x748] sm:$0xff]
      %v599 = vld [vmem:[%s345 + $0x750] sm:$0xff]
      %v600 = vld [vmem:[%s345 + $0x758] sm:$0xff]
      %v601 = vld [vmem:[%s345 + $0x760] sm:$0xff]
      %v602 = vld [vmem:[%s345 + $0x768] sm:$0xff]
      %v603 = vld [vmem:[%s345 + $0x770] sm:$0xff]
      %v604 = vld [vmem:[%s345 + $0x778] sm:$0xff]
      %v605 = vld [vmem:[%s345 + $0x780] sm:$0xff]
      %v606 = vld [vmem:[%s345 + $0x788] sm:$0xff]
      %v607 = vld [vmem:[%s345 + $0x790] sm:$0xff]
      %v608 = vld [vmem:[%s345 + $0x798] sm:$0xff]
      %v609 = vld [vmem:[%s345 + $0x7a0] sm:$0xff]
      %v610 = vld [vmem:[%s345 + $0x7a8] sm:$0xff]
      %v611 = vld [vmem:[%s345 + $0x7b0] sm:$0xff]
      %v612 = vld [vmem:[%s345 + $0x7b8] sm:$0xff]
      %v613 = vld [vmem:[%s345 + $0x7c0] sm:$0xff]
      %v614 = vld [vmem:[%s345 + $0x7c8] sm:$0xff]
      %v615 = vld [vmem:[%s345 + $0x7d0] sm:$0xff]
      %v616 = vld [vmem:[%s345 + $0x7d8] sm:$0xff]
      %v617 = vld [vmem:[%s345 + $0x7e0] sm:$0xff]
      %v618 = vld [vmem:[%s345 + $0x7e8] sm:$0xff]
      %v619 = vld [vmem:[%s345 + $0x7f0] sm:$0xff]
      %v620 = vld [vmem:[%s345 + $0x7f8] sm:$0xff]
      %v621 = vld [vmem:[%s345 + $0x800] sm:$0xff]
      %v622 = vld [vmem:[%s345 + $0x808] sm:$0xff]
      %v623 = vld [vmem:[%s345 + $0x810] sm:$0xff]
      %v624 = vld [vmem:[%s345 + $0x818] sm:$0xff]
      %v625 = vld [vmem:[%s345 + $0x820] sm:$0xff]
      %v626 = vld [vmem:[%s345 + $0x828] sm:$0xff]
      %v627 = vld [vmem:[%s345 + $0x830] sm:$0xff]
      %v628 = vld [vmem:[%s345 + $0x838] sm:$0xff]
      %v629 = vld [vmem:[%s345 + $0x840] sm:$0xff]
      %v630 = vld [vmem:[%s345 + $0x848] sm:$0xff]
      %v631 = vld [vmem:[%s345 + $0x850] sm:$0xff]
      %v632 = vld [vmem:[%s345 + $0x858] sm:$0xff]
      %v633 = vld [vmem:[%s345 + $0x860] sm:$0xff]
      %v634 = vld [vmem:[%s345 + $0x868] sm:$0xff]
      %v635 = vld [vmem:[%s345 + $0x870] sm:$0xff]
      %v636 = vld [vmem:[%s345 + $0x878] sm:$0xff]
      %v637 = vld [vmem:[%s345 + $0x880] sm:$0xff]
      %v638 = vld [vmem:[%s345 + $0x888] sm:$0xff]
      %v639 = vld [vmem:[%s345 + $0x890] sm:$0xff]
      %v640 = vld [vmem:[%s345 + $0x898] sm:$0xff]
      %v641 = vld [vmem:[%s345 + $0x8a0] sm:$0xff]
      %v642 = vld [vmem:[%s345 + $0x8a8] sm:$0xff]
      %v643 = vld [vmem:[%s345 + $0x8b0] sm:$0xff]
      %v644 = vld [vmem:[%s345 + $0x8b8] sm:$0xff]
      %v645 = vld [vmem:[%s345 + $0x8c0] sm:$0xff]
      %v646 = vld [vmem:[%s345 + $0x8c8] sm:$0xff]
      %v647 = vld [vmem:[%s345 + $0x8d0] sm:$0xff]
      %v648 = vld [vmem:[%s345 + $0x8d8] sm:$0xff]
      %v649 = vld [vmem:[%s345 + $0x8e0] sm:$0xff]
      %v650 = vld [vmem:[%s345 + $0x8e8] sm:$0xff]
      %v651 = vld [vmem:[%s345 + $0x8f0] sm:$0xff]
      %v652 = vld [vmem:[%s345 + $0x8f8] sm:$0xff]
      %v658 = vunpack.c.l.b16 %v360
      %v659 = vunpack.c.h.b16 %v360
      %v660 = vunpack.c.l.b16 %v361
      %v661 = vunpack.c.h.b16 %v361
      %v662 = vunpack.c.l.b16 %v362
      %v663 = vunpack.c.h.b16 %v362
      %v664 = vunpack.c.l.b16 %v363
      %v665 = vunpack.c.h.b16 %v363
      %v666 = vunpack.c.l.b16 %v364
      %v667 = vpack.c.b16 %v658, %v658
      %v668 = vpack.c.b16 %v659, %v659
      %v669 = vpack.c.b16 %v660, %v660
      %v670 = vpack.c.b16 %v661, %v661
      %v671 = vpack.c.b16 %v662, %v662
      %v672 = vpack.c.b16 %v663, %v663
      %v673 = vpack.c.b16 %v664, %v664
      %v674 = vpack.c.b16 %v665, %v665
      %v675 = vpack.c.b16 %v666, %v666
      %v973 = vunpack.c.l.b16 %v365
      %v974 = vunpack.c.h.b16 %v365
      %v975 = vunpack.c.l.b16 %v366
      %v976 = vunpack.c.h.b16 %v366
      %v977 = vunpack.c.l.b16 %v367
      %v978 = vunpack.c.h.b16 %v367
      %v979 = vunpack.c.l.b16 %v368
      %v980 = vunpack.c.h.b16 %v368
      %v981 = vunpack.c.l.b16 %v369
      %v982 = vunpack.c.h.b16 %v369
      %v983 = vunpack.c.l.b16 %v370
      %v984 = vunpack.c.h.b16 %v370
      %v985 = vunpack.c.l.b16 %v371
      %v986 = vunpack.c.h.b16 %v371
      %v987 = vunpack.c.l.b16 %v372
      %v988 = vunpack.c.h.b16 %v372
      %v989 = vunpack.c.l.b16 %v373
      %v990 = vunpack.c.h.b16 %v373
      %v991 = vunpack.c.l.b16 %v374
      %v992 = vunpack.c.h.b16 %v374
      %v993 = vunpack.c.l.b16 %v375
      %v994 = vunpack.c.h.b16 %v375
      %v995 = vunpack.c.l.b16 %v376
      %v996 = vunpack.c.h.b16 %v376
      %v997 = vunpack.c.l.b16 %v377
      %v998 = vunpack.c.h.b16 %v377
      %v999 = vunpack.c.l.b16 %v378
      %v1000 = vunpack.c.h.b16 %v378
      %v1001 = vunpack.c.l.b16 %v379
      %v1002 = vunpack.c.h.b16 %v379
      %v1003 = vunpack.c.l.b16 %v380
      %v1004 = vunpack.c.h.b16 %v380
      %v1005 = vunpack.c.l.b16 %v381
      %v1006 = vunpack.c.h.b16 %v381
      %v1007 = vunpack.c.l.b16 %v382
      %v1008 = vunpack.c.h.b16 %v382
      %v1009 = vunpack.c.l.b16 %v383
      %v1010 = vunpack.c.h.b16 %v383
      %v1011 = vunpack.c.l.b16 %v384
      %v1012 = vunpack.c.h.b16 %v384
      %v1013 = vunpack.c.l.b16 %v385
      %v1014 = vunpack.c.h.b16 %v385
      %v1015 = vunpack.c.l.b16 %v386
      %v1016 = vunpack.c.h.b16 %v386
      %v1017 = vunpack.c.l.b16 %v387
      %v1018 = vunpack.c.h.b16 %v387
      %v1019 = vunpack.c.l.b16 %v388
      %v1020 = vunpack.c.h.b16 %v388
      %v1021 = vunpack.c.l.b16 %v389
      %v1022 = vunpack.c.h.b16 %v389
      %v1023 = vunpack.c.l.b16 %v390
      %v1024 = vunpack.c.h.b16 %v390
      %v1025 = vunpack.c.l.b16 %v391
      %v1026 = vunpack.c.h.b16 %v391
      %v1027 = vunpack.c.l.b16 %v392
      %v1028 = vunpack.c.h.b16 %v392
      %v1029 = vunpack.c.l.b16 %v393
      %v1030 = vunpack.c.h.b16 %v393
      %v1031 = vunpack.c.l.b16 %v394
      %v1032 = vunpack.c.h.b16 %v394
      %v1033 = vunpack.c.l.b16 %v395
      %v1034 = vunpack.c.h.b16 %v395
      %v1035 = vunpack.c.l.b16 %v396
      %v1036 = vunpack.c.h.b16 %v396
      %v1037 = vunpack.c.l.b16 %v397
      %v1038 = vunpack.c.h.b16 %v397
      %v1039 = vunpack.c.l.b16 %v398
      %v1040 = vunpack.c.h.b16 %v398
      %v1041 = vunpack.c.l.b16 %v399
      %v1042 = vunpack.c.h.b16 %v399
      %v1043 = vunpack.c.l.b16 %v400
      %v1044 = vunpack.c.h.b16 %v400
      %v1045 = vunpack.c.l.b16 %v401
      %v1046 = vunpack.c.h.b16 %v401
      %v1047 = vunpack.c.l.b16 %v402
      %v1048 = vunpack.c.h.b16 %v402
      %v1049 = vunpack.c.l.b16 %v403
      %v1050 = vunpack.c.h.b16 %v403
      %v1051 = vunpack.c.l.b16 %v404
      %v1052 = vunpack.c.h.b16 %v404
      %v1053 = vunpack.c.l.b16 %v405
      %v1054 = vunpack.c.h.b16 %v405
      %v1055 = vunpack.c.l.b16 %v406
      %v1056 = vunpack.c.h.b16 %v406
      %v1057 = vunpack.c.l.b16 %v407
      %v1058 = vunpack.c.h.b16 %v407
      %v1059 = vunpack.c.l.b16 %v408
      %v1060 = vunpack.c.h.b16 %v408
      %v1061 = vunpack.c.l.b16 %v409
      %v1062 = vunpack.c.h.b16 %v409
      %v1063 = vunpack.c.l.b16 %v410
      %v1064 = vunpack.c.h.b16 %v410
      %v1065 = vunpack.c.l.b16 %v411
      %v1066 = vunpack.c.h.b16 %v411
      %v1067 = vunpack.c.l.b16 %v412
      %v1068 = vunpack.c.h.b16 %v412
      %v1069 = vunpack.c.l.b16 %v413
      %v1070 = vunpack.c.h.b16 %v413
      %v1071 = vunpack.c.l.b16 %v414
      %v1072 = vunpack.c.h.b16 %v414
      %v1073 = vunpack.c.l.b16 %v415
      %v1074 = vunpack.c.h.b16 %v415
      %v1075 = vunpack.c.l.b16 %v416
      %v1076 = vunpack.c.h.b16 %v416
      %v1077 = vunpack.c.l.b16 %v417
      %v1078 = vunpack.c.h.b16 %v417
      %v1079 = vunpack.c.l.b16 %v418
      %v1080 = vunpack.c.h.b16 %v418
      %v1081 = vunpack.c.l.b16 %v419
      %v1082 = vunpack.c.h.b16 %v419
      %v1083 = vunpack.c.l.b16 %v420
      %v1084 = vunpack.c.h.b16 %v420
      %v1085 = vunpack.c.l.b16 %v421
      %v1086 = vunpack.c.h.b16 %v421
      %v1087 = vunpack.c.l.b16 %v422
      %v1088 = vunpack.c.h.b16 %v422
      %v1089 = vunpack.c.l.b16 %v423
      %v1090 = vunpack.c.h.b16 %v423
      %v1091 = vunpack.c.l.b16 %v424
      %v1092 = vunpack.c.h.b16 %v424
      %v1093 = vunpack.c.l.b16 %v425
      %v1094 = vunpack.c.h.b16 %v425
      %v1095 = vunpack.c.l.b16 %v426
      %v1096 = vunpack.c.h.b16 %v426
      %v1097 = vunpack.c.l.b16 %v427
      %v1098 = vunpack.c.h.b16 %v427
      %v1099 = vunpack.c.l.b16 %v428
      %v1100 = vunpack.c.h.b16 %v428
      %v1101 = vunpack.c.l.b16 %v429
      %v1102 = vunpack.c.h.b16 %v429
      %v1103 = vunpack.c.l.b16 %v430
      %v1104 = vunpack.c.h.b16 %v430
      %v1105 = vunpack.c.l.b16 %v431
      %v1106 = vunpack.c.h.b16 %v431
      %v1107 = vunpack.c.l.b16 %v432
      %v1108 = vunpack.c.h.b16 %v432
      %v1109 = vunpack.c.l.b16 %v433
      %v1110 = vunpack.c.h.b16 %v433
      %v1111 = vunpack.c.l.b16 %v434
      %v1112 = vunpack.c.h.b16 %v434
      %v1113 = vunpack.c.l.b16 %v435
      %v1114 = vunpack.c.h.b16 %v435
      %v1115 = vunpack.c.l.b16 %v436
      %v1116 = vunpack.c.h.b16 %v436
      %v1117 = vunpack.c.l.b16 %v437
      %v1118 = vunpack.c.h.b16 %v437
      %v1119 = vunpack.c.l.b16 %v438
      %v1120 = vunpack.c.h.b16 %v438
      %v1121 = vunpack.c.l.b16 %v439
      %v1122 = vunpack.c.h.b16 %v439
      %v1123 = vunpack.c.l.b16 %v440
      %v1124 = vunpack.c.h.b16 %v440
      %v1125 = vunpack.c.l.b16 %v441
      %v1126 = vunpack.c.h.b16 %v441
      %v1127 = vunpack.c.l.b16 %v442
      %v1128 = vunpack.c.h.b16 %v442
      %v1129 = vunpack.c.l.b16 %v443
      %v1130 = vunpack.c.h.b16 %v443
      %v1131 = vunpack.c.l.b16 %v444
      %v1132 = vunpack.c.h.b16 %v444
      %v1133 = vunpack.c.l.b16 %v445
      %v1134 = vunpack.c.h.b16 %v445
      %v1135 = vunpack.c.l.b16 %v446
      %v1136 = vunpack.c.h.b16 %v446
      %v1137 = vunpack.c.l.b16 %v447
      %v1138 = vunpack.c.h.b16 %v447
      %v1139 = vunpack.c.l.b16 %v448
      %v1140 = vunpack.c.h.b16 %v448
      %v1141 = vunpack.c.l.b16 %v449
      %v1142 = vunpack.c.h.b16 %v449
      %v1143 = vunpack.c.l.b16 %v450
      %v1144 = vunpack.c.h.b16 %v450
      %v1145 = vunpack.c.l.b16 %v451
      %v1146 = vunpack.c.h.b16 %v451
      %v1147 = vunpack.c.l.b16 %v452
      %v1148 = vunpack.c.h.b16 %v452
      %v1149 = vunpack.c.l.b16 %v453
      %v1150 = vunpack.c.h.b16 %v453
      %v1151 = vunpack.c.l.b16 %v454
      %v1152 = vunpack.c.h.b16 %v454
      %v1153 = vunpack.c.l.b16 %v455
      %v1154 = vunpack.c.h.b16 %v455
      %v1155 = vunpack.c.l.b16 %v456
      %v1156 = vunpack.c.h.b16 %v456
      %v1157 = vunpack.c.l.b16 %v457
      %v1158 = vunpack.c.h.b16 %v457
      %v1159 = vunpack.c.l.b16 %v458
      %v1160 = vunpack.c.h.b16 %v458
      %v1161 = vunpack.c.l.b16 %v459
      %v1162 = vunpack.c.h.b16 %v459
      %v1163 = vunpack.c.l.b16 %v460
      %v1164 = vunpack.c.h.b16 %v460
      %v1165 = vunpack.c.l.b16 %v461
      %v1166 = vunpack.c.h.b16 %v461
      %v1167 = vunpack.c.l.b16 %v462
      %v1168 = vunpack.c.h.b16 %v462
      %v1169 = vunpack.c.l.b16 %v463
      %v1170 = vunpack.c.h.b16 %v463
      %v1171 = vunpack.c.l.b16 %v464
      %v1172 = vunpack.c.h.b16 %v464
      %v1173 = vunpack.c.l.b16 %v465
      %v1174 = vunpack.c.h.b16 %v465
      %v1175 = vunpack.c.l.b16 %v466
      %v1176 = vunpack.c.h.b16 %v466
      %v1177 = vunpack.c.l.b16 %v467
      %v1178 = vunpack.c.h.b16 %v467
      %v1179 = vunpack.c.l.b16 %v468
      %v1180 = vunpack.c.h.b16 %v468
      %v1181 = vunpack.c.l.b16 %v469
      %v1182 = vunpack.c.h.b16 %v469
      %v1183 = vunpack.c.l.b16 %v470
      %v1184 = vunpack.c.h.b16 %v470
      %v1185 = vunpack.c.l.b16 %v471
      %v1186 = vunpack.c.h.b16 %v471
      %v1187 = vunpack.c.l.b16 %v472
      %v1188 = vunpack.c.h.b16 %v472
      %v1189 = vunpack.c.l.b16 %v473
      %v1190 = vunpack.c.h.b16 %v473
      %v1191 = vunpack.c.l.b16 %v474
      %v1192 = vunpack.c.h.b16 %v474
      %v1193 = vunpack.c.l.b16 %v475
      %v1194 = vunpack.c.h.b16 %v475
      %v1195 = vunpack.c.l.b16 %v476
      %v1196 = vunpack.c.h.b16 %v476
      %v1197 = vunpack.c.l.b16 %v477
      %v1198 = vunpack.c.h.b16 %v477
      %v1199 = vunpack.c.l.b16 %v478
      %v1200 = vunpack.c.h.b16 %v478
      %v1201 = vunpack.c.l.b16 %v479
      %v1202 = vunpack.c.h.b16 %v479
      %v1203 = vunpack.c.l.b16 %v480
      %v1204 = vunpack.c.h.b16 %v480
      %v1205 = vunpack.c.l.b16 %v481
      %v1206 = vunpack.c.h.b16 %v481
      %v1207 = vunpack.c.l.b16 %v482
      %v1208 = vunpack.c.h.b16 %v482
      %v1209 = vunpack.c.l.b16 %v483
      %v1210 = vunpack.c.h.b16 %v483
      %v1211 = vunpack.c.l.b16 %v484
      %v1212 = vunpack.c.h.b16 %v484
      %v1213 = vunpack.c.l.b16 %v485
      %v1214 = vunpack.c.h.b16 %v485
      %v1215 = vunpack.c.l.b16 %v486
      %v1216 = vunpack.c.h.b16 %v486
      %v1217 = vunpack.c.l.b16 %v487
      %v1218 = vunpack.c.h.b16 %v487
      %v1219 = vunpack.c.l.b16 %v488
      %v1220 = vunpack.c.h.b16 %v488
      %v1221 = vunpack.c.l.b16 %v489
      %v1222 = vunpack.c.h.b16 %v489
      %v1223 = vunpack.c.l.b16 %v490
      %v1224 = vunpack.c.h.b16 %v490
      %v1225 = vunpack.c.l.b16 %v491
      %v1226 = vunpack.c.h.b16 %v491
      %v1227 = vunpack.c.l.b16 %v492
      %v1228 = vunpack.c.h.b16 %v492
      %v1229 = vunpack.c.l.b16 %v493
      %v1230 = vunpack.c.h.b16 %v493
      %v1231 = vunpack.c.l.b16 %v494
      %v1232 = vunpack.c.h.b16 %v494
      %v1233 = vunpack.c.l.b16 %v495
      %v1234 = vunpack.c.h.b16 %v495
      %v1235 = vunpack.c.l.b16 %v496
      %v1236 = vunpack.c.h.b16 %v496
      %v1237 = vunpack.c.l.b16 %v497
      %v1238 = vunpack.c.h.b16 %v497
      %v1239 = vunpack.c.l.b16 %v498
      %v1240 = vunpack.c.h.b16 %v498
      %v1241 = vunpack.c.l.b16 %v499
      %v1242 = vunpack.c.h.b16 %v499
      %v1243 = vunpack.c.l.b16 %v500
      %v1244 = vunpack.c.h.b16 %v500
      %v1245 = vunpack.c.l.b16 %v501
      %v1246 = vunpack.c.h.b16 %v501
      %v1247 = vunpack.c.l.b16 %v502
      %v1248 = vunpack.c.h.b16 %v502
      %v1249 = vunpack.c.l.b16 %v503
      %v1250 = vunpack.c.h.b16 %v503
      %v1251 = vunpack.c.l.b16 %v504
      %v1252 = vunpack.c.h.b16 %v504
      %v1253 = vunpack.c.l.b16 %v505
      %v1254 = vunpack.c.h.b16 %v505
      %v1255 = vunpack.c.l.b16 %v506
      %v1256 = vunpack.c.h.b16 %v506
      %v1257 = vunpack.c.l.b16 %v507
      %v1258 = vunpack.c.h.b16 %v507
      %v1259 = vunpack.c.l.b16 %v508
      %v1260 = vunpack.c.h.b16 %v508
      %v1261 = vunpack.c.l.b16 %v509
      %v1262 = vunpack.c.h.b16 %v509
      %v1263 = vunpack.c.l.b16 %v510
      %v1264 = vunpack.c.h.b16 %v510
      %v1265 = vunpack.c.l.b16 %v511
      %v1266 = vunpack.c.h.b16 %v511
      %v1267 = vunpack.c.l.b16 %v512
      %v1268 = vunpack.c.h.b16 %v512
      %v1269 = vunpack.c.l.b16 %v513
      %v1270 = vunpack.c.h.b16 %v513
      %v1271 = vunpack.c.l.b16 %v514
      %v1272 = vunpack.c.h.b16 %v514
      %v1273 = vunpack.c.l.b16 %v515
      %v1274 = vunpack.c.h.b16 %v515
      %v1275 = vunpack.c.l.b16 %v516
      %v1276 = vunpack.c.h.b16 %v516
      %v1277 = vunpack.c.l.b16 %v517
      %v1278 = vunpack.c.h.b16 %v517
      %v1279 = vunpack.c.l.b16 %v518
      %v1280 = vunpack.c.h.b16 %v518
      %v1281 = vunpack.c.l.b16 %v519
      %v1282 = vunpack.c.h.b16 %v519
      %v1283 = vunpack.c.l.b16 %v520
      %v1284 = vunpack.c.h.b16 %v520
      %v1285 = vunpack.c.l.b16 %v521
      %v1286 = vunpack.c.h.b16 %v521
      %v1287 = vunpack.c.l.b16 %v522
      %v1288 = vunpack.c.h.b16 %v522
      %v1289 = vunpack.c.l.b16 %v523
      %v1290 = vunpack.c.h.b16 %v523
      %v1291 = vunpack.c.l.b16 %v524
      %v1292 = vunpack.c.h.b16 %v524
      %v1293 = vunpack.c.l.b16 %v525
      %v1294 = vunpack.c.h.b16 %v525
      %v1295 = vunpack.c.l.b16 %v526
      %v1296 = vunpack.c.h.b16 %v526
      %v1297 = vunpack.c.l.b16 %v527
      %v1298 = vunpack.c.h.b16 %v527
      %v1299 = vunpack.c.l.b16 %v528
      %v1300 = vunpack.c.h.b16 %v528
      %v1301 = vunpack.c.l.b16 %v529
      %v1302 = vunpack.c.h.b16 %v529
      %v1303 = vunpack.c.l.b16 %v530
      %v1304 = vunpack.c.h.b16 %v530
      %v1305 = vunpack.c.l.b16 %v531
      %v1306 = vunpack.c.h.b16 %v531
      %v1307 = vunpack.c.l.b16 %v532
      %v1308 = vunpack.c.h.b16 %v532
      %v1309 = vunpack.c.l.b16 %v533
      %v1310 = vunpack.c.h.b16 %v533
      %v1311 = vunpack.c.l.b16 %v534
      %v1312 = vunpack.c.h.b16 %v534
      %v1313 = vunpack.c.l.b16 %v535
      %v1314 = vunpack.c.h.b16 %v535
      %v1315 = vunpack.c.l.b16 %v536
      %v1316 = vunpack.c.h.b16 %v536
      %v1317 = vunpack.c.l.b16 %v537
      %v1318 = vunpack.c.h.b16 %v537
      %v1319 = vunpack.c.l.b16 %v538
      %v1320 = vunpack.c.h.b16 %v538
      %v1321 = vunpack.c.l.b16 %v539
      %v1322 = vunpack.c.h.b16 %v539
      %v1323 = vunpack.c.l.b16 %v540
      %v1324 = vunpack.c.h.b16 %v540
      %v1325 = vunpack.c.l.b16 %v541
      %v1326 = vunpack.c.h.b16 %v541
      %v1327 = vunpack.c.l.b16 %v542
      %v1328 = vunpack.c.h.b16 %v542
      %v1329 = vunpack.c.l.b16 %v543
      %v1330 = vunpack.c.h.b16 %v543
      %v1331 = vunpack.c.l.b16 %v544
      %v1332 = vunpack.c.h.b16 %v544
      %v1333 = vunpack.c.l.b16 %v545
      %v1334 = vunpack.c.h.b16 %v545
      %v1335 = vunpack.c.l.b16 %v546
      %v1336 = vunpack.c.h.b16 %v546
      %v1337 = vunpack.c.l.b16 %v547
      %v1338 = vunpack.c.h.b16 %v547
      %v1339 = vunpack.c.l.b16 %v548
      %v1340 = vunpack.c.h.b16 %v548
      %v1341 = vunpack.c.l.b16 %v549
      %v1342 = vunpack.c.h.b16 %v549
      %v1343 = vunpack.c.l.b16 %v550
      %v1344 = vunpack.c.h.b16 %v550
      %v1345 = vunpack.c.l.b16 %v551
      %v1346 = vunpack.c.h.b16 %v551
      %v1347 = vunpack.c.l.b16 %v552
      %v1348 = vunpack.c.h.b16 %v552
      %v1349 = vunpack.c.l.b16 %v553
      %v1350 = vunpack.c.h.b16 %v553
      %v1351 = vunpack.c.l.b16 %v554
      %v1352 = vunpack.c.h.b16 %v554
      %v1353 = vunpack.c.l.b16 %v555
      %v1354 = vunpack.c.h.b16 %v555
      %v1355 = vunpack.c.l.b16 %v556
      %v1356 = vunpack.c.h.b16 %v556
      %v1357 = vunpack.c.l.b16 %v557
      %v1358 = vunpack.c.h.b16 %v557
      %v1359 = vunpack.c.l.b16 %v558
      %v1360 = vunpack.c.h.b16 %v558
      %v1361 = vunpack.c.l.b16 %v559
      %v1362 = vunpack.c.h.b16 %v559
      %v1363 = vunpack.c.l.b16 %v560
      %v1364 = vunpack.c.h.b16 %v560
      %v1365 = vunpack.c.l.b16 %v561
      %v1366 = vunpack.c.h.b16 %v561
      %v1367 = vunpack.c.l.b16 %v562
      %v1368 = vunpack.c.h.b16 %v562
      %v1369 = vunpack.c.l.b16 %v563
      %v1370 = vunpack.c.h.b16 %v563
      %v1371 = vunpack.c.l.b16 %v564
      %v1372 = vunpack.c.h.b16 %v564
      %v1373 = vunpack.c.l.b16 %v565
      %v1374 = vunpack.c.h.b16 %v565
      %v1375 = vunpack.c.l.b16 %v566
      %v1376 = vunpack.c.h.b16 %v566
      %v1377 = vunpack.c.l.b16 %v567
      %v1378 = vunpack.c.h.b16 %v567
      %v1379 = vunpack.c.l.b16 %v568
      %v1380 = vunpack.c.h.b16 %v568
      %v1381 = vunpack.c.l.b16 %v569
      %v1382 = vunpack.c.h.b16 %v569
      %v1383 = vunpack.c.l.b16 %v570
      %v1384 = vunpack.c.h.b16 %v570
      %v1385 = vunpack.c.l.b16 %v571
      %v1386 = vunpack.c.h.b16 %v571
      %v1387 = vunpack.c.l.b16 %v572
      %v1388 = vunpack.c.h.b16 %v572
      %v1389 = vunpack.c.l.b16 %v573
      %v1390 = vunpack.c.h.b16 %v573
      %v1391 = vunpack.c.l.b16 %v574
      %v1392 = vunpack.c.h.b16 %v574
      %v1393 = vunpack.c.l.b16 %v575
      %v1394 = vunpack.c.h.b16 %v575
      %v1395 = vunpack.c.l.b16 %v576
      %v1396 = vunpack.c.h.b16 %v576
      %v1397 = vunpack.c.l.b16 %v577
      %v1398 = vunpack.c.h.b16 %v577
      %v1399 = vunpack.c.l.b16 %v578
      %v1400 = vunpack.c.h.b16 %v578
      %v1401 = vunpack.c.l.b16 %v579
      %v1402 = vunpack.c.h.b16 %v579
      %v1403 = vunpack.c.l.b16 %v580
      %v1404 = vunpack.c.h.b16 %v580
      %v1405 = vunpack.c.l.b16 %v581
      %v1406 = vunpack.c.h.b16 %v581
      %v1407 = vunpack.c.l.b16 %v582
      %v1408 = vunpack.c.h.b16 %v582
      %v1409 = vunpack.c.l.b16 %v583
      %v1410 = vunpack.c.h.b16 %v583
      %v1411 = vunpack.c.l.b16 %v584
      %v1412 = vunpack.c.h.b16 %v584
      %v1413 = vunpack.c.l.b16 %v585
      %v1414 = vunpack.c.h.b16 %v585
      %v1415 = vunpack.c.l.b16 %v586
      %v1416 = vunpack.c.h.b16 %v586
      %v1417 = vunpack.c.l.b16 %v587
      %v1418 = vunpack.c.h.b16 %v587
      %v1419 = vunpack.c.l.b16 %v588
      %v1420 = vunpack.c.h.b16 %v588
      %v1421 = vunpack.c.l.b16 %v589
      %v1422 = vunpack.c.h.b16 %v589
      %v1423 = vunpack.c.l.b16 %v590
      %v1424 = vunpack.c.h.b16 %v590
      %v1425 = vunpack.c.l.b16 %v591
      %v1426 = vunpack.c.h.b16 %v591
      %v1427 = vunpack.c.l.b16 %v592
      %v1428 = vunpack.c.h.b16 %v592
      %v1429 = vunpack.c.l.b16 %v593
      %v1430 = vunpack.c.h.b16 %v593
      %v1431 = vunpack.c.l.b16 %v594
      %v1432 = vunpack.c.h.b16 %v594
      %v1433 = vunpack.c.l.b16 %v595
      %v1434 = vunpack.c.h.b16 %v595
      %v1435 = vunpack.c.l.b16 %v596
      %v1436 = vunpack.c.h.b16 %v596
      %v1437 = vunpack.c.l.b16 %v597
      %v1438 = vunpack.c.h.b16 %v597
      %v1439 = vunpack.c.l.b16 %v598
      %v1440 = vunpack.c.h.b16 %v598
      %v1441 = vunpack.c.l.b16 %v599
      %v1442 = vunpack.c.h.b16 %v599
      %v1443 = vunpack.c.l.b16 %v600
      %v1444 = vunpack.c.h.b16 %v600
      %v1445 = vunpack.c.l.b16 %v601
      %v1446 = vunpack.c.h.b16 %v601
      %v1447 = vunpack.c.l.b16 %v602
      %v1448 = vunpack.c.h.b16 %v602
      %v1449 = vunpack.c.l.b16 %v603
      %v1450 = vunpack.c.h.b16 %v603
      %v1451 = vunpack.c.l.b16 %v604
      %v1452 = vunpack.c.h.b16 %v604
      %v1453 = vunpack.c.l.b16 %v605
      %v1454 = vunpack.c.h.b16 %v605
      %v1455 = vunpack.c.l.b16 %v606
      %v1456 = vunpack.c.h.b16 %v606
      %v1457 = vunpack.c.l.b16 %v607
      %v1458 = vunpack.c.h.b16 %v607
      %v1459 = vunpack.c.l.b16 %v608
      %v1460 = vunpack.c.h.b16 %v608
      %v1461 = vunpack.c.l.b16 %v609
      %v1462 = vunpack.c.h.b16 %v609
      %v1463 = vunpack.c.l.b16 %v610
      %v1464 = vunpack.c.h.b16 %v610
      %v1465 = vunpack.c.l.b16 %v611
      %v1466 = vunpack.c.h.b16 %v611
      %v1467 = vunpack.c.l.b16 %v612
      %v1468 = vunpack.c.h.b16 %v612
      %v1469 = vunpack.c.l.b16 %v613
      %v1470 = vunpack.c.h.b16 %v613
      %v1471 = vunpack.c.l.b16 %v614
      %v1472 = vunpack.c.h.b16 %v614
      %v1473 = vunpack.c.l.b16 %v615
      %v1474 = vunpack.c.h.b16 %v615
      %v1475 = vunpack.c.l.b16 %v616
      %v1476 = vunpack.c.h.b16 %v616
      %v1477 = vunpack.c.l.b16 %v617
      %v1478 = vunpack.c.h.b16 %v617
      %v1479 = vunpack.c.l.b16 %v618
      %v1480 = vunpack.c.h.b16 %v618
      %v1481 = vunpack.c.l.b16 %v619
      %v1482 = vunpack.c.h.b16 %v619
      %v1483 = vunpack.c.l.b16 %v620
      %v1484 = vunpack.c.h.b16 %v620
      %v1485 = vunpack.c.l.b16 %v621
      %v1486 = vunpack.c.h.b16 %v621
      %v1487 = vunpack.c.l.b16 %v622
      %v1488 = vunpack.c.h.b16 %v622
      %v1489 = vunpack.c.l.b16 %v623
      %v1490 = vunpack.c.h.b16 %v623
      %v1491 = vunpack.c.l.b16 %v624
      %v1492 = vunpack.c.h.b16 %v624
      %v1493 = vunpack.c.l.b16 %v625
      %v1494 = vunpack.c.h.b16 %v625
      %v1495 = vunpack.c.l.b16 %v626
      %v1496 = vunpack.c.h.b16 %v626
      %v1497 = vunpack.c.l.b16 %v627
      %v1498 = vunpack.c.h.b16 %v627
      %v1499 = vunpack.c.l.b16 %v628
      %v1500 = vunpack.c.h.b16 %v628
      %v1501 = vunpack.c.l.b16 %v629
      %v1502 = vunpack.c.h.b16 %v629
      %v1503 = vunpack.c.l.b16 %v630
      %v1504 = vunpack.c.h.b16 %v630
      %v1505 = vunpack.c.l.b16 %v631
      %v1506 = vunpack.c.h.b16 %v631
      %v1507 = vunpack.c.l.b16 %v632
      %v1508 = vunpack.c.h.b16 %v632
      %v1509 = vunpack.c.l.b16 %v633
      %v1510 = vunpack.c.h.b16 %v633
      %v1511 = vunpack.c.l.b16 %v634
      %v1512 = vunpack.c.h.b16 %v634
      %v1513 = vunpack.c.l.b16 %v635
      %v1514 = vunpack.c.h.b16 %v635
      %v1515 = vunpack.c.l.b16 %v636
      %v1516 = vunpack.c.h.b16 %v636
      %v1517 = vunpack.c.l.b16 %v637
      %v1518 = vunpack.c.h.b16 %v637
      %v1519 = vunpack.c.l.b16 %v638
      %v1520 = vunpack.c.h.b16 %v638
      %v1521 = vunpack.c.l.b16 %v639
      %v1522 = vunpack.c.h.b16 %v639
      %v1523 = vunpack.c.l.b16 %v640
      %v1524 = vunpack.c.h.b16 %v640
      %v1525 = vunpack.c.l.b16 %v641
      %v1526 = vunpack.c.h.b16 %v641
      %v1527 = vunpack.c.l.b16 %v642
      %v1528 = vunpack.c.h.b16 %v642
      %v1529 = vunpack.c.l.b16 %v643
      %v1530 = vunpack.c.h.b16 %v643
      %v1531 = vunpack.c.l.b16 %v644
      %v1532 = vunpack.c.h.b16 %v644
      %v1533 = vunpack.c.l.b16 %v645
      %v1534 = vunpack.c.h.b16 %v645
      %v1535 = vunpack.c.l.b16 %v646
      %v1536 = vunpack.c.h.b16 %v646
      %v1537 = vunpack.c.l.b16 %v647
      %v1538 = vunpack.c.h.b16 %v647
      %v1539 = vunpack.c.l.b16 %v648
      %v1540 = vunpack.c.h.b16 %v648
      %v1541 = vunpack.c.l.b16 %v649
      %v1542 = vunpack.c.h.b16 %v649
      %v1543 = vunpack.c.l.b16 %v650
      %v1544 = vunpack.c.h.b16 %v650
      %v1545 = vunpack.c.l.b16 %v651
      %v1546 = vunpack.c.h.b16 %v651
      %v1547 = vunpack.c.l.b16 %v652
      %v1548 = vunpack.c.h.b16 %v652
      %v1549 = vpack.c.b16 %v977, %v973
      %v1550 = vpack.c.b16 %v978, %v974
      %v1551 = vpack.c.b16 %v979, %v975
      %v1552 = vpack.c.b16 %v980, %v976
      %v1553 = vpack.c.b16 %v985, %v981
      %v1554 = vpack.c.b16 %v986, %v982
      %v1555 = vpack.c.b16 %v987, %v983
      %v1556 = vpack.c.b16 %v988, %v984
      %v1557 = vpack.c.b16 %v993, %v989
      %v1558 = vpack.c.b16 %v994, %v990
      %v1559 = vpack.c.b16 %v995, %v991
      %v1560 = vpack.c.b16 %v996, %v992
      %v1561 = vpack.c.b16 %v1001, %v997
      %v1562 = vpack.c.b16 %v1002, %v998
      %v1563 = vpack.c.b16 %v1003, %v999
      %v1564 = vpack.c.b16 %v1004, %v1000
      %v1565 = vpack.c.b16 %v1009, %v1005
      %v1566 = vpack.c.b16 %v1010, %v1006
      %v1567 = vpack.c.b16 %v1011, %v1007
      %v1568 = vpack.c.b16 %v1012, %v1008
      %v1569 = vpack.c.b16 %v1017, %v1013
      %v1570 = vpack.c.b16 %v1018, %v1014
      %v1571 = vpack.c.b16 %v1019, %v1015
      %v1572 = vpack.c.b16 %v1020, %v1016
      %v1573 = vpack.c.b16 %v1025, %v1021
      %v1574 = vpack.c.b16 %v1026, %v1022
      %v1575 = vpack.c.b16 %v1027, %v1023
      %v1576 = vpack.c.b16 %v1028, %v1024
      %v1577 = vpack.c.b16 %v1033, %v1029
      %v1578 = vpack.c.b16 %v1034, %v1030
      %v1579 = vpack.c.b16 %v1035, %v1031
      %v1580 = vpack.c.b16 %v1036, %v1032
      %v1581 = vpack.c.b16 %v1041, %v1037
      %v1582 = vpack.c.b16 %v1042, %v1038
      %v1583 = vpack.c.b16 %v1043, %v1039
      %v1584 = vpack.c.b16 %v1044, %v1040
      %v1585 = vpack.c.b16 %v1049, %v1045
      %v1586 = vpack.c.b16 %v1050, %v1046
      %v1587 = vpack.c.b16 %v1051, %v1047
      %v1588 = vpack.c.b16 %v1052, %v1048
      %v1589 = vpack.c.b16 %v1057, %v1053
      %v1590 = vpack.c.b16 %v1058, %v1054
      %v1591 = vpack.c.b16 %v1059, %v1055
      %v1592 = vpack.c.b16 %v1060, %v1056
      %v1593 = vpack.c.b16 %v1065, %v1061
      %v1594 = vpack.c.b16 %v1066, %v1062
      %v1595 = vpack.c.b16 %v1067, %v1063
      %v1596 = vpack.c.b16 %v1068, %v1064
      %v1597 = vpack.c.b16 %v1073, %v1069
      %v1598 = vpack.c.b16 %v1074, %v1070
      %v1599 = vpack.c.b16 %v1075, %v1071
      %v1600 = vpack.c.b16 %v1076, %v1072
      %v1601 = vpack.c.b16 %v1081, %v1077
      %v1602 = vpack.c.b16 %v1082, %v1078
      %v1603 = vpack.c.b16 %v1083, %v1079
      %v1604 = vpack.c.b16 %v1084, %v1080
      %v1605 = vpack.c.b16 %v1089, %v1085
      %v1606 = vpack.c.b16 %v1090, %v1086
      %v1607 = vpack.c.b16 %v1091, %v1087
      %v1608 = vpack.c.b16 %v1092, %v1088
      %v1609 = vpack.c.b16 %v1097, %v1093
      %v1610 = vpack.c.b16 %v1098, %v1094
      %v1611 = vpack.c.b16 %v1099, %v1095
      %v1612 = vpack.c.b16 %v1100, %v1096
      %v1613 = vpack.c.b16 %v1105, %v1101
      %v1614 = vpack.c.b16 %v1106, %v1102
      %v1615 = vpack.c.b16 %v1107, %v1103
      %v1616 = vpack.c.b16 %v1108, %v1104
      %v1617 = vpack.c.b16 %v1113, %v1109
      %v1618 = vpack.c.b16 %v1114, %v1110
      %v1619 = vpack.c.b16 %v1115, %v1111
      %v1620 = vpack.c.b16 %v1116, %v1112
      %v1621 = vpack.c.b16 %v1121, %v1117
      %v1622 = vpack.c.b16 %v1122, %v1118
      %v1623 = vpack.c.b16 %v1123, %v1119
      %v1624 = vpack.c.b16 %v1124, %v1120
      %v1625 = vpack.c.b16 %v1129, %v1125
      %v1626 = vpack.c.b16 %v1130, %v1126
      %v1627 = vpack.c.b16 %v1131, %v1127
      %v1628 = vpack.c.b16 %v1132, %v1128
      %v1629 = vpack.c.b16 %v1137, %v1133
      %v1630 = vpack.c.b16 %v1138, %v1134
      %v1631 = vpack.c.b16 %v1139, %v1135
      %v1632 = vpack.c.b16 %v1140, %v1136
      %v1633 = vpack.c.b16 %v1145, %v1141
      %v1634 = vpack.c.b16 %v1146, %v1142
      %v1635 = vpack.c.b16 %v1147, %v1143
      %v1636 = vpack.c.b16 %v1148, %v1144
      %v1637 = vpack.c.b16 %v1153, %v1149
      %v1638 = vpack.c.b16 %v1154, %v1150
      %v1639 = vpack.c.b16 %v1155, %v1151
      %v1640 = vpack.c.b16 %v1156, %v1152
      %v1641 = vpack.c.b16 %v1161, %v1157
      %v1642 = vpack.c.b16 %v1162, %v1158
      %v1643 = vpack.c.b16 %v1163, %v1159
      %v1644 = vpack.c.b16 %v1164, %v1160
      %v1645 = vpack.c.b16 %v1169, %v1165
      %v1646 = vpack.c.b16 %v1170, %v1166
      %v1647 = vpack.c.b16 %v1171, %v1167
      %v1648 = vpack.c.b16 %v1172, %v1168
      %v1649 = vpack.c.b16 %v1177, %v1173
      %v1650 = vpack.c.b16 %v1178, %v1174
      %v1651 = vpack.c.b16 %v1179, %v1175
      %v1652 = vpack.c.b16 %v1180, %v1176
      %v1653 = vpack.c.b16 %v1185, %v1181
      %v1654 = vpack.c.b16 %v1186, %v1182
      %v1655 = vpack.c.b16 %v1187, %v1183
      %v1656 = vpack.c.b16 %v1188, %v1184
      %v1657 = vpack.c.b16 %v1193, %v1189
      %v1658 = vpack.c.b16 %v1194, %v1190
      %v1659 = vpack.c.b16 %v1195, %v1191
      %v1660 = vpack.c.b16 %v1196, %v1192
      %v1661 = vpack.c.b16 %v1201, %v1197
      %v1662 = vpack.c.b16 %v1202, %v1198
      %v1663 = vpack.c.b16 %v1203, %v1199
      %v1664 = vpack.c.b16 %v1204, %v1200
      %v1665 = vpack.c.b16 %v1209, %v1205
      %v1666 = vpack.c.b16 %v1210, %v1206
      %v1667 = vpack.c.b16 %v1211, %v1207
      %v1668 = vpack.c.b16 %v1212, %v1208
      %v1669 = vpack.c.b16 %v1217, %v1213
      %v1670 = vpack.c.b16 %v1218, %v1214
      %v1671 = vpack.c.b16 %v1219, %v1215
      %v1672 = vpack.c.b16 %v1220, %v1216
      %v1673 = vpack.c.b16 %v1225, %v1221
      %v1674 = vpack.c.b16 %v1226, %v1222
      %v1675 = vpack.c.b16 %v1227, %v1223
      %v1676 = vpack.c.b16 %v1228, %v1224
      %v1677 = vpack.c.b16 %v1233, %v1229
      %v1678 = vpack.c.b16 %v1234, %v1230
      %v1679 = vpack.c.b16 %v1235, %v1231
      %v1680 = vpack.c.b16 %v1236, %v1232
      %v1681 = vpack.c.b16 %v1241, %v1237
      %v1682 = vpack.c.b16 %v1242, %v1238
      %v1683 = vpack.c.b16 %v1243, %v1239
      %v1684 = vpack.c.b16 %v1244, %v1240
      %v1685 = vpack.c.b16 %v1249, %v1245
      %v1686 = vpack.c.b16 %v1250, %v1246
      %v1687 = vpack.c.b16 %v1251, %v1247
      %v1688 = vpack.c.b16 %v1252, %v1248
      %v1689 = vpack.c.b16 %v1257, %v1253
      %v1690 = vpack.c.b16 %v1258, %v1254
      %v1691 = vpack.c.b16 %v1259, %v1255
      %v1692 = vpack.c.b16 %v1260, %v1256
      %v1693 = vpack.c.b16 %v1265, %v1261
      %v1694 = vpack.c.b16 %v1266, %v1262
      %v1695 = vpack.c.b16 %v1267, %v1263
      %v1696 = vpack.c.b16 %v1268, %v1264
      %v1697 = vpack.c.b16 %v1273, %v1269
      %v1698 = vpack.c.b16 %v1274, %v1270
      %v1699 = vpack.c.b16 %v1275, %v1271
      %v1700 = vpack.c.b16 %v1276, %v1272
      %v1701 = vpack.c.b16 %v1281, %v1277
      %v1702 = vpack.c.b16 %v1282, %v1278
      %v1703 = vpack.c.b16 %v1283, %v1279
      %v1704 = vpack.c.b16 %v1284, %v1280
      %v1705 = vpack.c.b16 %v1289, %v1285
      %v1706 = vpack.c.b16 %v1290, %v1286
      %v1707 = vpack.c.b16 %v1291, %v1287
      %v1708 = vpack.c.b16 %v1292, %v1288
      %v1709 = vpack.c.b16 %v1297, %v1293
      %v1710 = vpack.c.b16 %v1298, %v1294
      %v1711 = vpack.c.b16 %v1299, %v1295
      %v1712 = vpack.c.b16 %v1300, %v1296
      %v1713 = vpack.c.b16 %v1305, %v1301
      %v1714 = vpack.c.b16 %v1306, %v1302
      %v1715 = vpack.c.b16 %v1307, %v1303
      %v1716 = vpack.c.b16 %v1308, %v1304
      %v1717 = vpack.c.b16 %v1313, %v1309
      %v1718 = vpack.c.b16 %v1314, %v1310
      %v1719 = vpack.c.b16 %v1315, %v1311
      %v1720 = vpack.c.b16 %v1316, %v1312
      %v1721 = vpack.c.b16 %v1321, %v1317
      %v1722 = vpack.c.b16 %v1322, %v1318
      %v1723 = vpack.c.b16 %v1323, %v1319
      %v1724 = vpack.c.b16 %v1324, %v1320
      %v1725 = vpack.c.b16 %v1329, %v1325
      %v1726 = vpack.c.b16 %v1330, %v1326
      %v1727 = vpack.c.b16 %v1331, %v1327
      %v1728 = vpack.c.b16 %v1332, %v1328
      %v1729 = vpack.c.b16 %v1337, %v1333
      %v1730 = vpack.c.b16 %v1338, %v1334
      %v1731 = vpack.c.b16 %v1339, %v1335
      %v1732 = vpack.c.b16 %v1340, %v1336
      %v1733 = vpack.c.b16 %v1345, %v1341
      %v1734 = vpack.c.b16 %v1346, %v1342
      %v1735 = vpack.c.b16 %v1347, %v1343
      %v1736 = vpack.c.b16 %v1348, %v1344
      %v1737 = vpack.c.b16 %v1353, %v1349
      %v1738 = vpack.c.b16 %v1354, %v1350
      %v1739 = vpack.c.b16 %v1355, %v1351
      %v1740 = vpack.c.b16 %v1356, %v1352
      %v1741 = vpack.c.b16 %v1361, %v1357
      %v1742 = vpack.c.b16 %v1362, %v1358
      %v1743 = vpack.c.b16 %v1363, %v1359
      %v1744 = vpack.c.b16 %v1364, %v1360
      %v1745 = vpack.c.b16 %v1369, %v1365
      %v1746 = vpack.c.b16 %v1370, %v1366
      %v1747 = vpack.c.b16 %v1371, %v1367
      %v1748 = vpack.c.b16 %v1372, %v1368
      %v1749 = vpack.c.b16 %v1377, %v1373
      %v1750 = vpack.c.b16 %v1378, %v1374
      %v1751 = vpack.c.b16 %v1379, %v1375
      %v1752 = vpack.c.b16 %v1380, %v1376
      %v1753 = vpack.c.b16 %v1385, %v1381
      %v1754 = vpack.c.b16 %v1386, %v1382
      %v1755 = vpack.c.b16 %v1387, %v1383
      %v1756 = vpack.c.b16 %v1388, %v1384
      %v1757 = vpack.c.b16 %v1393, %v1389
      %v1758 = vpack.c.b16 %v1394, %v1390
      %v1759 = vpack.c.b16 %v1395, %v1391
      %v1760 = vpack.c.b16 %v1396, %v1392
      %v1761 = vpack.c.b16 %v1401, %v1397
      %v1762 = vpack.c.b16 %v1402, %v1398
      %v1763 = vpack.c.b16 %v1403, %v1399
      %v1764 = vpack.c.b16 %v1404, %v1400
      %v1765 = vpack.c.b16 %v1409, %v1405
      %v1766 = vpack.c.b16 %v1410, %v1406
      %v1767 = vpack.c.b16 %v1411, %v1407
      %v1768 = vpack.c.b16 %v1412, %v1408
      %v1769 = vpack.c.b16 %v1417, %v1413
      %v1770 = vpack.c.b16 %v1418, %v1414
      %v1771 = vpack.c.b16 %v1419, %v1415
      %v1772 = vpack.c.b16 %v1420, %v1416
      %v1773 = vpack.c.b16 %v1425, %v1421
      %v1774 = vpack.c.b16 %v1426, %v1422
      %v1775 = vpack.c.b16 %v1427, %v1423
      %v1776 = vpack.c.b16 %v1428, %v1424
      %v1777 = vpack.c.b16 %v1433, %v1429
      %v1778 = vpack.c.b16 %v1434, %v1430
      %v1779 = vpack.c.b16 %v1435, %v1431
      %v1780 = vpack.c.b16 %v1436, %v1432
      %v1781 = vpack.c.b16 %v1441, %v1437
      %v1782 = vpack.c.b16 %v1442, %v1438
      %v1783 = vpack.c.b16 %v1443, %v1439
      %v1784 = vpack.c.b16 %v1444, %v1440
      %v1785 = vpack.c.b16 %v1449, %v1445
      %v1786 = vpack.c.b16 %v1450, %v1446
      %v1787 = vpack.c.b16 %v1451, %v1447
      %v1788 = vpack.c.b16 %v1452, %v1448
      %v1789 = vpack.c.b16 %v1457, %v1453
      %v1790 = vpack.c.b16 %v1458, %v1454
      %v1791 = vpack.c.b16 %v1459, %v1455
      %v1792 = vpack.c.b16 %v1460, %v1456
      %v1793 = vpack.c.b16 %v1465, %v1461
      %v1794 = vpack.c.b16 %v1466, %v1462
      %v1795 = vpack.c.b16 %v1467, %v1463
      %v1796 = vpack.c.b16 %v1468, %v1464
      %v1797 = vpack.c.b16 %v1473, %v1469
      %v1798 = vpack.c.b16 %v1474, %v1470
      %v1799 = vpack.c.b16 %v1475, %v1471
      %v1800 = vpack.c.b16 %v1476, %v1472
      %v1801 = vpack.c.b16 %v1481, %v1477
      %v1802 = vpack.c.b16 %v1482, %v1478
      %v1803 = vpack.c.b16 %v1483, %v1479
      %v1804 = vpack.c.b16 %v1484, %v1480
      %v1805 = vpack.c.b16 %v1489, %v1485
      %v1806 = vpack.c.b16 %v1490, %v1486
      %v1807 = vpack.c.b16 %v1491, %v1487
      %v1808 = vpack.c.b16 %v1492, %v1488
      %v1809 = vpack.c.b16 %v1497, %v1493
      %v1810 = vpack.c.b16 %v1498, %v1494
      %v1811 = vpack.c.b16 %v1499, %v1495
      %v1812 = vpack.c.b16 %v1500, %v1496
      %v1813 = vpack.c.b16 %v1505, %v1501
      %v1814 = vpack.c.b16 %v1506, %v1502
      %v1815 = vpack.c.b16 %v1507, %v1503
      %v1816 = vpack.c.b16 %v1508, %v1504
      %v1817 = vpack.c.b16 %v1513, %v1509
      %v1818 = vpack.c.b16 %v1514, %v1510
      %v1819 = vpack.c.b16 %v1515, %v1511
      %v1820 = vpack.c.b16 %v1516, %v1512
      %v1821 = vpack.c.b16 %v1521, %v1517
      %v1822 = vpack.c.b16 %v1522, %v1518
      %v1823 = vpack.c.b16 %v1523, %v1519
      %v1824 = vpack.c.b16 %v1524, %v1520
      %v1825 = vpack.c.b16 %v1529, %v1525
      %v1826 = vpack.c.b16 %v1530, %v1526
      %v1827 = vpack.c.b16 %v1531, %v1527
      %v1828 = vpack.c.b16 %v1532, %v1528
      %v1829 = vpack.c.b16 %v1537, %v1533
      %v1830 = vpack.c.b16 %v1538, %v1534
      %v1831 = vpack.c.b16 %v1539, %v1535
      %v1832 = vpack.c.b16 %v1540, %v1536
      %v1833 = vpack.c.b16 %v1545, %v1541
      %v1834 = vpack.c.b16 %v1546, %v1542
      %v1835 = vpack.c.b16 %v1547, %v1543
      %v1836 = vpack.c.b16 %v1548, %v1544
      %2125 = vmatprep.subr.bf16.mxu0 %v1578
      %2126 = vmatpush1.bf16.msra.mxu0 %v1577
      %2127 = vmatprep.subr.bf16.mxu0 %v1574
      %2128 = vmatpush1.bf16.msra.mxu0 %v1573
      %2129 = vmatprep.subr.bf16.mxu0 %v1570
      %2130 = vmatpush1.bf16.msra.mxu0 %v1569
      %2131 = vmatprep.subr.bf16.mxu0 %v1566
      %2132 = vmatpush1.bf16.msra.mxu0 %v1565
      %2133 = vmatprep.subr.bf16.mxu0 %v1562
      %2134 = vmatpush1.bf16.msra.mxu0 %v1561
      %2135 = vmatprep.subr.bf16.mxu0 %v1558
      %2136 = vmatpush1.bf16.msra.mxu0 %v1557
      %2137 = vmatprep.subr.bf16.mxu0 %v1554
      %2138 = vmatpush1.bf16.msra.mxu0 %v1553
      %2139 = vmatprep.subr.bf16.mxu0 %v1550
      %2140 = vmatpush1.bf16.msra.mxu0 %v1549
      %2141 = vmatprep.subr.bf16.mxu0 %v1610
      %2142 = vmatpush2.bf16.msra.mxu0 %v1609
      %2143 = vmatprep.subr.bf16.mxu0 %v1606
      %2144 = vmatpush2.bf16.msra.mxu0 %v1605
      %2145 = vmatprep.subr.bf16.mxu0 %v1602
      %2146 = vmatpush2.bf16.msra.mxu0 %v1601
      %2147 = vmatprep.subr.bf16.mxu0 %v1598
      %2148 = vmatpush2.bf16.msra.mxu0 %v1597
      %2149 = vmatprep.subr.bf16.mxu0 %v1594
      %2150 = vmatpush2.bf16.msra.mxu0 %v1593
      %2151 = vmatprep.subr.bf16.mxu0 %v1590
      %2152 = vmatpush2.bf16.msra.mxu0 %v1589
      %2153 = vmatprep.subr.bf16.mxu0 %v1586
      %2154 = vmatpush2.bf16.msra.mxu0 %v1585
      %2155 = vmatprep.subr.bf16.mxu0 %v1582
      %2156 = vmatpush2.bf16.msra.mxu0 %v1581
      %2157 = vmatprep.mubr.bf16.mxu0 %v668
      %2158 = vmatmul.mubr.bf16.gmra.mxu0 %v667
      %v2159 = vpop.f32.mrf.mxu0
      %v2160 = vadd.f32 0.0, %v2159
      %v2161 = vpop.f32.mrf.mxu0
      %v2162 = vadd.f32 0.0, %v2161
      %v2163 = vpop.f32.mrf.mxu0
      %v2164 = vpop.f32.mrf.mxu0
      %2165 = vdwg.mxu0
      %2166 = vmatprep.subr.bf16.mxu0 %v1642
      %2167 = vmatpush1.bf16.msra.mxu0 %v1641
      %2168 = vmatprep.subr.bf16.mxu0 %v1638
      %2169 = vmatpush1.bf16.msra.mxu0 %v1637
      %2170 = vmatprep.subr.bf16.mxu0 %v1634
      %2171 = vmatpush1.bf16.msra.mxu0 %v1633
      %2172 = vmatprep.subr.bf16.mxu0 %v1630
      %2173 = vmatpush1.bf16.msra.mxu0 %v1629
      %2174 = vmatprep.subr.bf16.mxu0 %v1626
      %2175 = vmatpush1.bf16.msra.mxu0 %v1625
      %2176 = vmatprep.subr.bf16.mxu0 %v1622
      %2177 = vmatpush1.bf16.msra.mxu0 %v1621
      %2178 = vmatprep.subr.bf16.mxu0 %v1618
      %2179 = vmatpush1.bf16.msra.mxu0 %v1617
      %2180 = vmatprep.subr.bf16.mxu0 %v1614
      %2181 = vmatpush1.bf16.msra.mxu0 %v1613
      %2182 = vmatprep.subr.bf16.mxu0 %v1674
      %2183 = vmatpush2.bf16.msra.mxu0 %v1673
      %2184 = vmatprep.subr.bf16.mxu0 %v1670
      %2185 = vmatpush2.bf16.msra.mxu0 %v1669
      %2186 = vmatprep.subr.bf16.mxu0 %v1666
      %2187 = vmatpush2.bf16.msra.mxu0 %v1665
      %2188 = vmatprep.subr.bf16.mxu0 %v1662
      %2189 = vmatpush2.bf16.msra.mxu0 %v1661
      %2190 = vmatprep.subr.bf16.mxu0 %v1658
      %2191 = vmatpush2.bf16.msra.mxu0 %v1657
      %2192 = vmatprep.subr.bf16.mxu0 %v1654
      %2193 = vmatpush2.bf16.msra.mxu0 %v1653
      %2194 = vmatprep.subr.bf16.mxu0 %v1650
      %2195 = vmatpush2.bf16.msra.mxu0 %v1649
      %2196 = vmatprep.subr.bf16.mxu0 %v1646
      %2197 = vmatpush2.bf16.msra.mxu0 %v1645
      %2198 = vmatprep.mubr.bf16.mxu0 %v670
      %2199 = vmatmul.mubr.bf16.gmra.mxu0 %v669
      %v2200 = vpop.f32.mrf.mxu0
      %v2201 = vadd.f32 %v2160, %v2200
      %v2202 = vpop.f32.mrf.mxu0
      %v2203 = vadd.f32 %v2162, %v2202
      %v2204 = vpop.f32.mrf.mxu0
      %v2205 = vpop.f32.mrf.mxu0
      %2206 = vdwg.mxu0
      %2207 = vmatprep.subr.bf16.mxu0 %v1706
      %2208 = vmatpush1.bf16.msra.mxu0 %v1705
      %2209 = vmatprep.subr.bf16.mxu0 %v1702
      %2210 = vmatpush1.bf16.msra.mxu0 %v1701
      %2211 = vmatprep.subr.bf16.mxu0 %v1698
      %2212 = vmatpush1.bf16.msra.mxu0 %v1697
      %2213 = vmatprep.subr.bf16.mxu0 %v1694
      %2214 = vmatpush1.bf16.msra.mxu0 %v1693
      %2215 = vmatprep.subr.bf16.mxu0 %v1690
      %2216 = vmatpush1.bf16.msra.mxu0 %v1689
      %2217 = vmatprep.subr.bf16.mxu0 %v1686
      %2218 = vmatpush1.bf16.msra.mxu0 %v1685
      %2219 = vmatprep.subr.bf16.mxu0 %v1682
      %2220 = vmatpush1.bf16.msra.mxu0 %v1681
      %2221 = vmatprep.subr.bf16.mxu0 %v1678
      %2222 = vmatpush1.bf16.msra.mxu0 %v1677
      %2223 = vmatprep.subr.bf16.mxu0 %v1738
      %2224 = vmatpush2.bf16.msra.mxu0 %v1737
      %2225 = vmatprep.subr.bf16.mxu0 %v1734
      %2226 = vmatpush2.bf16.msra.mxu0 %v1733
      %2227 = vmatprep.subr.bf16.mxu0 %v1730
      %2228 = vmatpush2.bf16.msra.mxu0 %v1729
      %2229 = vmatprep.subr.bf16.mxu0 %v1726
      %2230 = vmatpush2.bf16.msra.mxu0 %v1725
      %2231 = vmatprep.subr.bf16.mxu0 %v1722
      %2232 = vmatpush2.bf16.msra.mxu0 %v1721
      %2233 = vmatprep.subr.bf16.mxu0 %v1718
      %2234 = vmatpush2.bf16.msra.mxu0 %v1717
      %2235 = vmatprep.subr.bf16.mxu0 %v1714
      %2236 = vmatpush2.bf16.msra.mxu0 %v1713
      %2237 = vmatprep.subr.bf16.mxu0 %v1710
      %2238 = vmatpush2.bf16.msra.mxu0 %v1709
      %2239 = vmatprep.mubr.bf16.mxu0 %v672
      %2240 = vmatmul.mubr.bf16.gmra.mxu0 %v671
      %v2241 = vpop.f32.mrf.mxu0
      %v2242 = vadd.f32 %v2201, %v2241
      %v2243 = vpop.f32.mrf.mxu0
      %v2244 = vadd.f32 %v2203, %v2243
      %v2245 = vpop.f32.mrf.mxu0
      %v2246 = vpop.f32.mrf.mxu0
      %2247 = vdwg.mxu0
      %2248 = vmatprep.subr.bf16.mxu0 %v1770
      %2249 = vmatpush1.bf16.msra.mxu0 %v1769
      %2250 = vmatprep.subr.bf16.mxu0 %v1766
      %2251 = vmatpush1.bf16.msra.mxu0 %v1765
      %2252 = vmatprep.subr.bf16.mxu0 %v1762
      %2253 = vmatpush1.bf16.msra.mxu0 %v1761
      %2254 = vmatprep.subr.bf16.mxu0 %v1758
      %2255 = vmatpush1.bf16.msra.mxu0 %v1757
      %2256 = vmatprep.subr.bf16.mxu0 %v1754
      %2257 = vmatpush1.bf16.msra.mxu0 %v1753
      %2258 = vmatprep.subr.bf16.mxu0 %v1750
      %2259 = vmatpush1.bf16.msra.mxu0 %v1749
      %2260 = vmatprep.subr.bf16.mxu0 %v1746
      %2261 = vmatpush1.bf16.msra.mxu0 %v1745
      %2262 = vmatprep.subr.bf16.mxu0 %v1742
      %2263 = vmatpush1.bf16.msra.mxu0 %v1741
      %2264 = vmatprep.subr.bf16.mxu0 %v1802
      %2265 = vmatpush2.bf16.msra.mxu0 %v1801
      %2266 = vmatprep.subr.bf16.mxu0 %v1798
      %2267 = vmatpush2.bf16.msra.mxu0 %v1797
      %2268 = vmatprep.subr.bf16.mxu0 %v1794
      %2269 = vmatpush2.bf16.msra.mxu0 %v1793
      %2270 = vmatprep.subr.bf16.mxu0 %v1790
      %2271 = vmatpush2.bf16.msra.mxu0 %v1789
      %2272 = vmatprep.subr.bf16.mxu0 %v1786
      %2273 = vmatpush2.bf16.msra.mxu0 %v1785
      %2274 = vmatprep.subr.bf16.mxu0 %v1782
      %2275 = vmatpush2.bf16.msra.mxu0 %v1781
      %2276 = vmatprep.subr.bf16.mxu0 %v1778
      %2277 = vmatpush2.bf16.msra.mxu0 %v1777
      %2278 = vmatprep.subr.bf16.mxu0 %v1774
      %2279 = vmatpush2.bf16.msra.mxu0 %v1773
      %2280 = vmatprep.mubr.bf16.mxu0 %v674
      %2281 = vmatmul.mubr.bf16.gmra.mxu0 %v673
      %v2282 = vpop.f32.mrf.mxu0
      %v2283 = vadd.f32 %v2242, %v2282
      %v2284 = vpop.f32.mrf.mxu0
      %v2285 = vadd.f32 %v2244, %v2284
      %v2286 = vpop.f32.mrf.mxu0
      %v2287 = vpop.f32.mrf.mxu0
      %2288 = vdwg.mxu0
      %2289 = vmatprep.subr.bf16.mxu0 %v1834
      %2290 = vmatpush1.bf16.msra.mxu0 %v1833
      %2291 = vmatprep.subr.bf16.mxu0 %v1830
      %2292 = vmatpush1.bf16.msra.mxu0 %v1829
      %2293 = vmatprep.subr.bf16.mxu0 %v1826
      %2294 = vmatpush1.bf16.msra.mxu0 %v1825
      %2295 = vmatprep.subr.bf16.mxu0 %v1822
      %2296 = vmatpush1.bf16.msra.mxu0 %v1821
      %2297 = vmatprep.subr.bf16.mxu0 %v1818
      %2298 = vmatpush1.bf16.msra.mxu0 %v1817
      %2299 = vmatprep.subr.bf16.mxu0 %v1814
      %2300 = vmatpush1.bf16.msra.mxu0 %v1813
      %2301 = vmatprep.subr.bf16.mxu0 %v1810
      %2302 = vmatpush1.bf16.msra.mxu0 %v1809
      %2303 = vmatprep.subr.bf16.mxu0 %v1806
      %2304 = vmatpush1.bf16.msra.mxu0 %v1805
      %2305 = vmatprep.subr.bf16.mxu0 0
      %2306 = vmatpush2.bf16.msra.mxu0 0
      %2307 = vmatprep.subr.bf16.mxu0 0
      %2308 = vmatpush2.bf16.msra.mxu0 0
      %2309 = vmatprep.subr.bf16.mxu0 0
      %2310 = vmatpush2.bf16.msra.mxu0 0
      %2311 = vmatprep.subr.bf16.mxu0 0
      %2312 = vmatpush2.bf16.msra.mxu0 0
      %2313 = vmatprep.subr.bf16.mxu0 0
      %2314 = vmatpush2.bf16.msra.mxu0 0
      %2315 = vmatprep.subr.bf16.mxu0 0
      %2316 = vmatpush2.bf16.msra.mxu0 0
      %2317 = vmatprep.subr.bf16.mxu0 0
      %2318 = vmatpush2.bf16.msra.mxu0 0
      %2319 = vmatprep.subr.bf16.mxu0 0
      %2320 = vmatpush2.bf16.msra.mxu0 0
      %2321 = vmatprep.mubr.bf16.mxu0 0
      %2322 = vmatmul.mubr.bf16.gmra.mxu0 %v675
      %v2323 = vpop.f32.mrf.mxu0
      %v2324 = vadd.f32 %v2283, %v2323
      %v2325 = vpop.f32.mrf.mxu0
      %v2326 = vadd.f32 %v2285, %v2325
      %v2327 = vpop.f32.mrf.mxu0
      %v2328 = vpop.f32.mrf.mxu0
      %2329 = vdwg.mxu0
      %2330 = vmatprep.subr.bf16.mxu0 %v1580
      %2331 = vmatpush1.bf16.msra.mxu0 %v1579
      %2332 = vmatprep.subr.bf16.mxu0 %v1576
      %2333 = vmatpush1.bf16.msra.mxu0 %v1575
      %2334 = vmatprep.subr.bf16.mxu0 %v1572
      %2335 = vmatpush1.bf16.msra.mxu0 %v1571
      %2336 = vmatprep.subr.bf16.mxu0 %v1568
      %2337 = vmatpush1.bf16.msra.mxu0 %v1567
      %2338 = vmatprep.subr.bf16.mxu0 %v1564
      %2339 = vmatpush1.bf16.msra.mxu0 %v1563
      %2340 = vmatprep.subr.bf16.mxu0 %v1560
      %2341 = vmatpush1.bf16.msra.mxu0 %v1559
      %2342 = vmatprep.subr.bf16.mxu0 %v1556
      %2343 = vmatpush1.bf16.msra.mxu0 %v1555
      %2344 = vmatprep.subr.bf16.mxu0 %v1552
      %2345 = vmatpush1.bf16.msra.mxu0 %v1551
      %2346 = vmatprep.subr.bf16.mxu0 %v1612
      %2347 = vmatpush2.bf16.msra.mxu0 %v1611
      %2348 = vmatprep.subr.bf16.mxu0 %v1608
      %2349 = vmatpush2.bf16.msra.mxu0 %v1607
      %2350 = vmatprep.subr.bf16.mxu0 %v1604
      %2351 = vmatpush2.bf16.msra.mxu0 %v1603
      %2352 = vmatprep.subr.bf16.mxu0 %v1600
      %2353 = vmatpush2.bf16.msra.mxu0 %v1599
      %2354 = vmatprep.subr.bf16.mxu0 %v1596
      %2355 = vmatpush2.bf16.msra.mxu0 %v1595
      %2356 = vmatprep.subr.bf16.mxu0 %v1592
      %2357 = vmatpush2.bf16.msra.mxu0 %v1591
      %2358 = vmatprep.subr.bf16.mxu0 %v1588
      %2359 = vmatpush2.bf16.msra.mxu0 %v1587
      %2360 = vmatprep.subr.bf16.mxu0 %v1584
      %2361 = vmatpush2.bf16.msra.mxu0 %v1583
      %2362 = vmatprep.mubr.bf16.mxu0 %v668
      %2363 = vmatmul.mubr.bf16.gmra.mxu0 %v667
      %v2364 = vpop.f32.mrf.mxu0
      %v2365 = vadd.f32 0.0, %v2364
      %v2366 = vpop.f32.mrf.mxu0
      %v2367 = vadd.f32 0.0, %v2366
      %v2368 = vpop.f32.mrf.mxu0
      %v2369 = vpop.f32.mrf.mxu0
      %2370 = vdwg.mxu0
      %2371 = vmatprep.subr.bf16.mxu0 %v1644
      %2372 = vmatpush1.bf16.msra.mxu0 %v1643
      %2373 = vmatprep.subr.bf16.mxu0 %v1640
      %2374 = vmatpush1.bf16.msra.mxu0 %v1639
      %2375 = vmatprep.subr.bf16.mxu0 %v1636
      %2376 = vmatpush1.bf16.msra.mxu0 %v1635
      %2377 = vmatprep.subr.bf16.mxu0 %v1632
      %2378 = vmatpush1.bf16.msra.mxu0 %v1631
      %2379 = vmatprep.subr.bf16.mxu0 %v1628
      %2380 = vmatpush1.bf16.msra.mxu0 %v1627
      %2381 = vmatprep.subr.bf16.mxu0 %v1624
      %2382 = vmatpush1.bf16.msra.mxu0 %v1623
      %2383 = vmatprep.subr.bf16.mxu0 %v1620
      %2384 = vmatpush1.bf16.msra.mxu0 %v1619
      %2385 = vmatprep.subr.bf16.mxu0 %v1616
      %2386 = vmatpush1.bf16.msra.mxu0 %v1615
      %2387 = vmatprep.subr.bf16.mxu0 %v1676
      %2388 = vmatpush2.bf16.msra.mxu0 %v1675
      %2389 = vmatprep.subr.bf16.mxu0 %v1672
      %2390 = vmatpush2.bf16.msra.mxu0 %v1671
      %2391 = vmatprep.subr.bf16.mxu0 %v1668
      %2392 = vmatpush2.bf16.msra.mxu0 %v1667
      %2393 = vmatprep.subr.bf16.mxu0 %v1664
      %2394 = vmatpush2.bf16.msra.mxu0 %v1663
      %2395 = vmatprep.subr.bf16.mxu0 %v1660
      %2396 = vmatpush2.bf16.msra.mxu0 %v1659
      %2397 = vmatprep.subr.bf16.mxu0 %v1656
      %2398 = vmatpush2.bf16.msra.mxu0 %v1655
      %2399 = vmatprep.subr.bf16.mxu0 %v1652
      %2400 = vmatpush2.bf16.msra.mxu0 %v1651
      %2401 = vmatprep.subr.bf16.mxu0 %v1648
      %2402 = vmatpush2.bf16.msra.mxu0 %v1647
      %2403 = vmatprep.mubr.bf16.mxu0 %v670
      %2404 = vmatmul.mubr.bf16.gmra.mxu0 %v669
      %v2405 = vpop.f32.mrf.mxu0
      %v2406 = vadd.f32 %v2365, %v2405
      %v2407 = vpop.f32.mrf.mxu0
      %v2408 = vadd.f32 %v2367, %v2407
      %v2409 = vpop.f32.mrf.mxu0
      %v2410 = vpop.f32.mrf.mxu0
      %2411 = vdwg.mxu0
      %2412 = vmatprep.subr.bf16.mxu0 %v1708
      %2413 = vmatpush1.bf16.msra.mxu0 %v1707
      %2414 = vmatprep.subr.bf16.mxu0 %v1704
      %2415 = vmatpush1.bf16.msra.mxu0 %v1703
      %2416 = vmatprep.subr.bf16.mxu0 %v1700
      %2417 = vmatpush1.bf16.msra.mxu0 %v1699
      %2418 = vmatprep.subr.bf16.mxu0 %v1696
      %2419 = vmatpush1.bf16.msra.mxu0 %v1695
      %2420 = vmatprep.subr.bf16.mxu0 %v1692
      %2421 = vmatpush1.bf16.msra.mxu0 %v1691
      %2422 = vmatprep.subr.bf16.mxu0 %v1688
      %2423 = vmatpush1.bf16.msra.mxu0 %v1687
      %2424 = vmatprep.subr.bf16.mxu0 %v1684
      %2425 = vmatpush1.bf16.msra.mxu0 %v1683
      %2426 = vmatprep.subr.bf16.mxu0 %v1680
      %2427 = vmatpush1.bf16.msra.mxu0 %v1679
      %2428 = vmatprep.subr.bf16.mxu0 %v1740
      %2429 = vmatpush2.bf16.msra.mxu0 %v1739
      %2430 = vmatprep.subr.bf16.mxu0 %v1736
      %2431 = vmatpush2.bf16.msra.mxu0 %v1735
      %2432 = vmatprep.subr.bf16.mxu0 %v1732
      %2433 = vmatpush2.bf16.msra.mxu0 %v1731
      %2434 = vmatprep.subr.bf16.mxu0 %v1728
      %2435 = vmatpush2.bf16.msra.mxu0 %v1727
      %2436 = vmatprep.subr.bf16.mxu0 %v1724
      %2437 = vmatpush2.bf16.msra.mxu0 %v1723
      %2438 = vmatprep.subr.bf16.mxu0 %v1720
      %2439 = vmatpush2.bf16.msra.mxu0 %v1719
      %2440 = vmatprep.subr.bf16.mxu0 %v1716
      %2441 = vmatpush2.bf16.msra.mxu0 %v1715
      %2442 = vmatprep.subr.bf16.mxu0 %v1712
      %2443 = vmatpush2.bf16.msra.mxu0 %v1711
      %2444 = vmatprep.mubr.bf16.mxu0 %v672
      %2445 = vmatmul.mubr.bf16.gmra.mxu0 %v671
      %v2446 = vpop.f32.mrf.mxu0
      %v2447 = vadd.f32 %v2406, %v2446
      %v2448 = vpop.f32.mrf.mxu0
      %v2449 = vadd.f32 %v2408, %v2448
      %v2450 = vpop.f32.mrf.mxu0
      %v2451 = vpop.f32.mrf.mxu0
      %2452 = vdwg.mxu0
      %2453 = vmatprep.subr.bf16.mxu0 %v1772
      %2454 = vmatpush1.bf16.msra.mxu0 %v1771
      %2455 = vmatprep.subr.bf16.mxu0 %v1768
      %2456 = vmatpush1.bf16.msra.mxu0 %v1767
      %2457 = vmatprep.subr.bf16.mxu0 %v1764
      %2458 = vmatpush1.bf16.msra.mxu0 %v1763
      %2459 = vmatprep.subr.bf16.mxu0 %v1760
      %2460 = vmatpush1.bf16.msra.mxu0 %v1759
      %2461 = vmatprep.subr.bf16.mxu0 %v1756
      %2462 = vmatpush1.bf16.msra.mxu0 %v1755
      %2463 = vmatprep.subr.bf16.mxu0 %v1752
      %2464 = vmatpush1.bf16.msra.mxu0 %v1751
      %2465 = vmatprep.subr.bf16.mxu0 %v1748
      %2466 = vmatpush1.bf16.msra.mxu0 %v1747
      %2467 = vmatprep.subr.bf16.mxu0 %v1744
      %2468 = vmatpush1.bf16.msra.mxu0 %v1743
      %2469 = vmatprep.subr.bf16.mxu0 %v1804
      %2470 = vmatpush2.bf16.msra.mxu0 %v1803
      %2471 = vmatprep.subr.bf16.mxu0 %v1800
      %2472 = vmatpush2.bf16.msra.mxu0 %v1799
      %2473 = vmatprep.subr.bf16.mxu0 %v1796
      %2474 = vmatpush2.bf16.msra.mxu0 %v1795
      %2475 = vmatprep.subr.bf16.mxu0 %v1792
      %2476 = vmatpush2.bf16.msra.mxu0 %v1791
      %2477 = vmatprep.subr.bf16.mxu0 %v1788
      %2478 = vmatpush2.bf16.msra.mxu0 %v1787
      %2479 = vmatprep.subr.bf16.mxu0 %v1784
      %2480 = vmatpush2.bf16.msra.mxu0 %v1783
      %2481 = vmatprep.subr.bf16.mxu0 %v1780
      %2482 = vmatpush2.bf16.msra.mxu0 %v1779
      %2483 = vmatprep.subr.bf16.mxu0 %v1776
      %2484 = vmatpush2.bf16.msra.mxu0 %v1775
      %2485 = vmatprep.mubr.bf16.mxu0 %v674
      %2486 = vmatmul.mubr.bf16.gmra.mxu0 %v673
      %v2487 = vpop.f32.mrf.mxu0
      %v2488 = vadd.f32 %v2447, %v2487
      %v2489 = vpop.f32.mrf.mxu0
      %v2490 = vadd.f32 %v2449, %v2489
      %v2491 = vpop.f32.mrf.mxu0
      %v2492 = vpop.f32.mrf.mxu0
      %2493 = vdwg.mxu0
      %2494 = vmatprep.subr.bf16.mxu0 %v1836
      %2495 = vmatpush1.bf16.msra.mxu0 %v1835
      %2496 = vmatprep.subr.bf16.mxu0 %v1832
      %2497 = vmatpush1.bf16.msra.mxu0 %v1831
      %2498 = vmatprep.subr.bf16.mxu0 %v1828
      %2499 = vmatpush1.bf16.msra.mxu0 %v1827
      %2500 = vmatprep.subr.bf16.mxu0 %v1824
      %2501 = vmatpush1.bf16.msra.mxu0 %v1823
      %2502 = vmatprep.subr.bf16.mxu0 %v1820
      %2503 = vmatpush1.bf16.msra.mxu0 %v1819
      %2504 = vmatprep.subr.bf16.mxu0 %v1816
      %2505 = vmatpush1.bf16.msra.mxu0 %v1815
      %2506 = vmatprep.subr.bf16.mxu0 %v1812
      %2507 = vmatpush1.bf16.msra.mxu0 %v1811
      %2508 = vmatprep.subr.bf16.mxu0 %v1808
      %2509 = vmatpush1.bf16.msra.mxu0 %v1807
      %2510 = vmatprep.subr.bf16.mxu0 0
      %2511 = vmatpush2.bf16.msra.mxu0 0
      %2512 = vmatprep.subr.bf16.mxu0 0
      %2513 = vmatpush2.bf16.msra.mxu0 0
      %2514 = vmatprep.subr.bf16.mxu0 0
      %2515 = vmatpush2.bf16.msra.mxu0 0
      %2516 = vmatprep.subr.bf16.mxu0 0
      %2517 = vmatpush2.bf16.msra.mxu0 0
      %2518 = vmatprep.subr.bf16.mxu0 0
      %2519 = vmatpush2.bf16.msra.mxu0 0
      %2520 = vmatprep.subr.bf16.mxu0 0
      %2521 = vmatpush2.bf16.msra.mxu0 0
      %2522 = vmatprep.subr.bf16.mxu0 0
      %2523 = vmatpush2.bf16.msra.mxu0 0
      %2524 = vmatprep.subr.bf16.mxu0 0
      %2525 = vmatpush2.bf16.msra.mxu0 0
      %2526 = vmatprep.mubr.bf16.mxu0 0
      %2527 = vmatmul.mubr.bf16.gmra.mxu0 %v675
      %v2528 = vpop.f32.mrf.mxu0
      %v2529 = vadd.f32 %v2488, %v2528
      %v2530 = vpop.f32.mrf.mxu0
      %v2531 = vadd.f32 %v2490, %v2530
      %v2532 = vpop.f32.mrf.mxu0
      %v2533 = vpop.f32.mrf.mxu0
      %2534 = vdwg.mxu0
      %v2535 = vadd.f32 %v356, %v2324
      %v2536 = vadd.f32 %v357, %v2326
      %v2537 = vadd.f32 %v358, %v2529
      %v2538 = vadd.f32 %v359, %v2531
      %2539 = vst [vmem:[#allocation2] sm:$0xff] %v2535
      %2540 = vst [vmem:[#allocation2 + $0x8] sm:$0xff] %v2536
      %2541 = vst [vmem:[#allocation2 + $0x10] sm:$0xff] %v2537
      %2542 = vst [vmem:[#allocation2 + $0x18] sm:$0xff] %v2538
      %p2543 = scmp.eq.s32.totalorder %s22, 7
      // Predicated region
      $region61: #{mil_forward.10} parent=55 // pred_check
        %p2544 = pneg %p2543
      $region62: #{mil_forward.10} parent=55 // pred_check_branch
        %2546 = sbr.rel (%p2544) target = $region64
      $region63: #{mil_forward.10} parent=55 // pred_region
        %v2547 = vld [vmem:[#allocation2] sm:$0xff]
        %v2548 = vld [vmem:[#allocation2 + $0x8] sm:$0xff]
        %v2549 = vld [vmem:[#allocation2 + $0x10] sm:$0xff]
        %v2550 = vld [vmem:[#allocation2 + $0x18] sm:$0xff]
        %v2551 = vld [vmem:[%s2] sm:$0xf]
        %v2553 = vlaneseq
        %v2554 = vshrl.u32 %v2553, 7
        %v2555 = vsub.s32 0, %v2554
        %v2556 = vrot.slane %v2551, %v2555
        %v2557 = vlaneseq
        %v2558 = vshrl.u32 %v2557, 7
        %v2559 = vsub.s32 1, %v2558
        %v2560 = vrot.slane %v2551, %v2559
        %v2561 = vlaneseq
        %v2562 = vshrl.u32 %v2561, 7
        %v2563 = vsub.s32 2, %v2562
        %v2564 = vrot.slane %v2551, %v2563
        %v2565 = vlaneseq
        %v2566 = vshrl.u32 %v2565, 7
        %v2567 = vsub.s32 3, %v2566
        %v2568 = vrot.slane %v2551, %v2567
        %v2573 = vadd.f32 %v2547, %v2556
        %v2574 = vadd.f32 %v2548, %v2560
        %v2575 = vadd.f32 %v2549, %v2564
        %v2576 = vadd.f32 %v2550, %v2568
        %v2577 = vmax.f32 %v2573, 0.0
        %v2578 = vmax.f32 %v2574, 0.0
        %v2579 = vmax.f32 %v2575, 0.0
        %v2580 = vmax.f32 %v2576, 0.0
        %v2581 = vpack.c.bf16 %v2577, %v2577
        %v2582 = vpack.c.bf16 %v2578, %v2578
        %v2583 = vpack.c.bf16 %v2579, %v2579
        %v2584 = vpack.c.bf16 %v2580, %v2580
        %v2585 = vld [vmem:[%s3] sm:$0xff]
        %v2586 = vld [vmem:[%s3 + $0x8] sm:$0xff]
        %v2587 = vld [vmem:[%s3 + $0x10] sm:$0xff]
        %v2588 = vld [vmem:[%s3 + $0x18] sm:$0xff]
        %v2589 = vld [vmem:[%s3 + $0x20] sm:$0xff]
        %v2590 = vld [vmem:[%s3 + $0x28] sm:$0xff]
        %v2591 = vld [vmem:[%s3 + $0x30] sm:$0xff]
        %v2592 = vld [vmem:[%s3 + $0x38] sm:$0xff]
        %v2593 = vld [vmem:[%s3 + $0x40] sm:$0xff]
        %v2594 = vld [vmem:[%s3 + $0x48] sm:$0xff]
        %v2595 = vld [vmem:[%s3 + $0x50] sm:$0xff]
        %v2596 = vld [vmem:[%s3 + $0x58] sm:$0xff]
        %v2597 = vld [vmem:[%s3 + $0x60] sm:$0xff]
        %v2598 = vld [vmem:[%s3 + $0x68] sm:$0xff]
        %v2599 = vld [vmem:[%s3 + $0x70] sm:$0xff]
        %v2600 = vld [vmem:[%s3 + $0x78] sm:$0xff]
        %v2601 = vld [vmem:[%s3 + $0x80] sm:$0xff]
        %v2602 = vld [vmem:[%s3 + $0x88] sm:$0xff]
        %v2603 = vld [vmem:[%s3 + $0x90] sm:$0xff]
        %v2604 = vld [vmem:[%s3 + $0x98] sm:$0xff]
        %v2605 = vld [vmem:[%s3 + $0xa0] sm:$0xff]
        %v2606 = vld [vmem:[%s3 + $0xa8] sm:$0xff]
        %v2607 = vld [vmem:[%s3 + $0xb0] sm:$0xff]
        %v2608 = vld [vmem:[%s3 + $0xb8] sm:$0xff]
        %v2609 = vld [vmem:[%s3 + $0xc0] sm:$0xff]
        %v2610 = vld [vmem:[%s3 + $0xc8] sm:$0xff]
        %v2611 = vld [vmem:[%s3 + $0xd0] sm:$0xff]
        %v2612 = vld [vmem:[%s3 + $0xd8] sm:$0xff]
        %v2613 = vld [vmem:[%s3 + $0xe0] sm:$0xff]
        %v2614 = vld [vmem:[%s3 + $0xe8] sm:$0xff]
        %v2615 = vld [vmem:[%s3 + $0xf0] sm:$0xff]
        %v2616 = vld [vmem:[%s3 + $0xf8] sm:$0xff]
        %v2617 = vld [vmem:[%s3 + $0x100] sm:$0xff]
        %v2618 = vld [vmem:[%s3 + $0x108] sm:$0xff]
        %v2619 = vld [vmem:[%s3 + $0x110] sm:$0xff]
        %v2620 = vld [vmem:[%s3 + $0x118] sm:$0xff]
        %v2621 = vld [vmem:[%s3 + $0x120] sm:$0xff]
        %v2622 = vld [vmem:[%s3 + $0x128] sm:$0xff]
        %v2623 = vld [vmem:[%s3 + $0x130] sm:$0xff]
        %v2624 = vld [vmem:[%s3 + $0x138] sm:$0xff]
        %v2625 = vld [vmem:[%s3 + $0x140] sm:$0xff]
        %v2626 = vld [vmem:[%s3 + $0x148] sm:$0xff]
        %v2627 = vld [vmem:[%s3 + $0x150] sm:$0xff]
        %v2628 = vld [vmem:[%s3 + $0x158] sm:$0xff]
        %v2629 = vld [vmem:[%s3 + $0x160] sm:$0xff]
        %v2630 = vld [vmem:[%s3 + $0x168] sm:$0xff]
        %v2631 = vld [vmem:[%s3 + $0x170] sm:$0xff]
        %v2632 = vld [vmem:[%s3 + $0x178] sm:$0xff]
        %v2633 = vld [vmem:[%s3 + $0x180] sm:$0xff]
        %v2634 = vld [vmem:[%s3 + $0x188] sm:$0xff]
        %v2635 = vld [vmem:[%s3 + $0x190] sm:$0xff]
        %v2636 = vld [vmem:[%s3 + $0x198] sm:$0xff]
        %v2637 = vld [vmem:[%s3 + $0x1a0] sm:$0xff]
        %v2638 = vld [vmem:[%s3 + $0x1a8] sm:$0xff]
        %v2639 = vld [vmem:[%s3 + $0x1b0] sm:$0xff]
        %v2640 = vld [vmem:[%s3 + $0x1b8] sm:$0xff]
        %v2641 = vld [vmem:[%s3 + $0x1c0] sm:$0xff]
        %v2642 = vld [vmem:[%s3 + $0x1c8] sm:$0xff]
        %v2643 = vld [vmem:[%s3 + $0x1d0] sm:$0xff]
        %v2644 = vld [vmem:[%s3 + $0x1d8] sm:$0xff]
        %v2645 = vld [vmem:[%s3 + $0x1e0] sm:$0xff]
        %v2646 = vld [vmem:[%s3 + $0x1e8] sm:$0xff]
        %v2647 = vld [vmem:[%s3 + $0x1f0] sm:$0xff]
        %v2648 = vld [vmem:[%s3 + $0x1f8] sm:$0xff]
        %v2649 = vld [vmem:[%s4] sm:$0x3]
        %v2651 = vlaneseq
        %v2652 = vshrl.u32 %v2651, 7
        %v2653 = vsub.s32 0, %v2652
        %v2654 = vrot.slane %v2649, %v2653
        %v2655 = vlaneseq
        %v2656 = vshrl.u32 %v2655, 7
        %v2657 = vsub.s32 1, %v2656
        %v2658 = vrot.slane %v2649, %v2657
        %v2725 = vunpack.c.l.b16 %v2585
        %v2726 = vunpack.c.h.b16 %v2585
        %v2727 = vunpack.c.l.b16 %v2586
        %v2728 = vunpack.c.h.b16 %v2586
        %v2729 = vunpack.c.l.b16 %v2587
        %v2730 = vunpack.c.h.b16 %v2587
        %v2731 = vunpack.c.l.b16 %v2588
        %v2732 = vunpack.c.h.b16 %v2588
        %v2733 = vunpack.c.l.b16 %v2589
        %v2734 = vunpack.c.h.b16 %v2589
        %v2735 = vunpack.c.l.b16 %v2590
        %v2736 = vunpack.c.h.b16 %v2590
        %v2737 = vunpack.c.l.b16 %v2591
        %v2738 = vunpack.c.h.b16 %v2591
        %v2739 = vunpack.c.l.b16 %v2592
        %v2740 = vunpack.c.h.b16 %v2592
        %v2741 = vunpack.c.l.b16 %v2593
        %v2742 = vunpack.c.h.b16 %v2593
        %v2743 = vunpack.c.l.b16 %v2594
        %v2744 = vunpack.c.h.b16 %v2594
        %v2745 = vunpack.c.l.b16 %v2595
        %v2746 = vunpack.c.h.b16 %v2595
        %v2747 = vunpack.c.l.b16 %v2596
        %v2748 = vunpack.c.h.b16 %v2596
        %v2749 = vunpack.c.l.b16 %v2597
        %v2750 = vunpack.c.h.b16 %v2597
        %v2751 = vunpack.c.l.b16 %v2598
        %v2752 = vunpack.c.h.b16 %v2598
        %v2753 = vunpack.c.l.b16 %v2599
        %v2754 = vunpack.c.h.b16 %v2599
        %v2755 = vunpack.c.l.b16 %v2600
        %v2756 = vunpack.c.h.b16 %v2600
        %v2757 = vunpack.c.l.b16 %v2601
        %v2758 = vunpack.c.h.b16 %v2601
        %v2759 = vunpack.c.l.b16 %v2602
        %v2760 = vunpack.c.h.b16 %v2602
        %v2761 = vunpack.c.l.b16 %v2603
        %v2762 = vunpack.c.h.b16 %v2603
        %v2763 = vunpack.c.l.b16 %v2604
        %v2764 = vunpack.c.h.b16 %v2604
        %v2765 = vunpack.c.l.b16 %v2605
        %v2766 = vunpack.c.h.b16 %v2605
        %v2767 = vunpack.c.l.b16 %v2606
        %v2768 = vunpack.c.h.b16 %v2606
        %v2769 = vunpack.c.l.b16 %v2607
        %v2770 = vunpack.c.h.b16 %v2607
        %v2771 = vunpack.c.l.b16 %v2608
        %v2772 = vunpack.c.h.b16 %v2608
        %v2773 = vunpack.c.l.b16 %v2609
        %v2774 = vunpack.c.h.b16 %v2609
        %v2775 = vunpack.c.l.b16 %v2610
        %v2776 = vunpack.c.h.b16 %v2610
        %v2777 = vunpack.c.l.b16 %v2611
        %v2778 = vunpack.c.h.b16 %v2611
        %v2779 = vunpack.c.l.b16 %v2612
        %v2780 = vunpack.c.h.b16 %v2612
        %v2781 = vunpack.c.l.b16 %v2613
        %v2782 = vunpack.c.h.b16 %v2613
        %v2783 = vunpack.c.l.b16 %v2614
        %v2784 = vunpack.c.h.b16 %v2614
        %v2785 = vunpack.c.l.b16 %v2615
        %v2786 = vunpack.c.h.b16 %v2615
        %v2787 = vunpack.c.l.b16 %v2616
        %v2788 = vunpack.c.h.b16 %v2616
        %v2789 = vunpack.c.l.b16 %v2617
        %v2790 = vunpack.c.h.b16 %v2617
        %v2791 = vunpack.c.l.b16 %v2618
        %v2792 = vunpack.c.h.b16 %v2618
        %v2793 = vunpack.c.l.b16 %v2619
        %v2794 = vunpack.c.h.b16 %v2619
        %v2795 = vunpack.c.l.b16 %v2620
        %v2796 = vunpack.c.h.b16 %v2620
        %v2797 = vunpack.c.l.b16 %v2621
        %v2798 = vunpack.c.h.b16 %v2621
        %v2799 = vunpack.c.l.b16 %v2622
        %v2800 = vunpack.c.h.b16 %v2622
        %v2801 = vunpack.c.l.b16 %v2623
        %v2802 = vunpack.c.h.b16 %v2623
        %v2803 = vunpack.c.l.b16 %v2624
        %v2804 = vunpack.c.h.b16 %v2624
        %v2805 = vunpack.c.l.b16 %v2625
        %v2806 = vunpack.c.h.b16 %v2625
        %v2807 = vunpack.c.l.b16 %v2626
        %v2808 = vunpack.c.h.b16 %v2626
        %v2809 = vunpack.c.l.b16 %v2627
        %v2810 = vunpack.c.h.b16 %v2627
        %v2811 = vunpack.c.l.b16 %v2628
        %v2812 = vunpack.c.h.b16 %v2628
        %v2813 = vunpack.c.l.b16 %v2629
        %v2814 = vunpack.c.h.b16 %v2629
        %v2815 = vunpack.c.l.b16 %v2630
        %v2816 = vunpack.c.h.b16 %v2630
        %v2817 = vunpack.c.l.b16 %v2631
        %v2818 = vunpack.c.h.b16 %v2631
        %v2819 = vunpack.c.l.b16 %v2632
        %v2820 = vunpack.c.h.b16 %v2632
        %v2821 = vunpack.c.l.b16 %v2633
        %v2822 = vunpack.c.h.b16 %v2633
        %v2823 = vunpack.c.l.b16 %v2634
        %v2824 = vunpack.c.h.b16 %v2634
        %v2825 = vunpack.c.l.b16 %v2635
        %v2826 = vunpack.c.h.b16 %v2635
        %v2827 = vunpack.c.l.b16 %v2636
        %v2828 = vunpack.c.h.b16 %v2636
        %v2829 = vunpack.c.l.b16 %v2637
        %v2830 = vunpack.c.h.b16 %v2637
        %v2831 = vunpack.c.l.b16 %v2638
        %v2832 = vunpack.c.h.b16 %v2638
        %v2833 = vunpack.c.l.b16 %v2639
        %v2834 = vunpack.c.h.b16 %v2639
        %v2835 = vunpack.c.l.b16 %v2640
        %v2836 = vunpack.c.h.b16 %v2640
        %v2837 = vunpack.c.l.b16 %v2641
        %v2838 = vunpack.c.h.b16 %v2641
        %v2839 = vunpack.c.l.b16 %v2642
        %v2840 = vunpack.c.h.b16 %v2642
        %v2841 = vunpack.c.l.b16 %v2643
        %v2842 = vunpack.c.h.b16 %v2643
        %v2843 = vunpack.c.l.b16 %v2644
        %v2844 = vunpack.c.h.b16 %v2644
        %v2845 = vunpack.c.l.b16 %v2645
        %v2846 = vunpack.c.h.b16 %v2645
        %v2847 = vunpack.c.l.b16 %v2646
        %v2848 = vunpack.c.h.b16 %v2646
        %v2849 = vunpack.c.l.b16 %v2647
        %v2850 = vunpack.c.h.b16 %v2647
        %v2851 = vunpack.c.l.b16 %v2648
        %v2852 = vunpack.c.h.b16 %v2648
        %v2853 = vpack.c.b16 %v2727, %v2725
        %v2854 = vpack.c.b16 %v2728, %v2726
        %v2855 = vpack.c.b16 %v2731, %v2729
        %v2856 = vpack.c.b16 %v2732, %v2730
        %v2857 = vpack.c.b16 %v2735, %v2733
        %v2858 = vpack.c.b16 %v2736, %v2734
        %v2859 = vpack.c.b16 %v2739, %v2737
        %v2860 = vpack.c.b16 %v2740, %v2738
        %v2861 = vpack.c.b16 %v2743, %v2741
        %v2862 = vpack.c.b16 %v2744, %v2742
        %v2863 = vpack.c.b16 %v2747, %v2745
        %v2864 = vpack.c.b16 %v2748, %v2746
        %v2865 = vpack.c.b16 %v2751, %v2749
        %v2866 = vpack.c.b16 %v2752, %v2750
        %v2867 = vpack.c.b16 %v2755, %v2753
        %v2868 = vpack.c.b16 %v2756, %v2754
        %v2869 = vpack.c.b16 %v2759, %v2757
        %v2870 = vpack.c.b16 %v2760, %v2758
        %v2871 = vpack.c.b16 %v2763, %v2761
        %v2872 = vpack.c.b16 %v2764, %v2762
        %v2873 = vpack.c.b16 %v2767, %v2765
        %v2874 = vpack.c.b16 %v2768, %v2766
        %v2875 = vpack.c.b16 %v2771, %v2769
        %v2876 = vpack.c.b16 %v2772, %v2770
        %v2877 = vpack.c.b16 %v2775, %v2773
        %v2878 = vpack.c.b16 %v2776, %v2774
        %v2879 = vpack.c.b16 %v2779, %v2777
        %v2880 = vpack.c.b16 %v2780, %v2778
        %v2881 = vpack.c.b16 %v2783, %v2781
        %v2882 = vpack.c.b16 %v2784, %v2782
        %v2883 = vpack.c.b16 %v2787, %v2785
        %v2884 = vpack.c.b16 %v2788, %v2786
        %v2885 = vpack.c.b16 %v2791, %v2789
        %v2886 = vpack.c.b16 %v2792, %v2790
        %v2887 = vpack.c.b16 %v2795, %v2793
        %v2888 = vpack.c.b16 %v2796, %v2794
        %v2889 = vpack.c.b16 %v2799, %v2797
        %v2890 = vpack.c.b16 %v2800, %v2798
        %v2891 = vpack.c.b16 %v2803, %v2801
        %v2892 = vpack.c.b16 %v2804, %v2802
        %v2893 = vpack.c.b16 %v2807, %v2805
        %v2894 = vpack.c.b16 %v2808, %v2806
        %v2895 = vpack.c.b16 %v2811, %v2809
        %v2896 = vpack.c.b16 %v2812, %v2810
        %v2897 = vpack.c.b16 %v2815, %v2813
        %v2898 = vpack.c.b16 %v2816, %v2814
        %v2899 = vpack.c.b16 %v2819, %v2817
        %v2900 = vpack.c.b16 %v2820, %v2818
        %v2901 = vpack.c.b16 %v2823, %v2821
        %v2902 = vpack.c.b16 %v2824, %v2822
        %v2903 = vpack.c.b16 %v2827, %v2825
        %v2904 = vpack.c.b16 %v2828, %v2826
        %v2905 = vpack.c.b16 %v2831, %v2829
        %v2906 = vpack.c.b16 %v2832, %v2830
        %v2907 = vpack.c.b16 %v2835, %v2833
        %v2908 = vpack.c.b16 %v2836, %v2834
        %v2909 = vpack.c.b16 %v2839, %v2837
        %v2910 = vpack.c.b16 %v2840, %v2838
        %v2911 = vpack.c.b16 %v2843, %v2841
        %v2912 = vpack.c.b16 %v2844, %v2842
        %v2913 = vpack.c.b16 %v2847, %v2845
        %v2914 = vpack.c.b16 %v2848, %v2846
        %v2915 = vpack.c.b16 %v2851, %v2849
        %v2916 = vpack.c.b16 %v2852, %v2850
        %2981 = vmatprep.subr.bf16.mxu0 %v2868
        %2982 = vmatpush1.bf16.msra.mxu0 %v2867
        %2983 = vmatprep.subr.bf16.mxu0 %v2866
        %2984 = vmatpush1.bf16.msra.mxu0 %v2865
        %2985 = vmatprep.subr.bf16.mxu0 %v2864
        %2986 = vmatpush1.bf16.msra.mxu0 %v2863
        %2987 = vmatprep.subr.bf16.mxu0 %v2862
        %2988 = vmatpush1.bf16.msra.mxu0 %v2861
        %2989 = vmatprep.subr.bf16.mxu0 %v2860
        %2990 = vmatpush1.bf16.msra.mxu0 %v2859
        %2991 = vmatprep.subr.bf16.mxu0 %v2858
        %2992 = vmatpush1.bf16.msra.mxu0 %v2857
        %2993 = vmatprep.subr.bf16.mxu0 %v2856
        %2994 = vmatpush1.bf16.msra.mxu0 %v2855
        %2995 = vmatprep.subr.bf16.mxu0 %v2854
        %2996 = vmatpush1.bf16.msra.mxu0 %v2853
        %2997 = vmatprep.subr.bf16.mxu0 %v2884
        %2998 = vmatpush2.bf16.msra.mxu0 %v2883
        %2999 = vmatprep.subr.bf16.mxu0 %v2882
        %3000 = vmatpush2.bf16.msra.mxu0 %v2881
        %3001 = vmatprep.subr.bf16.mxu0 %v2880
        %3002 = vmatpush2.bf16.msra.mxu0 %v2879
        %3003 = vmatprep.subr.bf16.mxu0 %v2878
        %3004 = vmatpush2.bf16.msra.mxu0 %v2877
        %3005 = vmatprep.subr.bf16.mxu0 %v2876
        %3006 = vmatpush2.bf16.msra.mxu0 %v2875
        %3007 = vmatprep.subr.bf16.mxu0 %v2874
        %3008 = vmatpush2.bf16.msra.mxu0 %v2873
        %3009 = vmatprep.subr.bf16.mxu0 %v2872
        %3010 = vmatpush2.bf16.msra.mxu0 %v2871
        %3011 = vmatprep.subr.bf16.mxu0 %v2870
        %3012 = vmatpush2.bf16.msra.mxu0 %v2869
        %3013 = vmatprep.mubr.bf16.mxu0 %v2582
        %3014 = vmatmul.mubr.bf16.gmra.mxu0 %v2581
        %v3015 = vpop.f32.mrf.mxu0
        %v3016 = vadd.f32 %v2654, %v3015
        %v3017 = vpop.f32.mrf.mxu0
        %v3018 = vadd.f32 %v2658, %v3017
        %v3019 = vpop.f32.mrf.mxu0
        %v3020 = vpop.f32.mrf.mxu0
        %3021 = vdwg.mxu0
        %3022 = vmatprep.subr.bf16.mxu0 %v2900
        %3023 = vmatpush1.bf16.msra.mxu0 %v2899
        %3024 = vmatprep.subr.bf16.mxu0 %v2898
        %3025 = vmatpush1.bf16.msra.mxu0 %v2897
        %3026 = vmatprep.subr.bf16.mxu0 %v2896
        %3027 = vmatpush1.bf16.msra.mxu0 %v2895
        %3028 = vmatprep.subr.bf16.mxu0 %v2894
        %3029 = vmatpush1.bf16.msra.mxu0 %v2893
        %3030 = vmatprep.subr.bf16.mxu0 %v2892
        %3031 = vmatpush1.bf16.msra.mxu0 %v2891
        %3032 = vmatprep.subr.bf16.mxu0 %v2890
        %3033 = vmatpush1.bf16.msra.mxu0 %v2889
        %3034 = vmatprep.subr.bf16.mxu0 %v2888
        %3035 = vmatpush1.bf16.msra.mxu0 %v2887
        %3036 = vmatprep.subr.bf16.mxu0 %v2886
        %3037 = vmatpush1.bf16.msra.mxu0 %v2885
        %3038 = vmatprep.subr.bf16.mxu0 %v2916
        %3039 = vmatpush2.bf16.msra.mxu0 %v2915
        %3040 = vmatprep.subr.bf16.mxu0 %v2914
        %3041 = vmatpush2.bf16.msra.mxu0 %v2913
        %3042 = vmatprep.subr.bf16.mxu0 %v2912
        %3043 = vmatpush2.bf16.msra.mxu0 %v2911
        %3044 = vmatprep.subr.bf16.mxu0 %v2910
        %3045 = vmatpush2.bf16.msra.mxu0 %v2909
        %3046 = vmatprep.subr.bf16.mxu0 %v2908
        %3047 = vmatpush2.bf16.msra.mxu0 %v2907
        %3048 = vmatprep.subr.bf16.mxu0 %v2906
        %3049 = vmatpush2.bf16.msra.mxu0 %v2905
        %3050 = vmatprep.subr.bf16.mxu0 %v2904
        %3051 = vmatpush2.bf16.msra.mxu0 %v2903
        %3052 = vmatprep.subr.bf16.mxu0 %v2902
        %3053 = vmatpush2.bf16.msra.mxu0 %v2901
        %3054 = vmatprep.mubr.bf16.mxu0 %v2584
        %3055 = vmatmul.mubr.bf16.gmra.mxu0 %v2583
        %v3056 = vpop.f32.mrf.mxu0
        %v3057 = vadd.f32 %v3016, %v3056
        %v3058 = vpop.f32.mrf.mxu0
        %v3059 = vadd.f32 %v3018, %v3058
        %v3060 = vpop.f32.mrf.mxu0
        %v3061 = vpop.f32.mrf.mxu0
        %3062 = vdwg.mxu0
        %v3063 = vpack.c.bf16 %v3057, %v3057
        %v3064 = vpack.c.bf16 %v3059, %v3059
        %v3065 = vld [vmem:[%s5] sm:$0xf]
        %v3066 = vld [vmem:[%s5 + $0x4] sm:$0xf]
        %v3067 = vld [vmem:[%s5 + $0x8] sm:$0xf]
        %v3068 = vld [vmem:[%s5 + $0xc] sm:$0xf]
        %v3069 = vld [vmem:[%s5 + $0x10] sm:$0xf]
        %v3070 = vld [vmem:[%s5 + $0x14] sm:$0xf]
        %v3071 = vld [vmem:[%s5 + $0x18] sm:$0xf]
        %v3072 = vld [vmem:[%s5 + $0x1c] sm:$0xf]
        %v3073 = vld [vmem:[%s5 + $0x20] sm:$0xf]
        %v3074 = vld [vmem:[%s5 + $0x24] sm:$0xf]
        %v3075 = vld [vmem:[%s5 + $0x28] sm:$0xf]
        %v3076 = vld [vmem:[%s5 + $0x2c] sm:$0xf]
        %v3077 = vld [vmem:[%s5 + $0x30] sm:$0xf]
        %v3078 = vld [vmem:[%s5 + $0x34] sm:$0xf]
        %v3079 = vld [vmem:[%s5 + $0x38] sm:$0xf]
        %v3080 = vld [vmem:[%s5 + $0x3c] sm:$0xf]
        %v3081 = vld [vmem:[%s5 + $0x40] sm:$0xf]
        %v3082 = vld [vmem:[%s5 + $0x44] sm:$0xf]
        %v3083 = vld [vmem:[%s5 + $0x48] sm:$0xf]
        %v3084 = vld [vmem:[%s5 + $0x4c] sm:$0xf]
        %v3085 = vld [vmem:[%s5 + $0x50] sm:$0xf]
        %v3086 = vld [vmem:[%s5 + $0x54] sm:$0xf]
        %v3087 = vld [vmem:[%s5 + $0x58] sm:$0xf]
        %v3088 = vld [vmem:[%s5 + $0x5c] sm:$0xf]
        %v3089 = vld [vmem:[%s5 + $0x60] sm:$0xf]
        %v3090 = vld [vmem:[%s5 + $0x64] sm:$0xf]
        %v3091 = vld [vmem:[%s5 + $0x68] sm:$0xf]
        %v3092 = vld [vmem:[%s5 + $0x6c] sm:$0xf]
        %v3093 = vld [vmem:[%s5 + $0x70] sm:$0xf]
        %v3094 = vld [vmem:[%s5 + $0x74] sm:$0xf]
        %v3095 = vld [vmem:[%s5 + $0x78] sm:$0xf]
        %v3096 = vld [vmem:[%s5 + $0x7c] sm:$0xf]
        %v3097 = vld [vmem:[%s6] sm:$0x1]
        %v3099 = vlaneseq
        %v3100 = vshrl.u32 %v3099, 7
        %v3101 = vsub.s32 0, %v3100
        %v3102 = vrot.slane %v3097, %v3101
        %v3136 = vunpack.c.l.b16 %v3065
        %v3137 = vunpack.c.l.b16 %v3066
        %v3138 = vunpack.c.l.b16 %v3067
        %v3139 = vunpack.c.l.b16 %v3068
        %v3140 = vunpack.c.l.b16 %v3069
        %v3141 = vunpack.c.l.b16 %v3070
        %v3142 = vunpack.c.l.b16 %v3071
        %v3143 = vunpack.c.l.b16 %v3072
        %v3144 = vunpack.c.l.b16 %v3073
        %v3145 = vunpack.c.l.b16 %v3074
        %v3146 = vunpack.c.l.b16 %v3075
        %v3147 = vunpack.c.l.b16 %v3076
        %v3148 = vunpack.c.l.b16 %v3077
        %v3149 = vunpack.c.l.b16 %v3078
        %v3150 = vunpack.c.l.b16 %v3079
        %v3151 = vunpack.c.l.b16 %v3080
        %v3152 = vunpack.c.l.b16 %v3081
        %v3153 = vunpack.c.l.b16 %v3082
        %v3154 = vunpack.c.l.b16 %v3083
        %v3155 = vunpack.c.l.b16 %v3084
        %v3156 = vunpack.c.l.b16 %v3085
        %v3157 = vunpack.c.l.b16 %v3086
        %v3158 = vunpack.c.l.b16 %v3087
        %v3159 = vunpack.c.l.b16 %v3088
        %v3160 = vunpack.c.l.b16 %v3089
        %v3161 = vunpack.c.l.b16 %v3090
        %v3162 = vunpack.c.l.b16 %v3091
        %v3163 = vunpack.c.l.b16 %v3092
        %v3164 = vunpack.c.l.b16 %v3093
        %v3165 = vunpack.c.l.b16 %v3094
        %v3166 = vunpack.c.l.b16 %v3095
        %v3167 = vunpack.c.l.b16 %v3096
        %v3168 = vpack.c.b16 %v3137, %v3136
        %v3169 = vpack.c.b16 %v3139, %v3138
        %v3170 = vpack.c.b16 %v3141, %v3140
        %v3171 = vpack.c.b16 %v3143, %v3142
        %v3172 = vpack.c.b16 %v3145, %v3144
        %v3173 = vpack.c.b16 %v3147, %v3146
        %v3174 = vpack.c.b16 %v3149, %v3148
        %v3175 = vpack.c.b16 %v3151, %v3150
        %v3176 = vpack.c.b16 %v3153, %v3152
        %v3177 = vpack.c.b16 %v3155, %v3154
        %v3178 = vpack.c.b16 %v3157, %v3156
        %v3179 = vpack.c.b16 %v3159, %v3158
        %v3180 = vpack.c.b16 %v3161, %v3160
        %v3181 = vpack.c.b16 %v3163, %v3162
        %v3182 = vpack.c.b16 %v3165, %v3164
        %v3183 = vpack.c.b16 %v3167, %v3166
        %3200 = vmatprep.subr.bf16.mxu0 0
        %3201 = vmatpush1.bf16.msra.mxu0 %v3175
        %3202 = vmatprep.subr.bf16.mxu0 0
        %3203 = vmatpush1.bf16.msra.mxu0 %v3174
        %3204 = vmatprep.subr.bf16.mxu0 0
        %3205 = vmatpush1.bf16.msra.mxu0 %v3173
        %3206 = vmatprep.subr.bf16.mxu0 0
        %3207 = vmatpush1.bf16.msra.mxu0 %v3172
        %3208 = vmatprep.subr.bf16.mxu0 0
        %3209 = vmatpush1.bf16.msra.mxu0 %v3171
        %3210 = vmatprep.subr.bf16.mxu0 0
        %3211 = vmatpush1.bf16.msra.mxu0 %v3170
        %3212 = vmatprep.subr.bf16.mxu0 0
        %3213 = vmatpush1.bf16.msra.mxu0 %v3169
        %3214 = vmatprep.subr.bf16.mxu0 0
        %3215 = vmatpush1.bf16.msra.mxu0 %v3168
        %3216 = vmatprep.subr.bf16.mxu0 0
        %3217 = vmatpush2.bf16.msra.mxu0 %v3183
        %3218 = vmatprep.subr.bf16.mxu0 0
        %3219 = vmatpush2.bf16.msra.mxu0 %v3182
        %3220 = vmatprep.subr.bf16.mxu0 0
        %3221 = vmatpush2.bf16.msra.mxu0 %v3181
        %3222 = vmatprep.subr.bf16.mxu0 0
        %3223 = vmatpush2.bf16.msra.mxu0 %v3180
        %3224 = vmatprep.subr.bf16.mxu0 0
        %3225 = vmatpush2.bf16.msra.mxu0 %v3179
        %3226 = vmatprep.subr.bf16.mxu0 0
        %3227 = vmatpush2.bf16.msra.mxu0 %v3178
        %3228 = vmatprep.subr.bf16.mxu0 0
        %3229 = vmatpush2.bf16.msra.mxu0 %v3177
        %3230 = vmatprep.subr.bf16.mxu0 0
        %3231 = vmatpush2.bf16.msra.mxu0 %v3176
        %3232 = vmatprep.mubr.bf16.mxu0 %v3064
        %3233 = vmatmul.mubr.bf16.gmra.mxu0 %v3063
        %v3234 = vpop.f32.mrf.mxu0
        %v3235 = vadd.f32 %v3102, %v3234
        %v3236 = vpop.f32.mrf.mxu0
        %v3237 = vpop.f32.mrf.mxu0
        %v3238 = vpop.f32.mrf.mxu0
        %3239 = vdwg.mxu0
        %v3240 = vmax.f32 %v3235, 0.0
        %v3241 = vld [vmem:[%s7] sm:$0x1]
        %v3242 = vunpack.c.l.bf16 %v3241
        %v3243 = vlaneseq
        %v3244 = vshrl.u32 %v3243, 7
        %v3245 = vsub.s32 0, %v3244
        %v3246 = vrot.slane %v3242, %v3245
        %v3247 = vmul.f32 %v3240, %v3246
        %vm3248 = vcmask 261120
        %v3249 = vsel %vm3248, %v3247, 0.0
        %3250 = vadd.xlane.f32.xlu0 %v3249
        %v3251 = vpop.xlane.xlu0 %3250
        %v3252 = vld [vmem:[#allocation3] sm:$0x1]
        %v3254 = vlaneseq
        %v3255 = vshrl.u32 %v3254, 7
        %v3256 = vsub.s32 0, %v3255
        %v3257 = vrot.slane %v3252, %v3256
        %v3259 = vadd.f32 %v3251, %v3257
        %v3260 = vxor.u32 %v3259, 2147483648
        %v3261 = vmul.f32 %v3260, 1.442695
        %v3262 = vpow.pop %v3261
        %v3263 = vadd.f32 %v3262, 1.0
        %v3264 = vrcp.pop %v3263
        %v3265 = vmul.f32 1.0, %v3264
        %vm3266 = vcmask 7168
        %3267 = vst.msk [vmem:[%s9] sm:$0xff] %vm3266, %v3265
      $region64: #{mil_forward.10} parent=55 // pred_fallthru
        _
      // Predicated region
      $region65: #{mil_forward.10} parent=55 // pred_check
        %p3268 = pneg %p234
      $region66: #{mil_forward.10} parent=55 // pred_check_branch
        %3270 = sbr.rel (%p3268) target = $region68
      $region67: #{mil_forward.10} parent=55 // pred_region
        _
      $region68: #{mil_forward.10} parent=55 // pred_fallthru
        _
      // Predicated region
      $region69: #{mil_forward.10} parent=55 // pred_check
        %p3271 = pneg %p234
      $region70: #{mil_forward.10} parent=55 // pred_check_branch
        %3273 = sbr.rel (%p3271) target = $region72
      $region71: #{mil_forward.10} parent=55 // pred_region
        _
      $region72: #{mil_forward.10} parent=55 // pred_fallthru
        _
    $region56: #{mil_forward.10} parent=5 // pred_fallthru
      _
    %p3274 = scmp.le.s32.totalorder 2, %s17
    // Predicated region
    $region73: #{mil_forward.10} parent=5 // pred_check
      %p3275 = pneg %p3274
    $region74: #{mil_forward.10} parent=5 // pred_check_branch
      %3277 = sbr.rel (%p3275) target = $region76
    $region75: #{mil_forward.10} parent=5 // pred_region
      %s3278 = ssub.s32 %s17, 2
    $region76: #{mil_forward.10} parent=5 // pred_fallthru
      _
  $region6: #{mil_forward.10} parent=0 // loop_footer
    %s21 = sadd.s32 1, %s17
  $region7: #{mil_forward.10} parent=0 // loop_footer_branch
    %16 = sbr.rel target = $region3
  $region8: #{mil_forward.10} parent=0 // loop_exit
    _

</llo_original>
